<compile_context>
chip_gen: v7x
topology: tpu7x:2x2x1
jax: 0.10.0
libtpu: 0.0.40
codegen_flags: <defaults>
</compile_context>

<pallas_src>
import numpy as np
import jax
import jax.numpy as jnp
from jax.experimental import pallas as pl
from jax.experimental.pallas import tpu as pltpu

# Small, module-consistent sizes.
D_MODEL = 32
N_HEAD = 4
HEAD_DIM = D_MODEL // N_HEAD
DIM_FF = 64
LN_EPS = 1e-5
NEG_BIG = -1e30  # finite "minus infinity" (avoids NaN for fully-masked rows)

# Column layout of the fused weight slab (D, 8*D + DIM_FF).
_C_QKV_SELF = (0 * D_MODEL, 3 * D_MODEL)          # self-attn fused QKV (q pre-scaled)
_C_O_SELF = (3 * D_MODEL, 4 * D_MODEL)            # self-attn output proj
_C_Q_CROSS = (4 * D_MODEL, 5 * D_MODEL)           # cross-attn Q (pre-scaled)
_C_KV_CROSS = (5 * D_MODEL, 7 * D_MODEL)          # cross-attn fused KV
_C_O_CROSS = (7 * D_MODEL, 8 * D_MODEL)           # cross-attn output proj
_C_W1 = (8 * D_MODEL, 8 * D_MODEL + DIM_FF)       # FFN first layer


def decoder_layer_kernel(x_ref, enc_ref, encbias_ref, selfbias_ref,
                         w_ref, w2_ref, vec_ref, out_ref, attn_ref):
    # Static shapes for this block.
    m_rows, d = x_ref.shape                     # m_rows = bblk * T
    t_len = selfbias_ref.shape[0]
    s_len = encbias_ref.shape[1]
    bblk = m_rows // t_len
    bf16 = jnp.bfloat16

    x = x_ref[...].astype(jnp.float32)          # (bblk*T, D)
    enc_bf = enc_ref[...].astype(bf16)          # (bblk*S, D) -> MXU operand

    # ---- unpack fused weight slab (slice f32, cast slices to bf16 for the MXU) ----
    W = w_ref[...]
    w_qkv_self = W[:, _C_QKV_SELF[0]:_C_QKV_SELF[1]].astype(bf16)
    w_o_self = W[:, _C_O_SELF[0]:_C_O_SELF[1]].astype(bf16)
    w_q_cross = W[:, _C_Q_CROSS[0]:_C_Q_CROSS[1]].astype(bf16)
    w_kv_cross = W[:, _C_KV_CROSS[0]:_C_KV_CROSS[1]].astype(bf16)
    w_o_cross = W[:, _C_O_CROSS[0]:_C_O_CROSS[1]].astype(bf16)
    w1 = W[:, _C_W1[0]:_C_W1[1]].astype(bf16)
    w2 = w2_ref[...].astype(bf16)

    # ---- unpack bias / LayerNorm slab (all f32) ----
    b_qkv_self = vec_ref[0:1, :]                              # (1, 3D)
    row1 = vec_ref[1:2, :]
    b_q_cross = row1[:, 0:d]                                  # (1, D)
    b_kv_cross = row1[:, d:3 * d]                             # (1, 2D)
    row2 = vec_ref[2:3, :]
    b_o_self = row2[:, 0:d]
    b_o_cross = row2[:, d:2 * d]
    b2v = row2[:, 2 * d:3 * d]
    b1v = vec_ref[3:4, 0:DIM_FF]                              # (1, DIM_FF)
    gamma_row = vec_ref[4:5, :]                               # [g0|g1|g2]
    beta_row = vec_ref[5:6, :]                                # [b0|b1|b2]

    def layer_norm(v, idx):
        g = gamma_row[:, idx * d:(idx + 1) * d]
        b = beta_row[:, idx * d:(idx + 1) * d]
        mu = jnp.mean(v, axis=-1, keepdims=True)
        var = jnp.mean((v - mu) ** 2, axis=-1, keepdims=True)
        return (v - mu) * jax.lax.rsqrt(var + LN_EPS) * g + b

    def attention(q3, k3, v3, bias_full, exact_softmax):
        # q3: (bblk, Tq, D) f32, k3/v3: (bblk, Tk, D) f32, bias_full: (bblk, Tq, Tk) f32.
        t_q = q3.shape[1]
        head_outs, head_probs = [], []
        for hd in range(N_HEAD):
            sl = slice(hd * HEAD_DIM, (hd + 1) * HEAD_DIM)
            qh = q3[:, :, sl].astype(bf16)
            kh = k3[:, :, sl].astype(bf16)
            vh = v3[:, :, sl].astype(bf16)
            scores = jnp.einsum("btd,bsd->bts", qh, kh,
                                preferred_element_type=jnp.float32) + bias_full
            m = jnp.max(scores, axis=-1, keepdims=True)
            e = jnp.exp(scores - m)
            ssum = jnp.sum(e, axis=-1, keepdims=True)
            if exact_softmax:
                p = e / ssum                        # exact: these probs are returned
            else:
                p = e * pl.reciprocal(ssum, approx=True)
            head_probs.append(p)
            head_outs.append(jnp.einsum("bts,bsd->btd", p.astype(bf16), vh,
                                        preferred_element_type=jnp.float32))
        ctx = jnp.concatenate(head_outs, axis=-1).reshape(bblk * t_q, d)
        return ctx, head_probs

    # ---- self-attention sub-layer (pre-LN) ----
    residual = x
    xn = layer_norm(x, 0).astype(bf16)
    qkv = jnp.dot(xn, w_qkv_self, preferred_element_type=jnp.float32) + b_qkv_self
    q3 = qkv[:, 0:d].reshape(bblk, t_len, d)
    k3 = qkv[:, d:2 * d].reshape(bblk, t_len, d)
    v3 = qkv[:, 2 * d:3 * d].reshape(bblk, t_len, d)
    self_bias_full = jnp.broadcast_to(selfbias_ref[...][None, :, :],
                                      (bblk, t_len, t_len))
    ctx, _ = attention(q3, k3, v3, self_bias_full, exact_softmax=False)
    sa = jnp.dot(ctx.astype(bf16), w_o_self,
                 preferred_element_type=jnp.float32) + b_o_self
    x = residual + sa

    # ---- encoder (cross) attention sub-layer ----
    residual = x
    xn = layer_norm(x, 1).astype(bf16)
    q = jnp.dot(xn, w_q_cross, preferred_element_type=jnp.float32) + b_q_cross
    kv = jnp.dot(enc_bf, w_kv_cross, preferred_element_type=jnp.float32) + b_kv_cross
    q3 = q.reshape(bblk, t_len, d)
    k3 = kv[:, 0:d].reshape(bblk, s_len, d)
    v3 = kv[:, d:2 * d].reshape(bblk, s_len, d)
    enc_bias_full = encbias_ref[...].reshape(bblk, t_len, s_len)   # pre-broadcast in wrapper
    ctx, probs = attention(q3, k3, v3, enc_bias_full, exact_softmax=True)
    ca = jnp.dot(ctx.astype(bf16), w_o_cross,
                 preferred_element_type=jnp.float32) + b_o_cross
    x = residual + ca
    # One 2-D packed store of all heads' probabilities: (bblk*T, n_head*S).
    attn_ref[...] = jnp.concatenate(
        [p.reshape(bblk * t_len, s_len) for p in probs], axis=-1).astype(attn_ref.dtype)

    # ---- feed-forward sub-layer ----
    residual = x
    xn = layer_norm(x, 2).astype(bf16)
    f = jnp.maximum(
        jnp.dot(xn, w1, preferred_element_type=jnp.float32) + b1v, 0.0)
    f = jnp.dot(f.astype(bf16), w2, preferred_element_type=jnp.float32) + b2v
    x = residual + f

    out_ref[...] = x.astype(out_ref.dtype)


def _default_grid_steps(batch):
    """1 grid step on single-TensorCore chips (v5e/v6e); 2 'parallel' steps on v7x
    so the batch shards across its 2 TensorCores."""
    try:
        kind = jax.devices()[0].device_kind.lower()
    except Exception:
        kind = ""
    if batch % 2 == 0 and ("v7" in kind or "7x" in kind):
        return 2
    return 1


def pack_params(params):
    """Fold q-scaling into the Q weights/bias and pack everything into 3 slabs."""
    scale = jnp.float32(HEAD_DIM ** -0.5)
    ws, bs = params["self_w"], params["self_b"]
    wc, bc = params["cross_w"], params["cross_b"]
    w_slab = jnp.concatenate([
        ws[0] * scale, ws[1], ws[2],   # self fused QKV (q pre-scaled)
        ws[3],                         # self output proj
        wc[0] * scale,                 # cross Q (pre-scaled)
        wc[1], wc[2],                  # cross fused KV
        wc[3],                         # cross output proj
        params["ffn_w1"],              # FFN W1
    ], axis=1).astype(jnp.float32)     # (D, 8*D + DIM_FF) = (32, 320)
    zeros_d = jnp.zeros((D_MODEL,), jnp.float32)
    vec_slab = jnp.stack([
        jnp.concatenate([bs[0] * scale, bs[1], bs[2]]),          # self QKV biases
        jnp.concatenate([bc[0] * scale, bc[1], bc[2]]),          # cross Q|KV biases
        jnp.concatenate([bs[3], bc[3], params["ffn_b2"][0]]),    # o_self | o_cross | b2
        jnp.concatenate([params["ffn_b1"][0], zeros_d]),         # b1 | pad
        params["ln"][:, 0, :].reshape(-1),                       # gammas [g0|g1|g2]
        params["ln"][:, 1, :].reshape(-1),                       # betas  [b0|b1|b2]
    ]).astype(jnp.float32)             # (6, 3*D) = (6, 96)
    return w_slab, params["ffn_w2"].astype(jnp.float32), vec_slab


def transformer_decoder_layer(x, encoder_output, encoder_mask, self_attn_mask, params,
                              grid_steps=None):
    B, T, D = x.shape
    S = encoder_output.shape[1]
    assert D == D_MODEL and self_attn_mask.shape == (T, T)

    if grid_steps is None:
        grid_steps = _default_grid_steps(B)
    if B % grid_steps:
        grid_steps = 1
    bblk = B // grid_steps
    # VMEM note: per-step footprint here is tens of KB, far below the 32 MiB
    # default scoped VMEM on any generation (v7x: 64 MiB physical) -- no cap needed.

    # Flatten batch into the sublane axis outside the kernel (free HBM reshape).
    x_flat = x.reshape(B * T, D).astype(jnp.float32)
    enc_flat = encoder_output.reshape(B * S, D).astype(jnp.float32)
    # Hoisted mask -> additive bias (finite negative, f32), pre-broadcast over T so
    # the kernel's per-head loop adds a ready-made (bblk, T, S) bias with no
    # per-iteration broadcast_in_dim.
    enc_bias = jnp.where(encoder_mask > 0, 0.0, NEG_BIG).astype(jnp.float32)
    enc_bias_full = jnp.broadcast_to(enc_bias[:, None, :], (B, T, S)).reshape(B * T, S)
    self_bias = jnp.where(self_attn_mask == 0, NEG_BIG, 0.0).astype(jnp.float32)

    w_slab, w2, vec_slab = pack_params(params)
    wcols = w_slab.shape[1]

    in_specs = [
        pl.BlockSpec((bblk * T, D), lambda b: (b, 0)),        # x (flattened)
        pl.BlockSpec((bblk * S, D), lambda b: (b, 0)),        # encoder output (flattened)
        pl.BlockSpec((bblk * T, S), lambda b: (b, 0)),        # cross-attn additive bias
        pl.BlockSpec((T, T), lambda b: (0, 0)),               # self-attn additive bias
        pl.BlockSpec((D, wcols), lambda b: (0, 0)),           # fused weight slab
        pl.BlockSpec((DIM_FF, D), lambda b: (0, 0)),          # FFN W2
        pl.BlockSpec((6, 3 * D), lambda b: (0, 0)),           # bias / LayerNorm slab
    ]
    out_specs = [
        pl.BlockSpec((bblk * T, D), lambda b: (b, 0)),             # output (flattened)
        pl.BlockSpec((bblk * T, N_HEAD * S), lambda b: (b, 0)),    # packed attn probs
    ]
    out_shapes = [
        jax.ShapeDtypeStruct((B * T, D), jnp.float32),
        jax.ShapeDtypeStruct((B * T, N_HEAD * S), jnp.float32),
    ]

    out_flat, attn_packed = pl.pallas_call(
        decoder_layer_kernel,
        grid=(grid_steps,),
        in_specs=in_specs,
        out_specs=out_specs,
        out_shape=out_shapes,
        compiler_params=pltpu.CompilerParams(dimension_semantics=("parallel",)),
    )(x_flat, enc_flat, enc_bias_full, self_bias, w_slab, w2, vec_slab)

    out = out_flat.reshape(B, T, D)
    # packed layout is [head0 | head1 | ...] along lanes -> (B, T, S, n_head) 'bqkn'
    attn_weight = jnp.transpose(attn_packed.reshape(B, T, N_HEAD, S), (0, 1, 3, 2))
    return out, attn_weight


# ---------------- pure-JAX reference (for correctness check) ----------------
def reference(x, enc, enc_mask, self_mask, p):
    def ln(v, g, b):
        mu = v.mean(-1, keepdims=True)
        var = ((v - mu) ** 2).mean(-1, keepdims=True)
        return (v - mu) / jnp.sqrt(var + LN_EPS) * g + b

    def mha(q_in, kv_in, w, bvec, bias):
        scaling = HEAD_DIM ** -0.5
        q = (q_in @ w[0] + bvec[0]) * scaling
        k = kv_in @ w[1] + bvec[1]
        v = kv_in @ w[2] + bvec[2]
        B, T, _ = q.shape
        S = k.shape[1]
        qh = q.reshape(B, T, N_HEAD, HEAD_DIM)
        kh = k.reshape(B, S, N_HEAD, HEAD_DIM)
        vh = v.reshape(B, S, N_HEAD, HEAD_DIM)
        scores = jnp.einsum("bqnh,bknh->bqkn", qh, kh) + bias
        attn = jax.nn.softmax(scores, axis=2)
        o = jnp.einsum("bqkn,bknh->bqnh", attn, vh).reshape(B, T, D_MODEL)
        return o @ w[3] + bvec[3], attn

    neg_inf = -jnp.inf
    self_bias = jnp.where(self_mask == 0, neg_inf, 0.0)[None, :, :, None]
    enc_bias = jnp.where(enc_mask > 0, 0.0, neg_inf)[:, None, :, None]

    residual = x
    h = ln(x, p["ln"][0, 0], p["ln"][0, 1])
    sa, _ = mha(h, h, p["self_w"], p["self_b"], self_bias)
    x = residual + sa

    residual = x
    h = ln(x, p["ln"][1, 0], p["ln"][1, 1])
    ca, attn_w = mha(h, enc, p["cross_w"], p["cross_b"], enc_bias)
    x = residual + ca

    residual = x
    h = ln(x, p["ln"][2, 0], p["ln"][2, 1])
    f = jnp.maximum(h @ p["ffn_w1"] + p["ffn_b1"][0], 0.0)
    f = f @ p["ffn_w2"] + p["ffn_b2"][0]
    x = residual + f
    return x, attn_w


if __name__ == "__main__":
    B, T, S = 8, 8, 16
    key = jax.random.PRNGKey(0)
    ks = jax.random.split(key, 16)

    # Deterministic synthetic parameters (not a checkpoint load).
    gammas = 1.0 + 0.05 * jax.random.normal(ks[0], (3, D_MODEL), jnp.float32)
    betas = 0.05 * jax.random.normal(ks[1], (3, D_MODEL), jnp.float32)
    params = {
        "ln": jnp.stack([gammas, betas], axis=1),                              # (3,2,D)
        "self_w": 0.08 * jax.random.normal(ks[2], (4, D_MODEL, D_MODEL), jnp.float32),
        "self_b": 0.02 * jax.random.normal(ks[3], (4, D_MODEL), jnp.float32),
        "cross_w": 0.08 * jax.random.normal(ks[4], (4, D_MODEL, D_MODEL), jnp.float32),
        "cross_b": 0.02 * jax.random.normal(ks[5], (4, D_MODEL), jnp.float32),
        "ffn_w1": 0.08 * jax.random.normal(ks[6], (D_MODEL, DIM_FF), jnp.float32),
        "ffn_b1": 0.02 * jax.random.normal(ks[7], (1, DIM_FF), jnp.float32),
        "ffn_w2": 0.08 * jax.random.normal(ks[8], (DIM_FF, D_MODEL), jnp.float32),
        "ffn_b2": 0.02 * jax.random.normal(ks[9], (1, D_MODEL), jnp.float32),
    }

    x = jax.random.normal(ks[10], (B, T, D_MODEL), jnp.float32)
    encoder_output = jax.random.normal(ks[11], (B, S, D_MODEL), jnp.float32)
    src_lens = jnp.array([16, 12, 16, 9, 16, 8, 14, 10])
    encoder_mask = (jnp.arange(S)[None, :] < src_lens[:, None]).astype(jnp.float32)  # (B,S)
    self_attn_mask = jnp.tril(jnp.ones((T, T), jnp.float32))                          # (T,T)

    ref_out, ref_attn = reference(x, encoder_output, encoder_mask, self_attn_mask, params)

    # Exercise both the 1-step layout (v5e/v6e) and the 2-step parallel layout (v7x).
    for steps in (1, 2):
        out, attn_weight = transformer_decoder_layer(
            x, encoder_output, encoder_mask, self_attn_mask, params, grid_steps=steps)
        out = jax.block_until_ready(out)
        attn_weight = jax.block_until_ready(attn_weight)
        # Tolerance reflects bf16 MXU operands (f32 accumulation) in the kernel.
        np.testing.assert_allclose(np.asarray(out), np.asarray(ref_out),
                                   rtol=2e-2, atol=2e-2)
        np.testing.assert_allclose(np.asarray(attn_weight), np.asarray(ref_attn),
                                   rtol=2e-2, atol=2e-2)

    print("KERNEL_OK")
</pallas_src>

<mosaic_0001>
module attributes {stable_mosaic.version = 11 : i64} {
  func.func @decoder_layer_kernel(%arg0: i32, %arg1: memref<64x32xf32, #tpu.memory_space<vmem>>, %arg2: memref<128x32xf32, #tpu.memory_space<vmem>>, %arg3: memref<64x16xf32, #tpu.memory_space<vmem>>, %arg4: memref<8x8xf32, #tpu.memory_space<vmem>>, %arg5: memref<32x320xf32, #tpu.memory_space<vmem>>, %arg6: memref<64x32xf32, #tpu.memory_space<vmem>>, %arg7: memref<6x96xf32, #tpu.memory_space<vmem>>, %arg8: memref<64x32xf32, #tpu.memory_space<vmem>>, %arg9: memref<64x64xf32, #tpu.memory_space<vmem>>) attributes {dimension_semantics = [#tpu.dimension_semantics<parallel>], iteration_bounds = array<i64: 1>, scalar_prefetch = 0 : i64, scratch_operands = 0 : i64, tpu.core_type = #tpu.core_type<tc>, window_params = [{transform_indices = @transform_0, window_bounds = array<i64: 64, 32>}, {transform_indices = @transform_1, window_bounds = array<i64: 128, 32>}, {transform_indices = @transform_2, window_bounds = array<i64: 64, 16>}, {pipeline_mode = #tpu.pipeline_mode<synchronous>, transform_indices = @transform_3, window_bounds = array<i64: 8, 8>}, {pipeline_mode = #tpu.pipeline_mode<synchronous>, transform_indices = @transform_4, window_bounds = array<i64: 32, 320>}, {pipeline_mode = #tpu.pipeline_mode<synchronous>, transform_indices = @transform_5, window_bounds = array<i64: 64, 32>}, {pipeline_mode = #tpu.pipeline_mode<synchronous>, transform_indices = @transform_6, window_bounds = array<i64: 6, 96>}, {transform_indices = @transform_7, window_bounds = array<i64: 64, 32>}, {transform_indices = @transform_8, window_bounds = array<i64: 64, 64>}]} {
    %c0 = arith.constant 0 : index
    %c0_0 = arith.constant 0 : index
    %0 = vector.load %arg1[%c0, %c0_0] : memref<64x32xf32, #tpu.memory_space<vmem>>, vector<64x32xf32>
    %c0_1 = arith.constant 0 : index
    %c0_2 = arith.constant 0 : index
    %1 = vector.load %arg2[%c0_1, %c0_2] : memref<128x32xf32, #tpu.memory_space<vmem>>, vector<128x32xf32>
    %2 = arith.truncf %1 : vector<128x32xf32> to vector<128x32xbf16>
    %c0_3 = arith.constant 0 : index
    %c0_4 = arith.constant 0 : index
    %3 = vector.load %arg5[%c0_3, %c0_4] : memref<32x320xf32, #tpu.memory_space<vmem>>, vector<32x320xf32>
    %4 = vector.extract_strided_slice %3 {offsets = [0, 0], sizes = [32, 96], strides = [1, 1]} : vector<32x320xf32> to vector<32x96xf32>
    %5 = arith.truncf %4 : vector<32x96xf32> to vector<32x96xbf16>
    %6 = vector.extract_strided_slice %3 {offsets = [0, 96], sizes = [32, 32], strides = [1, 1]} : vector<32x320xf32> to vector<32x32xf32>
    %7 = arith.truncf %6 : vector<32x32xf32> to vector<32x32xbf16>
    %8 = vector.extract_strided_slice %3 {offsets = [0, 128], sizes = [32, 32], strides = [1, 1]} : vector<32x320xf32> to vector<32x32xf32>
    %9 = arith.truncf %8 : vector<32x32xf32> to vector<32x32xbf16>
    %10 = vector.extract_strided_slice %3 {offsets = [0, 160], sizes = [32, 64], strides = [1, 1]} : vector<32x320xf32> to vector<32x64xf32>
    %11 = arith.truncf %10 : vector<32x64xf32> to vector<32x64xbf16>
    %12 = vector.extract_strided_slice %3 {offsets = [0, 224], sizes = [32, 32], strides = [1, 1]} : vector<32x320xf32> to vector<32x32xf32>
    %13 = arith.truncf %12 : vector<32x32xf32> to vector<32x32xbf16>
    %14 = vector.extract_strided_slice %3 {offsets = [0, 256], sizes = [32, 64], strides = [1, 1]} : vector<32x320xf32> to vector<32x64xf32>
    %15 = arith.truncf %14 : vector<32x64xf32> to vector<32x64xbf16>
    %c0_5 = arith.constant 0 : index
    %c0_6 = arith.constant 0 : index
    %16 = vector.load %arg6[%c0_5, %c0_6] : memref<64x32xf32, #tpu.memory_space<vmem>>, vector<64x32xf32>
    %17 = arith.truncf %16 : vector<64x32xf32> to vector<64x32xbf16>
    %c0_7 = arith.constant 0 : index
    %c0_8 = arith.constant 0 : index
    %18 = vector.load %arg7[%c0_7, %c0_8] : memref<6x96xf32, #tpu.memory_space<vmem>>, vector<1x96xf32>
    %c1 = arith.constant 1 : index
    %c0_9 = arith.constant 0 : index
    %19 = vector.load %arg7[%c1, %c0_9] : memref<6x96xf32, #tpu.memory_space<vmem>>, vector<1x96xf32>
    %20 = vector.extract_strided_slice %19 {offsets = [0, 0], sizes = [1, 32], strides = [1, 1]} : vector<1x96xf32> to vector<1x32xf32>
    %21 = vector.extract_strided_slice %19 {offsets = [0, 32], sizes = [1, 64], strides = [1, 1]} : vector<1x96xf32> to vector<1x64xf32>
    %c2 = arith.constant 2 : index
    %c0_10 = arith.constant 0 : index
    %22 = vector.load %arg7[%c2, %c0_10] : memref<6x96xf32, #tpu.memory_space<vmem>>, vector<1x96xf32>
    %23 = vector.extract_strided_slice %22 {offsets = [0, 0], sizes = [1, 32], strides = [1, 1]} : vector<1x96xf32> to vector<1x32xf32>
    %24 = vector.extract_strided_slice %22 {offsets = [0, 32], sizes = [1, 32], strides = [1, 1]} : vector<1x96xf32> to vector<1x32xf32>
    %25 = vector.extract_strided_slice %22 {offsets = [0, 64], sizes = [1, 32], strides = [1, 1]} : vector<1x96xf32> to vector<1x32xf32>
    %c3 = arith.constant 3 : index
    %c0_11 = arith.constant 0 : index
    %26 = vector.load %arg7[%c3, %c0_11] : memref<6x96xf32, #tpu.memory_space<vmem>>, vector<1x64xf32>
    %c4 = arith.constant 4 : index
    %c0_12 = arith.constant 0 : index
    %27 = vector.load %arg7[%c4, %c0_12] : memref<6x96xf32, #tpu.memory_space<vmem>>, vector<1x96xf32>
    %c5 = arith.constant 5 : index
    %c0_13 = arith.constant 0 : index
    %28 = vector.load %arg7[%c5, %c0_13] : memref<6x96xf32, #tpu.memory_space<vmem>>, vector<1x96xf32>
    %29 = vector.extract_strided_slice %27 {offsets = [0, 0], sizes = [1, 32], strides = [1, 1]} : vector<1x96xf32> to vector<1x32xf32>
    %30 = vector.extract_strided_slice %28 {offsets = [0, 0], sizes = [1, 32], strides = [1, 1]} : vector<1x96xf32> to vector<1x32xf32>
    %cst = arith.constant dense<0.000000e+00> : vector<64xf32>
    %31 = vector.multi_reduction <add>, %0, %cst [1] : vector<64x32xf32> to vector<64xf32>
    %32 = vector.shape_cast %31 : vector<64xf32> to vector<64x1xf32>
    %cst_14 = arith.constant 3.200000e+01 : f32
    %33 = vector.broadcast %cst_14 : f32 to vector<64x1xf32>
    %34 = arith.divf %32, %33 : vector<64x1xf32>
    %35 = vector.broadcast %34 : vector<64x1xf32> to vector<64x32xf32>
    %36 = arith.subf %0, %35 : vector<64x32xf32>
    %37 = arith.mulf %36, %36 : vector<64x32xf32>
    %cst_15 = arith.constant dense<0.000000e+00> : vector<64xf32>
    %38 = vector.multi_reduction <add>, %37, %cst_15 [1] : vector<64x32xf32> to vector<64xf32>
    %39 = vector.shape_cast %38 : vector<64xf32> to vector<64x1xf32>
    %cst_16 = arith.constant 3.200000e+01 : f32
    %40 = vector.broadcast %cst_16 : f32 to vector<64x1xf32>
    %41 = arith.divf %39, %40 : vector<64x1xf32>
    %42 = vector.broadcast %34 : vector<64x1xf32> to vector<64x32xf32>
    %43 = arith.subf %0, %42 : vector<64x32xf32>
    %cst_17 = arith.constant 9.99999974E-6 : f32
    %44 = vector.broadcast %cst_17 : f32 to vector<64x1xf32>
    %45 = arith.addf %41, %44 : vector<64x1xf32>
    %46 = math.rsqrt %45 : vector<64x1xf32>
    %47 = vector.broadcast %46 : vector<64x1xf32> to vector<64x32xf32>
    %48 = arith.mulf %43, %47 : vector<64x32xf32>
    %49 = vector.broadcast %29 : vector<1x32xf32> to vector<64x32xf32>
    %50 = arith.mulf %48, %49 : vector<64x32xf32>
    %51 = vector.broadcast %30 : vector<1x32xf32> to vector<64x32xf32>
    %52 = arith.addf %50, %51 : vector<64x32xf32>
    %53 = arith.truncf %52 : vector<64x32xf32> to vector<64x32xbf16>
    %cst_18 = arith.constant dense<0.000000e+00> : vector<64x96xf32>
    %54 = tpu.matmul %53, %5, %cst_18 {dimension_numbers = #tpu.dot_dimension_numbers<[1], [0], [0], [1], [0, 0, 1, 1], [], []>} : vector<64x32xbf16>, vector<32x96xbf16>, vector<64x96xf32> -> vector<64x96xf32>
    %55 = vector.broadcast %18 : vector<1x96xf32> to vector<64x96xf32>
    %56 = arith.addf %54, %55 : vector<64x96xf32>
    %57 = vector.extract_strided_slice %56 {offsets = [0, 0], sizes = [64, 32], strides = [1, 1]} : vector<64x96xf32> to vector<64x32xf32>
    %58 = vector.shape_cast %57 : vector<64x32xf32> to vector<8x8x32xf32>
    %59 = vector.extract_strided_slice %56 {offsets = [0, 32], sizes = [64, 32], strides = [1, 1]} : vector<64x96xf32> to vector<64x32xf32>
    %60 = vector.shape_cast %59 : vector<64x32xf32> to vector<8x8x32xf32>
    %61 = vector.extract_strided_slice %56 {offsets = [0, 64], sizes = [64, 32], strides = [1, 1]} : vector<64x96xf32> to vector<64x32xf32>
    %62 = vector.shape_cast %61 : vector<64x32xf32> to vector<8x8x32xf32>
    %c0_19 = arith.constant 0 : index
    %c0_20 = arith.constant 0 : index
    %63 = vector.load %arg4[%c0_19, %c0_20] : memref<8x8xf32, #tpu.memory_space<vmem>>, vector<8x8xf32>
    %64 = vector.shape_cast %63 : vector<8x8xf32> to vector<1x8x8xf32>
    %65 = vector.shape_cast %64 : vector<1x8x8xf32> to vector<1x8x8xf32>
    %66 = vector.broadcast %65 : vector<1x8x8xf32> to vector<8x8x8xf32>
    %67 = vector.extract_strided_slice %58 {offsets = [0, 0, 0], sizes = [8, 8, 8], strides = [1, 1, 1]} : vector<8x8x32xf32> to vector<8x8x8xf32>
    %68 = arith.truncf %67 : vector<8x8x8xf32> to vector<8x8x8xbf16>
    %69 = vector.extract_strided_slice %60 {offsets = [0, 0, 0], sizes = [8, 8, 8], strides = [1, 1, 1]} : vector<8x8x32xf32> to vector<8x8x8xf32>
    %70 = arith.truncf %69 : vector<8x8x8xf32> to vector<8x8x8xbf16>
    %71 = vector.extract_strided_slice %62 {offsets = [0, 0, 0], sizes = [8, 8, 8], strides = [1, 1, 1]} : vector<8x8x32xf32> to vector<8x8x8xf32>
    %72 = arith.truncf %71 : vector<8x8x8xf32> to vector<8x8x8xbf16>
    "tpu.trace_start"() <{level = 10 : i32, message = "btd,bsd->bts"}> : () -> ()
    %cst_21 = arith.constant dense<0.000000e+00> : vector<8x8x8xf32>
    %73 = tpu.matmul %68, %70, %cst_21 {dimension_numbers = #tpu.dot_dimension_numbers<[2], [2], [1], [1], [0, 0, 0, 1, 1, 1], [0], [0]>} : vector<8x8x8xbf16>, vector<8x8x8xbf16>, vector<8x8x8xf32> -> vector<8x8x8xf32>
    "tpu.trace_stop"() : () -> ()
    %74 = arith.addf %73, %66 : vector<8x8x8xf32>
    %cst_22 = arith.constant dense<0xFF800000> : vector<8x8xf32>
    %75 = vector.multi_reduction <maximumf>, %74, %cst_22 [2] : vector<8x8x8xf32> to vector<8x8xf32>
    %76 = vector.shape_cast %75 : vector<8x8xf32> to vector<8x8x1xf32>
    %77 = vector.broadcast %76 : vector<8x8x1xf32> to vector<8x8x8xf32>
    %78 = arith.subf %74, %77 : vector<8x8x8xf32>
    %79 = math.exp %78 : vector<8x8x8xf32>
    %cst_23 = arith.constant dense<0.000000e+00> : vector<8x8xf32>
    %80 = vector.multi_reduction <add>, %79, %cst_23 [2] : vector<8x8x8xf32> to vector<8x8xf32>
    %81 = vector.shape_cast %80 : vector<8x8xf32> to vector<8x8x1xf32>
    %82 = tpu.reciprocal %81 {approx = true} : vector<8x8x1xf32> -> vector<8x8x1xf32>
    %83 = vector.broadcast %82 : vector<8x8x1xf32> to vector<8x8x8xf32>
    %84 = arith.mulf %79, %83 : vector<8x8x8xf32>
    %85 = arith.truncf %84 : vector<8x8x8xf32> to vector<8x8x8xbf16>
    "tpu.trace_start"() <{level = 10 : i32, message = "bts,bsd->btd"}> : () -> ()
    %cst_24 = arith.constant dense<0.000000e+00> : vector<8x8x8xf32>
    %86 = tpu.matmul %85, %72, %cst_24 {dimension_numbers = #tpu.dot_dimension_numbers<[2], [1], [1], [2], [0, 0, 0, 1, 1, 2], [0], [0]>} : vector<8x8x8xbf16>, vector<8x8x8xbf16>, vector<8x8x8xf32> -> vector<8x8x8xf32>
    "tpu.trace_stop"() : () -> ()
    %87 = vector.extract_strided_slice %58 {offsets = [0, 0, 8], sizes = [8, 8, 8], strides = [1, 1, 1]} : vector<8x8x32xf32> to vector<8x8x8xf32>
    %88 = arith.truncf %87 : vector<8x8x8xf32> to vector<8x8x8xbf16>
    %89 = vector.extract_strided_slice %60 {offsets = [0, 0, 8], sizes = [8, 8, 8], strides = [1, 1, 1]} : vector<8x8x32xf32> to vector<8x8x8xf32>
    %90 = arith.truncf %89 : vector<8x8x8xf32> to vector<8x8x8xbf16>
    %91 = vector.extract_strided_slice %62 {offsets = [0, 0, 8], sizes = [8, 8, 8], strides = [1, 1, 1]} : vector<8x8x32xf32> to vector<8x8x8xf32>
    %92 = arith.truncf %91 : vector<8x8x8xf32> to vector<8x8x8xbf16>
    "tpu.trace_start"() <{level = 10 : i32, message = "btd,bsd->bts"}> : () -> ()
    %cst_25 = arith.constant dense<0.000000e+00> : vector<8x8x8xf32>
    %93 = tpu.matmul %88, %90, %cst_25 {dimension_numbers = #tpu.dot_dimension_numbers<[2], [2], [1], [1], [0, 0, 0, 1, 1, 1], [0], [0]>} : vector<8x8x8xbf16>, vector<8x8x8xbf16>, vector<8x8x8xf32> -> vector<8x8x8xf32>
    "tpu.trace_stop"() : () -> ()
    %94 = arith.addf %93, %66 : vector<8x8x8xf32>
    %cst_26 = arith.constant dense<0xFF800000> : vector<8x8xf32>
    %95 = vector.multi_reduction <maximumf>, %94, %cst_26 [2] : vector<8x8x8xf32> to vector<8x8xf32>
    %96 = vector.shape_cast %95 : vector<8x8xf32> to vector<8x8x1xf32>
    %97 = vector.broadcast %96 : vector<8x8x1xf32> to vector<8x8x8xf32>
    %98 = arith.subf %94, %97 : vector<8x8x8xf32>
    %99 = math.exp %98 : vector<8x8x8xf32>
    %cst_27 = arith.constant dense<0.000000e+00> : vector<8x8xf32>
    %100 = vector.multi_reduction <add>, %99, %cst_27 [2] : vector<8x8x8xf32> to vector<8x8xf32>
    %101 = vector.shape_cast %100 : vector<8x8xf32> to vector<8x8x1xf32>
    %102 = tpu.reciprocal %101 {approx = true} : vector<8x8x1xf32> -> vector<8x8x1xf32>
    %103 = vector.broadcast %102 : vector<8x8x1xf32> to vector<8x8x8xf32>
    %104 = arith.mulf %99, %103 : vector<8x8x8xf32>
    %105 = arith.truncf %104 : vector<8x8x8xf32> to vector<8x8x8xbf16>
    "tpu.trace_start"() <{level = 10 : i32, message = "bts,bsd->btd"}> : () -> ()
    %cst_28 = arith.constant dense<0.000000e+00> : vector<8x8x8xf32>
    %106 = tpu.matmul %105, %92, %cst_28 {dimension_numbers = #tpu.dot_dimension_numbers<[2], [1], [1], [2], [0, 0, 0, 1, 1, 2], [0], [0]>} : vector<8x8x8xbf16>, vector<8x8x8xbf16>, vector<8x8x8xf32> -> vector<8x8x8xf32>
    "tpu.trace_stop"() : () -> ()
    %107 = vector.extract_strided_slice %58 {offsets = [0, 0, 16], sizes = [8, 8, 8], strides = [1, 1, 1]} : vector<8x8x32xf32> to vector<8x8x8xf32>
    %108 = arith.truncf %107 : vector<8x8x8xf32> to vector<8x8x8xbf16>
    %109 = vector.extract_strided_slice %60 {offsets = [0, 0, 16], sizes = [8, 8, 8], strides = [1, 1, 1]} : vector<8x8x32xf32> to vector<8x8x8xf32>
    %110 = arith.truncf %109 : vector<8x8x8xf32> to vector<8x8x8xbf16>
    %111 = vector.extract_strided_slice %62 {offsets = [0, 0, 16], sizes = [8, 8, 8], strides = [1, 1, 1]} : vector<8x8x32xf32> to vector<8x8x8xf32>
    %112 = arith.truncf %111 : vector<8x8x8xf32> to vector<8x8x8xbf16>
    "tpu.trace_start"() <{level = 10 : i32, message = "btd,bsd->bts"}> : () -> ()
    %cst_29 = arith.constant dense<0.000000e+00> : vector<8x8x8xf32>
    %113 = tpu.matmul %108, %110, %cst_29 {dimension_numbers = #tpu.dot_dimension_numbers<[2], [2], [1], [1], [0, 0, 0, 1, 1, 1], [0], [0]>} : vector<8x8x8xbf16>, vector<8x8x8xbf16>, vector<8x8x8xf32> -> vector<8x8x8xf32>
    "tpu.trace_stop"() : () -> ()
    %114 = arith.addf %113, %66 : vector<8x8x8xf32>
    %cst_30 = arith.constant dense<0xFF800000> : vector<8x8xf32>
    %115 = vector.multi_reduction <maximumf>, %114, %cst_30 [2] : vector<8x8x8xf32> to vector<8x8xf32>
    %116 = vector.shape_cast %115 : vector<8x8xf32> to vector<8x8x1xf32>
    %117 = vector.broadcast %116 : vector<8x8x1xf32> to vector<8x8x8xf32>
    %118 = arith.subf %114, %117 : vector<8x8x8xf32>
    %119 = math.exp %118 : vector<8x8x8xf32>
    %cst_31 = arith.constant dense<0.000000e+00> : vector<8x8xf32>
    %120 = vector.multi_reduction <add>, %119, %cst_31 [2] : vector<8x8x8xf32> to vector<8x8xf32>
    %121 = vector.shape_cast %120 : vector<8x8xf32> to vector<8x8x1xf32>
    %122 = tpu.reciprocal %121 {approx = true} : vector<8x8x1xf32> -> vector<8x8x1xf32>
    %123 = vector.broadcast %122 : vector<8x8x1xf32> to vector<8x8x8xf32>
    %124 = arith.mulf %119, %123 : vector<8x8x8xf32>
    %125 = arith.truncf %124 : vector<8x8x8xf32> to vector<8x8x8xbf16>
    "tpu.trace_start"() <{level = 10 : i32, message = "bts,bsd->btd"}> : () -> ()
    %cst_32 = arith.constant dense<0.000000e+00> : vector<8x8x8xf32>
    %126 = tpu.matmul %125, %112, %cst_32 {dimension_numbers = #tpu.dot_dimension_numbers<[2], [1], [1], [2], [0, 0, 0, 1, 1, 2], [0], [0]>} : vector<8x8x8xbf16>, vector<8x8x8xbf16>, vector<8x8x8xf32> -> vector<8x8x8xf32>
    "tpu.trace_stop"() : () -> ()
    %127 = vector.extract_strided_slice %58 {offsets = [0, 0, 24], sizes = [8, 8, 8], strides = [1, 1, 1]} : vector<8x8x32xf32> to vector<8x8x8xf32>
    %128 = arith.truncf %127 : vector<8x8x8xf32> to vector<8x8x8xbf16>
    %129 = vector.extract_strided_slice %60 {offsets = [0, 0, 24], sizes = [8, 8, 8], strides = [1, 1, 1]} : vector<8x8x32xf32> to vector<8x8x8xf32>
    %130 = arith.truncf %129 : vector<8x8x8xf32> to vector<8x8x8xbf16>
    %131 = vector.extract_strided_slice %62 {offsets = [0, 0, 24], sizes = [8, 8, 8], strides = [1, 1, 1]} : vector<8x8x32xf32> to vector<8x8x8xf32>
    %132 = arith.truncf %131 : vector<8x8x8xf32> to vector<8x8x8xbf16>
    "tpu.trace_start"() <{level = 10 : i32, message = "btd,bsd->bts"}> : () -> ()
    %cst_33 = arith.constant dense<0.000000e+00> : vector<8x8x8xf32>
    %133 = tpu.matmul %128, %130, %cst_33 {dimension_numbers = #tpu.dot_dimension_numbers<[2], [2], [1], [1], [0, 0, 0, 1, 1, 1], [0], [0]>} : vector<8x8x8xbf16>, vector<8x8x8xbf16>, vector<8x8x8xf32> -> vector<8x8x8xf32>
    "tpu.trace_stop"() : () -> ()
    %134 = arith.addf %133, %66 : vector<8x8x8xf32>
    %cst_34 = arith.constant dense<0xFF800000> : vector<8x8xf32>
    %135 = vector.multi_reduction <maximumf>, %134, %cst_34 [2] : vector<8x8x8xf32> to vector<8x8xf32>
    %136 = vector.shape_cast %135 : vector<8x8xf32> to vector<8x8x1xf32>
    %137 = vector.broadcast %136 : vector<8x8x1xf32> to vector<8x8x8xf32>
    %138 = arith.subf %134, %137 : vector<8x8x8xf32>
    %139 = math.exp %138 : vector<8x8x8xf32>
    %cst_35 = arith.constant dense<0.000000e+00> : vector<8x8xf32>
    %140 = vector.multi_reduction <add>, %139, %cst_35 [2] : vector<8x8x8xf32> to vector<8x8xf32>
    %141 = vector.shape_cast %140 : vector<8x8xf32> to vector<8x8x1xf32>
    %142 = tpu.reciprocal %141 {approx = true} : vector<8x8x1xf32> -> vector<8x8x1xf32>
    %143 = vector.broadcast %142 : vector<8x8x1xf32> to vector<8x8x8xf32>
    %144 = arith.mulf %139, %143 : vector<8x8x8xf32>
    %145 = arith.truncf %144 : vector<8x8x8xf32> to vector<8x8x8xbf16>
    "tpu.trace_start"() <{level = 10 : i32, message = "bts,bsd->btd"}> : () -> ()
    %cst_36 = arith.constant dense<0.000000e+00> : vector<8x8x8xf32>
    %146 = tpu.matmul %145, %132, %cst_36 {dimension_numbers = #tpu.dot_dimension_numbers<[2], [1], [1], [2], [0, 0, 0, 1, 1, 2], [0], [0]>} : vector<8x8x8xbf16>, vector<8x8x8xbf16>, vector<8x8x8xf32> -> vector<8x8x8xf32>
    "tpu.trace_stop"() : () -> ()
    %147 = tpu.concatenate %86, %106, %126, %146 in 2 : vector<8x8x8xf32>, vector<8x8x8xf32>, vector<8x8x8xf32>, vector<8x8x8xf32> -> vector<8x8x32xf32>
    %148 = vector.shape_cast %147 : vector<8x8x32xf32> to vector<64x32xf32>
    %149 = arith.truncf %148 : vector<64x32xf32> to vector<64x32xbf16>
    %cst_37 = arith.constant dense<0.000000e+00> : vector<64x32xf32>
    %150 = tpu.matmul %149, %7, %cst_37 {dimension_numbers = #tpu.dot_dimension_numbers<[1], [0], [0], [1], [0, 0, 1, 1], [], []>} : vector<64x32xbf16>, vector<32x32xbf16>, vector<64x32xf32> -> vector<64x32xf32>
    %151 = vector.broadcast %23 : vector<1x32xf32> to vector<64x32xf32>
    %152 = arith.addf %150, %151 : vector<64x32xf32>
    %153 = arith.addf %0, %152 : vector<64x32xf32>
    %154 = vector.extract_strided_slice %27 {offsets = [0, 32], sizes = [1, 32], strides = [1, 1]} : vector<1x96xf32> to vector<1x32xf32>
    %155 = vector.extract_strided_slice %28 {offsets = [0, 32], sizes = [1, 32], strides = [1, 1]} : vector<1x96xf32> to vector<1x32xf32>
    %cst_38 = arith.constant dense<0.000000e+00> : vector<64xf32>
    %156 = vector.multi_reduction <add>, %153, %cst_38 [1] : vector<64x32xf32> to vector<64xf32>
    %157 = vector.shape_cast %156 : vector<64xf32> to vector<64x1xf32>
    %cst_39 = arith.constant 3.200000e+01 : f32
    %158 = vector.broadcast %cst_39 : f32 to vector<64x1xf32>
    %159 = arith.divf %157, %158 : vector<64x1xf32>
    %160 = vector.broadcast %159 : vector<64x1xf32> to vector<64x32xf32>
    %161 = arith.subf %153, %160 : vector<64x32xf32>
    %162 = arith.mulf %161, %161 : vector<64x32xf32>
    %cst_40 = arith.constant dense<0.000000e+00> : vector<64xf32>
    %163 = vector.multi_reduction <add>, %162, %cst_40 [1] : vector<64x32xf32> to vector<64xf32>
    %164 = vector.shape_cast %163 : vector<64xf32> to vector<64x1xf32>
    %cst_41 = arith.constant 3.200000e+01 : f32
    %165 = vector.broadcast %cst_41 : f32 to vector<64x1xf32>
    %166 = arith.divf %164, %165 : vector<64x1xf32>
    %167 = vector.broadcast %159 : vector<64x1xf32> to vector<64x32xf32>
    %168 = arith.subf %153, %167 : vector<64x32xf32>
    %cst_42 = arith.constant 9.99999974E-6 : f32
    %169 = vector.broadcast %cst_42 : f32 to vector<64x1xf32>
    %170 = arith.addf %166, %169 : vector<64x1xf32>
    %171 = math.rsqrt %170 : vector<64x1xf32>
    %172 = vector.broadcast %171 : vector<64x1xf32> to vector<64x32xf32>
    %173 = arith.mulf %168, %172 : vector<64x32xf32>
    %174 = vector.broadcast %154 : vector<1x32xf32> to vector<64x32xf32>
    %175 = arith.mulf %173, %174 : vector<64x32xf32>
    %176 = vector.broadcast %155 : vector<1x32xf32> to vector<64x32xf32>
    %177 = arith.addf %175, %176 : vector<64x32xf32>
    %178 = arith.truncf %177 : vector<64x32xf32> to vector<64x32xbf16>
    %cst_43 = arith.constant dense<0.000000e+00> : vector<64x32xf32>
    %179 = tpu.matmul %178, %9, %cst_43 {dimension_numbers = #tpu.dot_dimension_numbers<[1], [0], [0], [1], [0, 0, 1, 1], [], []>} : vector<64x32xbf16>, vector<32x32xbf16>, vector<64x32xf32> -> vector<64x32xf32>
    %180 = vector.broadcast %20 : vector<1x32xf32> to vector<64x32xf32>
    %181 = arith.addf %179, %180 : vector<64x32xf32>
    %cst_44 = arith.constant dense<0.000000e+00> : vector<128x64xf32>
    %182 = tpu.matmul %2, %11, %cst_44 {dimension_numbers = #tpu.dot_dimension_numbers<[1], [0], [0], [1], [0, 0, 1, 1], [], []>} : vector<128x32xbf16>, vector<32x64xbf16>, vector<128x64xf32> -> vector<128x64xf32>
    %183 = vector.broadcast %21 : vector<1x64xf32> to vector<128x64xf32>
    %184 = arith.addf %182, %183 : vector<128x64xf32>
    %185 = vector.shape_cast %181 : vector<64x32xf32> to vector<8x8x32xf32>
    %186 = vector.extract_strided_slice %184 {offsets = [0, 0], sizes = [128, 32], strides = [1, 1]} : vector<128x64xf32> to vector<128x32xf32>
    %187 = vector.shape_cast %186 : vector<128x32xf32> to vector<8x16x32xf32>
    %188 = vector.extract_strided_slice %184 {offsets = [0, 32], sizes = [128, 32], strides = [1, 1]} : vector<128x64xf32> to vector<128x32xf32>
    %189 = vector.shape_cast %188 : vector<128x32xf32> to vector<8x16x32xf32>
    %c0_45 = arith.constant 0 : index
    %c0_46 = arith.constant 0 : index
    %190 = vector.load %arg3[%c0_45, %c0_46] : memref<64x16xf32, #tpu.memory_space<vmem>>, vector<64x16xf32>
    %191 = vector.shape_cast %190 : vector<64x16xf32> to vector<8x8x16xf32>
    %192 = vector.extract_strided_slice %185 {offsets = [0, 0, 0], sizes = [8, 8, 8], strides = [1, 1, 1]} : vector<8x8x32xf32> to vector<8x8x8xf32>
    %193 = arith.truncf %192 : vector<8x8x8xf32> to vector<8x8x8xbf16>
    %194 = vector.extract_strided_slice %187 {offsets = [0, 0, 0], sizes = [8, 16, 8], strides = [1, 1, 1]} : vector<8x16x32xf32> to vector<8x16x8xf32>
    %195 = arith.truncf %194 : vector<8x16x8xf32> to vector<8x16x8xbf16>
    %196 = vector.extract_strided_slice %189 {offsets = [0, 0, 0], sizes = [8, 16, 8], strides = [1, 1, 1]} : vector<8x16x32xf32> to vector<8x16x8xf32>
    %197 = arith.truncf %196 : vector<8x16x8xf32> to vector<8x16x8xbf16>
    "tpu.trace_start"() <{level = 10 : i32, message = "btd,bsd->bts"}> : () -> ()
    %cst_47 = arith.constant dense<0.000000e+00> : vector<8x8x16xf32>
    %198 = tpu.matmul %193, %195, %cst_47 {dimension_numbers = #tpu.dot_dimension_numbers<[2], [2], [1], [1], [0, 0, 0, 1, 1, 1], [0], [0]>} : vector<8x8x8xbf16>, vector<8x16x8xbf16>, vector<8x8x16xf32> -> vector<8x8x16xf32>
    "tpu.trace_stop"() : () -> ()
    %199 = arith.addf %198, %191 : vector<8x8x16xf32>
    %cst_48 = arith.constant dense<0xFF800000> : vector<8x8xf32>
    %200 = vector.multi_reduction <maximumf>, %199, %cst_48 [2] : vector<8x8x16xf32> to vector<8x8xf32>
    %201 = vector.shape_cast %200 : vector<8x8xf32> to vector<8x8x1xf32>
    %202 = vector.broadcast %201 : vector<8x8x1xf32> to vector<8x8x16xf32>
    %203 = arith.subf %199, %202 : vector<8x8x16xf32>
    %204 = math.exp %203 : vector<8x8x16xf32>
    %cst_49 = arith.constant dense<0.000000e+00> : vector<8x8xf32>
    %205 = vector.multi_reduction <add>, %204, %cst_49 [2] : vector<8x8x16xf32> to vector<8x8xf32>
    %206 = vector.shape_cast %205 : vector<8x8xf32> to vector<8x8x1xf32>
    %207 = vector.broadcast %206 : vector<8x8x1xf32> to vector<8x8x16xf32>
    %208 = arith.divf %204, %207 : vector<8x8x16xf32>
    %209 = arith.truncf %208 : vector<8x8x16xf32> to vector<8x8x16xbf16>
    "tpu.trace_start"() <{level = 10 : i32, message = "bts,bsd->btd"}> : () -> ()
    %cst_50 = arith.constant dense<0.000000e+00> : vector<8x8x8xf32>
    %210 = tpu.matmul %209, %197, %cst_50 {dimension_numbers = #tpu.dot_dimension_numbers<[2], [1], [1], [2], [0, 0, 0, 1, 1, 2], [0], [0]>} : vector<8x8x16xbf16>, vector<8x16x8xbf16>, vector<8x8x8xf32> -> vector<8x8x8xf32>
    "tpu.trace_stop"() : () -> ()
    %211 = vector.extract_strided_slice %185 {offsets = [0, 0, 8], sizes = [8, 8, 8], strides = [1, 1, 1]} : vector<8x8x32xf32> to vector<8x8x8xf32>
    %212 = arith.truncf %211 : vector<8x8x8xf32> to vector<8x8x8xbf16>
    %213 = vector.extract_strided_slice %187 {offsets = [0, 0, 8], sizes = [8, 16, 8], strides = [1, 1, 1]} : vector<8x16x32xf32> to vector<8x16x8xf32>
    %214 = arith.truncf %213 : vector<8x16x8xf32> to vector<8x16x8xbf16>
    %215 = vector.extract_strided_slice %189 {offsets = [0, 0, 8], sizes = [8, 16, 8], strides = [1, 1, 1]} : vector<8x16x32xf32> to vector<8x16x8xf32>
    %216 = arith.truncf %215 : vector<8x16x8xf32> to vector<8x16x8xbf16>
    "tpu.trace_start"() <{level = 10 : i32, message = "btd,bsd->bts"}> : () -> ()
    %cst_51 = arith.constant dense<0.000000e+00> : vector<8x8x16xf32>
    %217 = tpu.matmul %212, %214, %cst_51 {dimension_numbers = #tpu.dot_dimension_numbers<[2], [2], [1], [1], [0, 0, 0, 1, 1, 1], [0], [0]>} : vector<8x8x8xbf16>, vector<8x16x8xbf16>, vector<8x8x16xf32> -> vector<8x8x16xf32>
    "tpu.trace_stop"() : () -> ()
    %218 = arith.addf %217, %191 : vector<8x8x16xf32>
    %cst_52 = arith.constant dense<0xFF800000> : vector<8x8xf32>
    %219 = vector.multi_reduction <maximumf>, %218, %cst_52 [2] : vector<8x8x16xf32> to vector<8x8xf32>
    %220 = vector.shape_cast %219 : vector<8x8xf32> to vector<8x8x1xf32>
    %221 = vector.broadcast %220 : vector<8x8x1xf32> to vector<8x8x16xf32>
    %222 = arith.subf %218, %221 : vector<8x8x16xf32>
    %223 = math.exp %222 : vector<8x8x16xf32>
    %cst_53 = arith.constant dense<0.000000e+00> : vector<8x8xf32>
    %224 = vector.multi_reduction <add>, %223, %cst_53 [2] : vector<8x8x16xf32> to vector<8x8xf32>
    %225 = vector.shape_cast %224 : vector<8x8xf32> to vector<8x8x1xf32>
    %226 = vector.broadcast %225 : vector<8x8x1xf32> to vector<8x8x16xf32>
    %227 = arith.divf %223, %226 : vector<8x8x16xf32>
    %228 = arith.truncf %227 : vector<8x8x16xf32> to vector<8x8x16xbf16>
    "tpu.trace_start"() <{level = 10 : i32, message = "bts,bsd->btd"}> : () -> ()
    %cst_54 = arith.constant dense<0.000000e+00> : vector<8x8x8xf32>
    %229 = tpu.matmul %228, %216, %cst_54 {dimension_numbers = #tpu.dot_dimension_numbers<[2], [1], [1], [2], [0, 0, 0, 1, 1, 2], [0], [0]>} : vector<8x8x16xbf16>, vector<8x16x8xbf16>, vector<8x8x8xf32> -> vector<8x8x8xf32>
    "tpu.trace_stop"() : () -> ()
    %230 = vector.extract_strided_slice %185 {offsets = [0, 0, 16], sizes = [8, 8, 8], strides = [1, 1, 1]} : vector<8x8x32xf32> to vector<8x8x8xf32>
    %231 = arith.truncf %230 : vector<8x8x8xf32> to vector<8x8x8xbf16>
    %232 = vector.extract_strided_slice %187 {offsets = [0, 0, 16], sizes = [8, 16, 8], strides = [1, 1, 1]} : vector<8x16x32xf32> to vector<8x16x8xf32>
    %233 = arith.truncf %232 : vector<8x16x8xf32> to vector<8x16x8xbf16>
    %234 = vector.extract_strided_slice %189 {offsets = [0, 0, 16], sizes = [8, 16, 8], strides = [1, 1, 1]} : vector<8x16x32xf32> to vector<8x16x8xf32>
    %235 = arith.truncf %234 : vector<8x16x8xf32> to vector<8x16x8xbf16>
    "tpu.trace_start"() <{level = 10 : i32, message = "btd,bsd->bts"}> : () -> ()
    %cst_55 = arith.constant dense<0.000000e+00> : vector<8x8x16xf32>
    %236 = tpu.matmul %231, %233, %cst_55 {dimension_numbers = #tpu.dot_dimension_numbers<[2], [2], [1], [1], [0, 0, 0, 1, 1, 1], [0], [0]>} : vector<8x8x8xbf16>, vector<8x16x8xbf16>, vector<8x8x16xf32> -> vector<8x8x16xf32>
    "tpu.trace_stop"() : () -> ()
    %237 = arith.addf %236, %191 : vector<8x8x16xf32>
    %cst_56 = arith.constant dense<0xFF800000> : vector<8x8xf32>
    %238 = vector.multi_reduction <maximumf>, %237, %cst_56 [2] : vector<8x8x16xf32> to vector<8x8xf32>
    %239 = vector.shape_cast %238 : vector<8x8xf32> to vector<8x8x1xf32>
    %240 = vector.broadcast %239 : vector<8x8x1xf32> to vector<8x8x16xf32>
    %241 = arith.subf %237, %240 : vector<8x8x16xf32>
    %242 = math.exp %241 : vector<8x8x16xf32>
    %cst_57 = arith.constant dense<0.000000e+00> : vector<8x8xf32>
    %243 = vector.multi_reduction <add>, %242, %cst_57 [2] : vector<8x8x16xf32> to vector<8x8xf32>
    %244 = vector.shape_cast %243 : vector<8x8xf32> to vector<8x8x1xf32>
    %245 = vector.broadcast %244 : vector<8x8x1xf32> to vector<8x8x16xf32>
    %246 = arith.divf %242, %245 : vector<8x8x16xf32>
    %247 = arith.truncf %246 : vector<8x8x16xf32> to vector<8x8x16xbf16>
    "tpu.trace_start"() <{level = 10 : i32, message = "bts,bsd->btd"}> : () -> ()
    %cst_58 = arith.constant dense<0.000000e+00> : vector<8x8x8xf32>
    %248 = tpu.matmul %247, %235, %cst_58 {dimension_numbers = #tpu.dot_dimension_numbers<[2], [1], [1], [2], [0, 0, 0, 1, 1, 2], [0], [0]>} : vector<8x8x16xbf16>, vector<8x16x8xbf16>, vector<8x8x8xf32> -> vector<8x8x8xf32>
    "tpu.trace_stop"() : () -> ()
    %249 = vector.extract_strided_slice %185 {offsets = [0, 0, 24], sizes = [8, 8, 8], strides = [1, 1, 1]} : vector<8x8x32xf32> to vector<8x8x8xf32>
    %250 = arith.truncf %249 : vector<8x8x8xf32> to vector<8x8x8xbf16>
    %251 = vector.extract_strided_slice %187 {offsets = [0, 0, 24], sizes = [8, 16, 8], strides = [1, 1, 1]} : vector<8x16x32xf32> to vector<8x16x8xf32>
    %252 = arith.truncf %251 : vector<8x16x8xf32> to vector<8x16x8xbf16>
    %253 = vector.extract_strided_slice %189 {offsets = [0, 0, 24], sizes = [8, 16, 8], strides = [1, 1, 1]} : vector<8x16x32xf32> to vector<8x16x8xf32>
    %254 = arith.truncf %253 : vector<8x16x8xf32> to vector<8x16x8xbf16>
    "tpu.trace_start"() <{level = 10 : i32, message = "btd,bsd->bts"}> : () -> ()
    %cst_59 = arith.constant dense<0.000000e+00> : vector<8x8x16xf32>
    %255 = tpu.matmul %250, %252, %cst_59 {dimension_numbers = #tpu.dot_dimension_numbers<[2], [2], [1], [1], [0, 0, 0, 1, 1, 1], [0], [0]>} : vector<8x8x8xbf16>, vector<8x16x8xbf16>, vector<8x8x16xf32> -> vector<8x8x16xf32>
    "tpu.trace_stop"() : () -> ()
    %256 = arith.addf %255, %191 : vector<8x8x16xf32>
    %cst_60 = arith.constant dense<0xFF800000> : vector<8x8xf32>
    %257 = vector.multi_reduction <maximumf>, %256, %cst_60 [2] : vector<8x8x16xf32> to vector<8x8xf32>
    %258 = vector.shape_cast %257 : vector<8x8xf32> to vector<8x8x1xf32>
    %259 = vector.broadcast %258 : vector<8x8x1xf32> to vector<8x8x16xf32>
    %260 = arith.subf %256, %259 : vector<8x8x16xf32>
    %261 = math.exp %260 : vector<8x8x16xf32>
    %cst_61 = arith.constant dense<0.000000e+00> : vector<8x8xf32>
    %262 = vector.multi_reduction <add>, %261, %cst_61 [2] : vector<8x8x16xf32> to vector<8x8xf32>
    %263 = vector.shape_cast %262 : vector<8x8xf32> to vector<8x8x1xf32>
    %264 = vector.broadcast %263 : vector<8x8x1xf32> to vector<8x8x16xf32>
    %265 = arith.divf %261, %264 : vector<8x8x16xf32>
    %266 = arith.truncf %265 : vector<8x8x16xf32> to vector<8x8x16xbf16>
    "tpu.trace_start"() <{level = 10 : i32, message = "bts,bsd->btd"}> : () -> ()
    %cst_62 = arith.constant dense<0.000000e+00> : vector<8x8x8xf32>
    %267 = tpu.matmul %266, %254, %cst_62 {dimension_numbers = #tpu.dot_dimension_numbers<[2], [1], [1], [2], [0, 0, 0, 1, 1, 2], [0], [0]>} : vector<8x8x16xbf16>, vector<8x16x8xbf16>, vector<8x8x8xf32> -> vector<8x8x8xf32>
    "tpu.trace_stop"() : () -> ()
    %268 = tpu.concatenate %210, %229, %248, %267 in 2 : vector<8x8x8xf32>, vector<8x8x8xf32>, vector<8x8x8xf32>, vector<8x8x8xf32> -> vector<8x8x32xf32>
    %269 = vector.shape_cast %268 : vector<8x8x32xf32> to vector<64x32xf32>
    %270 = arith.truncf %269 : vector<64x32xf32> to vector<64x32xbf16>
    %cst_63 = arith.constant dense<0.000000e+00> : vector<64x32xf32>
    %271 = tpu.matmul %270, %13, %cst_63 {dimension_numbers = #tpu.dot_dimension_numbers<[1], [0], [0], [1], [0, 0, 1, 1], [], []>} : vector<64x32xbf16>, vector<32x32xbf16>, vector<64x32xf32> -> vector<64x32xf32>
    %272 = vector.broadcast %24 : vector<1x32xf32> to vector<64x32xf32>
    %273 = arith.addf %271, %272 : vector<64x32xf32>
    %274 = arith.addf %153, %273 : vector<64x32xf32>
    %275 = vector.shape_cast %208 : vector<8x8x16xf32> to vector<64x16xf32>
    %276 = vector.shape_cast %227 : vector<8x8x16xf32> to vector<64x16xf32>
    %277 = vector.shape_cast %246 : vector<8x8x16xf32> to vector<64x16xf32>
    %278 = vector.shape_cast %265 : vector<8x8x16xf32> to vector<64x16xf32>
    %279 = tpu.concatenate %275, %276, %277, %278 in 1 : vector<64x16xf32>, vector<64x16xf32>, vector<64x16xf32>, vector<64x16xf32> -> vector<64x64xf32>
    %c0_64 = arith.constant 0 : index
    %c0_65 = arith.constant 0 : index
    %280 = vector.load %arg9[%c0_64, %c0_65] : memref<64x64xf32, #tpu.memory_space<vmem>>, vector<64x64xf32>
    tpu.vector_store %arg9[%c0_64, %c0_65], %279 {strides = array<i32>} : memref<64x64xf32, #tpu.memory_space<vmem>>, vector<64x64xf32>,
    %281 = vector.extract_strided_slice %27 {offsets = [0, 64], sizes = [1, 32], strides = [1, 1]} : vector<1x96xf32> to vector<1x32xf32>
    %282 = vector.extract_strided_slice %28 {offsets = [0, 64], sizes = [1, 32], strides = [1, 1]} : vector<1x96xf32> to vector<1x32xf32>
    %cst_66 = arith.constant dense<0.000000e+00> : vector<64xf32>
    %283 = vector.multi_reduction <add>, %274, %cst_66 [1] : vector<64x32xf32> to vector<64xf32>
    %284 = vector.shape_cast %283 : vector<64xf32> to vector<64x1xf32>
    %cst_67 = arith.constant 3.200000e+01 : f32
    %285 = vector.broadcast %cst_67 : f32 to vector<64x1xf32>
    %286 = arith.divf %284, %285 : vector<64x1xf32>
    %287 = vector.broadcast %286 : vector<64x1xf32> to vector<64x32xf32>
    %288 = arith.subf %274, %287 : vector<64x32xf32>
    %289 = arith.mulf %288, %288 : vector<64x32xf32>
    %cst_68 = arith.constant dense<0.000000e+00> : vector<64xf32>
    %290 = vector.multi_reduction <add>, %289, %cst_68 [1] : vector<64x32xf32> to vector<64xf32>
    %291 = vector.shape_cast %290 : vector<64xf32> to vector<64x1xf32>
    %cst_69 = arith.constant 3.200000e+01 : f32
    %292 = vector.broadcast %cst_69 : f32 to vector<64x1xf32>
    %293 = arith.divf %291, %292 : vector<64x1xf32>
    %294 = vector.broadcast %286 : vector<64x1xf32> to vector<64x32xf32>
    %295 = arith.subf %274, %294 : vector<64x32xf32>
    %cst_70 = arith.constant 9.99999974E-6 : f32
    %296 = vector.broadcast %cst_70 : f32 to vector<64x1xf32>
    %297 = arith.addf %293, %296 : vector<64x1xf32>
    %298 = math.rsqrt %297 : vector<64x1xf32>
    %299 = vector.broadcast %298 : vector<64x1xf32> to vector<64x32xf32>
    %300 = arith.mulf %295, %299 : vector<64x32xf32>
    %301 = vector.broadcast %281 : vector<1x32xf32> to vector<64x32xf32>
    %302 = arith.mulf %300, %301 : vector<64x32xf32>
    %303 = vector.broadcast %282 : vector<1x32xf32> to vector<64x32xf32>
    %304 = arith.addf %302, %303 : vector<64x32xf32>
    %305 = arith.truncf %304 : vector<64x32xf32> to vector<64x32xbf16>
    %cst_71 = arith.constant dense<0.000000e+00> : vector<64x64xf32>
    %306 = tpu.matmul %305, %15, %cst_71 {dimension_numbers = #tpu.dot_dimension_numbers<[1], [0], [0], [1], [0, 0, 1, 1], [], []>} : vector<64x32xbf16>, vector<32x64xbf16>, vector<64x64xf32> -> vector<64x64xf32>
    %307 = vector.broadcast %26 : vector<1x64xf32> to vector<64x64xf32>
    %308 = arith.addf %306, %307 : vector<64x64xf32>
    %cst_72 = arith.constant 0.000000e+00 : f32
    %309 = vector.broadcast %cst_72 : f32 to vector<64x64xf32>
    %310 = arith.maximumf %308, %309 : vector<64x64xf32>
    %311 = arith.truncf %310 : vector<64x64xf32> to vector<64x64xbf16>
    %cst_73 = arith.constant dense<0.000000e+00> : vector<64x32xf32>
    %312 = tpu.matmul %311, %17, %cst_73 {dimension_numbers = #tpu.dot_dimension_numbers<[1], [0], [0], [1], [0, 0, 1, 1], [], []>} : vector<64x64xbf16>, vector<64x32xbf16>, vector<64x32xf32> -> vector<64x32xf32>
    %313 = vector.broadcast %25 : vector<1x32xf32> to vector<64x32xf32>
    %314 = arith.addf %312, %313 : vector<64x32xf32>
    %315 = arith.addf %274, %314 : vector<64x32xf32>
    %c0_74 = arith.constant 0 : index
    %c0_75 = arith.constant 0 : index
    %316 = vector.load %arg8[%c0_74, %c0_75] : memref<64x32xf32, #tpu.memory_space<vmem>>, vector<64x32xf32>
    tpu.vector_store %arg8[%c0_74, %c0_75], %315 {strides = array<i32>} : memref<64x32xf32, #tpu.memory_space<vmem>>, vector<64x32xf32>,
    return
  }
  func.func @transform_0(%arg0: i32) -> (i32, i32) {
    %c0_i32 = arith.constant 0 : i32
    %c0_i32_0 = arith.constant 0 : i32
    return %arg0, %c0_i32 : i32, i32
  }
  func.func @transform_1(%arg0: i32) -> (i32, i32) {
    %c0_i32 = arith.constant 0 : i32
    %c0_i32_0 = arith.constant 0 : i32
    return %arg0, %c0_i32 : i32, i32
  }
  func.func @transform_2(%arg0: i32) -> (i32, i32) {
    %c0_i32 = arith.constant 0 : i32
    %c0_i32_0 = arith.constant 0 : i32
    return %arg0, %c0_i32 : i32, i32
  }
  func.func @transform_3(%arg0: i32) -> (i32, i32) {
    %c0_i32 = arith.constant 0 : i32
    %c0_i32_0 = arith.constant 0 : i32
    %c0_i32_1 = arith.constant 0 : i32
    return %c0_i32, %c0_i32_0 : i32, i32
  }
  func.func @transform_4(%arg0: i32) -> (i32, i32) {
    %c0_i32 = arith.constant 0 : i32
    %c0_i32_0 = arith.constant 0 : i32
    %c0_i32_1 = arith.constant 0 : i32
    return %c0_i32, %c0_i32_0 : i32, i32
  }
  func.func @transform_5(%arg0: i32) -> (i32, i32) {
    %c0_i32 = arith.constant 0 : i32
    %c0_i32_0 = arith.constant 0 : i32
    %c0_i32_1 = arith.constant 0 : i32
    return %c0_i32, %c0_i32_0 : i32, i32
  }
  func.func @transform_6(%arg0: i32) -> (i32, i32) {
    %c0_i32 = arith.constant 0 : i32
    %c0_i32_0 = arith.constant 0 : i32
    %c0_i32_1 = arith.constant 0 : i32
    return %c0_i32, %c0_i32_0 : i32, i32
  }
  func.func @transform_7(%arg0: i32) -> (i32, i32) {
    %c0_i32 = arith.constant 0 : i32
    %c0_i32_0 = arith.constant 0 : i32
    return %arg0, %c0_i32 : i32, i32
  }
  func.func @transform_8(%arg0: i32) -> (i32, i32) {
    %c0_i32 = arith.constant 0 : i32
    %c0_i32_0 = arith.constant 0 : i32
    return %arg0, %c0_i32 : i32, i32
  }
}

</mosaic_0001>

<llo_original>
// kernel: tpu_custom_call.1
$region0: #{tpu_custom_call.1}
  #allocation0 [shape = 'u32[]', space=smem, size = 0x4, offset = 0x4, fixed_abs, tag = 'smem constant byte address 0x4 - core index']
  #allocation1 [shape = 'u32[144,128]{1,0:T(1,128)}', space=vmem, size = 0x12000, scoped, tag = 'internal scratch']
  %s0 = inlined_call_operand.vmem [shape: f32[64,32], index: 0, kind: input, shape index: {}]
  %s1 = inlined_call_operand.vmem [shape: f32[128,32], index: 1, kind: input, shape index: {}]
  %s2 = inlined_call_operand.vmem [shape: f32[64,16], index: 2, kind: input, shape index: {}]
  %s3 = inlined_call_operand.vmem [shape: f32[8,8], index: 3, kind: input, shape index: {}]
  %s4 = inlined_call_operand.vmem [shape: f32[32,320], index: 4, kind: input, shape index: {}]
  %s5 = inlined_call_operand.vmem [shape: f32[64,32], index: 5, kind: input, shape index: {}]
  %s6 = inlined_call_operand.vmem [shape: f32[6,96], index: 6, kind: input, shape index: {}]
  %s7 = inlined_call_operand.vmem [shape: f32[64,32], index: 7, kind: output, shape index: {0}]
  %s8 = inlined_call_operand.hbm [shape: f32[64,64], index: 8, kind: output, shape index: {1}]
  %9 = xla_tuple %s7, %s8
  %s10 = sld [smem:[#allocation0]]
  $region46: #{tpu_custom_call.1} parent=0
    _
  %s12 = ssub.s32 1, %s10
  %s13 = scalar_select 0, %s12, %s10
  $region1: #{tpu_custom_call.1} parent=0
    #allocation2 [shape = 'u8[32768]{0}', space=vmem, size = 0x8000, scoped, tag = 'output window, operand 1, single buffered']
    #allocation3 [shape = 's32[1]{0}', space=sflag, size = 0x4, scoped, tag = 'scoped memory for tpu_custom_call.1']
    %14 = vsyncpa [#allocation3], 0
    // Predicated region
    $region2: #{tpu_custom_call.1} parent=1 // pred_check
      _
    $region3: #{tpu_custom_call.1} parent=1 // pred_check_branch
      %16 = sbr.rel (0) target = $region5
    $region4: #{tpu_custom_call.1} parent=1 // pred_region
      _
    $region5: #{tpu_custom_call.1} parent=1 // pred_fallthru
      _
    // Predicated region
    $region6: #{tpu_custom_call.1} parent=1 // pred_check
      _
    $region7: #{tpu_custom_call.1} parent=1 // pred_check_branch
      %18 = sbr.rel (0) target = $region9
    $region8: #{tpu_custom_call.1} parent=1 // pred_region
      _
    $region9: #{tpu_custom_call.1} parent=1 // pred_fallthru
      _
    // Predicated region
    $region10: #{tpu_custom_call.1} parent=1 // pred_check
      _
    $region11: #{tpu_custom_call.1} parent=1 // pred_check_branch
      %20 = sbr.rel (0) target = $region13
    $region12: #{tpu_custom_call.1} parent=1 // pred_region
      _
    $region13: #{tpu_custom_call.1} parent=1 // pred_fallthru
      _
    // Predicated region
    $region14: #{tpu_custom_call.1} parent=1 // pred_check
      _
    $region15: #{tpu_custom_call.1} parent=1 // pred_check_branch
      %22 = sbr.rel (0) target = $region17
    $region16: #{tpu_custom_call.1} parent=1 // pred_region
      _
    $region17: #{tpu_custom_call.1} parent=1 // pred_fallthru
      _
    // Predicated region
    $region18: #{tpu_custom_call.1} parent=1 // pred_check
      _
    $region19: #{tpu_custom_call.1} parent=1 // pred_check_branch
      %24 = sbr.rel (0) target = $region21
    $region20: #{tpu_custom_call.1} parent=1 // pred_region
      _
    $region21: #{tpu_custom_call.1} parent=1 // pred_fallthru
      _
    // Predicated region
    $region22: #{tpu_custom_call.1} parent=1 // pred_check
      _
    $region23: #{tpu_custom_call.1} parent=1 // pred_check_branch
      %26 = sbr.rel (0) target = $region25
    $region24: #{tpu_custom_call.1} parent=1 // pred_region
      _
    $region25: #{tpu_custom_call.1} parent=1 // pred_fallthru
      _
    // Predicated region
    $region26: #{tpu_custom_call.1} parent=1 // pred_check
      _
    $region27: #{tpu_custom_call.1} parent=1 // pred_check_branch
      %28 = sbr.rel (0) target = $region29
    $region28: #{tpu_custom_call.1} parent=1 // pred_region
      _
    $region29: #{tpu_custom_call.1} parent=1 // pred_fallthru
      _
    %v30 = vld [vmem:[%s0] sm:$0xff]
    %v31 = vld [vmem:[%s0 + $0x8] sm:$0xff]
    %v32 = vld [vmem:[%s0 + $0x10] sm:$0xff]
    %v33 = vld [vmem:[%s0 + $0x18] sm:$0xff]
    %v34 = vld [vmem:[%s0 + $0x20] sm:$0xff]
    %v35 = vld [vmem:[%s0 + $0x28] sm:$0xff]
    %v36 = vld [vmem:[%s0 + $0x30] sm:$0xff]
    %v37 = vld [vmem:[%s0 + $0x38] sm:$0xff]
    %v38 = vld [vmem:[%s1] sm:$0xff]
    %v39 = vld [vmem:[%s1 + $0x8] sm:$0xff]
    %v40 = vld [vmem:[%s1 + $0x10] sm:$0xff]
    %v41 = vld [vmem:[%s1 + $0x18] sm:$0xff]
    %v42 = vld [vmem:[%s1 + $0x20] sm:$0xff]
    %v43 = vld [vmem:[%s1 + $0x28] sm:$0xff]
    %v44 = vld [vmem:[%s1 + $0x30] sm:$0xff]
    %v45 = vld [vmem:[%s1 + $0x38] sm:$0xff]
    %v46 = vld [vmem:[%s1 + $0x40] sm:$0xff]
    %v47 = vld [vmem:[%s1 + $0x48] sm:$0xff]
    %v48 = vld [vmem:[%s1 + $0x50] sm:$0xff]
    %v49 = vld [vmem:[%s1 + $0x58] sm:$0xff]
    %v50 = vld [vmem:[%s1 + $0x60] sm:$0xff]
    %v51 = vld [vmem:[%s1 + $0x68] sm:$0xff]
    %v52 = vld [vmem:[%s1 + $0x70] sm:$0xff]
    %v53 = vld [vmem:[%s1 + $0x78] sm:$0xff]
    %v54 = vpack.c.bf16 %v39, %v38
    %v55 = vpack.c.bf16 %v41, %v40
    %v56 = vpack.c.bf16 %v43, %v42
    %v57 = vpack.c.bf16 %v45, %v44
    %v58 = vpack.c.bf16 %v47, %v46
    %v59 = vpack.c.bf16 %v49, %v48
    %v60 = vpack.c.bf16 %v51, %v50
    %v61 = vpack.c.bf16 %v53, %v52
    %v62 = vld [vmem:[%s4] sm:$0xff]
    %v63 = vld [vmem:[%s4 + $0x8] sm:$0xff]
    %v64 = vld [vmem:[%s4 + $0x10] sm:$0xff]
    %v65 = vld [vmem:[%s4 + $0x18] sm:$0xff]
    %v66 = vld [vmem:[%s4 + $0x20] sm:$0xff]
    %v67 = vld [vmem:[%s4 + $0x28] sm:$0xff]
    %v68 = vld [vmem:[%s4 + $0x30] sm:$0xff]
    %v69 = vld [vmem:[%s4 + $0x38] sm:$0xff]
    %v70 = vld [vmem:[%s4 + $0x40] sm:$0xff]
    %v71 = vld [vmem:[%s4 + $0x48] sm:$0xff]
    %v72 = vld [vmem:[%s4 + $0x50] sm:$0xff]
    %v73 = vld [vmem:[%s4 + $0x58] sm:$0xff]
    %v74 = vpack.c.bf16 %v65, %v62
    %v75 = vpack.c.bf16 %v71, %v68
    %v76 = vpack.c.bf16 %v66, %v63
    %v77 = vpack.c.bf16 %v72, %v69
    %v78 = vpack.c.bf16 %v67, %v64
    %v79 = vpack.c.bf16 %v73, %v70
    %v80 = vld [vmem:[%s5] sm:$0xff]
    %v81 = vld [vmem:[%s5 + $0x8] sm:$0xff]
    %v82 = vld [vmem:[%s5 + $0x10] sm:$0xff]
    %v83 = vld [vmem:[%s5 + $0x18] sm:$0xff]
    %v84 = vld [vmem:[%s5 + $0x20] sm:$0xff]
    %v85 = vld [vmem:[%s5 + $0x28] sm:$0xff]
    %v86 = vld [vmem:[%s5 + $0x30] sm:$0xff]
    %v87 = vld [vmem:[%s5 + $0x38] sm:$0xff]
    %v88 = vpack.c.bf16 %v81, %v80
    %v89 = vpack.c.bf16 %v83, %v82
    %v90 = vpack.c.bf16 %v85, %v84
    %v91 = vpack.c.bf16 %v87, %v86
    %v92 = vld [vmem:[%s6] sm:$0x1]
    %v93 = vld [vmem:[%s6 + $0x1] sm:$0x1]
    %v94 = vld [vmem:[%s6 + $0x2] sm:$0x1]
    %v95 = vld [vmem:[%s6 + $0x3] sm:$0x1]
    %v96 = vld [vmem:[%s6 + $0x4] sm:$0x1]
    %v97 = vld [vmem:[%s6 + $0x5] sm:$0x1]
    %vm98 = vcmask 261120
    %v99 = vsel %vm98, %v30, 0.0
    %100 = vadd.xlane.f32.xlu0 %v99
    %v101 = vpop.xlane.xlu0 %100
    %v102 = vsel %vm98, %v31, 0.0
    %103 = vadd.xlane.f32.xlu0 %v102
    %v104 = vpop.xlane.xlu0 %103
    %v105 = vsel %vm98, %v32, 0.0
    %106 = vadd.xlane.f32.xlu0 %v105
    %v107 = vpop.xlane.xlu0 %106
    %v108 = vsel %vm98, %v33, 0.0
    %109 = vadd.xlane.f32.xlu0 %v108
    %v110 = vpop.xlane.xlu0 %109
    %v111 = vsel %vm98, %v34, 0.0
    %112 = vadd.xlane.f32.xlu0 %v111
    %v113 = vpop.xlane.xlu0 %112
    %v114 = vsel %vm98, %v35, 0.0
    %115 = vadd.xlane.f32.xlu0 %v114
    %v116 = vpop.xlane.xlu0 %115
    %v117 = vsel %vm98, %v36, 0.0
    %118 = vadd.xlane.f32.xlu0 %v117
    %v119 = vpop.xlane.xlu0 %118
    %v120 = vsel %vm98, %v37, 0.0
    %121 = vadd.xlane.f32.xlu0 %v120
    %v122 = vpop.xlane.xlu0 %121
    %v123 = vrcp.pop 32.0
    %v124 = vmul.f32 %v101, %v123
    %v125 = vmul.f32 %v104, %v123
    %v126 = vmul.f32 %v107, %v123
    %v127 = vmul.f32 %v110, %v123
    %v128 = vmul.f32 %v113, %v123
    %v129 = vmul.f32 %v116, %v123
    %v130 = vmul.f32 %v119, %v123
    %v131 = vmul.f32 %v122, %v123
    %v132 = vsub.f32 %v30, %v124
    %v133 = vsub.f32 %v31, %v125
    %v134 = vsub.f32 %v32, %v126
    %v135 = vsub.f32 %v33, %v127
    %v136 = vsub.f32 %v34, %v128
    %v137 = vsub.f32 %v35, %v129
    %v138 = vsub.f32 %v36, %v130
    %v139 = vsub.f32 %v37, %v131
    %v140 = vmul.f32 %v132, %v132
    %v141 = vmul.f32 %v133, %v133
    %v142 = vmul.f32 %v134, %v134
    %v143 = vmul.f32 %v135, %v135
    %v144 = vmul.f32 %v136, %v136
    %v145 = vmul.f32 %v137, %v137
    %v146 = vmul.f32 %v138, %v138
    %v147 = vmul.f32 %v139, %v139
    %v148 = vsel %vm98, %v140, 0.0
    %149 = vadd.xlane.f32.xlu0 %v148
    %v150 = vpop.xlane.xlu0 %149
    %v151 = vsel %vm98, %v141, 0.0
    %152 = vadd.xlane.f32.xlu0 %v151
    %v153 = vpop.xlane.xlu0 %152
    %v154 = vsel %vm98, %v142, 0.0
    %155 = vadd.xlane.f32.xlu0 %v154
    %v156 = vpop.xlane.xlu0 %155
    %v157 = vsel %vm98, %v143, 0.0
    %158 = vadd.xlane.f32.xlu0 %v157
    %v159 = vpop.xlane.xlu0 %158
    %v160 = vsel %vm98, %v144, 0.0
    %161 = vadd.xlane.f32.xlu0 %v160
    %v162 = vpop.xlane.xlu0 %161
    %v163 = vsel %vm98, %v145, 0.0
    %164 = vadd.xlane.f32.xlu0 %v163
    %v165 = vpop.xlane.xlu0 %164
    %v166 = vsel %vm98, %v146, 0.0
    %167 = vadd.xlane.f32.xlu0 %v166
    %v168 = vpop.xlane.xlu0 %167
    %v169 = vsel %vm98, %v147, 0.0
    %170 = vadd.xlane.f32.xlu0 %v169
    %v171 = vpop.xlane.xlu0 %170
    %v172 = vmul.f32 %v150, %v123
    %v173 = vmul.f32 %v153, %v123
    %v174 = vmul.f32 %v156, %v123
    %v175 = vmul.f32 %v159, %v123
    %v176 = vmul.f32 %v162, %v123
    %v177 = vmul.f32 %v165, %v123
    %v178 = vmul.f32 %v168, %v123
    %v179 = vmul.f32 %v171, %v123
    %v180 = vadd.f32 %v172, 1e-05
    %v181 = vadd.f32 %v173, 1e-05
    %v182 = vadd.f32 %v174, 1e-05
    %v183 = vadd.f32 %v175, 1e-05
    %v184 = vadd.f32 %v176, 1e-05
    %v185 = vadd.f32 %v177, 1e-05
    %v186 = vadd.f32 %v178, 1e-05
    %v187 = vadd.f32 %v179, 1e-05
    %v188 = vrsqrt.pop %v180
    %v189 = vrsqrt.pop %v181
    %v190 = vrsqrt.pop %v182
    %v191 = vrsqrt.pop %v183
    %v192 = vrsqrt.pop %v184
    %v193 = vrsqrt.pop %v185
    %v194 = vrsqrt.pop %v186
    %v195 = vrsqrt.pop %v187
    %v196 = vmul.f32 %v132, %v188
    %v197 = vmul.f32 %v133, %v189
    %v198 = vmul.f32 %v134, %v190
    %v199 = vmul.f32 %v135, %v191
    %v200 = vmul.f32 %v136, %v192
    %v201 = vmul.f32 %v137, %v193
    %v202 = vmul.f32 %v138, %v194
    %v203 = vmul.f32 %v139, %v195
    %v204 = vlaneseq
    %v205 = vshrl.u32 %v204, 7
    %v206 = vsub.s32 0, %v205
    %v207 = vrot.slane %v96, %v206
    %v208 = vmul.f32 %v196, %v207
    %v209 = vmul.f32 %v197, %v207
    %v210 = vmul.f32 %v198, %v207
    %v211 = vmul.f32 %v199, %v207
    %v212 = vmul.f32 %v200, %v207
    %v213 = vmul.f32 %v201, %v207
    %v214 = vmul.f32 %v202, %v207
    %v215 = vmul.f32 %v203, %v207
    %v216 = vlaneseq
    %v217 = vshrl.u32 %v216, 7
    %v218 = vsub.s32 0, %v217
    %v219 = vrot.slane %v97, %v218
    %v220 = vadd.f32 %v208, %v219
    %v221 = vadd.f32 %v209, %v219
    %v222 = vadd.f32 %v210, %v219
    %v223 = vadd.f32 %v211, %v219
    %v224 = vadd.f32 %v212, %v219
    %v225 = vadd.f32 %v213, %v219
    %v226 = vadd.f32 %v214, %v219
    %v227 = vadd.f32 %v215, %v219
    %v228 = vpack.c.bf16 %v221, %v220
    %v229 = vpack.c.bf16 %v223, %v222
    %v230 = vpack.c.bf16 %v225, %v224
    %v231 = vpack.c.bf16 %v227, %v226
    %v232 = vlaneseq
    %v233 = vshrl.u32 %v232, 7
    %v234 = vsub.s32 0, %v233
    %v235 = vrot.slane %v92, %v234
    %v237 = vsel %vm98, %v228, 0
    %v240 = vsel %vm98, %v229, 0
    %v243 = vsel %vm98, %v230, 0
    %v246 = vsel %vm98, %v231, 0
    %248 = vmatprep.subr.bf16.mxu0 0
    %249 = vmatpush1.bf16.msra.mxu0 %v74
    %250 = vmatprep.subr.bf16.mxu0 0
    %251 = vmatpush1.bf16.msra.mxu0 %v75
    %252 = vmatprep.subr.bf16.mxu0 0
    %253 = vmatpush1.bf16.msra.mxu0 0
    %254 = vmatprep.subr.bf16.mxu0 0
    %255 = vmatpush1.bf16.msra.mxu0 0
    %256 = vmatprep.subr.bf16.mxu0 0
    %257 = vmatpush1.bf16.msra.mxu0 0
    %258 = vmatprep.subr.bf16.mxu0 0
    %259 = vmatpush1.bf16.msra.mxu0 0
    %260 = vmatprep.subr.bf16.mxu0 0
    %261 = vmatpush1.bf16.msra.mxu0 0
    %262 = vmatprep.subr.bf16.mxu0 0
    %263 = vmatpush1.bf16.msra.mxu0 0
    %264 = vmatprep.subr.bf16.mxu0 0
    %265 = vmatpush1.bf16.msra.mxu0 0
    %266 = vmatprep.subr.bf16.mxu0 0
    %267 = vmatpush1.bf16.msra.mxu0 0
    %268 = vmatprep.subr.bf16.mxu0 0
    %269 = vmatpush1.bf16.msra.mxu0 0
    %270 = vmatprep.subr.bf16.mxu0 0
    %271 = vmatpush1.bf16.msra.mxu0 0
    %272 = vmatprep.subr.bf16.mxu0 0
    %273 = vmatpush1.bf16.msra.mxu0 0
    %274 = vmatprep.subr.bf16.mxu0 0
    %275 = vmatpush1.bf16.msra.mxu0 0
    %276 = vmatprep.subr.bf16.mxu0 0
    %277 = vmatpush1.bf16.msra.mxu0 0
    %278 = vmatprep.subr.bf16.mxu0 0
    %279 = vmatpush1.bf16.msra.mxu0 0
    %280 = vmatprep.mubr.bf16.mxu0 0
    %281 = vmatmul.mubr.bf16.gmra.mrb[0].mxu0 %v237
    %v282 = vpop.f32.mrb[0].mxu0
    %v283 = vadd.f32 %v235, %v282
    %v284 = vpop.f32.mrb[0].mxu0
    %v285 = vpop.f32.mrb[0].mxu0
    %v286 = vadd.f32 %v235, %v285
    %v287 = vpop.f32.mrb[0].mxu0
    %288 = vmatprep.mubr.bf16.mxu0 0
    %289 = vmatmul.mubr.bf16.gmra.mrb[0].mxu0 %v240
    %v290 = vpop.f32.mrb[0].mxu0
    %v291 = vadd.f32 %v235, %v290
    %v292 = vpop.f32.mrb[0].mxu0
    %v293 = vpop.f32.mrb[0].mxu0
    %v294 = vadd.f32 %v235, %v293
    %v295 = vpop.f32.mrb[0].mxu0
    %296 = vmatprep.mubr.bf16.mxu0 0
    %297 = vmatmul.mubr.bf16.gmra.mrb[0].mxu0 %v243
    %v298 = vpop.f32.mrb[0].mxu0
    %v299 = vadd.f32 %v235, %v298
    %v300 = vpop.f32.mrb[0].mxu0
    %v301 = vpop.f32.mrb[0].mxu0
    %v302 = vadd.f32 %v235, %v301
    %v303 = vpop.f32.mrb[0].mxu0
    %304 = vmatprep.mubr.bf16.mxu0 0
    %305 = vmatmul.mubr.bf16.gmra.mrb[0].mxu0 %v246
    %v306 = vpop.f32.mrb[0].mxu0
    %v307 = vadd.f32 %v235, %v306
    %v308 = vpop.f32.mrb[0].mxu0
    %v309 = vpop.f32.mrb[0].mxu0
    %v310 = vadd.f32 %v235, %v309
    %v311 = vpop.f32.mrb[0].mxu0
    %312 = vdwg.mxu0
    %v313 = vld [vmem:[%s3] sm:$0xff]
    %v314 = vpack.c.bf16 %v283, %v283
    %v315 = vpack.c.bf16 %v286, %v286
    %v316 = vpack.c.bf16 %v291, %v291
    %v317 = vpack.c.bf16 %v294, %v294
    %v318 = vpack.c.bf16 %v299, %v299
    %v319 = vpack.c.bf16 %v302, %v302
    %v320 = vpack.c.bf16 %v307, %v307
    %v321 = vpack.c.bf16 %v310, %v310
    %323 = vrot.lane.b32.xlu0 %v314, 96
    %v324 = vpop.permute.xlu0 %323
    %vm325 = vcmask 64512
    %v327 = vsel %vm325, %v314, 0
    %v330 = vsel %vm325, %v324, 0
    %332 = vmatprep.subr.bf16.mxu0 0
    %333 = vmatpush1.bf16.xpose.msra.mxu0 %v330
    %334 = vmatprep.subr.bf16.mxu0 0
    %335 = vmatpush1.bf16.xpose.msra.mxu0 0
    %336 = vmatprep.subr.bf16.mxu0 0
    %337 = vmatpush1.bf16.xpose.msra.mxu0 0
    %338 = vmatprep.subr.bf16.mxu0 0
    %339 = vmatpush1.bf16.xpose.msra.mxu0 0
    %340 = vmatprep.subr.bf16.mxu0 0
    %341 = vmatpush1.bf16.xpose.msra.mxu0 0
    %342 = vmatprep.subr.bf16.mxu0 0
    %343 = vmatpush1.bf16.xpose.msra.mxu0 0
    %344 = vmatprep.subr.bf16.mxu0 0
    %345 = vmatpush1.bf16.xpose.msra.mxu0 0
    %346 = vmatprep.subr.bf16.mxu0 0
    %347 = vmatpush1.bf16.xpose.msra.mxu0 0
    %348 = vmatprep.subr.bf16.mxu0 0
    %349 = vmatpush1.bf16.xpose.msra.mxu0 0
    %350 = vmatprep.subr.bf16.mxu0 0
    %351 = vmatpush1.bf16.xpose.msra.mxu0 0
    %352 = vmatprep.subr.bf16.mxu0 0
    %353 = vmatpush1.bf16.xpose.msra.mxu0 0
    %354 = vmatprep.subr.bf16.mxu0 0
    %355 = vmatpush1.bf16.xpose.msra.mxu0 0
    %356 = vmatprep.subr.bf16.mxu0 0
    %357 = vmatpush1.bf16.xpose.msra.mxu0 0
    %358 = vmatprep.subr.bf16.mxu0 0
    %359 = vmatpush1.bf16.xpose.msra.mxu0 0
    %360 = vmatprep.subr.bf16.mxu0 0
    %361 = vmatpush1.bf16.xpose.msra.mxu0 0
    %362 = vmatprep.subr.bf16.mxu0 0
    %363 = vmatpush1.bf16.xpose.msra.mxu0 0
    %364 = vmatprep.mubr.bf16.mxu0 0
    %365 = vmatmul.mubr.bf16.gmra.mrb[0].mxu0 %v327
    %v366 = vpop.f32.mrb[0].mxu0
    %v367 = vadd.f32 %v313, %v366
    %v368 = vpop.f32.mrb[0].mxu0
    %v369 = vpop.f32.mrb[0].mxu0
    %v370 = vpop.f32.mrb[0].mxu0
    %371 = vdwg.mxu0
    %373 = vrot.lane.b32.xlu0 %v315, 96
    %v374 = vpop.permute.xlu0 %373
    %v376 = vsel %vm325, %v315, 0
    %v379 = vsel %vm325, %v374, 0
    %381 = vmatprep.subr.bf16.mxu0 0
    %382 = vmatpush1.bf16.xpose.msra.mxu0 %v379
    %383 = vmatprep.subr.bf16.mxu0 0
    %384 = vmatpush1.bf16.xpose.msra.mxu0 0
    %385 = vmatprep.subr.bf16.mxu0 0
    %386 = vmatpush1.bf16.xpose.msra.mxu0 0
    %387 = vmatprep.subr.bf16.mxu0 0
    %388 = vmatpush1.bf16.xpose.msra.mxu0 0
    %389 = vmatprep.subr.bf16.mxu0 0
    %390 = vmatpush1.bf16.xpose.msra.mxu0 0
    %391 = vmatprep.subr.bf16.mxu0 0
    %392 = vmatpush1.bf16.xpose.msra.mxu0 0
    %393 = vmatprep.subr.bf16.mxu0 0
    %394 = vmatpush1.bf16.xpose.msra.mxu0 0
    %395 = vmatprep.subr.bf16.mxu0 0
    %396 = vmatpush1.bf16.xpose.msra.mxu0 0
    %397 = vmatprep.subr.bf16.mxu0 0
    %398 = vmatpush1.bf16.xpose.msra.mxu0 0
    %399 = vmatprep.subr.bf16.mxu0 0
    %400 = vmatpush1.bf16.xpose.msra.mxu0 0
    %401 = vmatprep.subr.bf16.mxu0 0
    %402 = vmatpush1.bf16.xpose.msra.mxu0 0
    %403 = vmatprep.subr.bf16.mxu0 0
    %404 = vmatpush1.bf16.xpose.msra.mxu0 0
    %405 = vmatprep.subr.bf16.mxu0 0
    %406 = vmatpush1.bf16.xpose.msra.mxu0 0
    %407 = vmatprep.subr.bf16.mxu0 0
    %408 = vmatpush1.bf16.xpose.msra.mxu0 0
    %409 = vmatprep.subr.bf16.mxu0 0
    %410 = vmatpush1.bf16.xpose.msra.mxu0 0
    %411 = vmatprep.subr.bf16.mxu0 0
    %412 = vmatpush1.bf16.xpose.msra.mxu0 0
    %413 = vmatprep.mubr.bf16.mxu0 0
    %414 = vmatmul.mubr.bf16.gmra.mrb[0].mxu0 %v376
    %v415 = vpop.f32.mrb[0].mxu0
    %v416 = vadd.f32 %v313, %v415
    %v417 = vpop.f32.mrb[0].mxu0
    %v418 = vpop.f32.mrb[0].mxu0
    %v419 = vpop.f32.mrb[0].mxu0
    %420 = vdwg.mxu0
    %422 = vrot.lane.b32.xlu0 %v316, 96
    %v423 = vpop.permute.xlu0 %422
    %v425 = vsel %vm325, %v316, 0
    %v428 = vsel %vm325, %v423, 0
    %430 = vmatprep.subr.bf16.mxu0 0
    %431 = vmatpush1.bf16.xpose.msra.mxu0 %v428
    %432 = vmatprep.subr.bf16.mxu0 0
    %433 = vmatpush1.bf16.xpose.msra.mxu0 0
    %434 = vmatprep.subr.bf16.mxu0 0
    %435 = vmatpush1.bf16.xpose.msra.mxu0 0
    %436 = vmatprep.subr.bf16.mxu0 0
    %437 = vmatpush1.bf16.xpose.msra.mxu0 0
    %438 = vmatprep.subr.bf16.mxu0 0
    %439 = vmatpush1.bf16.xpose.msra.mxu0 0
    %440 = vmatprep.subr.bf16.mxu0 0
    %441 = vmatpush1.bf16.xpose.msra.mxu0 0
    %442 = vmatprep.subr.bf16.mxu0 0
    %443 = vmatpush1.bf16.xpose.msra.mxu0 0
    %444 = vmatprep.subr.bf16.mxu0 0
    %445 = vmatpush1.bf16.xpose.msra.mxu0 0
    %446 = vmatprep.subr.bf16.mxu0 0
    %447 = vmatpush1.bf16.xpose.msra.mxu0 0
    %448 = vmatprep.subr.bf16.mxu0 0
    %449 = vmatpush1.bf16.xpose.msra.mxu0 0
    %450 = vmatprep.subr.bf16.mxu0 0
    %451 = vmatpush1.bf16.xpose.msra.mxu0 0
    %452 = vmatprep.subr.bf16.mxu0 0
    %453 = vmatpush1.bf16.xpose.msra.mxu0 0
    %454 = vmatprep.subr.bf16.mxu0 0
    %455 = vmatpush1.bf16.xpose.msra.mxu0 0
    %456 = vmatprep.subr.bf16.mxu0 0
    %457 = vmatpush1.bf16.xpose.msra.mxu0 0
    %458 = vmatprep.subr.bf16.mxu0 0
    %459 = vmatpush1.bf16.xpose.msra.mxu0 0
    %460 = vmatprep.subr.bf16.mxu0 0
    %461 = vmatpush1.bf16.xpose.msra.mxu0 0
    %462 = vmatprep.mubr.bf16.mxu0 0
    %463 = vmatmul.mubr.bf16.gmra.mrb[0].mxu0 %v425
    %v464 = vpop.f32.mrb[0].mxu0
    %v465 = vadd.f32 %v313, %v464
    %v466 = vpop.f32.mrb[0].mxu0
    %v467 = vpop.f32.mrb[0].mxu0
    %v468 = vpop.f32.mrb[0].mxu0
    %469 = vdwg.mxu0
    %471 = vrot.lane.b32.xlu0 %v317, 96
    %v472 = vpop.permute.xlu0 %471
    %v474 = vsel %vm325, %v317, 0
    %v477 = vsel %vm325, %v472, 0
    %479 = vmatprep.subr.bf16.mxu0 0
    %480 = vmatpush1.bf16.xpose.msra.mxu0 %v477
    %481 = vmatprep.subr.bf16.mxu0 0
    %482 = vmatpush1.bf16.xpose.msra.mxu0 0
    %483 = vmatprep.subr.bf16.mxu0 0
    %484 = vmatpush1.bf16.xpose.msra.mxu0 0
    %485 = vmatprep.subr.bf16.mxu0 0
    %486 = vmatpush1.bf16.xpose.msra.mxu0 0
    %487 = vmatprep.subr.bf16.mxu0 0
    %488 = vmatpush1.bf16.xpose.msra.mxu0 0
    %489 = vmatprep.subr.bf16.mxu0 0
    %490 = vmatpush1.bf16.xpose.msra.mxu0 0
    %491 = vmatprep.subr.bf16.mxu0 0
    %492 = vmatpush1.bf16.xpose.msra.mxu0 0
    %493 = vmatprep.subr.bf16.mxu0 0
    %494 = vmatpush1.bf16.xpose.msra.mxu0 0
    %495 = vmatprep.subr.bf16.mxu0 0
    %496 = vmatpush1.bf16.xpose.msra.mxu0 0
    %497 = vmatprep.subr.bf16.mxu0 0
    %498 = vmatpush1.bf16.xpose.msra.mxu0 0
    %499 = vmatprep.subr.bf16.mxu0 0
    %500 = vmatpush1.bf16.xpose.msra.mxu0 0
    %501 = vmatprep.subr.bf16.mxu0 0
    %502 = vmatpush1.bf16.xpose.msra.mxu0 0
    %503 = vmatprep.subr.bf16.mxu0 0
    %504 = vmatpush1.bf16.xpose.msra.mxu0 0
    %505 = vmatprep.subr.bf16.mxu0 0
    %506 = vmatpush1.bf16.xpose.msra.mxu0 0
    %507 = vmatprep.subr.bf16.mxu0 0
    %508 = vmatpush1.bf16.xpose.msra.mxu0 0
    %509 = vmatprep.subr.bf16.mxu0 0
    %510 = vmatpush1.bf16.xpose.msra.mxu0 0
    %511 = vmatprep.mubr.bf16.mxu0 0
    %512 = vmatmul.mubr.bf16.gmra.mrb[0].mxu0 %v474
    %v513 = vpop.f32.mrb[0].mxu0
    %v514 = vadd.f32 %v313, %v513
    %v515 = vpop.f32.mrb[0].mxu0
    %v516 = vpop.f32.mrb[0].mxu0
    %v517 = vpop.f32.mrb[0].mxu0
    %518 = vdwg.mxu0
    %520 = vrot.lane.b32.xlu0 %v318, 96
    %v521 = vpop.permute.xlu0 %520
    %v523 = vsel %vm325, %v318, 0
    %v526 = vsel %vm325, %v521, 0
    %528 = vmatprep.subr.bf16.mxu0 0
    %529 = vmatpush1.bf16.xpose.msra.mxu0 %v526
    %530 = vmatprep.subr.bf16.mxu0 0
    %531 = vmatpush1.bf16.xpose.msra.mxu0 0
    %532 = vmatprep.subr.bf16.mxu0 0
    %533 = vmatpush1.bf16.xpose.msra.mxu0 0
    %534 = vmatprep.subr.bf16.mxu0 0
    %535 = vmatpush1.bf16.xpose.msra.mxu0 0
    %536 = vmatprep.subr.bf16.mxu0 0
    %537 = vmatpush1.bf16.xpose.msra.mxu0 0
    %538 = vmatprep.subr.bf16.mxu0 0
    %539 = vmatpush1.bf16.xpose.msra.mxu0 0
    %540 = vmatprep.subr.bf16.mxu0 0
    %541 = vmatpush1.bf16.xpose.msra.mxu0 0
    %542 = vmatprep.subr.bf16.mxu0 0
    %543 = vmatpush1.bf16.xpose.msra.mxu0 0
    %544 = vmatprep.subr.bf16.mxu0 0
    %545 = vmatpush1.bf16.xpose.msra.mxu0 0
    %546 = vmatprep.subr.bf16.mxu0 0
    %547 = vmatpush1.bf16.xpose.msra.mxu0 0
    %548 = vmatprep.subr.bf16.mxu0 0
    %549 = vmatpush1.bf16.xpose.msra.mxu0 0
    %550 = vmatprep.subr.bf16.mxu0 0
    %551 = vmatpush1.bf16.xpose.msra.mxu0 0
    %552 = vmatprep.subr.bf16.mxu0 0
    %553 = vmatpush1.bf16.xpose.msra.mxu0 0
    %554 = vmatprep.subr.bf16.mxu0 0
    %555 = vmatpush1.bf16.xpose.msra.mxu0 0
    %556 = vmatprep.subr.bf16.mxu0 0
    %557 = vmatpush1.bf16.xpose.msra.mxu0 0
    %558 = vmatprep.subr.bf16.mxu0 0
    %559 = vmatpush1.bf16.xpose.msra.mxu0 0
    %560 = vmatprep.mubr.bf16.mxu0 0
    %561 = vmatmul.mubr.bf16.gmra.mrb[0].mxu0 %v523
    %v562 = vpop.f32.mrb[0].mxu0
    %v563 = vadd.f32 %v313, %v562
    %v564 = vpop.f32.mrb[0].mxu0
    %v565 = vpop.f32.mrb[0].mxu0
    %v566 = vpop.f32.mrb[0].mxu0
    %567 = vdwg.mxu0
    %569 = vrot.lane.b32.xlu0 %v319, 96
    %v570 = vpop.permute.xlu0 %569
    %v572 = vsel %vm325, %v319, 0
    %v575 = vsel %vm325, %v570, 0
    %577 = vmatprep.subr.bf16.mxu0 0
    %578 = vmatpush1.bf16.xpose.msra.mxu0 %v575
    %579 = vmatprep.subr.bf16.mxu0 0
    %580 = vmatpush1.bf16.xpose.msra.mxu0 0
    %581 = vmatprep.subr.bf16.mxu0 0
    %582 = vmatpush1.bf16.xpose.msra.mxu0 0
    %583 = vmatprep.subr.bf16.mxu0 0
    %584 = vmatpush1.bf16.xpose.msra.mxu0 0
    %585 = vmatprep.subr.bf16.mxu0 0
    %586 = vmatpush1.bf16.xpose.msra.mxu0 0
    %587 = vmatprep.subr.bf16.mxu0 0
    %588 = vmatpush1.bf16.xpose.msra.mxu0 0
    %589 = vmatprep.subr.bf16.mxu0 0
    %590 = vmatpush1.bf16.xpose.msra.mxu0 0
    %591 = vmatprep.subr.bf16.mxu0 0
    %592 = vmatpush1.bf16.xpose.msra.mxu0 0
    %593 = vmatprep.subr.bf16.mxu0 0
    %594 = vmatpush1.bf16.xpose.msra.mxu0 0
    %595 = vmatprep.subr.bf16.mxu0 0
    %596 = vmatpush1.bf16.xpose.msra.mxu0 0
    %597 = vmatprep.subr.bf16.mxu0 0
    %598 = vmatpush1.bf16.xpose.msra.mxu0 0
    %599 = vmatprep.subr.bf16.mxu0 0
    %600 = vmatpush1.bf16.xpose.msra.mxu0 0
    %601 = vmatprep.subr.bf16.mxu0 0
    %602 = vmatpush1.bf16.xpose.msra.mxu0 0
    %603 = vmatprep.subr.bf16.mxu0 0
    %604 = vmatpush1.bf16.xpose.msra.mxu0 0
    %605 = vmatprep.subr.bf16.mxu0 0
    %606 = vmatpush1.bf16.xpose.msra.mxu0 0
    %607 = vmatprep.subr.bf16.mxu0 0
    %608 = vmatpush1.bf16.xpose.msra.mxu0 0
    %609 = vmatprep.mubr.bf16.mxu0 0
    %610 = vmatmul.mubr.bf16.gmra.mrb[0].mxu0 %v572
    %v611 = vpop.f32.mrb[0].mxu0
    %v612 = vadd.f32 %v313, %v611
    %v613 = vpop.f32.mrb[0].mxu0
    %v614 = vpop.f32.mrb[0].mxu0
    %v615 = vpop.f32.mrb[0].mxu0
    %616 = vdwg.mxu0
    %618 = vrot.lane.b32.xlu0 %v320, 96
    %v619 = vpop.permute.xlu0 %618
    %v621 = vsel %vm325, %v320, 0
    %v624 = vsel %vm325, %v619, 0
    %626 = vmatprep.subr.bf16.mxu0 0
    %627 = vmatpush1.bf16.xpose.msra.mxu0 %v624
    %628 = vmatprep.subr.bf16.mxu0 0
    %629 = vmatpush1.bf16.xpose.msra.mxu0 0
    %630 = vmatprep.subr.bf16.mxu0 0
    %631 = vmatpush1.bf16.xpose.msra.mxu0 0
    %632 = vmatprep.subr.bf16.mxu0 0
    %633 = vmatpush1.bf16.xpose.msra.mxu0 0
    %634 = vmatprep.subr.bf16.mxu0 0
    %635 = vmatpush1.bf16.xpose.msra.mxu0 0
    %636 = vmatprep.subr.bf16.mxu0 0
    %637 = vmatpush1.bf16.xpose.msra.mxu0 0
    %638 = vmatprep.subr.bf16.mxu0 0
    %639 = vmatpush1.bf16.xpose.msra.mxu0 0
    %640 = vmatprep.subr.bf16.mxu0 0
    %641 = vmatpush1.bf16.xpose.msra.mxu0 0
    %642 = vmatprep.subr.bf16.mxu0 0
    %643 = vmatpush1.bf16.xpose.msra.mxu0 0
    %644 = vmatprep.subr.bf16.mxu0 0
    %645 = vmatpush1.bf16.xpose.msra.mxu0 0
    %646 = vmatprep.subr.bf16.mxu0 0
    %647 = vmatpush1.bf16.xpose.msra.mxu0 0
    %648 = vmatprep.subr.bf16.mxu0 0
    %649 = vmatpush1.bf16.xpose.msra.mxu0 0
    %650 = vmatprep.subr.bf16.mxu0 0
    %651 = vmatpush1.bf16.xpose.msra.mxu0 0
    %652 = vmatprep.subr.bf16.mxu0 0
    %653 = vmatpush1.bf16.xpose.msra.mxu0 0
    %654 = vmatprep.subr.bf16.mxu0 0
    %655 = vmatpush1.bf16.xpose.msra.mxu0 0
    %656 = vmatprep.subr.bf16.mxu0 0
    %657 = vmatpush1.bf16.xpose.msra.mxu0 0
    %658 = vmatprep.mubr.bf16.mxu0 0
    %659 = vmatmul.mubr.bf16.gmra.mrb[0].mxu0 %v621
    %v660 = vpop.f32.mrb[0].mxu0
    %v661 = vadd.f32 %v313, %v660
    %v662 = vpop.f32.mrb[0].mxu0
    %v663 = vpop.f32.mrb[0].mxu0
    %v664 = vpop.f32.mrb[0].mxu0
    %665 = vdwg.mxu0
    %667 = vrot.lane.b32.xlu0 %v321, 96
    %v668 = vpop.permute.xlu0 %667
    %v670 = vsel %vm325, %v321, 0
    %v673 = vsel %vm325, %v668, 0
    %675 = vmatprep.subr.bf16.mxu0 0
    %676 = vmatpush1.bf16.xpose.msra.mxu0 %v673
    %677 = vmatprep.subr.bf16.mxu0 0
    %678 = vmatpush1.bf16.xpose.msra.mxu0 0
    %679 = vmatprep.subr.bf16.mxu0 0
    %680 = vmatpush1.bf16.xpose.msra.mxu0 0
    %681 = vmatprep.subr.bf16.mxu0 0
    %682 = vmatpush1.bf16.xpose.msra.mxu0 0
    %683 = vmatprep.subr.bf16.mxu0 0
    %684 = vmatpush1.bf16.xpose.msra.mxu0 0
    %685 = vmatprep.subr.bf16.mxu0 0
    %686 = vmatpush1.bf16.xpose.msra.mxu0 0
    %687 = vmatprep.subr.bf16.mxu0 0
    %688 = vmatpush1.bf16.xpose.msra.mxu0 0
    %689 = vmatprep.subr.bf16.mxu0 0
    %690 = vmatpush1.bf16.xpose.msra.mxu0 0
    %691 = vmatprep.subr.bf16.mxu0 0
    %692 = vmatpush1.bf16.xpose.msra.mxu0 0
    %693 = vmatprep.subr.bf16.mxu0 0
    %694 = vmatpush1.bf16.xpose.msra.mxu0 0
    %695 = vmatprep.subr.bf16.mxu0 0
    %696 = vmatpush1.bf16.xpose.msra.mxu0 0
    %697 = vmatprep.subr.bf16.mxu0 0
    %698 = vmatpush1.bf16.xpose.msra.mxu0 0
    %699 = vmatprep.subr.bf16.mxu0 0
    %700 = vmatpush1.bf16.xpose.msra.mxu0 0
    %701 = vmatprep.subr.bf16.mxu0 0
    %702 = vmatpush1.bf16.xpose.msra.mxu0 0
    %703 = vmatprep.subr.bf16.mxu0 0
    %704 = vmatpush1.bf16.xpose.msra.mxu0 0
    %705 = vmatprep.subr.bf16.mxu0 0
    %706 = vmatpush1.bf16.xpose.msra.mxu0 0
    %707 = vmatprep.mubr.bf16.mxu0 0
    %708 = vmatmul.mubr.bf16.gmra.mrb[0].mxu0 %v670
    %v709 = vpop.f32.mrb[0].mxu0
    %v710 = vadd.f32 %v313, %v709
    %v711 = vpop.f32.mrb[0].mxu0
    %v712 = vpop.f32.mrb[0].mxu0
    %v713 = vpop.f32.mrb[0].mxu0
    %714 = vdwg.mxu0
    %v715 = vsel %vm325, %v367, -inf
    %716 = vmax.xlane.f32.xlu0 %v715
    %v717 = vpop.xlane.xlu0 %716
    %v718 = vsel %vm325, %v416, -inf
    %719 = vmax.xlane.f32.xlu0 %v718
    %v720 = vpop.xlane.xlu0 %719
    %v721 = vsel %vm325, %v465, -inf
    %722 = vmax.xlane.f32.xlu0 %v721
    %v723 = vpop.xlane.xlu0 %722
    %v724 = vsel %vm325, %v514, -inf
    %725 = vmax.xlane.f32.xlu0 %v724
    %v726 = vpop.xlane.xlu0 %725
    %v727 = vsel %vm325, %v563, -inf
    %728 = vmax.xlane.f32.xlu0 %v727
    %v729 = vpop.xlane.xlu0 %728
    %v730 = vsel %vm325, %v612, -inf
    %731 = vmax.xlane.f32.xlu0 %v730
    %v732 = vpop.xlane.xlu0 %731
    %v733 = vsel %vm325, %v661, -inf
    %734 = vmax.xlane.f32.xlu0 %v733
    %v735 = vpop.xlane.xlu0 %734
    %v736 = vsel %vm325, %v710, -inf
    %737 = vmax.xlane.f32.xlu0 %v736
    %v738 = vpop.xlane.xlu0 %737
    %v739 = vsub.f32 %v367, %v717
    %v740 = vsub.f32 %v416, %v720
    %v741 = vsub.f32 %v465, %v723
    %v742 = vsub.f32 %v514, %v726
    %v743 = vsub.f32 %v563, %v729
    %v744 = vsub.f32 %v612, %v732
    %v745 = vsub.f32 %v661, %v735
    %v746 = vsub.f32 %v710, %v738
    %v747 = vmul.f32 %v739, 1.442695
    %v748 = vpow.pop %v747
    %v749 = vmul.f32 %v740, 1.442695
    %v750 = vpow.pop %v749
    %v751 = vmul.f32 %v741, 1.442695
    %v752 = vpow.pop %v751
    %v753 = vmul.f32 %v742, 1.442695
    %v754 = vpow.pop %v753
    %v755 = vmul.f32 %v743, 1.442695
    %v756 = vpow.pop %v755
    %v757 = vmul.f32 %v744, 1.442695
    %v758 = vpow.pop %v757
    %v759 = vmul.f32 %v745, 1.442695
    %v760 = vpow.pop %v759
    %v761 = vmul.f32 %v746, 1.442695
    %v762 = vpow.pop %v761
    %v763 = vsel %vm325, %v748, 0.0
    %764 = vadd.xlane.f32.xlu0 %v763
    %v765 = vpop.xlane.xlu0 %764
    %v766 = vsel %vm325, %v750, 0.0
    %767 = vadd.xlane.f32.xlu0 %v766
    %v768 = vpop.xlane.xlu0 %767
    %v769 = vsel %vm325, %v752, 0.0
    %770 = vadd.xlane.f32.xlu0 %v769
    %v771 = vpop.xlane.xlu0 %770
    %v772 = vsel %vm325, %v754, 0.0
    %773 = vadd.xlane.f32.xlu0 %v772
    %v774 = vpop.xlane.xlu0 %773
    %v775 = vsel %vm325, %v756, 0.0
    %776 = vadd.xlane.f32.xlu0 %v775
    %v777 = vpop.xlane.xlu0 %776
    %v778 = vsel %vm325, %v758, 0.0
    %779 = vadd.xlane.f32.xlu0 %v778
    %v780 = vpop.xlane.xlu0 %779
    %v781 = vsel %vm325, %v760, 0.0
    %782 = vadd.xlane.f32.xlu0 %v781
    %v783 = vpop.xlane.xlu0 %782
    %v784 = vsel %vm325, %v762, 0.0
    %785 = vadd.xlane.f32.xlu0 %v784
    %v786 = vpop.xlane.xlu0 %785
    %v787 = vrcp.pop %v765
    %v788 = vrcp.pop %v768
    %v789 = vrcp.pop %v771
    %v790 = vrcp.pop %v774
    %v791 = vrcp.pop %v777
    %v792 = vrcp.pop %v780
    %v793 = vrcp.pop %v783
    %v794 = vrcp.pop %v786
    %v795 = vmul.f32 %v748, %v787
    %v796 = vmul.f32 %v750, %v788
    %v797 = vmul.f32 %v752, %v789
    %v798 = vmul.f32 %v754, %v790
    %v799 = vmul.f32 %v756, %v791
    %v800 = vmul.f32 %v758, %v792
    %v801 = vmul.f32 %v760, %v793
    %v802 = vmul.f32 %v762, %v794
    %v803 = vpack.c.bf16 %v795, %v795
    %v804 = vpack.c.bf16 %v796, %v796
    %v805 = vpack.c.bf16 %v797, %v797
    %v806 = vpack.c.bf16 %v798, %v798
    %v807 = vpack.c.bf16 %v799, %v799
    %v808 = vpack.c.bf16 %v800, %v800
    %v809 = vpack.c.bf16 %v801, %v801
    %v810 = vpack.c.bf16 %v802, %v802
    %811 = vrot.lane.b32.xlu0 %v314, 64
    %v812 = vpop.permute.xlu0 %811
    %v814 = vsel %vm325, %v803, 0
    %vm816 = vcmask 1043456
    %v818 = vsel %vm816, %v812, 0
    %820 = vmatprep.subr.bf16.mxu0 0
    %821 = vmatpush1.bf16.msra.mxu0 %v818
    %822 = vmatprep.subr.bf16.mxu0 0
    %823 = vmatpush1.bf16.msra.mxu0 0
    %824 = vmatprep.subr.bf16.mxu0 0
    %825 = vmatpush1.bf16.msra.mxu0 0
    %826 = vmatprep.subr.bf16.mxu0 0
    %827 = vmatpush1.bf16.msra.mxu0 0
    %828 = vmatprep.subr.bf16.mxu0 0
    %829 = vmatpush1.bf16.msra.mxu0 0
    %830 = vmatprep.subr.bf16.mxu0 0
    %831 = vmatpush1.bf16.msra.mxu0 0
    %832 = vmatprep.subr.bf16.mxu0 0
    %833 = vmatpush1.bf16.msra.mxu0 0
    %834 = vmatprep.subr.bf16.mxu0 0
    %835 = vmatpush1.bf16.msra.mxu0 0
    %836 = vmatprep.subr.bf16.mxu0 0
    %837 = vmatpush1.bf16.msra.mxu0 0
    %838 = vmatprep.subr.bf16.mxu0 0
    %839 = vmatpush1.bf16.msra.mxu0 0
    %840 = vmatprep.subr.bf16.mxu0 0
    %841 = vmatpush1.bf16.msra.mxu0 0
    %842 = vmatprep.subr.bf16.mxu0 0
    %843 = vmatpush1.bf16.msra.mxu0 0
    %844 = vmatprep.subr.bf16.mxu0 0
    %845 = vmatpush1.bf16.msra.mxu0 0
    %846 = vmatprep.subr.bf16.mxu0 0
    %847 = vmatpush1.bf16.msra.mxu0 0
    %848 = vmatprep.subr.bf16.mxu0 0
    %849 = vmatpush1.bf16.msra.mxu0 0
    %850 = vmatprep.subr.bf16.mxu0 0
    %851 = vmatpush1.bf16.msra.mxu0 0
    %852 = vmatprep.mubr.bf16.mxu0 0
    %853 = vmatmul.mubr.bf16.gmra.mrb[0].mxu0 %v814
    %v854 = vpop.f32.mrb[0].mxu0
    %v855 = vadd.f32 0.0, %v854
    %v856 = vpop.f32.mrb[0].mxu0
    %v857 = vpop.f32.mrb[0].mxu0
    %v858 = vpop.f32.mrb[0].mxu0
    %859 = vdwg.mxu0
    %860 = vrot.lane.b32.xlu0 %v315, 64
    %v861 = vpop.permute.xlu0 %860
    %v863 = vsel %vm325, %v804, 0
    %v866 = vsel %vm816, %v861, 0
    %868 = vmatprep.subr.bf16.mxu0 0
    %869 = vmatpush1.bf16.msra.mxu0 %v866
    %870 = vmatprep.subr.bf16.mxu0 0
    %871 = vmatpush1.bf16.msra.mxu0 0
    %872 = vmatprep.subr.bf16.mxu0 0
    %873 = vmatpush1.bf16.msra.mxu0 0
    %874 = vmatprep.subr.bf16.mxu0 0
    %875 = vmatpush1.bf16.msra.mxu0 0
    %876 = vmatprep.subr.bf16.mxu0 0
    %877 = vmatpush1.bf16.msra.mxu0 0
    %878 = vmatprep.subr.bf16.mxu0 0
    %879 = vmatpush1.bf16.msra.mxu0 0
    %880 = vmatprep.subr.bf16.mxu0 0
    %881 = vmatpush1.bf16.msra.mxu0 0
    %882 = vmatprep.subr.bf16.mxu0 0
    %883 = vmatpush1.bf16.msra.mxu0 0
    %884 = vmatprep.subr.bf16.mxu0 0
    %885 = vmatpush1.bf16.msra.mxu0 0
    %886 = vmatprep.subr.bf16.mxu0 0
    %887 = vmatpush1.bf16.msra.mxu0 0
    %888 = vmatprep.subr.bf16.mxu0 0
    %889 = vmatpush1.bf16.msra.mxu0 0
    %890 = vmatprep.subr.bf16.mxu0 0
    %891 = vmatpush1.bf16.msra.mxu0 0
    %892 = vmatprep.subr.bf16.mxu0 0
    %893 = vmatpush1.bf16.msra.mxu0 0
    %894 = vmatprep.subr.bf16.mxu0 0
    %895 = vmatpush1.bf16.msra.mxu0 0
    %896 = vmatprep.subr.bf16.mxu0 0
    %897 = vmatpush1.bf16.msra.mxu0 0
    %898 = vmatprep.subr.bf16.mxu0 0
    %899 = vmatpush1.bf16.msra.mxu0 0
    %900 = vmatprep.mubr.bf16.mxu0 0
    %901 = vmatmul.mubr.bf16.gmra.mrb[0].mxu0 %v863
    %v902 = vpop.f32.mrb[0].mxu0
    %v903 = vadd.f32 0.0, %v902
    %v904 = vpop.f32.mrb[0].mxu0
    %v905 = vpop.f32.mrb[0].mxu0
    %v906 = vpop.f32.mrb[0].mxu0
    %907 = vdwg.mxu0
    %908 = vrot.lane.b32.xlu0 %v316, 64
    %v909 = vpop.permute.xlu0 %908
    %v911 = vsel %vm325, %v805, 0
    %v914 = vsel %vm816, %v909, 0
    %916 = vmatprep.subr.bf16.mxu0 0
    %917 = vmatpush1.bf16.msra.mxu0 %v914
    %918 = vmatprep.subr.bf16.mxu0 0
    %919 = vmatpush1.bf16.msra.mxu0 0
    %920 = vmatprep.subr.bf16.mxu0 0
    %921 = vmatpush1.bf16.msra.mxu0 0
    %922 = vmatprep.subr.bf16.mxu0 0
    %923 = vmatpush1.bf16.msra.mxu0 0
    %924 = vmatprep.subr.bf16.mxu0 0
    %925 = vmatpush1.bf16.msra.mxu0 0
    %926 = vmatprep.subr.bf16.mxu0 0
    %927 = vmatpush1.bf16.msra.mxu0 0
    %928 = vmatprep.subr.bf16.mxu0 0
    %929 = vmatpush1.bf16.msra.mxu0 0
    %930 = vmatprep.subr.bf16.mxu0 0
    %931 = vmatpush1.bf16.msra.mxu0 0
    %932 = vmatprep.subr.bf16.mxu0 0
    %933 = vmatpush1.bf16.msra.mxu0 0
    %934 = vmatprep.subr.bf16.mxu0 0
    %935 = vmatpush1.bf16.msra.mxu0 0
    %936 = vmatprep.subr.bf16.mxu0 0
    %937 = vmatpush1.bf16.msra.mxu0 0
    %938 = vmatprep.subr.bf16.mxu0 0
    %939 = vmatpush1.bf16.msra.mxu0 0
    %940 = vmatprep.subr.bf16.mxu0 0
    %941 = vmatpush1.bf16.msra.mxu0 0
    %942 = vmatprep.subr.bf16.mxu0 0
    %943 = vmatpush1.bf16.msra.mxu0 0
    %944 = vmatprep.subr.bf16.mxu0 0
    %945 = vmatpush1.bf16.msra.mxu0 0
    %946 = vmatprep.subr.bf16.mxu0 0
    %947 = vmatpush1.bf16.msra.mxu0 0
    %948 = vmatprep.mubr.bf16.mxu0 0
    %949 = vmatmul.mubr.bf16.gmra.mrb[0].mxu0 %v911
    %v950 = vpop.f32.mrb[0].mxu0
    %v951 = vadd.f32 0.0, %v950
    %v952 = vpop.f32.mrb[0].mxu0
    %v953 = vpop.f32.mrb[0].mxu0
    %v954 = vpop.f32.mrb[0].mxu0
    %955 = vdwg.mxu0
    %956 = vrot.lane.b32.xlu0 %v317, 64
    %v957 = vpop.permute.xlu0 %956
    %v959 = vsel %vm325, %v806, 0
    %v962 = vsel %vm816, %v957, 0
    %964 = vmatprep.subr.bf16.mxu0 0
    %965 = vmatpush1.bf16.msra.mxu0 %v962
    %966 = vmatprep.subr.bf16.mxu0 0
    %967 = vmatpush1.bf16.msra.mxu0 0
    %968 = vmatprep.subr.bf16.mxu0 0
    %969 = vmatpush1.bf16.msra.mxu0 0
    %970 = vmatprep.subr.bf16.mxu0 0
    %971 = vmatpush1.bf16.msra.mxu0 0
    %972 = vmatprep.subr.bf16.mxu0 0
    %973 = vmatpush1.bf16.msra.mxu0 0
    %974 = vmatprep.subr.bf16.mxu0 0
    %975 = vmatpush1.bf16.msra.mxu0 0
    %976 = vmatprep.subr.bf16.mxu0 0
    %977 = vmatpush1.bf16.msra.mxu0 0
    %978 = vmatprep.subr.bf16.mxu0 0
    %979 = vmatpush1.bf16.msra.mxu0 0
    %980 = vmatprep.subr.bf16.mxu0 0
    %981 = vmatpush1.bf16.msra.mxu0 0
    %982 = vmatprep.subr.bf16.mxu0 0
    %983 = vmatpush1.bf16.msra.mxu0 0
    %984 = vmatprep.subr.bf16.mxu0 0
    %985 = vmatpush1.bf16.msra.mxu0 0
    %986 = vmatprep.subr.bf16.mxu0 0
    %987 = vmatpush1.bf16.msra.mxu0 0
    %988 = vmatprep.subr.bf16.mxu0 0
    %989 = vmatpush1.bf16.msra.mxu0 0
    %990 = vmatprep.subr.bf16.mxu0 0
    %991 = vmatpush1.bf16.msra.mxu0 0
    %992 = vmatprep.subr.bf16.mxu0 0
    %993 = vmatpush1.bf16.msra.mxu0 0
    %994 = vmatprep.subr.bf16.mxu0 0
    %995 = vmatpush1.bf16.msra.mxu0 0
    %996 = vmatprep.mubr.bf16.mxu0 0
    %997 = vmatmul.mubr.bf16.gmra.mrb[0].mxu0 %v959
    %v998 = vpop.f32.mrb[0].mxu0
    %v999 = vadd.f32 0.0, %v998
    %v1000 = vpop.f32.mrb[0].mxu0
    %v1001 = vpop.f32.mrb[0].mxu0
    %v1002 = vpop.f32.mrb[0].mxu0
    %1003 = vdwg.mxu0
    %1004 = vrot.lane.b32.xlu0 %v318, 64
    %v1005 = vpop.permute.xlu0 %1004
    %v1007 = vsel %vm325, %v807, 0
    %v1010 = vsel %vm816, %v1005, 0
    %1012 = vmatprep.subr.bf16.mxu0 0
    %1013 = vmatpush1.bf16.msra.mxu0 %v1010
    %1014 = vmatprep.subr.bf16.mxu0 0
    %1015 = vmatpush1.bf16.msra.mxu0 0
    %1016 = vmatprep.subr.bf16.mxu0 0
    %1017 = vmatpush1.bf16.msra.mxu0 0
    %1018 = vmatprep.subr.bf16.mxu0 0
    %1019 = vmatpush1.bf16.msra.mxu0 0
    %1020 = vmatprep.subr.bf16.mxu0 0
    %1021 = vmatpush1.bf16.msra.mxu0 0
    %1022 = vmatprep.subr.bf16.mxu0 0
    %1023 = vmatpush1.bf16.msra.mxu0 0
    %1024 = vmatprep.subr.bf16.mxu0 0
    %1025 = vmatpush1.bf16.msra.mxu0 0
    %1026 = vmatprep.subr.bf16.mxu0 0
    %1027 = vmatpush1.bf16.msra.mxu0 0
    %1028 = vmatprep.subr.bf16.mxu0 0
    %1029 = vmatpush1.bf16.msra.mxu0 0
    %1030 = vmatprep.subr.bf16.mxu0 0
    %1031 = vmatpush1.bf16.msra.mxu0 0
    %1032 = vmatprep.subr.bf16.mxu0 0
    %1033 = vmatpush1.bf16.msra.mxu0 0
    %1034 = vmatprep.subr.bf16.mxu0 0
    %1035 = vmatpush1.bf16.msra.mxu0 0
    %1036 = vmatprep.subr.bf16.mxu0 0
    %1037 = vmatpush1.bf16.msra.mxu0 0
    %1038 = vmatprep.subr.bf16.mxu0 0
    %1039 = vmatpush1.bf16.msra.mxu0 0
    %1040 = vmatprep.subr.bf16.mxu0 0
    %1041 = vmatpush1.bf16.msra.mxu0 0
    %1042 = vmatprep.subr.bf16.mxu0 0
    %1043 = vmatpush1.bf16.msra.mxu0 0
    %1044 = vmatprep.mubr.bf16.mxu0 0
    %1045 = vmatmul.mubr.bf16.gmra.mrb[0].mxu0 %v1007
    %v1046 = vpop.f32.mrb[0].mxu0
    %v1047 = vadd.f32 0.0, %v1046
    %v1048 = vpop.f32.mrb[0].mxu0
    %v1049 = vpop.f32.mrb[0].mxu0
    %v1050 = vpop.f32.mrb[0].mxu0
    %1051 = vdwg.mxu0
    %1052 = vrot.lane.b32.xlu0 %v319, 64
    %v1053 = vpop.permute.xlu0 %1052
    %v1055 = vsel %vm325, %v808, 0
    %v1058 = vsel %vm816, %v1053, 0
    %1060 = vmatprep.subr.bf16.mxu0 0
    %1061 = vmatpush1.bf16.msra.mxu0 %v1058
    %1062 = vmatprep.subr.bf16.mxu0 0
    %1063 = vmatpush1.bf16.msra.mxu0 0
    %1064 = vmatprep.subr.bf16.mxu0 0
    %1065 = vmatpush1.bf16.msra.mxu0 0
    %1066 = vmatprep.subr.bf16.mxu0 0
    %1067 = vmatpush1.bf16.msra.mxu0 0
    %1068 = vmatprep.subr.bf16.mxu0 0
    %1069 = vmatpush1.bf16.msra.mxu0 0
    %1070 = vmatprep.subr.bf16.mxu0 0
    %1071 = vmatpush1.bf16.msra.mxu0 0
    %1072 = vmatprep.subr.bf16.mxu0 0
    %1073 = vmatpush1.bf16.msra.mxu0 0
    %1074 = vmatprep.subr.bf16.mxu0 0
    %1075 = vmatpush1.bf16.msra.mxu0 0
    %1076 = vmatprep.subr.bf16.mxu0 0
    %1077 = vmatpush1.bf16.msra.mxu0 0
    %1078 = vmatprep.subr.bf16.mxu0 0
    %1079 = vmatpush1.bf16.msra.mxu0 0
    %1080 = vmatprep.subr.bf16.mxu0 0
    %1081 = vmatpush1.bf16.msra.mxu0 0
    %1082 = vmatprep.subr.bf16.mxu0 0
    %1083 = vmatpush1.bf16.msra.mxu0 0
    %1084 = vmatprep.subr.bf16.mxu0 0
    %1085 = vmatpush1.bf16.msra.mxu0 0
    %1086 = vmatprep.subr.bf16.mxu0 0
    %1087 = vmatpush1.bf16.msra.mxu0 0
    %1088 = vmatprep.subr.bf16.mxu0 0
    %1089 = vmatpush1.bf16.msra.mxu0 0
    %1090 = vmatprep.subr.bf16.mxu0 0
    %1091 = vmatpush1.bf16.msra.mxu0 0
    %1092 = vmatprep.mubr.bf16.mxu0 0
    %1093 = vmatmul.mubr.bf16.gmra.mrb[0].mxu0 %v1055
    %v1094 = vpop.f32.mrb[0].mxu0
    %v1095 = vadd.f32 0.0, %v1094
    %v1096 = vpop.f32.mrb[0].mxu0
    %v1097 = vpop.f32.mrb[0].mxu0
    %v1098 = vpop.f32.mrb[0].mxu0
    %1099 = vdwg.mxu0
    %1100 = vrot.lane.b32.xlu0 %v320, 64
    %v1101 = vpop.permute.xlu0 %1100
    %v1103 = vsel %vm325, %v809, 0
    %v1106 = vsel %vm816, %v1101, 0
    %1108 = vmatprep.subr.bf16.mxu0 0
    %1109 = vmatpush1.bf16.msra.mxu0 %v1106
    %1110 = vmatprep.subr.bf16.mxu0 0
    %1111 = vmatpush1.bf16.msra.mxu0 0
    %1112 = vmatprep.subr.bf16.mxu0 0
    %1113 = vmatpush1.bf16.msra.mxu0 0
    %1114 = vmatprep.subr.bf16.mxu0 0
    %1115 = vmatpush1.bf16.msra.mxu0 0
    %1116 = vmatprep.subr.bf16.mxu0 0
    %1117 = vmatpush1.bf16.msra.mxu0 0
    %1118 = vmatprep.subr.bf16.mxu0 0
    %1119 = vmatpush1.bf16.msra.mxu0 0
    %1120 = vmatprep.subr.bf16.mxu0 0
    %1121 = vmatpush1.bf16.msra.mxu0 0
    %1122 = vmatprep.subr.bf16.mxu0 0
    %1123 = vmatpush1.bf16.msra.mxu0 0
    %1124 = vmatprep.subr.bf16.mxu0 0
    %1125 = vmatpush1.bf16.msra.mxu0 0
    %1126 = vmatprep.subr.bf16.mxu0 0
    %1127 = vmatpush1.bf16.msra.mxu0 0
    %1128 = vmatprep.subr.bf16.mxu0 0
    %1129 = vmatpush1.bf16.msra.mxu0 0
    %1130 = vmatprep.subr.bf16.mxu0 0
    %1131 = vmatpush1.bf16.msra.mxu0 0
    %1132 = vmatprep.subr.bf16.mxu0 0
    %1133 = vmatpush1.bf16.msra.mxu0 0
    %1134 = vmatprep.subr.bf16.mxu0 0
    %1135 = vmatpush1.bf16.msra.mxu0 0
    %1136 = vmatprep.subr.bf16.mxu0 0
    %1137 = vmatpush1.bf16.msra.mxu0 0
    %1138 = vmatprep.subr.bf16.mxu0 0
    %1139 = vmatpush1.bf16.msra.mxu0 0
    %1140 = vmatprep.mubr.bf16.mxu0 0
    %1141 = vmatmul.mubr.bf16.gmra.mrb[0].mxu0 %v1103
    %v1142 = vpop.f32.mrb[0].mxu0
    %v1143 = vadd.f32 0.0, %v1142
    %v1144 = vpop.f32.mrb[0].mxu0
    %v1145 = vpop.f32.mrb[0].mxu0
    %v1146 = vpop.f32.mrb[0].mxu0
    %1147 = vdwg.mxu0
    %1148 = vrot.lane.b32.xlu0 %v321, 64
    %v1149 = vpop.permute.xlu0 %1148
    %v1151 = vsel %vm325, %v810, 0
    %v1154 = vsel %vm816, %v1149, 0
    %1156 = vmatprep.subr.bf16.mxu0 0
    %1157 = vmatpush1.bf16.msra.mxu0 %v1154
    %1158 = vmatprep.subr.bf16.mxu0 0
    %1159 = vmatpush1.bf16.msra.mxu0 0
    %1160 = vmatprep.subr.bf16.mxu0 0
    %1161 = vmatpush1.bf16.msra.mxu0 0
    %1162 = vmatprep.subr.bf16.mxu0 0
    %1163 = vmatpush1.bf16.msra.mxu0 0
    %1164 = vmatprep.subr.bf16.mxu0 0
    %1165 = vmatpush1.bf16.msra.mxu0 0
    %1166 = vmatprep.subr.bf16.mxu0 0
    %1167 = vmatpush1.bf16.msra.mxu0 0
    %1168 = vmatprep.subr.bf16.mxu0 0
    %1169 = vmatpush1.bf16.msra.mxu0 0
    %1170 = vmatprep.subr.bf16.mxu0 0
    %1171 = vmatpush1.bf16.msra.mxu0 0
    %1172 = vmatprep.subr.bf16.mxu0 0
    %1173 = vmatpush1.bf16.msra.mxu0 0
    %1174 = vmatprep.subr.bf16.mxu0 0
    %1175 = vmatpush1.bf16.msra.mxu0 0
    %1176 = vmatprep.subr.bf16.mxu0 0
    %1177 = vmatpush1.bf16.msra.mxu0 0
    %1178 = vmatprep.subr.bf16.mxu0 0
    %1179 = vmatpush1.bf16.msra.mxu0 0
    %1180 = vmatprep.subr.bf16.mxu0 0
    %1181 = vmatpush1.bf16.msra.mxu0 0
    %1182 = vmatprep.subr.bf16.mxu0 0
    %1183 = vmatpush1.bf16.msra.mxu0 0
    %1184 = vmatprep.subr.bf16.mxu0 0
    %1185 = vmatpush1.bf16.msra.mxu0 0
    %1186 = vmatprep.subr.bf16.mxu0 0
    %1187 = vmatpush1.bf16.msra.mxu0 0
    %1188 = vmatprep.mubr.bf16.mxu0 0
    %1189 = vmatmul.mubr.bf16.gmra.mrb[0].mxu0 %v1151
    %v1190 = vpop.f32.mrb[0].mxu0
    %v1191 = vadd.f32 0.0, %v1190
    %v1192 = vpop.f32.mrb[0].mxu0
    %v1193 = vpop.f32.mrb[0].mxu0
    %v1194 = vpop.f32.mrb[0].mxu0
    %1195 = vdwg.mxu0
    %1196 = vrot.lane.b32.xlu0 %v314, 120
    %v1197 = vpop.permute.xlu0 %1196
    %1198 = vrot.lane.b32.xlu0 %v314, 88
    %v1199 = vpop.permute.xlu0 %1198
    %v1201 = vsel %vm325, %v1197, 0
    %v1204 = vsel %vm325, %v1199, 0
    %1206 = vmatprep.subr.bf16.mxu0 0
    %1207 = vmatpush1.bf16.xpose.msra.mxu0 %v1204
    %1208 = vmatprep.subr.bf16.mxu0 0
    %1209 = vmatpush1.bf16.xpose.msra.mxu0 0
    %1210 = vmatprep.subr.bf16.mxu0 0
    %1211 = vmatpush1.bf16.xpose.msra.mxu0 0
    %1212 = vmatprep.subr.bf16.mxu0 0
    %1213 = vmatpush1.bf16.xpose.msra.mxu0 0
    %1214 = vmatprep.subr.bf16.mxu0 0
    %1215 = vmatpush1.bf16.xpose.msra.mxu0 0
    %1216 = vmatprep.subr.bf16.mxu0 0
    %1217 = vmatpush1.bf16.xpose.msra.mxu0 0
    %1218 = vmatprep.subr.bf16.mxu0 0
    %1219 = vmatpush1.bf16.xpose.msra.mxu0 0
    %1220 = vmatprep.subr.bf16.mxu0 0
    %1221 = vmatpush1.bf16.xpose.msra.mxu0 0
    %1222 = vmatprep.subr.bf16.mxu0 0
    %1223 = vmatpush1.bf16.xpose.msra.mxu0 0
    %1224 = vmatprep.subr.bf16.mxu0 0
    %1225 = vmatpush1.bf16.xpose.msra.mxu0 0
    %1226 = vmatprep.subr.bf16.mxu0 0
    %1227 = vmatpush1.bf16.xpose.msra.mxu0 0
    %1228 = vmatprep.subr.bf16.mxu0 0
    %1229 = vmatpush1.bf16.xpose.msra.mxu0 0
    %1230 = vmatprep.subr.bf16.mxu0 0
    %1231 = vmatpush1.bf16.xpose.msra.mxu0 0
    %1232 = vmatprep.subr.bf16.mxu0 0
    %1233 = vmatpush1.bf16.xpose.msra.mxu0 0
    %1234 = vmatprep.subr.bf16.mxu0 0
    %1235 = vmatpush1.bf16.xpose.msra.mxu0 0
    %1236 = vmatprep.subr.bf16.mxu0 0
    %1237 = vmatpush1.bf16.xpose.msra.mxu0 0
    %1238 = vmatprep.mubr.bf16.mxu0 0
    %1239 = vmatmul.mubr.bf16.gmra.mrb[0].mxu0 %v1201
    %v1240 = vpop.f32.mrb[0].mxu0
    %v1241 = vadd.f32 %v313, %v1240
    %v1242 = vpop.f32.mrb[0].mxu0
    %v1243 = vpop.f32.mrb[0].mxu0
    %v1244 = vpop.f32.mrb[0].mxu0
    %1245 = vdwg.mxu0
    %1246 = vrot.lane.b32.xlu0 %v315, 120
    %v1247 = vpop.permute.xlu0 %1246
    %1248 = vrot.lane.b32.xlu0 %v315, 88
    %v1249 = vpop.permute.xlu0 %1248
    %v1251 = vsel %vm325, %v1247, 0
    %v1254 = vsel %vm325, %v1249, 0
    %1256 = vmatprep.subr.bf16.mxu0 0
    %1257 = vmatpush1.bf16.xpose.msra.mxu0 %v1254
    %1258 = vmatprep.subr.bf16.mxu0 0
    %1259 = vmatpush1.bf16.xpose.msra.mxu0 0
    %1260 = vmatprep.subr.bf16.mxu0 0
    %1261 = vmatpush1.bf16.xpose.msra.mxu0 0
    %1262 = vmatprep.subr.bf16.mxu0 0
    %1263 = vmatpush1.bf16.xpose.msra.mxu0 0
    %1264 = vmatprep.subr.bf16.mxu0 0
    %1265 = vmatpush1.bf16.xpose.msra.mxu0 0
    %1266 = vmatprep.subr.bf16.mxu0 0
    %1267 = vmatpush1.bf16.xpose.msra.mxu0 0
    %1268 = vmatprep.subr.bf16.mxu0 0
    %1269 = vmatpush1.bf16.xpose.msra.mxu0 0
    %1270 = vmatprep.subr.bf16.mxu0 0
    %1271 = vmatpush1.bf16.xpose.msra.mxu0 0
    %1272 = vmatprep.subr.bf16.mxu0 0
    %1273 = vmatpush1.bf16.xpose.msra.mxu0 0
    %1274 = vmatprep.subr.bf16.mxu0 0
    %1275 = vmatpush1.bf16.xpose.msra.mxu0 0
    %1276 = vmatprep.subr.bf16.mxu0 0
    %1277 = vmatpush1.bf16.xpose.msra.mxu0 0
    %1278 = vmatprep.subr.bf16.mxu0 0
    %1279 = vmatpush1.bf16.xpose.msra.mxu0 0
    %1280 = vmatprep.subr.bf16.mxu0 0
    %1281 = vmatpush1.bf16.xpose.msra.mxu0 0
    %1282 = vmatprep.subr.bf16.mxu0 0
    %1283 = vmatpush1.bf16.xpose.msra.mxu0 0
    %1284 = vmatprep.subr.bf16.mxu0 0
    %1285 = vmatpush1.bf16.xpose.msra.mxu0 0
    %1286 = vmatprep.subr.bf16.mxu0 0
    %1287 = vmatpush1.bf16.xpose.msra.mxu0 0
    %1288 = vmatprep.mubr.bf16.mxu0 0
    %1289 = vmatmul.mubr.bf16.gmra.mrb[0].mxu0 %v1251
    %v1290 = vpop.f32.mrb[0].mxu0
    %v1291 = vadd.f32 %v313, %v1290
    %v1292 = vpop.f32.mrb[0].mxu0
    %v1293 = vpop.f32.mrb[0].mxu0
    %v1294 = vpop.f32.mrb[0].mxu0
    %1295 = vdwg.mxu0
    %1296 = vrot.lane.b32.xlu0 %v316, 120
    %v1297 = vpop.permute.xlu0 %1296
    %1298 = vrot.lane.b32.xlu0 %v316, 88
    %v1299 = vpop.permute.xlu0 %1298
    %v1301 = vsel %vm325, %v1297, 0
    %v1304 = vsel %vm325, %v1299, 0
    %1306 = vmatprep.subr.bf16.mxu0 0
    %1307 = vmatpush1.bf16.xpose.msra.mxu0 %v1304
    %1308 = vmatprep.subr.bf16.mxu0 0
    %1309 = vmatpush1.bf16.xpose.msra.mxu0 0
    %1310 = vmatprep.subr.bf16.mxu0 0
    %1311 = vmatpush1.bf16.xpose.msra.mxu0 0
    %1312 = vmatprep.subr.bf16.mxu0 0
    %1313 = vmatpush1.bf16.xpose.msra.mxu0 0
    %1314 = vmatprep.subr.bf16.mxu0 0
    %1315 = vmatpush1.bf16.xpose.msra.mxu0 0
    %1316 = vmatprep.subr.bf16.mxu0 0
    %1317 = vmatpush1.bf16.xpose.msra.mxu0 0
    %1318 = vmatprep.subr.bf16.mxu0 0
    %1319 = vmatpush1.bf16.xpose.msra.mxu0 0
    %1320 = vmatprep.subr.bf16.mxu0 0
    %1321 = vmatpush1.bf16.xpose.msra.mxu0 0
    %1322 = vmatprep.subr.bf16.mxu0 0
    %1323 = vmatpush1.bf16.xpose.msra.mxu0 0
    %1324 = vmatprep.subr.bf16.mxu0 0
    %1325 = vmatpush1.bf16.xpose.msra.mxu0 0
    %1326 = vmatprep.subr.bf16.mxu0 0
    %1327 = vmatpush1.bf16.xpose.msra.mxu0 0
    %1328 = vmatprep.subr.bf16.mxu0 0
    %1329 = vmatpush1.bf16.xpose.msra.mxu0 0
    %1330 = vmatprep.subr.bf16.mxu0 0
    %1331 = vmatpush1.bf16.xpose.msra.mxu0 0
    %1332 = vmatprep.subr.bf16.mxu0 0
    %1333 = vmatpush1.bf16.xpose.msra.mxu0 0
    %1334 = vmatprep.subr.bf16.mxu0 0
    %1335 = vmatpush1.bf16.xpose.msra.mxu0 0
    %1336 = vmatprep.subr.bf16.mxu0 0
    %1337 = vmatpush1.bf16.xpose.msra.mxu0 0
    %1338 = vmatprep.mubr.bf16.mxu0 0
    %1339 = vmatmul.mubr.bf16.gmra.mrb[0].mxu0 %v1301
    %v1340 = vpop.f32.mrb[0].mxu0
    %v1341 = vadd.f32 %v313, %v1340
    %v1342 = vpop.f32.mrb[0].mxu0
    %v1343 = vpop.f32.mrb[0].mxu0
    %v1344 = vpop.f32.mrb[0].mxu0
    %1345 = vdwg.mxu0
    %1346 = vrot.lane.b32.xlu0 %v317, 120
    %v1347 = vpop.permute.xlu0 %1346
    %1348 = vrot.lane.b32.xlu0 %v317, 88
    %v1349 = vpop.permute.xlu0 %1348
    %v1351 = vsel %vm325, %v1347, 0
    %v1354 = vsel %vm325, %v1349, 0
    %1356 = vmatprep.subr.bf16.mxu0 0
    %1357 = vmatpush1.bf16.xpose.msra.mxu0 %v1354
    %1358 = vmatprep.subr.bf16.mxu0 0
    %1359 = vmatpush1.bf16.xpose.msra.mxu0 0
    %1360 = vmatprep.subr.bf16.mxu0 0
    %1361 = vmatpush1.bf16.xpose.msra.mxu0 0
    %1362 = vmatprep.subr.bf16.mxu0 0
    %1363 = vmatpush1.bf16.xpose.msra.mxu0 0
    %1364 = vmatprep.subr.bf16.mxu0 0
    %1365 = vmatpush1.bf16.xpose.msra.mxu0 0
    %1366 = vmatprep.subr.bf16.mxu0 0
    %1367 = vmatpush1.bf16.xpose.msra.mxu0 0
    %1368 = vmatprep.subr.bf16.mxu0 0
    %1369 = vmatpush1.bf16.xpose.msra.mxu0 0
    %1370 = vmatprep.subr.bf16.mxu0 0
    %1371 = vmatpush1.bf16.xpose.msra.mxu0 0
    %1372 = vmatprep.subr.bf16.mxu0 0
    %1373 = vmatpush1.bf16.xpose.msra.mxu0 0
    %1374 = vmatprep.subr.bf16.mxu0 0
    %1375 = vmatpush1.bf16.xpose.msra.mxu0 0
    %1376 = vmatprep.subr.bf16.mxu0 0
    %1377 = vmatpush1.bf16.xpose.msra.mxu0 0
    %1378 = vmatprep.subr.bf16.mxu0 0
    %1379 = vmatpush1.bf16.xpose.msra.mxu0 0
    %1380 = vmatprep.subr.bf16.mxu0 0
    %1381 = vmatpush1.bf16.xpose.msra.mxu0 0
    %1382 = vmatprep.subr.bf16.mxu0 0
    %1383 = vmatpush1.bf16.xpose.msra.mxu0 0
    %1384 = vmatprep.subr.bf16.mxu0 0
    %1385 = vmatpush1.bf16.xpose.msra.mxu0 0
    %1386 = vmatprep.subr.bf16.mxu0 0
    %1387 = vmatpush1.bf16.xpose.msra.mxu0 0
    %1388 = vmatprep.mubr.bf16.mxu0 0
    %1389 = vmatmul.mubr.bf16.gmra.mrb[0].mxu0 %v1351
    %v1390 = vpop.f32.mrb[0].mxu0
    %v1391 = vadd.f32 %v313, %v1390
    %v1392 = vpop.f32.mrb[0].mxu0
    %v1393 = vpop.f32.mrb[0].mxu0
    %v1394 = vpop.f32.mrb[0].mxu0
    %1395 = vdwg.mxu0
    %1396 = vrot.lane.b32.xlu0 %v318, 120
    %v1397 = vpop.permute.xlu0 %1396
    %1398 = vrot.lane.b32.xlu0 %v318, 88
    %v1399 = vpop.permute.xlu0 %1398
    %v1401 = vsel %vm325, %v1397, 0
    %v1404 = vsel %vm325, %v1399, 0
    %1406 = vmatprep.subr.bf16.mxu0 0
    %1407 = vmatpush1.bf16.xpose.msra.mxu0 %v1404
    %1408 = vmatprep.subr.bf16.mxu0 0
    %1409 = vmatpush1.bf16.xpose.msra.mxu0 0
    %1410 = vmatprep.subr.bf16.mxu0 0
    %1411 = vmatpush1.bf16.xpose.msra.mxu0 0
    %1412 = vmatprep.subr.bf16.mxu0 0
    %1413 = vmatpush1.bf16.xpose.msra.mxu0 0
    %1414 = vmatprep.subr.bf16.mxu0 0
    %1415 = vmatpush1.bf16.xpose.msra.mxu0 0
    %1416 = vmatprep.subr.bf16.mxu0 0
    %1417 = vmatpush1.bf16.xpose.msra.mxu0 0
    %1418 = vmatprep.subr.bf16.mxu0 0
    %1419 = vmatpush1.bf16.xpose.msra.mxu0 0
    %1420 = vmatprep.subr.bf16.mxu0 0
    %1421 = vmatpush1.bf16.xpose.msra.mxu0 0
    %1422 = vmatprep.subr.bf16.mxu0 0
    %1423 = vmatpush1.bf16.xpose.msra.mxu0 0
    %1424 = vmatprep.subr.bf16.mxu0 0
    %1425 = vmatpush1.bf16.xpose.msra.mxu0 0
    %1426 = vmatprep.subr.bf16.mxu0 0
    %1427 = vmatpush1.bf16.xpose.msra.mxu0 0
    %1428 = vmatprep.subr.bf16.mxu0 0
    %1429 = vmatpush1.bf16.xpose.msra.mxu0 0
    %1430 = vmatprep.subr.bf16.mxu0 0
    %1431 = vmatpush1.bf16.xpose.msra.mxu0 0
    %1432 = vmatprep.subr.bf16.mxu0 0
    %1433 = vmatpush1.bf16.xpose.msra.mxu0 0
    %1434 = vmatprep.subr.bf16.mxu0 0
    %1435 = vmatpush1.bf16.xpose.msra.mxu0 0
    %1436 = vmatprep.subr.bf16.mxu0 0
    %1437 = vmatpush1.bf16.xpose.msra.mxu0 0
    %1438 = vmatprep.mubr.bf16.mxu0 0
    %1439 = vmatmul.mubr.bf16.gmra.mrb[0].mxu0 %v1401
    %v1440 = vpop.f32.mrb[0].mxu0
    %v1441 = vadd.f32 %v313, %v1440
    %v1442 = vpop.f32.mrb[0].mxu0
    %v1443 = vpop.f32.mrb[0].mxu0
    %v1444 = vpop.f32.mrb[0].mxu0
    %1445 = vdwg.mxu0
    %1446 = vrot.lane.b32.xlu0 %v319, 120
    %v1447 = vpop.permute.xlu0 %1446
    %1448 = vrot.lane.b32.xlu0 %v319, 88
    %v1449 = vpop.permute.xlu0 %1448
    %v1451 = vsel %vm325, %v1447, 0
    %v1454 = vsel %vm325, %v1449, 0
    %1456 = vmatprep.subr.bf16.mxu0 0
    %1457 = vmatpush1.bf16.xpose.msra.mxu0 %v1454
    %1458 = vmatprep.subr.bf16.mxu0 0
    %1459 = vmatpush1.bf16.xpose.msra.mxu0 0
    %1460 = vmatprep.subr.bf16.mxu0 0
    %1461 = vmatpush1.bf16.xpose.msra.mxu0 0
    %1462 = vmatprep.subr.bf16.mxu0 0
    %1463 = vmatpush1.bf16.xpose.msra.mxu0 0
    %1464 = vmatprep.subr.bf16.mxu0 0
    %1465 = vmatpush1.bf16.xpose.msra.mxu0 0
    %1466 = vmatprep.subr.bf16.mxu0 0
    %1467 = vmatpush1.bf16.xpose.msra.mxu0 0
    %1468 = vmatprep.subr.bf16.mxu0 0
    %1469 = vmatpush1.bf16.xpose.msra.mxu0 0
    %1470 = vmatprep.subr.bf16.mxu0 0
    %1471 = vmatpush1.bf16.xpose.msra.mxu0 0
    %1472 = vmatprep.subr.bf16.mxu0 0
    %1473 = vmatpush1.bf16.xpose.msra.mxu0 0
    %1474 = vmatprep.subr.bf16.mxu0 0
    %1475 = vmatpush1.bf16.xpose.msra.mxu0 0
    %1476 = vmatprep.subr.bf16.mxu0 0
    %1477 = vmatpush1.bf16.xpose.msra.mxu0 0
    %1478 = vmatprep.subr.bf16.mxu0 0
    %1479 = vmatpush1.bf16.xpose.msra.mxu0 0
    %1480 = vmatprep.subr.bf16.mxu0 0
    %1481 = vmatpush1.bf16.xpose.msra.mxu0 0
    %1482 = vmatprep.subr.bf16.mxu0 0
    %1483 = vmatpush1.bf16.xpose.msra.mxu0 0
    %1484 = vmatprep.subr.bf16.mxu0 0
    %1485 = vmatpush1.bf16.xpose.msra.mxu0 0
    %1486 = vmatprep.subr.bf16.mxu0 0
    %1487 = vmatpush1.bf16.xpose.msra.mxu0 0
    %1488 = vmatprep.mubr.bf16.mxu0 0
    %1489 = vmatmul.mubr.bf16.gmra.mrb[0].mxu0 %v1451
    %v1490 = vpop.f32.mrb[0].mxu0
    %v1491 = vadd.f32 %v313, %v1490
    %v1492 = vpop.f32.mrb[0].mxu0
    %v1493 = vpop.f32.mrb[0].mxu0
    %v1494 = vpop.f32.mrb[0].mxu0
    %1495 = vdwg.mxu0
    %1496 = vrot.lane.b32.xlu0 %v320, 120
    %v1497 = vpop.permute.xlu0 %1496
    %1498 = vrot.lane.b32.xlu0 %v320, 88
    %v1499 = vpop.permute.xlu0 %1498
    %v1501 = vsel %vm325, %v1497, 0
    %v1504 = vsel %vm325, %v1499, 0
    %1506 = vmatprep.subr.bf16.mxu0 0
    %1507 = vmatpush1.bf16.xpose.msra.mxu0 %v1504
    %1508 = vmatprep.subr.bf16.mxu0 0
    %1509 = vmatpush1.bf16.xpose.msra.mxu0 0
    %1510 = vmatprep.subr.bf16.mxu0 0
    %1511 = vmatpush1.bf16.xpose.msra.mxu0 0
    %1512 = vmatprep.subr.bf16.mxu0 0
    %1513 = vmatpush1.bf16.xpose.msra.mxu0 0
    %1514 = vmatprep.subr.bf16.mxu0 0
    %1515 = vmatpush1.bf16.xpose.msra.mxu0 0
    %1516 = vmatprep.subr.bf16.mxu0 0
    %1517 = vmatpush1.bf16.xpose.msra.mxu0 0
    %1518 = vmatprep.subr.bf16.mxu0 0
    %1519 = vmatpush1.bf16.xpose.msra.mxu0 0
    %1520 = vmatprep.subr.bf16.mxu0 0
    %1521 = vmatpush1.bf16.xpose.msra.mxu0 0
    %1522 = vmatprep.subr.bf16.mxu0 0
    %1523 = vmatpush1.bf16.xpose.msra.mxu0 0
    %1524 = vmatprep.subr.bf16.mxu0 0
    %1525 = vmatpush1.bf16.xpose.msra.mxu0 0
    %1526 = vmatprep.subr.bf16.mxu0 0
    %1527 = vmatpush1.bf16.xpose.msra.mxu0 0
    %1528 = vmatprep.subr.bf16.mxu0 0
    %1529 = vmatpush1.bf16.xpose.msra.mxu0 0
    %1530 = vmatprep.subr.bf16.mxu0 0
    %1531 = vmatpush1.bf16.xpose.msra.mxu0 0
    %1532 = vmatprep.subr.bf16.mxu0 0
    %1533 = vmatpush1.bf16.xpose.msra.mxu0 0
    %1534 = vmatprep.subr.bf16.mxu0 0
    %1535 = vmatpush1.bf16.xpose.msra.mxu0 0
    %1536 = vmatprep.subr.bf16.mxu0 0
    %1537 = vmatpush1.bf16.xpose.msra.mxu0 0
    %1538 = vmatprep.mubr.bf16.mxu0 0
    %1539 = vmatmul.mubr.bf16.gmra.mrb[0].mxu0 %v1501
    %v1540 = vpop.f32.mrb[0].mxu0
    %v1541 = vadd.f32 %v313, %v1540
    %v1542 = vpop.f32.mrb[0].mxu0
    %v1543 = vpop.f32.mrb[0].mxu0
    %v1544 = vpop.f32.mrb[0].mxu0
    %1545 = vdwg.mxu0
    %1546 = vrot.lane.b32.xlu0 %v321, 120
    %v1547 = vpop.permute.xlu0 %1546
    %1548 = vrot.lane.b32.xlu0 %v321, 88
    %v1549 = vpop.permute.xlu0 %1548
    %v1551 = vsel %vm325, %v1547, 0
    %v1554 = vsel %vm325, %v1549, 0
    %1556 = vmatprep.subr.bf16.mxu0 0
    %1557 = vmatpush1.bf16.xpose.msra.mxu0 %v1554
    %1558 = vmatprep.subr.bf16.mxu0 0
    %1559 = vmatpush1.bf16.xpose.msra.mxu0 0
    %1560 = vmatprep.subr.bf16.mxu0 0
    %1561 = vmatpush1.bf16.xpose.msra.mxu0 0
    %1562 = vmatprep.subr.bf16.mxu0 0
    %1563 = vmatpush1.bf16.xpose.msra.mxu0 0
    %1564 = vmatprep.subr.bf16.mxu0 0
    %1565 = vmatpush1.bf16.xpose.msra.mxu0 0
    %1566 = vmatprep.subr.bf16.mxu0 0
    %1567 = vmatpush1.bf16.xpose.msra.mxu0 0
    %1568 = vmatprep.subr.bf16.mxu0 0
    %1569 = vmatpush1.bf16.xpose.msra.mxu0 0
    %1570 = vmatprep.subr.bf16.mxu0 0
    %1571 = vmatpush1.bf16.xpose.msra.mxu0 0
    %1572 = vmatprep.subr.bf16.mxu0 0
    %1573 = vmatpush1.bf16.xpose.msra.mxu0 0
    %1574 = vmatprep.subr.bf16.mxu0 0
    %1575 = vmatpush1.bf16.xpose.msra.mxu0 0
    %1576 = vmatprep.subr.bf16.mxu0 0
    %1577 = vmatpush1.bf16.xpose.msra.mxu0 0
    %1578 = vmatprep.subr.bf16.mxu0 0
    %1579 = vmatpush1.bf16.xpose.msra.mxu0 0
    %1580 = vmatprep.subr.bf16.mxu0 0
    %1581 = vmatpush1.bf16.xpose.msra.mxu0 0
    %1582 = vmatprep.subr.bf16.mxu0 0
    %1583 = vmatpush1.bf16.xpose.msra.mxu0 0
    %1584 = vmatprep.subr.bf16.mxu0 0
    %1585 = vmatpush1.bf16.xpose.msra.mxu0 0
    %1586 = vmatprep.subr.bf16.mxu0 0
    %1587 = vmatpush1.bf16.xpose.msra.mxu0 0
    %1588 = vmatprep.mubr.bf16.mxu0 0
    %1589 = vmatmul.mubr.bf16.gmra.mrb[0].mxu0 %v1551
    %v1590 = vpop.f32.mrb[0].mxu0
    %v1591 = vadd.f32 %v313, %v1590
    %v1592 = vpop.f32.mrb[0].mxu0
    %v1593 = vpop.f32.mrb[0].mxu0
    %v1594 = vpop.f32.mrb[0].mxu0
    %1595 = vdwg.mxu0
    %v1596 = vsel %vm325, %v1241, -inf
    %1597 = vmax.xlane.f32.xlu0 %v1596
    %v1598 = vpop.xlane.xlu0 %1597
    %v1599 = vsel %vm325, %v1291, -inf
    %1600 = vmax.xlane.f32.xlu0 %v1599
    %v1601 = vpop.xlane.xlu0 %1600
    %v1602 = vsel %vm325, %v1341, -inf
    %1603 = vmax.xlane.f32.xlu0 %v1602
    %v1604 = vpop.xlane.xlu0 %1603
    %v1605 = vsel %vm325, %v1391, -inf
    %1606 = vmax.xlane.f32.xlu0 %v1605
    %v1607 = vpop.xlane.xlu0 %1606
    %v1608 = vsel %vm325, %v1441, -inf
    %1609 = vmax.xlane.f32.xlu0 %v1608
    %v1610 = vpop.xlane.xlu0 %1609
    %v1611 = vsel %vm325, %v1491, -inf
    %1612 = vmax.xlane.f32.xlu0 %v1611
    %v1613 = vpop.xlane.xlu0 %1612
    %v1614 = vsel %vm325, %v1541, -inf
    %1615 = vmax.xlane.f32.xlu0 %v1614
    %v1616 = vpop.xlane.xlu0 %1615
    %v1617 = vsel %vm325, %v1591, -inf
    %1618 = vmax.xlane.f32.xlu0 %v1617
    %v1619 = vpop.xlane.xlu0 %1618
    %v1620 = vsub.f32 %v1241, %v1598
    %v1621 = vsub.f32 %v1291, %v1601
    %v1622 = vsub.f32 %v1341, %v1604
    %v1623 = vsub.f32 %v1391, %v1607
    %v1624 = vsub.f32 %v1441, %v1610
    %v1625 = vsub.f32 %v1491, %v1613
    %v1626 = vsub.f32 %v1541, %v1616
    %v1627 = vsub.f32 %v1591, %v1619
    %v1628 = vmul.f32 %v1620, 1.442695
    %v1629 = vpow.pop %v1628
    %v1630 = vmul.f32 %v1621, 1.442695
    %v1631 = vpow.pop %v1630
    %v1632 = vmul.f32 %v1622, 1.442695
    %v1633 = vpow.pop %v1632
    %v1634 = vmul.f32 %v1623, 1.442695
    %v1635 = vpow.pop %v1634
    %v1636 = vmul.f32 %v1624, 1.442695
    %v1637 = vpow.pop %v1636
    %v1638 = vmul.f32 %v1625, 1.442695
    %v1639 = vpow.pop %v1638
    %v1640 = vmul.f32 %v1626, 1.442695
    %v1641 = vpow.pop %v1640
    %v1642 = vmul.f32 %v1627, 1.442695
    %v1643 = vpow.pop %v1642
    %v1644 = vsel %vm325, %v1629, 0.0
    %1645 = vadd.xlane.f32.xlu0 %v1644
    %v1646 = vpop.xlane.xlu0 %1645
    %v1647 = vsel %vm325, %v1631, 0.0
    %1648 = vadd.xlane.f32.xlu0 %v1647
    %v1649 = vpop.xlane.xlu0 %1648
    %v1650 = vsel %vm325, %v1633, 0.0
    %1651 = vadd.xlane.f32.xlu0 %v1650
    %v1652 = vpop.xlane.xlu0 %1651
    %v1653 = vsel %vm325, %v1635, 0.0
    %1654 = vadd.xlane.f32.xlu0 %v1653
    %v1655 = vpop.xlane.xlu0 %1654
    %v1656 = vsel %vm325, %v1637, 0.0
    %1657 = vadd.xlane.f32.xlu0 %v1656
    %v1658 = vpop.xlane.xlu0 %1657
    %v1659 = vsel %vm325, %v1639, 0.0
    %1660 = vadd.xlane.f32.xlu0 %v1659
    %v1661 = vpop.xlane.xlu0 %1660
    %v1662 = vsel %vm325, %v1641, 0.0
    %1663 = vadd.xlane.f32.xlu0 %v1662
    %v1664 = vpop.xlane.xlu0 %1663
    %v1665 = vsel %vm325, %v1643, 0.0
    %1666 = vadd.xlane.f32.xlu0 %v1665
    %v1667 = vpop.xlane.xlu0 %1666
    %v1668 = vrcp.pop %v1646
    %v1669 = vrcp.pop %v1649
    %v1670 = vrcp.pop %v1652
    %v1671 = vrcp.pop %v1655
    %v1672 = vrcp.pop %v1658
    %v1673 = vrcp.pop %v1661
    %v1674 = vrcp.pop %v1664
    %v1675 = vrcp.pop %v1667
    %v1676 = vmul.f32 %v1629, %v1668
    %v1677 = vmul.f32 %v1631, %v1669
    %v1678 = vmul.f32 %v1633, %v1670
    %v1679 = vmul.f32 %v1635, %v1671
    %v1680 = vmul.f32 %v1637, %v1672
    %v1681 = vmul.f32 %v1639, %v1673
    %v1682 = vmul.f32 %v1641, %v1674
    %v1683 = vmul.f32 %v1643, %v1675
    %v1684 = vpack.c.bf16 %v1676, %v1676
    %v1685 = vpack.c.bf16 %v1677, %v1677
    %v1686 = vpack.c.bf16 %v1678, %v1678
    %v1687 = vpack.c.bf16 %v1679, %v1679
    %v1688 = vpack.c.bf16 %v1680, %v1680
    %v1689 = vpack.c.bf16 %v1681, %v1681
    %v1690 = vpack.c.bf16 %v1682, %v1682
    %v1691 = vpack.c.bf16 %v1683, %v1683
    %1692 = vrot.lane.b32.xlu0 %v314, 56
    %v1693 = vpop.permute.xlu0 %1692
    %v1695 = vsel %vm325, %v1684, 0
    %v1698 = vsel %vm816, %v1693, 0
    %1700 = vmatprep.subr.bf16.mxu0 0
    %1701 = vmatpush1.bf16.msra.mxu0 %v1698
    %1702 = vmatprep.subr.bf16.mxu0 0
    %1703 = vmatpush1.bf16.msra.mxu0 0
    %1704 = vmatprep.subr.bf16.mxu0 0
    %1705 = vmatpush1.bf16.msra.mxu0 0
    %1706 = vmatprep.subr.bf16.mxu0 0
    %1707 = vmatpush1.bf16.msra.mxu0 0
    %1708 = vmatprep.subr.bf16.mxu0 0
    %1709 = vmatpush1.bf16.msra.mxu0 0
    %1710 = vmatprep.subr.bf16.mxu0 0
    %1711 = vmatpush1.bf16.msra.mxu0 0
    %1712 = vmatprep.subr.bf16.mxu0 0
    %1713 = vmatpush1.bf16.msra.mxu0 0
    %1714 = vmatprep.subr.bf16.mxu0 0
    %1715 = vmatpush1.bf16.msra.mxu0 0
    %1716 = vmatprep.subr.bf16.mxu0 0
    %1717 = vmatpush1.bf16.msra.mxu0 0
    %1718 = vmatprep.subr.bf16.mxu0 0
    %1719 = vmatpush1.bf16.msra.mxu0 0
    %1720 = vmatprep.subr.bf16.mxu0 0
    %1721 = vmatpush1.bf16.msra.mxu0 0
    %1722 = vmatprep.subr.bf16.mxu0 0
    %1723 = vmatpush1.bf16.msra.mxu0 0
    %1724 = vmatprep.subr.bf16.mxu0 0
    %1725 = vmatpush1.bf16.msra.mxu0 0
    %1726 = vmatprep.subr.bf16.mxu0 0
    %1727 = vmatpush1.bf16.msra.mxu0 0
    %1728 = vmatprep.subr.bf16.mxu0 0
    %1729 = vmatpush1.bf16.msra.mxu0 0
    %1730 = vmatprep.subr.bf16.mxu0 0
    %1731 = vmatpush1.bf16.msra.mxu0 0
    %1732 = vmatprep.mubr.bf16.mxu0 0
    %1733 = vmatmul.mubr.bf16.gmra.mrb[0].mxu0 %v1695
    %v1734 = vpop.f32.mrb[0].mxu0
    %v1735 = vadd.f32 0.0, %v1734
    %v1736 = vpop.f32.mrb[0].mxu0
    %v1737 = vpop.f32.mrb[0].mxu0
    %v1738 = vpop.f32.mrb[0].mxu0
    %1739 = vdwg.mxu0
    %1740 = vrot.lane.b32.xlu0 %v315, 56
    %v1741 = vpop.permute.xlu0 %1740
    %v1743 = vsel %vm325, %v1685, 0
    %v1746 = vsel %vm816, %v1741, 0
    %1748 = vmatprep.subr.bf16.mxu0 0
    %1749 = vmatpush1.bf16.msra.mxu0 %v1746
    %1750 = vmatprep.subr.bf16.mxu0 0
    %1751 = vmatpush1.bf16.msra.mxu0 0
    %1752 = vmatprep.subr.bf16.mxu0 0
    %1753 = vmatpush1.bf16.msra.mxu0 0
    %1754 = vmatprep.subr.bf16.mxu0 0
    %1755 = vmatpush1.bf16.msra.mxu0 0
    %1756 = vmatprep.subr.bf16.mxu0 0
    %1757 = vmatpush1.bf16.msra.mxu0 0
    %1758 = vmatprep.subr.bf16.mxu0 0
    %1759 = vmatpush1.bf16.msra.mxu0 0
    %1760 = vmatprep.subr.bf16.mxu0 0
    %1761 = vmatpush1.bf16.msra.mxu0 0
    %1762 = vmatprep.subr.bf16.mxu0 0
    %1763 = vmatpush1.bf16.msra.mxu0 0
    %1764 = vmatprep.subr.bf16.mxu0 0
    %1765 = vmatpush1.bf16.msra.mxu0 0
    %1766 = vmatprep.subr.bf16.mxu0 0
    %1767 = vmatpush1.bf16.msra.mxu0 0
    %1768 = vmatprep.subr.bf16.mxu0 0
    %1769 = vmatpush1.bf16.msra.mxu0 0
    %1770 = vmatprep.subr.bf16.mxu0 0
    %1771 = vmatpush1.bf16.msra.mxu0 0
    %1772 = vmatprep.subr.bf16.mxu0 0
    %1773 = vmatpush1.bf16.msra.mxu0 0
    %1774 = vmatprep.subr.bf16.mxu0 0
    %1775 = vmatpush1.bf16.msra.mxu0 0
    %1776 = vmatprep.subr.bf16.mxu0 0
    %1777 = vmatpush1.bf16.msra.mxu0 0
    %1778 = vmatprep.subr.bf16.mxu0 0
    %1779 = vmatpush1.bf16.msra.mxu0 0
    %1780 = vmatprep.mubr.bf16.mxu0 0
    %1781 = vmatmul.mubr.bf16.gmra.mrb[0].mxu0 %v1743
    %v1782 = vpop.f32.mrb[0].mxu0
    %v1783 = vadd.f32 0.0, %v1782
    %v1784 = vpop.f32.mrb[0].mxu0
    %v1785 = vpop.f32.mrb[0].mxu0
    %v1786 = vpop.f32.mrb[0].mxu0
    %1787 = vdwg.mxu0
    %1788 = vrot.lane.b32.xlu0 %v316, 56
    %v1789 = vpop.permute.xlu0 %1788
    %v1791 = vsel %vm325, %v1686, 0
    %v1794 = vsel %vm816, %v1789, 0
    %1796 = vmatprep.subr.bf16.mxu0 0
    %1797 = vmatpush1.bf16.msra.mxu0 %v1794
    %1798 = vmatprep.subr.bf16.mxu0 0
    %1799 = vmatpush1.bf16.msra.mxu0 0
    %1800 = vmatprep.subr.bf16.mxu0 0
    %1801 = vmatpush1.bf16.msra.mxu0 0
    %1802 = vmatprep.subr.bf16.mxu0 0
    %1803 = vmatpush1.bf16.msra.mxu0 0
    %1804 = vmatprep.subr.bf16.mxu0 0
    %1805 = vmatpush1.bf16.msra.mxu0 0
    %1806 = vmatprep.subr.bf16.mxu0 0
    %1807 = vmatpush1.bf16.msra.mxu0 0
    %1808 = vmatprep.subr.bf16.mxu0 0
    %1809 = vmatpush1.bf16.msra.mxu0 0
    %1810 = vmatprep.subr.bf16.mxu0 0
    %1811 = vmatpush1.bf16.msra.mxu0 0
    %1812 = vmatprep.subr.bf16.mxu0 0
    %1813 = vmatpush1.bf16.msra.mxu0 0
    %1814 = vmatprep.subr.bf16.mxu0 0
    %1815 = vmatpush1.bf16.msra.mxu0 0
    %1816 = vmatprep.subr.bf16.mxu0 0
    %1817 = vmatpush1.bf16.msra.mxu0 0
    %1818 = vmatprep.subr.bf16.mxu0 0
    %1819 = vmatpush1.bf16.msra.mxu0 0
    %1820 = vmatprep.subr.bf16.mxu0 0
    %1821 = vmatpush1.bf16.msra.mxu0 0
    %1822 = vmatprep.subr.bf16.mxu0 0
    %1823 = vmatpush1.bf16.msra.mxu0 0
    %1824 = vmatprep.subr.bf16.mxu0 0
    %1825 = vmatpush1.bf16.msra.mxu0 0
    %1826 = vmatprep.subr.bf16.mxu0 0
    %1827 = vmatpush1.bf16.msra.mxu0 0
    %1828 = vmatprep.mubr.bf16.mxu0 0
    %1829 = vmatmul.mubr.bf16.gmra.mrb[0].mxu0 %v1791
    %v1830 = vpop.f32.mrb[0].mxu0
    %v1831 = vadd.f32 0.0, %v1830
    %v1832 = vpop.f32.mrb[0].mxu0
    %v1833 = vpop.f32.mrb[0].mxu0
    %v1834 = vpop.f32.mrb[0].mxu0
    %1835 = vdwg.mxu0
    %1836 = vrot.lane.b32.xlu0 %v317, 56
    %v1837 = vpop.permute.xlu0 %1836
    %v1839 = vsel %vm325, %v1687, 0
    %v1842 = vsel %vm816, %v1837, 0
    %1844 = vmatprep.subr.bf16.mxu0 0
    %1845 = vmatpush1.bf16.msra.mxu0 %v1842
    %1846 = vmatprep.subr.bf16.mxu0 0
    %1847 = vmatpush1.bf16.msra.mxu0 0
    %1848 = vmatprep.subr.bf16.mxu0 0
    %1849 = vmatpush1.bf16.msra.mxu0 0
    %1850 = vmatprep.subr.bf16.mxu0 0
    %1851 = vmatpush1.bf16.msra.mxu0 0
    %1852 = vmatprep.subr.bf16.mxu0 0
    %1853 = vmatpush1.bf16.msra.mxu0 0
    %1854 = vmatprep.subr.bf16.mxu0 0
    %1855 = vmatpush1.bf16.msra.mxu0 0
    %1856 = vmatprep.subr.bf16.mxu0 0
    %1857 = vmatpush1.bf16.msra.mxu0 0
    %1858 = vmatprep.subr.bf16.mxu0 0
    %1859 = vmatpush1.bf16.msra.mxu0 0
    %1860 = vmatprep.subr.bf16.mxu0 0
    %1861 = vmatpush1.bf16.msra.mxu0 0
    %1862 = vmatprep.subr.bf16.mxu0 0
    %1863 = vmatpush1.bf16.msra.mxu0 0
    %1864 = vmatprep.subr.bf16.mxu0 0
    %1865 = vmatpush1.bf16.msra.mxu0 0
    %1866 = vmatprep.subr.bf16.mxu0 0
    %1867 = vmatpush1.bf16.msra.mxu0 0
    %1868 = vmatprep.subr.bf16.mxu0 0
    %1869 = vmatpush1.bf16.msra.mxu0 0
    %1870 = vmatprep.subr.bf16.mxu0 0
    %1871 = vmatpush1.bf16.msra.mxu0 0
    %1872 = vmatprep.subr.bf16.mxu0 0
    %1873 = vmatpush1.bf16.msra.mxu0 0
    %1874 = vmatprep.subr.bf16.mxu0 0
    %1875 = vmatpush1.bf16.msra.mxu0 0
    %1876 = vmatprep.mubr.bf16.mxu0 0
    %1877 = vmatmul.mubr.bf16.gmra.mrb[0].mxu0 %v1839
    %v1878 = vpop.f32.mrb[0].mxu0
    %v1879 = vadd.f32 0.0, %v1878
    %v1880 = vpop.f32.mrb[0].mxu0
    %v1881 = vpop.f32.mrb[0].mxu0
    %v1882 = vpop.f32.mrb[0].mxu0
    %1883 = vdwg.mxu0
    %1884 = vrot.lane.b32.xlu0 %v318, 56
    %v1885 = vpop.permute.xlu0 %1884
    %v1887 = vsel %vm325, %v1688, 0
    %v1890 = vsel %vm816, %v1885, 0
    %1892 = vmatprep.subr.bf16.mxu0 0
    %1893 = vmatpush1.bf16.msra.mxu0 %v1890
    %1894 = vmatprep.subr.bf16.mxu0 0
    %1895 = vmatpush1.bf16.msra.mxu0 0
    %1896 = vmatprep.subr.bf16.mxu0 0
    %1897 = vmatpush1.bf16.msra.mxu0 0
    %1898 = vmatprep.subr.bf16.mxu0 0
    %1899 = vmatpush1.bf16.msra.mxu0 0
    %1900 = vmatprep.subr.bf16.mxu0 0
    %1901 = vmatpush1.bf16.msra.mxu0 0
    %1902 = vmatprep.subr.bf16.mxu0 0
    %1903 = vmatpush1.bf16.msra.mxu0 0
    %1904 = vmatprep.subr.bf16.mxu0 0
    %1905 = vmatpush1.bf16.msra.mxu0 0
    %1906 = vmatprep.subr.bf16.mxu0 0
    %1907 = vmatpush1.bf16.msra.mxu0 0
    %1908 = vmatprep.subr.bf16.mxu0 0
    %1909 = vmatpush1.bf16.msra.mxu0 0
    %1910 = vmatprep.subr.bf16.mxu0 0
    %1911 = vmatpush1.bf16.msra.mxu0 0
    %1912 = vmatprep.subr.bf16.mxu0 0
    %1913 = vmatpush1.bf16.msra.mxu0 0
    %1914 = vmatprep.subr.bf16.mxu0 0
    %1915 = vmatpush1.bf16.msra.mxu0 0
    %1916 = vmatprep.subr.bf16.mxu0 0
    %1917 = vmatpush1.bf16.msra.mxu0 0
    %1918 = vmatprep.subr.bf16.mxu0 0
    %1919 = vmatpush1.bf16.msra.mxu0 0
    %1920 = vmatprep.subr.bf16.mxu0 0
    %1921 = vmatpush1.bf16.msra.mxu0 0
    %1922 = vmatprep.subr.bf16.mxu0 0
    %1923 = vmatpush1.bf16.msra.mxu0 0
    %1924 = vmatprep.mubr.bf16.mxu0 0
    %1925 = vmatmul.mubr.bf16.gmra.mrb[0].mxu0 %v1887
    %v1926 = vpop.f32.mrb[0].mxu0
    %v1927 = vadd.f32 0.0, %v1926
    %v1928 = vpop.f32.mrb[0].mxu0
    %v1929 = vpop.f32.mrb[0].mxu0
    %v1930 = vpop.f32.mrb[0].mxu0
    %1931 = vdwg.mxu0
    %1932 = vrot.lane.b32.xlu0 %v319, 56
    %v1933 = vpop.permute.xlu0 %1932
    %v1935 = vsel %vm325, %v1689, 0
    %v1938 = vsel %vm816, %v1933, 0
    %1940 = vmatprep.subr.bf16.mxu0 0
    %1941 = vmatpush1.bf16.msra.mxu0 %v1938
    %1942 = vmatprep.subr.bf16.mxu0 0
    %1943 = vmatpush1.bf16.msra.mxu0 0
    %1944 = vmatprep.subr.bf16.mxu0 0
    %1945 = vmatpush1.bf16.msra.mxu0 0
    %1946 = vmatprep.subr.bf16.mxu0 0
    %1947 = vmatpush1.bf16.msra.mxu0 0
    %1948 = vmatprep.subr.bf16.mxu0 0
    %1949 = vmatpush1.bf16.msra.mxu0 0
    %1950 = vmatprep.subr.bf16.mxu0 0
    %1951 = vmatpush1.bf16.msra.mxu0 0
    %1952 = vmatprep.subr.bf16.mxu0 0
    %1953 = vmatpush1.bf16.msra.mxu0 0
    %1954 = vmatprep.subr.bf16.mxu0 0
    %1955 = vmatpush1.bf16.msra.mxu0 0
    %1956 = vmatprep.subr.bf16.mxu0 0
    %1957 = vmatpush1.bf16.msra.mxu0 0
    %1958 = vmatprep.subr.bf16.mxu0 0
    %1959 = vmatpush1.bf16.msra.mxu0 0
    %1960 = vmatprep.subr.bf16.mxu0 0
    %1961 = vmatpush1.bf16.msra.mxu0 0
    %1962 = vmatprep.subr.bf16.mxu0 0
    %1963 = vmatpush1.bf16.msra.mxu0 0
    %1964 = vmatprep.subr.bf16.mxu0 0
    %1965 = vmatpush1.bf16.msra.mxu0 0
    %1966 = vmatprep.subr.bf16.mxu0 0
    %1967 = vmatpush1.bf16.msra.mxu0 0
    %1968 = vmatprep.subr.bf16.mxu0 0
    %1969 = vmatpush1.bf16.msra.mxu0 0
    %1970 = vmatprep.subr.bf16.mxu0 0
    %1971 = vmatpush1.bf16.msra.mxu0 0
    %1972 = vmatprep.mubr.bf16.mxu0 0
    %1973 = vmatmul.mubr.bf16.gmra.mrb[0].mxu0 %v1935
    %v1974 = vpop.f32.mrb[0].mxu0
    %v1975 = vadd.f32 0.0, %v1974
    %v1976 = vpop.f32.mrb[0].mxu0
    %v1977 = vpop.f32.mrb[0].mxu0
    %v1978 = vpop.f32.mrb[0].mxu0
    %1979 = vdwg.mxu0
    %1980 = vrot.lane.b32.xlu0 %v320, 56
    %v1981 = vpop.permute.xlu0 %1980
    %v1983 = vsel %vm325, %v1690, 0
    %v1986 = vsel %vm816, %v1981, 0
    %1988 = vmatprep.subr.bf16.mxu0 0
    %1989 = vmatpush1.bf16.msra.mxu0 %v1986
    %1990 = vmatprep.subr.bf16.mxu0 0
    %1991 = vmatpush1.bf16.msra.mxu0 0
    %1992 = vmatprep.subr.bf16.mxu0 0
    %1993 = vmatpush1.bf16.msra.mxu0 0
    %1994 = vmatprep.subr.bf16.mxu0 0
    %1995 = vmatpush1.bf16.msra.mxu0 0
    %1996 = vmatprep.subr.bf16.mxu0 0
    %1997 = vmatpush1.bf16.msra.mxu0 0
    %1998 = vmatprep.subr.bf16.mxu0 0
    %1999 = vmatpush1.bf16.msra.mxu0 0
    %2000 = vmatprep.subr.bf16.mxu0 0
    %2001 = vmatpush1.bf16.msra.mxu0 0
    %2002 = vmatprep.subr.bf16.mxu0 0
    %2003 = vmatpush1.bf16.msra.mxu0 0
    %2004 = vmatprep.subr.bf16.mxu0 0
    %2005 = vmatpush1.bf16.msra.mxu0 0
    %2006 = vmatprep.subr.bf16.mxu0 0
    %2007 = vmatpush1.bf16.msra.mxu0 0
    %2008 = vmatprep.subr.bf16.mxu0 0
    %2009 = vmatpush1.bf16.msra.mxu0 0
    %2010 = vmatprep.subr.bf16.mxu0 0
    %2011 = vmatpush1.bf16.msra.mxu0 0
    %2012 = vmatprep.subr.bf16.mxu0 0
    %2013 = vmatpush1.bf16.msra.mxu0 0
    %2014 = vmatprep.subr.bf16.mxu0 0
    %2015 = vmatpush1.bf16.msra.mxu0 0
    %2016 = vmatprep.subr.bf16.mxu0 0
    %2017 = vmatpush1.bf16.msra.mxu0 0
    %2018 = vmatprep.subr.bf16.mxu0 0
    %2019 = vmatpush1.bf16.msra.mxu0 0
    %2020 = vmatprep.mubr.bf16.mxu0 0
    %2021 = vmatmul.mubr.bf16.gmra.mrb[0].mxu0 %v1983
    %v2022 = vpop.f32.mrb[0].mxu0
    %v2023 = vadd.f32 0.0, %v2022
    %v2024 = vpop.f32.mrb[0].mxu0
    %v2025 = vpop.f32.mrb[0].mxu0
    %v2026 = vpop.f32.mrb[0].mxu0
    %2027 = vdwg.mxu0
    %2028 = vrot.lane.b32.xlu0 %v321, 56
    %v2029 = vpop.permute.xlu0 %2028
    %v2031 = vsel %vm325, %v1691, 0
    %v2034 = vsel %vm816, %v2029, 0
    %2036 = vmatprep.subr.bf16.mxu0 0
    %2037 = vmatpush1.bf16.msra.mxu0 %v2034
    %2038 = vmatprep.subr.bf16.mxu0 0
    %2039 = vmatpush1.bf16.msra.mxu0 0
    %2040 = vmatprep.subr.bf16.mxu0 0
    %2041 = vmatpush1.bf16.msra.mxu0 0
    %2042 = vmatprep.subr.bf16.mxu0 0
    %2043 = vmatpush1.bf16.msra.mxu0 0
    %2044 = vmatprep.subr.bf16.mxu0 0
    %2045 = vmatpush1.bf16.msra.mxu0 0
    %2046 = vmatprep.subr.bf16.mxu0 0
    %2047 = vmatpush1.bf16.msra.mxu0 0
    %2048 = vmatprep.subr.bf16.mxu0 0
    %2049 = vmatpush1.bf16.msra.mxu0 0
    %2050 = vmatprep.subr.bf16.mxu0 0
    %2051 = vmatpush1.bf16.msra.mxu0 0
    %2052 = vmatprep.subr.bf16.mxu0 0
    %2053 = vmatpush1.bf16.msra.mxu0 0
    %2054 = vmatprep.subr.bf16.mxu0 0
    %2055 = vmatpush1.bf16.msra.mxu0 0
    %2056 = vmatprep.subr.bf16.mxu0 0
    %2057 = vmatpush1.bf16.msra.mxu0 0
    %2058 = vmatprep.subr.bf16.mxu0 0
    %2059 = vmatpush1.bf16.msra.mxu0 0
    %2060 = vmatprep.subr.bf16.mxu0 0
    %2061 = vmatpush1.bf16.msra.mxu0 0
    %2062 = vmatprep.subr.bf16.mxu0 0
    %2063 = vmatpush1.bf16.msra.mxu0 0
    %2064 = vmatprep.subr.bf16.mxu0 0
    %2065 = vmatpush1.bf16.msra.mxu0 0
    %2066 = vmatprep.subr.bf16.mxu0 0
    %2067 = vmatpush1.bf16.msra.mxu0 0
    %2068 = vmatprep.mubr.bf16.mxu0 0
    %2069 = vmatmul.mubr.bf16.gmra.mrb[0].mxu0 %v2031
    %v2070 = vpop.f32.mrb[0].mxu0
    %v2071 = vadd.f32 0.0, %v2070
    %v2072 = vpop.f32.mrb[0].mxu0
    %v2073 = vpop.f32.mrb[0].mxu0
    %v2074 = vpop.f32.mrb[0].mxu0
    %2075 = vdwg.mxu0
    %2076 = vrot.lane.b32.xlu0 %v314, 112
    %v2077 = vpop.permute.xlu0 %2076
    %2078 = vrot.lane.b32.xlu0 %v314, 80
    %v2079 = vpop.permute.xlu0 %2078
    %v2081 = vsel %vm325, %v2077, 0
    %v2084 = vsel %vm325, %v2079, 0
    %2086 = vmatprep.subr.bf16.mxu0 0
    %2087 = vmatpush1.bf16.xpose.msra.mxu0 %v2084
    %2088 = vmatprep.subr.bf16.mxu0 0
    %2089 = vmatpush1.bf16.xpose.msra.mxu0 0
    %2090 = vmatprep.subr.bf16.mxu0 0
    %2091 = vmatpush1.bf16.xpose.msra.mxu0 0
    %2092 = vmatprep.subr.bf16.mxu0 0
    %2093 = vmatpush1.bf16.xpose.msra.mxu0 0
    %2094 = vmatprep.subr.bf16.mxu0 0
    %2095 = vmatpush1.bf16.xpose.msra.mxu0 0
    %2096 = vmatprep.subr.bf16.mxu0 0
    %2097 = vmatpush1.bf16.xpose.msra.mxu0 0
    %2098 = vmatprep.subr.bf16.mxu0 0
    %2099 = vmatpush1.bf16.xpose.msra.mxu0 0
    %2100 = vmatprep.subr.bf16.mxu0 0
    %2101 = vmatpush1.bf16.xpose.msra.mxu0 0
    %2102 = vmatprep.subr.bf16.mxu0 0
    %2103 = vmatpush1.bf16.xpose.msra.mxu0 0
    %2104 = vmatprep.subr.bf16.mxu0 0
    %2105 = vmatpush1.bf16.xpose.msra.mxu0 0
    %2106 = vmatprep.subr.bf16.mxu0 0
    %2107 = vmatpush1.bf16.xpose.msra.mxu0 0
    %2108 = vmatprep.subr.bf16.mxu0 0
    %2109 = vmatpush1.bf16.xpose.msra.mxu0 0
    %2110 = vmatprep.subr.bf16.mxu0 0
    %2111 = vmatpush1.bf16.xpose.msra.mxu0 0
    %2112 = vmatprep.subr.bf16.mxu0 0
    %2113 = vmatpush1.bf16.xpose.msra.mxu0 0
    %2114 = vmatprep.subr.bf16.mxu0 0
    %2115 = vmatpush1.bf16.xpose.msra.mxu0 0
    %2116 = vmatprep.subr.bf16.mxu0 0
    %2117 = vmatpush1.bf16.xpose.msra.mxu0 0
    %2118 = vmatprep.mubr.bf16.mxu0 0
    %2119 = vmatmul.mubr.bf16.gmra.mrb[0].mxu0 %v2081
    %v2120 = vpop.f32.mrb[0].mxu0
    %v2121 = vadd.f32 %v313, %v2120
    %v2122 = vpop.f32.mrb[0].mxu0
    %v2123 = vpop.f32.mrb[0].mxu0
    %v2124 = vpop.f32.mrb[0].mxu0
    %2125 = vdwg.mxu0
    %2126 = vrot.lane.b32.xlu0 %v315, 112
    %v2127 = vpop.permute.xlu0 %2126
    %2128 = vrot.lane.b32.xlu0 %v315, 80
    %v2129 = vpop.permute.xlu0 %2128
    %v2131 = vsel %vm325, %v2127, 0
    %v2134 = vsel %vm325, %v2129, 0
    %2136 = vmatprep.subr.bf16.mxu0 0
    %2137 = vmatpush1.bf16.xpose.msra.mxu0 %v2134
    %2138 = vmatprep.subr.bf16.mxu0 0
    %2139 = vmatpush1.bf16.xpose.msra.mxu0 0
    %2140 = vmatprep.subr.bf16.mxu0 0
    %2141 = vmatpush1.bf16.xpose.msra.mxu0 0
    %2142 = vmatprep.subr.bf16.mxu0 0
    %2143 = vmatpush1.bf16.xpose.msra.mxu0 0
    %2144 = vmatprep.subr.bf16.mxu0 0
    %2145 = vmatpush1.bf16.xpose.msra.mxu0 0
    %2146 = vmatprep.subr.bf16.mxu0 0
    %2147 = vmatpush1.bf16.xpose.msra.mxu0 0
    %2148 = vmatprep.subr.bf16.mxu0 0
    %2149 = vmatpush1.bf16.xpose.msra.mxu0 0
    %2150 = vmatprep.subr.bf16.mxu0 0
    %2151 = vmatpush1.bf16.xpose.msra.mxu0 0
    %2152 = vmatprep.subr.bf16.mxu0 0
    %2153 = vmatpush1.bf16.xpose.msra.mxu0 0
    %2154 = vmatprep.subr.bf16.mxu0 0
    %2155 = vmatpush1.bf16.xpose.msra.mxu0 0
    %2156 = vmatprep.subr.bf16.mxu0 0
    %2157 = vmatpush1.bf16.xpose.msra.mxu0 0
    %2158 = vmatprep.subr.bf16.mxu0 0
    %2159 = vmatpush1.bf16.xpose.msra.mxu0 0
    %2160 = vmatprep.subr.bf16.mxu0 0
    %2161 = vmatpush1.bf16.xpose.msra.mxu0 0
    %2162 = vmatprep.subr.bf16.mxu0 0
    %2163 = vmatpush1.bf16.xpose.msra.mxu0 0
    %2164 = vmatprep.subr.bf16.mxu0 0
    %2165 = vmatpush1.bf16.xpose.msra.mxu0 0
    %2166 = vmatprep.subr.bf16.mxu0 0
    %2167 = vmatpush1.bf16.xpose.msra.mxu0 0
    %2168 = vmatprep.mubr.bf16.mxu0 0
    %2169 = vmatmul.mubr.bf16.gmra.mrb[0].mxu0 %v2131
    %v2170 = vpop.f32.mrb[0].mxu0
    %v2171 = vadd.f32 %v313, %v2170
    %v2172 = vpop.f32.mrb[0].mxu0
    %v2173 = vpop.f32.mrb[0].mxu0
    %v2174 = vpop.f32.mrb[0].mxu0
    %2175 = vdwg.mxu0
    %2176 = vrot.lane.b32.xlu0 %v316, 112
    %v2177 = vpop.permute.xlu0 %2176
    %2178 = vrot.lane.b32.xlu0 %v316, 80
    %v2179 = vpop.permute.xlu0 %2178
    %v2181 = vsel %vm325, %v2177, 0
    %v2184 = vsel %vm325, %v2179, 0
    %2186 = vmatprep.subr.bf16.mxu0 0
    %2187 = vmatpush1.bf16.xpose.msra.mxu0 %v2184
    %2188 = vmatprep.subr.bf16.mxu0 0
    %2189 = vmatpush1.bf16.xpose.msra.mxu0 0
    %2190 = vmatprep.subr.bf16.mxu0 0
    %2191 = vmatpush1.bf16.xpose.msra.mxu0 0
    %2192 = vmatprep.subr.bf16.mxu0 0
    %2193 = vmatpush1.bf16.xpose.msra.mxu0 0
    %2194 = vmatprep.subr.bf16.mxu0 0
    %2195 = vmatpush1.bf16.xpose.msra.mxu0 0
    %2196 = vmatprep.subr.bf16.mxu0 0
    %2197 = vmatpush1.bf16.xpose.msra.mxu0 0
    %2198 = vmatprep.subr.bf16.mxu0 0
    %2199 = vmatpush1.bf16.xpose.msra.mxu0 0
    %2200 = vmatprep.subr.bf16.mxu0 0
    %2201 = vmatpush1.bf16.xpose.msra.mxu0 0
    %2202 = vmatprep.subr.bf16.mxu0 0
    %2203 = vmatpush1.bf16.xpose.msra.mxu0 0
    %2204 = vmatprep.subr.bf16.mxu0 0
    %2205 = vmatpush1.bf16.xpose.msra.mxu0 0
    %2206 = vmatprep.subr.bf16.mxu0 0
    %2207 = vmatpush1.bf16.xpose.msra.mxu0 0
    %2208 = vmatprep.subr.bf16.mxu0 0
    %2209 = vmatpush1.bf16.xpose.msra.mxu0 0
    %2210 = vmatprep.subr.bf16.mxu0 0
    %2211 = vmatpush1.bf16.xpose.msra.mxu0 0
    %2212 = vmatprep.subr.bf16.mxu0 0
    %2213 = vmatpush1.bf16.xpose.msra.mxu0 0
    %2214 = vmatprep.subr.bf16.mxu0 0
    %2215 = vmatpush1.bf16.xpose.msra.mxu0 0
    %2216 = vmatprep.subr.bf16.mxu0 0
    %2217 = vmatpush1.bf16.xpose.msra.mxu0 0
    %2218 = vmatprep.mubr.bf16.mxu0 0
    %2219 = vmatmul.mubr.bf16.gmra.mrb[0].mxu0 %v2181
    %v2220 = vpop.f32.mrb[0].mxu0
    %v2221 = vadd.f32 %v313, %v2220
    %v2222 = vpop.f32.mrb[0].mxu0
    %v2223 = vpop.f32.mrb[0].mxu0
    %v2224 = vpop.f32.mrb[0].mxu0
    %2225 = vdwg.mxu0
    %2226 = vrot.lane.b32.xlu0 %v317, 112
    %v2227 = vpop.permute.xlu0 %2226
    %2228 = vrot.lane.b32.xlu0 %v317, 80
    %v2229 = vpop.permute.xlu0 %2228
    %v2231 = vsel %vm325, %v2227, 0
    %v2234 = vsel %vm325, %v2229, 0
    %2236 = vmatprep.subr.bf16.mxu0 0
    %2237 = vmatpush1.bf16.xpose.msra.mxu0 %v2234
    %2238 = vmatprep.subr.bf16.mxu0 0
    %2239 = vmatpush1.bf16.xpose.msra.mxu0 0
    %2240 = vmatprep.subr.bf16.mxu0 0
    %2241 = vmatpush1.bf16.xpose.msra.mxu0 0
    %2242 = vmatprep.subr.bf16.mxu0 0
    %2243 = vmatpush1.bf16.xpose.msra.mxu0 0
    %2244 = vmatprep.subr.bf16.mxu0 0
    %2245 = vmatpush1.bf16.xpose.msra.mxu0 0
    %2246 = vmatprep.subr.bf16.mxu0 0
    %2247 = vmatpush1.bf16.xpose.msra.mxu0 0
    %2248 = vmatprep.subr.bf16.mxu0 0
    %2249 = vmatpush1.bf16.xpose.msra.mxu0 0
    %2250 = vmatprep.subr.bf16.mxu0 0
    %2251 = vmatpush1.bf16.xpose.msra.mxu0 0
    %2252 = vmatprep.subr.bf16.mxu0 0
    %2253 = vmatpush1.bf16.xpose.msra.mxu0 0
    %2254 = vmatprep.subr.bf16.mxu0 0
    %2255 = vmatpush1.bf16.xpose.msra.mxu0 0
    %2256 = vmatprep.subr.bf16.mxu0 0
    %2257 = vmatpush1.bf16.xpose.msra.mxu0 0
    %2258 = vmatprep.subr.bf16.mxu0 0
    %2259 = vmatpush1.bf16.xpose.msra.mxu0 0
    %2260 = vmatprep.subr.bf16.mxu0 0
    %2261 = vmatpush1.bf16.xpose.msra.mxu0 0
    %2262 = vmatprep.subr.bf16.mxu0 0
    %2263 = vmatpush1.bf16.xpose.msra.mxu0 0
    %2264 = vmatprep.subr.bf16.mxu0 0
    %2265 = vmatpush1.bf16.xpose.msra.mxu0 0
    %2266 = vmatprep.subr.bf16.mxu0 0
    %2267 = vmatpush1.bf16.xpose.msra.mxu0 0
    %2268 = vmatprep.mubr.bf16.mxu0 0
    %2269 = vmatmul.mubr.bf16.gmra.mrb[0].mxu0 %v2231
    %v2270 = vpop.f32.mrb[0].mxu0
    %v2271 = vadd.f32 %v313, %v2270
    %v2272 = vpop.f32.mrb[0].mxu0
    %v2273 = vpop.f32.mrb[0].mxu0
    %v2274 = vpop.f32.mrb[0].mxu0
    %2275 = vdwg.mxu0
    %2276 = vrot.lane.b32.xlu0 %v318, 112
    %v2277 = vpop.permute.xlu0 %2276
    %2278 = vrot.lane.b32.xlu0 %v318, 80
    %v2279 = vpop.permute.xlu0 %2278
    %v2281 = vsel %vm325, %v2277, 0
    %v2284 = vsel %vm325, %v2279, 0
    %2286 = vmatprep.subr.bf16.mxu0 0
    %2287 = vmatpush1.bf16.xpose.msra.mxu0 %v2284
    %2288 = vmatprep.subr.bf16.mxu0 0
    %2289 = vmatpush1.bf16.xpose.msra.mxu0 0
    %2290 = vmatprep.subr.bf16.mxu0 0
    %2291 = vmatpush1.bf16.xpose.msra.mxu0 0
    %2292 = vmatprep.subr.bf16.mxu0 0
    %2293 = vmatpush1.bf16.xpose.msra.mxu0 0
    %2294 = vmatprep.subr.bf16.mxu0 0
    %2295 = vmatpush1.bf16.xpose.msra.mxu0 0
    %2296 = vmatprep.subr.bf16.mxu0 0
    %2297 = vmatpush1.bf16.xpose.msra.mxu0 0
    %2298 = vmatprep.subr.bf16.mxu0 0
    %2299 = vmatpush1.bf16.xpose.msra.mxu0 0
    %2300 = vmatprep.subr.bf16.mxu0 0
    %2301 = vmatpush1.bf16.xpose.msra.mxu0 0
    %2302 = vmatprep.subr.bf16.mxu0 0
    %2303 = vmatpush1.bf16.xpose.msra.mxu0 0
    %2304 = vmatprep.subr.bf16.mxu0 0
    %2305 = vmatpush1.bf16.xpose.msra.mxu0 0
    %2306 = vmatprep.subr.bf16.mxu0 0
    %2307 = vmatpush1.bf16.xpose.msra.mxu0 0
    %2308 = vmatprep.subr.bf16.mxu0 0
    %2309 = vmatpush1.bf16.xpose.msra.mxu0 0
    %2310 = vmatprep.subr.bf16.mxu0 0
    %2311 = vmatpush1.bf16.xpose.msra.mxu0 0
    %2312 = vmatprep.subr.bf16.mxu0 0
    %2313 = vmatpush1.bf16.xpose.msra.mxu0 0
    %2314 = vmatprep.subr.bf16.mxu0 0
    %2315 = vmatpush1.bf16.xpose.msra.mxu0 0
    %2316 = vmatprep.subr.bf16.mxu0 0
    %2317 = vmatpush1.bf16.xpose.msra.mxu0 0
    %2318 = vmatprep.mubr.bf16.mxu0 0
    %2319 = vmatmul.mubr.bf16.gmra.mrb[0].mxu0 %v2281
    %v2320 = vpop.f32.mrb[0].mxu0
    %v2321 = vadd.f32 %v313, %v2320
    %v2322 = vpop.f32.mrb[0].mxu0
    %v2323 = vpop.f32.mrb[0].mxu0
    %v2324 = vpop.f32.mrb[0].mxu0
    %2325 = vdwg.mxu0
    %2326 = vrot.lane.b32.xlu0 %v319, 112
    %v2327 = vpop.permute.xlu0 %2326
    %2328 = vrot.lane.b32.xlu0 %v319, 80
    %v2329 = vpop.permute.xlu0 %2328
    %v2331 = vsel %vm325, %v2327, 0
    %v2334 = vsel %vm325, %v2329, 0
    %2336 = vmatprep.subr.bf16.mxu0 0
    %2337 = vmatpush1.bf16.xpose.msra.mxu0 %v2334
    %2338 = vmatprep.subr.bf16.mxu0 0
    %2339 = vmatpush1.bf16.xpose.msra.mxu0 0
    %2340 = vmatprep.subr.bf16.mxu0 0
    %2341 = vmatpush1.bf16.xpose.msra.mxu0 0
    %2342 = vmatprep.subr.bf16.mxu0 0
    %2343 = vmatpush1.bf16.xpose.msra.mxu0 0
    %2344 = vmatprep.subr.bf16.mxu0 0
    %2345 = vmatpush1.bf16.xpose.msra.mxu0 0
    %2346 = vmatprep.subr.bf16.mxu0 0
    %2347 = vmatpush1.bf16.xpose.msra.mxu0 0
    %2348 = vmatprep.subr.bf16.mxu0 0
    %2349 = vmatpush1.bf16.xpose.msra.mxu0 0
    %2350 = vmatprep.subr.bf16.mxu0 0
    %2351 = vmatpush1.bf16.xpose.msra.mxu0 0
    %2352 = vmatprep.subr.bf16.mxu0 0
    %2353 = vmatpush1.bf16.xpose.msra.mxu0 0
    %2354 = vmatprep.subr.bf16.mxu0 0
    %2355 = vmatpush1.bf16.xpose.msra.mxu0 0
    %2356 = vmatprep.subr.bf16.mxu0 0
    %2357 = vmatpush1.bf16.xpose.msra.mxu0 0
    %2358 = vmatprep.subr.bf16.mxu0 0
    %2359 = vmatpush1.bf16.xpose.msra.mxu0 0
    %2360 = vmatprep.subr.bf16.mxu0 0
    %2361 = vmatpush1.bf16.xpose.msra.mxu0 0
    %2362 = vmatprep.subr.bf16.mxu0 0
    %2363 = vmatpush1.bf16.xpose.msra.mxu0 0
    %2364 = vmatprep.subr.bf16.mxu0 0
    %2365 = vmatpush1.bf16.xpose.msra.mxu0 0
    %2366 = vmatprep.subr.bf16.mxu0 0
    %2367 = vmatpush1.bf16.xpose.msra.mxu0 0
    %2368 = vmatprep.mubr.bf16.mxu0 0
    %2369 = vmatmul.mubr.bf16.gmra.mrb[0].mxu0 %v2331
    %v2370 = vpop.f32.mrb[0].mxu0
    %v2371 = vadd.f32 %v313, %v2370
    %v2372 = vpop.f32.mrb[0].mxu0
    %v2373 = vpop.f32.mrb[0].mxu0
    %v2374 = vpop.f32.mrb[0].mxu0
    %2375 = vdwg.mxu0
    %2376 = vrot.lane.b32.xlu0 %v320, 112
    %v2377 = vpop.permute.xlu0 %2376
    %2378 = vrot.lane.b32.xlu0 %v320, 80
    %v2379 = vpop.permute.xlu0 %2378
    %v2381 = vsel %vm325, %v2377, 0
    %v2384 = vsel %vm325, %v2379, 0
    %2386 = vmatprep.subr.bf16.mxu0 0
    %2387 = vmatpush1.bf16.xpose.msra.mxu0 %v2384
    %2388 = vmatprep.subr.bf16.mxu0 0
    %2389 = vmatpush1.bf16.xpose.msra.mxu0 0
    %2390 = vmatprep.subr.bf16.mxu0 0
    %2391 = vmatpush1.bf16.xpose.msra.mxu0 0
    %2392 = vmatprep.subr.bf16.mxu0 0
    %2393 = vmatpush1.bf16.xpose.msra.mxu0 0
    %2394 = vmatprep.subr.bf16.mxu0 0
    %2395 = vmatpush1.bf16.xpose.msra.mxu0 0
    %2396 = vmatprep.subr.bf16.mxu0 0
    %2397 = vmatpush1.bf16.xpose.msra.mxu0 0
    %2398 = vmatprep.subr.bf16.mxu0 0
    %2399 = vmatpush1.bf16.xpose.msra.mxu0 0
    %2400 = vmatprep.subr.bf16.mxu0 0
    %2401 = vmatpush1.bf16.xpose.msra.mxu0 0
    %2402 = vmatprep.subr.bf16.mxu0 0
    %2403 = vmatpush1.bf16.xpose.msra.mxu0 0
    %2404 = vmatprep.subr.bf16.mxu0 0
    %2405 = vmatpush1.bf16.xpose.msra.mxu0 0
    %2406 = vmatprep.subr.bf16.mxu0 0
    %2407 = vmatpush1.bf16.xpose.msra.mxu0 0
    %2408 = vmatprep.subr.bf16.mxu0 0
    %2409 = vmatpush1.bf16.xpose.msra.mxu0 0
    %2410 = vmatprep.subr.bf16.mxu0 0
    %2411 = vmatpush1.bf16.xpose.msra.mxu0 0
    %2412 = vmatprep.subr.bf16.mxu0 0
    %2413 = vmatpush1.bf16.xpose.msra.mxu0 0
    %2414 = vmatprep.subr.bf16.mxu0 0
    %2415 = vmatpush1.bf16.xpose.msra.mxu0 0
    %2416 = vmatprep.subr.bf16.mxu0 0
    %2417 = vmatpush1.bf16.xpose.msra.mxu0 0
    %2418 = vmatprep.mubr.bf16.mxu0 0
    %2419 = vmatmul.mubr.bf16.gmra.mrb[0].mxu0 %v2381
    %v2420 = vpop.f32.mrb[0].mxu0
    %v2421 = vadd.f32 %v313, %v2420
    %v2422 = vpop.f32.mrb[0].mxu0
    %v2423 = vpop.f32.mrb[0].mxu0
    %v2424 = vpop.f32.mrb[0].mxu0
    %2425 = vdwg.mxu0
    %2426 = vrot.lane.b32.xlu0 %v321, 112
    %v2427 = vpop.permute.xlu0 %2426
    %2428 = vrot.lane.b32.xlu0 %v321, 80
    %v2429 = vpop.permute.xlu0 %2428
    %v2431 = vsel %vm325, %v2427, 0
    %v2434 = vsel %vm325, %v2429, 0
    %2436 = vmatprep.subr.bf16.mxu0 0
    %2437 = vmatpush1.bf16.xpose.msra.mxu0 %v2434
    %2438 = vmatprep.subr.bf16.mxu0 0
    %2439 = vmatpush1.bf16.xpose.msra.mxu0 0
    %2440 = vmatprep.subr.bf16.mxu0 0
    %2441 = vmatpush1.bf16.xpose.msra.mxu0 0
    %2442 = vmatprep.subr.bf16.mxu0 0
    %2443 = vmatpush1.bf16.xpose.msra.mxu0 0
    %2444 = vmatprep.subr.bf16.mxu0 0
    %2445 = vmatpush1.bf16.xpose.msra.mxu0 0
    %2446 = vmatprep.subr.bf16.mxu0 0
    %2447 = vmatpush1.bf16.xpose.msra.mxu0 0
    %2448 = vmatprep.subr.bf16.mxu0 0
    %2449 = vmatpush1.bf16.xpose.msra.mxu0 0
    %2450 = vmatprep.subr.bf16.mxu0 0
    %2451 = vmatpush1.bf16.xpose.msra.mxu0 0
    %2452 = vmatprep.subr.bf16.mxu0 0
    %2453 = vmatpush1.bf16.xpose.msra.mxu0 0
    %2454 = vmatprep.subr.bf16.mxu0 0
    %2455 = vmatpush1.bf16.xpose.msra.mxu0 0
    %2456 = vmatprep.subr.bf16.mxu0 0
    %2457 = vmatpush1.bf16.xpose.msra.mxu0 0
    %2458 = vmatprep.subr.bf16.mxu0 0
    %2459 = vmatpush1.bf16.xpose.msra.mxu0 0
    %2460 = vmatprep.subr.bf16.mxu0 0
    %2461 = vmatpush1.bf16.xpose.msra.mxu0 0
    %2462 = vmatprep.subr.bf16.mxu0 0
    %2463 = vmatpush1.bf16.xpose.msra.mxu0 0
    %2464 = vmatprep.subr.bf16.mxu0 0
    %2465 = vmatpush1.bf16.xpose.msra.mxu0 0
    %2466 = vmatprep.subr.bf16.mxu0 0
    %2467 = vmatpush1.bf16.xpose.msra.mxu0 0
    %2468 = vmatprep.mubr.bf16.mxu0 0
    %2469 = vmatmul.mubr.bf16.gmra.mrb[0].mxu0 %v2431
    %v2470 = vpop.f32.mrb[0].mxu0
    %v2471 = vadd.f32 %v313, %v2470
    %v2472 = vpop.f32.mrb[0].mxu0
    %v2473 = vpop.f32.mrb[0].mxu0
    %v2474 = vpop.f32.mrb[0].mxu0
    %2475 = vdwg.mxu0
    %v2476 = vsel %vm325, %v2121, -inf
    %2477 = vmax.xlane.f32.xlu0 %v2476
    %v2478 = vpop.xlane.xlu0 %2477
    %v2479 = vsel %vm325, %v2171, -inf
    %2480 = vmax.xlane.f32.xlu0 %v2479
    %v2481 = vpop.xlane.xlu0 %2480
    %v2482 = vsel %vm325, %v2221, -inf
    %2483 = vmax.xlane.f32.xlu0 %v2482
    %v2484 = vpop.xlane.xlu0 %2483
    %v2485 = vsel %vm325, %v2271, -inf
    %2486 = vmax.xlane.f32.xlu0 %v2485
    %v2487 = vpop.xlane.xlu0 %2486
    %v2488 = vsel %vm325, %v2321, -inf
    %2489 = vmax.xlane.f32.xlu0 %v2488
    %v2490 = vpop.xlane.xlu0 %2489
    %v2491 = vsel %vm325, %v2371, -inf
    %2492 = vmax.xlane.f32.xlu0 %v2491
    %v2493 = vpop.xlane.xlu0 %2492
    %v2494 = vsel %vm325, %v2421, -inf
    %2495 = vmax.xlane.f32.xlu0 %v2494
    %v2496 = vpop.xlane.xlu0 %2495
    %v2497 = vsel %vm325, %v2471, -inf
    %2498 = vmax.xlane.f32.xlu0 %v2497
    %v2499 = vpop.xlane.xlu0 %2498
    %v2500 = vsub.f32 %v2121, %v2478
    %v2501 = vsub.f32 %v2171, %v2481
    %v2502 = vsub.f32 %v2221, %v2484
    %v2503 = vsub.f32 %v2271, %v2487
    %v2504 = vsub.f32 %v2321, %v2490
    %v2505 = vsub.f32 %v2371, %v2493
    %v2506 = vsub.f32 %v2421, %v2496
    %v2507 = vsub.f32 %v2471, %v2499
    %v2508 = vmul.f32 %v2500, 1.442695
    %v2509 = vpow.pop %v2508
    %v2510 = vmul.f32 %v2501, 1.442695
    %v2511 = vpow.pop %v2510
    %v2512 = vmul.f32 %v2502, 1.442695
    %v2513 = vpow.pop %v2512
    %v2514 = vmul.f32 %v2503, 1.442695
    %v2515 = vpow.pop %v2514
    %v2516 = vmul.f32 %v2504, 1.442695
    %v2517 = vpow.pop %v2516
    %v2518 = vmul.f32 %v2505, 1.442695
    %v2519 = vpow.pop %v2518
    %v2520 = vmul.f32 %v2506, 1.442695
    %v2521 = vpow.pop %v2520
    %v2522 = vmul.f32 %v2507, 1.442695
    %v2523 = vpow.pop %v2522
    %v2524 = vsel %vm325, %v2509, 0.0
    %2525 = vadd.xlane.f32.xlu0 %v2524
    %v2526 = vpop.xlane.xlu0 %2525
    %v2527 = vsel %vm325, %v2511, 0.0
    %2528 = vadd.xlane.f32.xlu0 %v2527
    %v2529 = vpop.xlane.xlu0 %2528
    %v2530 = vsel %vm325, %v2513, 0.0
    %2531 = vadd.xlane.f32.xlu0 %v2530
    %v2532 = vpop.xlane.xlu0 %2531
    %v2533 = vsel %vm325, %v2515, 0.0
    %2534 = vadd.xlane.f32.xlu0 %v2533
    %v2535 = vpop.xlane.xlu0 %2534
    %v2536 = vsel %vm325, %v2517, 0.0
    %2537 = vadd.xlane.f32.xlu0 %v2536
    %v2538 = vpop.xlane.xlu0 %2537
    %v2539 = vsel %vm325, %v2519, 0.0
    %2540 = vadd.xlane.f32.xlu0 %v2539
    %v2541 = vpop.xlane.xlu0 %2540
    %v2542 = vsel %vm325, %v2521, 0.0
    %2543 = vadd.xlane.f32.xlu0 %v2542
    %v2544 = vpop.xlane.xlu0 %2543
    %v2545 = vsel %vm325, %v2523, 0.0
    %2546 = vadd.xlane.f32.xlu0 %v2545
    %v2547 = vpop.xlane.xlu0 %2546
    %v2548 = vrcp.pop %v2526
    %v2549 = vrcp.pop %v2529
    %v2550 = vrcp.pop %v2532
    %v2551 = vrcp.pop %v2535
    %v2552 = vrcp.pop %v2538
    %v2553 = vrcp.pop %v2541
    %v2554 = vrcp.pop %v2544
    %v2555 = vrcp.pop %v2547
    %v2556 = vmul.f32 %v2509, %v2548
    %v2557 = vmul.f32 %v2511, %v2549
    %v2558 = vmul.f32 %v2513, %v2550
    %v2559 = vmul.f32 %v2515, %v2551
    %v2560 = vmul.f32 %v2517, %v2552
    %v2561 = vmul.f32 %v2519, %v2553
    %v2562 = vmul.f32 %v2521, %v2554
    %v2563 = vmul.f32 %v2523, %v2555
    %v2564 = vpack.c.bf16 %v2556, %v2556
    %v2565 = vpack.c.bf16 %v2557, %v2557
    %v2566 = vpack.c.bf16 %v2558, %v2558
    %v2567 = vpack.c.bf16 %v2559, %v2559
    %v2568 = vpack.c.bf16 %v2560, %v2560
    %v2569 = vpack.c.bf16 %v2561, %v2561
    %v2570 = vpack.c.bf16 %v2562, %v2562
    %v2571 = vpack.c.bf16 %v2563, %v2563
    %2572 = vrot.lane.b32.xlu0 %v314, 48
    %v2573 = vpop.permute.xlu0 %2572
    %v2575 = vsel %vm325, %v2564, 0
    %v2578 = vsel %vm816, %v2573, 0
    %2580 = vmatprep.subr.bf16.mxu0 0
    %2581 = vmatpush1.bf16.msra.mxu0 %v2578
    %2582 = vmatprep.subr.bf16.mxu0 0
    %2583 = vmatpush1.bf16.msra.mxu0 0
    %2584 = vmatprep.subr.bf16.mxu0 0
    %2585 = vmatpush1.bf16.msra.mxu0 0
    %2586 = vmatprep.subr.bf16.mxu0 0
    %2587 = vmatpush1.bf16.msra.mxu0 0
    %2588 = vmatprep.subr.bf16.mxu0 0
    %2589 = vmatpush1.bf16.msra.mxu0 0
    %2590 = vmatprep.subr.bf16.mxu0 0
    %2591 = vmatpush1.bf16.msra.mxu0 0
    %2592 = vmatprep.subr.bf16.mxu0 0
    %2593 = vmatpush1.bf16.msra.mxu0 0
    %2594 = vmatprep.subr.bf16.mxu0 0
    %2595 = vmatpush1.bf16.msra.mxu0 0
    %2596 = vmatprep.subr.bf16.mxu0 0
    %2597 = vmatpush1.bf16.msra.mxu0 0
    %2598 = vmatprep.subr.bf16.mxu0 0
    %2599 = vmatpush1.bf16.msra.mxu0 0
    %2600 = vmatprep.subr.bf16.mxu0 0
    %2601 = vmatpush1.bf16.msra.mxu0 0
    %2602 = vmatprep.subr.bf16.mxu0 0
    %2603 = vmatpush1.bf16.msra.mxu0 0
    %2604 = vmatprep.subr.bf16.mxu0 0
    %2605 = vmatpush1.bf16.msra.mxu0 0
    %2606 = vmatprep.subr.bf16.mxu0 0
    %2607 = vmatpush1.bf16.msra.mxu0 0
    %2608 = vmatprep.subr.bf16.mxu0 0
    %2609 = vmatpush1.bf16.msra.mxu0 0
    %2610 = vmatprep.subr.bf16.mxu0 0
    %2611 = vmatpush1.bf16.msra.mxu0 0
    %2612 = vmatprep.mubr.bf16.mxu0 0
    %2613 = vmatmul.mubr.bf16.gmra.mrb[0].mxu0 %v2575
    %v2614 = vpop.f32.mrb[0].mxu0
    %v2615 = vadd.f32 0.0, %v2614
    %v2616 = vpop.f32.mrb[0].mxu0
    %v2617 = vpop.f32.mrb[0].mxu0
    %v2618 = vpop.f32.mrb[0].mxu0
    %2619 = vdwg.mxu0
    %2620 = vrot.lane.b32.xlu0 %v315, 48
    %v2621 = vpop.permute.xlu0 %2620
    %v2623 = vsel %vm325, %v2565, 0
    %v2626 = vsel %vm816, %v2621, 0
    %2628 = vmatprep.subr.bf16.mxu0 0
    %2629 = vmatpush1.bf16.msra.mxu0 %v2626
    %2630 = vmatprep.subr.bf16.mxu0 0
    %2631 = vmatpush1.bf16.msra.mxu0 0
    %2632 = vmatprep.subr.bf16.mxu0 0
    %2633 = vmatpush1.bf16.msra.mxu0 0
    %2634 = vmatprep.subr.bf16.mxu0 0
    %2635 = vmatpush1.bf16.msra.mxu0 0
    %2636 = vmatprep.subr.bf16.mxu0 0
    %2637 = vmatpush1.bf16.msra.mxu0 0
    %2638 = vmatprep.subr.bf16.mxu0 0
    %2639 = vmatpush1.bf16.msra.mxu0 0
    %2640 = vmatprep.subr.bf16.mxu0 0
    %2641 = vmatpush1.bf16.msra.mxu0 0
    %2642 = vmatprep.subr.bf16.mxu0 0
    %2643 = vmatpush1.bf16.msra.mxu0 0
    %2644 = vmatprep.subr.bf16.mxu0 0
    %2645 = vmatpush1.bf16.msra.mxu0 0
    %2646 = vmatprep.subr.bf16.mxu0 0
    %2647 = vmatpush1.bf16.msra.mxu0 0
    %2648 = vmatprep.subr.bf16.mxu0 0
    %2649 = vmatpush1.bf16.msra.mxu0 0
    %2650 = vmatprep.subr.bf16.mxu0 0
    %2651 = vmatpush1.bf16.msra.mxu0 0
    %2652 = vmatprep.subr.bf16.mxu0 0
    %2653 = vmatpush1.bf16.msra.mxu0 0
    %2654 = vmatprep.subr.bf16.mxu0 0
    %2655 = vmatpush1.bf16.msra.mxu0 0
    %2656 = vmatprep.subr.bf16.mxu0 0
    %2657 = vmatpush1.bf16.msra.mxu0 0
    %2658 = vmatprep.subr.bf16.mxu0 0
    %2659 = vmatpush1.bf16.msra.mxu0 0
    %2660 = vmatprep.mubr.bf16.mxu0 0
    %2661 = vmatmul.mubr.bf16.gmra.mrb[0].mxu0 %v2623
    %v2662 = vpop.f32.mrb[0].mxu0
    %v2663 = vadd.f32 0.0, %v2662
    %v2664 = vpop.f32.mrb[0].mxu0
    %v2665 = vpop.f32.mrb[0].mxu0
    %v2666 = vpop.f32.mrb[0].mxu0
    %2667 = vdwg.mxu0
    %2668 = vrot.lane.b32.xlu0 %v316, 48
    %v2669 = vpop.permute.xlu0 %2668
    %v2671 = vsel %vm325, %v2566, 0
    %v2674 = vsel %vm816, %v2669, 0
    %2676 = vmatprep.subr.bf16.mxu0 0
    %2677 = vmatpush1.bf16.msra.mxu0 %v2674
    %2678 = vmatprep.subr.bf16.mxu0 0
    %2679 = vmatpush1.bf16.msra.mxu0 0
    %2680 = vmatprep.subr.bf16.mxu0 0
    %2681 = vmatpush1.bf16.msra.mxu0 0
    %2682 = vmatprep.subr.bf16.mxu0 0
    %2683 = vmatpush1.bf16.msra.mxu0 0
    %2684 = vmatprep.subr.bf16.mxu0 0
    %2685 = vmatpush1.bf16.msra.mxu0 0
    %2686 = vmatprep.subr.bf16.mxu0 0
    %2687 = vmatpush1.bf16.msra.mxu0 0
    %2688 = vmatprep.subr.bf16.mxu0 0
    %2689 = vmatpush1.bf16.msra.mxu0 0
    %2690 = vmatprep.subr.bf16.mxu0 0
    %2691 = vmatpush1.bf16.msra.mxu0 0
    %2692 = vmatprep.subr.bf16.mxu0 0
    %2693 = vmatpush1.bf16.msra.mxu0 0
    %2694 = vmatprep.subr.bf16.mxu0 0
    %2695 = vmatpush1.bf16.msra.mxu0 0
    %2696 = vmatprep.subr.bf16.mxu0 0
    %2697 = vmatpush1.bf16.msra.mxu0 0
    %2698 = vmatprep.subr.bf16.mxu0 0
    %2699 = vmatpush1.bf16.msra.mxu0 0
    %2700 = vmatprep.subr.bf16.mxu0 0
    %2701 = vmatpush1.bf16.msra.mxu0 0
    %2702 = vmatprep.subr.bf16.mxu0 0
    %2703 = vmatpush1.bf16.msra.mxu0 0
    %2704 = vmatprep.subr.bf16.mxu0 0
    %2705 = vmatpush1.bf16.msra.mxu0 0
    %2706 = vmatprep.subr.bf16.mxu0 0
    %2707 = vmatpush1.bf16.msra.mxu0 0
    %2708 = vmatprep.mubr.bf16.mxu0 0
    %2709 = vmatmul.mubr.bf16.gmra.mrb[0].mxu0 %v2671
    %v2710 = vpop.f32.mrb[0].mxu0
    %v2711 = vadd.f32 0.0, %v2710
    %v2712 = vpop.f32.mrb[0].mxu0
    %v2713 = vpop.f32.mrb[0].mxu0
    %v2714 = vpop.f32.mrb[0].mxu0
    %2715 = vdwg.mxu0
    %2716 = vrot.lane.b32.xlu0 %v317, 48
    %v2717 = vpop.permute.xlu0 %2716
    %v2719 = vsel %vm325, %v2567, 0
    %v2722 = vsel %vm816, %v2717, 0
    %2724 = vmatprep.subr.bf16.mxu0 0
    %2725 = vmatpush1.bf16.msra.mxu0 %v2722
    %2726 = vmatprep.subr.bf16.mxu0 0
    %2727 = vmatpush1.bf16.msra.mxu0 0
    %2728 = vmatprep.subr.bf16.mxu0 0
    %2729 = vmatpush1.bf16.msra.mxu0 0
    %2730 = vmatprep.subr.bf16.mxu0 0
    %2731 = vmatpush1.bf16.msra.mxu0 0
    %2732 = vmatprep.subr.bf16.mxu0 0
    %2733 = vmatpush1.bf16.msra.mxu0 0
    %2734 = vmatprep.subr.bf16.mxu0 0
    %2735 = vmatpush1.bf16.msra.mxu0 0
    %2736 = vmatprep.subr.bf16.mxu0 0
    %2737 = vmatpush1.bf16.msra.mxu0 0
    %2738 = vmatprep.subr.bf16.mxu0 0
    %2739 = vmatpush1.bf16.msra.mxu0 0
    %2740 = vmatprep.subr.bf16.mxu0 0
    %2741 = vmatpush1.bf16.msra.mxu0 0
    %2742 = vmatprep.subr.bf16.mxu0 0
    %2743 = vmatpush1.bf16.msra.mxu0 0
    %2744 = vmatprep.subr.bf16.mxu0 0
    %2745 = vmatpush1.bf16.msra.mxu0 0
    %2746 = vmatprep.subr.bf16.mxu0 0
    %2747 = vmatpush1.bf16.msra.mxu0 0
    %2748 = vmatprep.subr.bf16.mxu0 0
    %2749 = vmatpush1.bf16.msra.mxu0 0
    %2750 = vmatprep.subr.bf16.mxu0 0
    %2751 = vmatpush1.bf16.msra.mxu0 0
    %2752 = vmatprep.subr.bf16.mxu0 0
    %2753 = vmatpush1.bf16.msra.mxu0 0
    %2754 = vmatprep.subr.bf16.mxu0 0
    %2755 = vmatpush1.bf16.msra.mxu0 0
    %2756 = vmatprep.mubr.bf16.mxu0 0
    %2757 = vmatmul.mubr.bf16.gmra.mrb[0].mxu0 %v2719
    %v2758 = vpop.f32.mrb[0].mxu0
    %v2759 = vadd.f32 0.0, %v2758
    %v2760 = vpop.f32.mrb[0].mxu0
    %v2761 = vpop.f32.mrb[0].mxu0
    %v2762 = vpop.f32.mrb[0].mxu0
    %2763 = vdwg.mxu0
    %2764 = vrot.lane.b32.xlu0 %v318, 48
    %v2765 = vpop.permute.xlu0 %2764
    %v2767 = vsel %vm325, %v2568, 0
    %v2770 = vsel %vm816, %v2765, 0
    %2772 = vmatprep.subr.bf16.mxu0 0
    %2773 = vmatpush1.bf16.msra.mxu0 %v2770
    %2774 = vmatprep.subr.bf16.mxu0 0
    %2775 = vmatpush1.bf16.msra.mxu0 0
    %2776 = vmatprep.subr.bf16.mxu0 0
    %2777 = vmatpush1.bf16.msra.mxu0 0
    %2778 = vmatprep.subr.bf16.mxu0 0
    %2779 = vmatpush1.bf16.msra.mxu0 0
    %2780 = vmatprep.subr.bf16.mxu0 0
    %2781 = vmatpush1.bf16.msra.mxu0 0
    %2782 = vmatprep.subr.bf16.mxu0 0
    %2783 = vmatpush1.bf16.msra.mxu0 0
    %2784 = vmatprep.subr.bf16.mxu0 0
    %2785 = vmatpush1.bf16.msra.mxu0 0
    %2786 = vmatprep.subr.bf16.mxu0 0
    %2787 = vmatpush1.bf16.msra.mxu0 0
    %2788 = vmatprep.subr.bf16.mxu0 0
    %2789 = vmatpush1.bf16.msra.mxu0 0
    %2790 = vmatprep.subr.bf16.mxu0 0
    %2791 = vmatpush1.bf16.msra.mxu0 0
    %2792 = vmatprep.subr.bf16.mxu0 0
    %2793 = vmatpush1.bf16.msra.mxu0 0
    %2794 = vmatprep.subr.bf16.mxu0 0
    %2795 = vmatpush1.bf16.msra.mxu0 0
    %2796 = vmatprep.subr.bf16.mxu0 0
    %2797 = vmatpush1.bf16.msra.mxu0 0
    %2798 = vmatprep.subr.bf16.mxu0 0
    %2799 = vmatpush1.bf16.msra.mxu0 0
    %2800 = vmatprep.subr.bf16.mxu0 0
    %2801 = vmatpush1.bf16.msra.mxu0 0
    %2802 = vmatprep.subr.bf16.mxu0 0
    %2803 = vmatpush1.bf16.msra.mxu0 0
    %2804 = vmatprep.mubr.bf16.mxu0 0
    %2805 = vmatmul.mubr.bf16.gmra.mrb[0].mxu0 %v2767
    %v2806 = vpop.f32.mrb[0].mxu0
    %v2807 = vadd.f32 0.0, %v2806
    %v2808 = vpop.f32.mrb[0].mxu0
    %v2809 = vpop.f32.mrb[0].mxu0
    %v2810 = vpop.f32.mrb[0].mxu0
    %2811 = vdwg.mxu0
    %2812 = vrot.lane.b32.xlu0 %v319, 48
    %v2813 = vpop.permute.xlu0 %2812
    %v2815 = vsel %vm325, %v2569, 0
    %v2818 = vsel %vm816, %v2813, 0
    %2820 = vmatprep.subr.bf16.mxu0 0
    %2821 = vmatpush1.bf16.msra.mxu0 %v2818
    %2822 = vmatprep.subr.bf16.mxu0 0
    %2823 = vmatpush1.bf16.msra.mxu0 0
    %2824 = vmatprep.subr.bf16.mxu0 0
    %2825 = vmatpush1.bf16.msra.mxu0 0
    %2826 = vmatprep.subr.bf16.mxu0 0
    %2827 = vmatpush1.bf16.msra.mxu0 0
    %2828 = vmatprep.subr.bf16.mxu0 0
    %2829 = vmatpush1.bf16.msra.mxu0 0
    %2830 = vmatprep.subr.bf16.mxu0 0
    %2831 = vmatpush1.bf16.msra.mxu0 0
    %2832 = vmatprep.subr.bf16.mxu0 0
    %2833 = vmatpush1.bf16.msra.mxu0 0
    %2834 = vmatprep.subr.bf16.mxu0 0
    %2835 = vmatpush1.bf16.msra.mxu0 0
    %2836 = vmatprep.subr.bf16.mxu0 0
    %2837 = vmatpush1.bf16.msra.mxu0 0
    %2838 = vmatprep.subr.bf16.mxu0 0
    %2839 = vmatpush1.bf16.msra.mxu0 0
    %2840 = vmatprep.subr.bf16.mxu0 0
    %2841 = vmatpush1.bf16.msra.mxu0 0
    %2842 = vmatprep.subr.bf16.mxu0 0
    %2843 = vmatpush1.bf16.msra.mxu0 0
    %2844 = vmatprep.subr.bf16.mxu0 0
    %2845 = vmatpush1.bf16.msra.mxu0 0
    %2846 = vmatprep.subr.bf16.mxu0 0
    %2847 = vmatpush1.bf16.msra.mxu0 0
    %2848 = vmatprep.subr.bf16.mxu0 0
    %2849 = vmatpush1.bf16.msra.mxu0 0
    %2850 = vmatprep.subr.bf16.mxu0 0
    %2851 = vmatpush1.bf16.msra.mxu0 0
    %2852 = vmatprep.mubr.bf16.mxu0 0
    %2853 = vmatmul.mubr.bf16.gmra.mrb[0].mxu0 %v2815
    %v2854 = vpop.f32.mrb[0].mxu0
    %v2855 = vadd.f32 0.0, %v2854
    %v2856 = vpop.f32.mrb[0].mxu0
    %v2857 = vpop.f32.mrb[0].mxu0
    %v2858 = vpop.f32.mrb[0].mxu0
    %2859 = vdwg.mxu0
    %2860 = vrot.lane.b32.xlu0 %v320, 48
    %v2861 = vpop.permute.xlu0 %2860
    %v2863 = vsel %vm325, %v2570, 0
    %v2866 = vsel %vm816, %v2861, 0
    %2868 = vmatprep.subr.bf16.mxu0 0
    %2869 = vmatpush1.bf16.msra.mxu0 %v2866
    %2870 = vmatprep.subr.bf16.mxu0 0
    %2871 = vmatpush1.bf16.msra.mxu0 0
    %2872 = vmatprep.subr.bf16.mxu0 0
    %2873 = vmatpush1.bf16.msra.mxu0 0
    %2874 = vmatprep.subr.bf16.mxu0 0
    %2875 = vmatpush1.bf16.msra.mxu0 0
    %2876 = vmatprep.subr.bf16.mxu0 0
    %2877 = vmatpush1.bf16.msra.mxu0 0
    %2878 = vmatprep.subr.bf16.mxu0 0
    %2879 = vmatpush1.bf16.msra.mxu0 0
    %2880 = vmatprep.subr.bf16.mxu0 0
    %2881 = vmatpush1.bf16.msra.mxu0 0
    %2882 = vmatprep.subr.bf16.mxu0 0
    %2883 = vmatpush1.bf16.msra.mxu0 0
    %2884 = vmatprep.subr.bf16.mxu0 0
    %2885 = vmatpush1.bf16.msra.mxu0 0
    %2886 = vmatprep.subr.bf16.mxu0 0
    %2887 = vmatpush1.bf16.msra.mxu0 0
    %2888 = vmatprep.subr.bf16.mxu0 0
    %2889 = vmatpush1.bf16.msra.mxu0 0
    %2890 = vmatprep.subr.bf16.mxu0 0
    %2891 = vmatpush1.bf16.msra.mxu0 0
    %2892 = vmatprep.subr.bf16.mxu0 0
    %2893 = vmatpush1.bf16.msra.mxu0 0
    %2894 = vmatprep.subr.bf16.mxu0 0
    %2895 = vmatpush1.bf16.msra.mxu0 0
    %2896 = vmatprep.subr.bf16.mxu0 0
    %2897 = vmatpush1.bf16.msra.mxu0 0
    %2898 = vmatprep.subr.bf16.mxu0 0
    %2899 = vmatpush1.bf16.msra.mxu0 0
    %2900 = vmatprep.mubr.bf16.mxu0 0
    %2901 = vmatmul.mubr.bf16.gmra.mrb[0].mxu0 %v2863
    %v2902 = vpop.f32.mrb[0].mxu0
    %v2903 = vadd.f32 0.0, %v2902
    %v2904 = vpop.f32.mrb[0].mxu0
    %v2905 = vpop.f32.mrb[0].mxu0
    %v2906 = vpop.f32.mrb[0].mxu0
    %2907 = vdwg.mxu0
    %2908 = vrot.lane.b32.xlu0 %v321, 48
    %v2909 = vpop.permute.xlu0 %2908
    %v2911 = vsel %vm325, %v2571, 0
    %v2914 = vsel %vm816, %v2909, 0
    %2916 = vmatprep.subr.bf16.mxu0 0
    %2917 = vmatpush1.bf16.msra.mxu0 %v2914
    %2918 = vmatprep.subr.bf16.mxu0 0
    %2919 = vmatpush1.bf16.msra.mxu0 0
    %2920 = vmatprep.subr.bf16.mxu0 0
    %2921 = vmatpush1.bf16.msra.mxu0 0
    %2922 = vmatprep.subr.bf16.mxu0 0
    %2923 = vmatpush1.bf16.msra.mxu0 0
    %2924 = vmatprep.subr.bf16.mxu0 0
    %2925 = vmatpush1.bf16.msra.mxu0 0
    %2926 = vmatprep.subr.bf16.mxu0 0
    %2927 = vmatpush1.bf16.msra.mxu0 0
    %2928 = vmatprep.subr.bf16.mxu0 0
    %2929 = vmatpush1.bf16.msra.mxu0 0
    %2930 = vmatprep.subr.bf16.mxu0 0
    %2931 = vmatpush1.bf16.msra.mxu0 0
    %2932 = vmatprep.subr.bf16.mxu0 0
    %2933 = vmatpush1.bf16.msra.mxu0 0
    %2934 = vmatprep.subr.bf16.mxu0 0
    %2935 = vmatpush1.bf16.msra.mxu0 0
    %2936 = vmatprep.subr.bf16.mxu0 0
    %2937 = vmatpush1.bf16.msra.mxu0 0
    %2938 = vmatprep.subr.bf16.mxu0 0
    %2939 = vmatpush1.bf16.msra.mxu0 0
    %2940 = vmatprep.subr.bf16.mxu0 0
    %2941 = vmatpush1.bf16.msra.mxu0 0
    %2942 = vmatprep.subr.bf16.mxu0 0
    %2943 = vmatpush1.bf16.msra.mxu0 0
    %2944 = vmatprep.subr.bf16.mxu0 0
    %2945 = vmatpush1.bf16.msra.mxu0 0
    %2946 = vmatprep.subr.bf16.mxu0 0
    %2947 = vmatpush1.bf16.msra.mxu0 0
    %2948 = vmatprep.mubr.bf16.mxu0 0
    %2949 = vmatmul.mubr.bf16.gmra.mrb[0].mxu0 %v2911
    %v2950 = vpop.f32.mrb[0].mxu0
    %v2951 = vadd.f32 0.0, %v2950
    %v2952 = vpop.f32.mrb[0].mxu0
    %v2953 = vpop.f32.mrb[0].mxu0
    %v2954 = vpop.f32.mrb[0].mxu0
    %2955 = vdwg.mxu0
    %2956 = vrot.lane.b32.xlu0 %v314, 104
    %v2957 = vpop.permute.xlu0 %2956
    %2958 = vrot.lane.b32.xlu0 %v314, 72
    %v2959 = vpop.permute.xlu0 %2958
    %v2961 = vsel %vm325, %v2957, 0
    %v2964 = vsel %vm325, %v2959, 0
    %2966 = vmatprep.subr.bf16.mxu0 0
    %2967 = vmatpush1.bf16.xpose.msra.mxu0 %v2964
    %2968 = vmatprep.subr.bf16.mxu0 0
    %2969 = vmatpush1.bf16.xpose.msra.mxu0 0
    %2970 = vmatprep.subr.bf16.mxu0 0
    %2971 = vmatpush1.bf16.xpose.msra.mxu0 0
    %2972 = vmatprep.subr.bf16.mxu0 0
    %2973 = vmatpush1.bf16.xpose.msra.mxu0 0
    %2974 = vmatprep.subr.bf16.mxu0 0
    %2975 = vmatpush1.bf16.xpose.msra.mxu0 0
    %2976 = vmatprep.subr.bf16.mxu0 0
    %2977 = vmatpush1.bf16.xpose.msra.mxu0 0
    %2978 = vmatprep.subr.bf16.mxu0 0
    %2979 = vmatpush1.bf16.xpose.msra.mxu0 0
    %2980 = vmatprep.subr.bf16.mxu0 0
    %2981 = vmatpush1.bf16.xpose.msra.mxu0 0
    %2982 = vmatprep.subr.bf16.mxu0 0
    %2983 = vmatpush1.bf16.xpose.msra.mxu0 0
    %2984 = vmatprep.subr.bf16.mxu0 0
    %2985 = vmatpush1.bf16.xpose.msra.mxu0 0
    %2986 = vmatprep.subr.bf16.mxu0 0
    %2987 = vmatpush1.bf16.xpose.msra.mxu0 0
    %2988 = vmatprep.subr.bf16.mxu0 0
    %2989 = vmatpush1.bf16.xpose.msra.mxu0 0
    %2990 = vmatprep.subr.bf16.mxu0 0
    %2991 = vmatpush1.bf16.xpose.msra.mxu0 0
    %2992 = vmatprep.subr.bf16.mxu0 0
    %2993 = vmatpush1.bf16.xpose.msra.mxu0 0
    %2994 = vmatprep.subr.bf16.mxu0 0
    %2995 = vmatpush1.bf16.xpose.msra.mxu0 0
    %2996 = vmatprep.subr.bf16.mxu0 0
    %2997 = vmatpush1.bf16.xpose.msra.mxu0 0
    %2998 = vmatprep.mubr.bf16.mxu0 0
    %2999 = vmatmul.mubr.bf16.gmra.mrb[0].mxu0 %v2961
    %v3000 = vpop.f32.mrb[0].mxu0
    %v3001 = vadd.f32 %v313, %v3000
    %v3002 = vpop.f32.mrb[0].mxu0
    %v3003 = vpop.f32.mrb[0].mxu0
    %v3004 = vpop.f32.mrb[0].mxu0
    %3005 = vdwg.mxu0
    %3006 = vrot.lane.b32.xlu0 %v315, 104
    %v3007 = vpop.permute.xlu0 %3006
    %3008 = vrot.lane.b32.xlu0 %v315, 72
    %v3009 = vpop.permute.xlu0 %3008
    %v3011 = vsel %vm325, %v3007, 0
    %v3014 = vsel %vm325, %v3009, 0
    %3016 = vmatprep.subr.bf16.mxu0 0
    %3017 = vmatpush1.bf16.xpose.msra.mxu0 %v3014
    %3018 = vmatprep.subr.bf16.mxu0 0
    %3019 = vmatpush1.bf16.xpose.msra.mxu0 0
    %3020 = vmatprep.subr.bf16.mxu0 0
    %3021 = vmatpush1.bf16.xpose.msra.mxu0 0
    %3022 = vmatprep.subr.bf16.mxu0 0
    %3023 = vmatpush1.bf16.xpose.msra.mxu0 0
    %3024 = vmatprep.subr.bf16.mxu0 0
    %3025 = vmatpush1.bf16.xpose.msra.mxu0 0
    %3026 = vmatprep.subr.bf16.mxu0 0
    %3027 = vmatpush1.bf16.xpose.msra.mxu0 0
    %3028 = vmatprep.subr.bf16.mxu0 0
    %3029 = vmatpush1.bf16.xpose.msra.mxu0 0
    %3030 = vmatprep.subr.bf16.mxu0 0
    %3031 = vmatpush1.bf16.xpose.msra.mxu0 0
    %3032 = vmatprep.subr.bf16.mxu0 0
    %3033 = vmatpush1.bf16.xpose.msra.mxu0 0
    %3034 = vmatprep.subr.bf16.mxu0 0
    %3035 = vmatpush1.bf16.xpose.msra.mxu0 0
    %3036 = vmatprep.subr.bf16.mxu0 0
    %3037 = vmatpush1.bf16.xpose.msra.mxu0 0
    %3038 = vmatprep.subr.bf16.mxu0 0
    %3039 = vmatpush1.bf16.xpose.msra.mxu0 0
    %3040 = vmatprep.subr.bf16.mxu0 0
    %3041 = vmatpush1.bf16.xpose.msra.mxu0 0
    %3042 = vmatprep.subr.bf16.mxu0 0
    %3043 = vmatpush1.bf16.xpose.msra.mxu0 0
    %3044 = vmatprep.subr.bf16.mxu0 0
    %3045 = vmatpush1.bf16.xpose.msra.mxu0 0
    %3046 = vmatprep.subr.bf16.mxu0 0
    %3047 = vmatpush1.bf16.xpose.msra.mxu0 0
    %3048 = vmatprep.mubr.bf16.mxu0 0
    %3049 = vmatmul.mubr.bf16.gmra.mrb[0].mxu0 %v3011
    %v3050 = vpop.f32.mrb[0].mxu0
    %v3051 = vadd.f32 %v313, %v3050
    %v3052 = vpop.f32.mrb[0].mxu0
    %v3053 = vpop.f32.mrb[0].mxu0
    %v3054 = vpop.f32.mrb[0].mxu0
    %3055 = vdwg.mxu0
    %3056 = vrot.lane.b32.xlu0 %v316, 104
    %v3057 = vpop.permute.xlu0 %3056
    %3058 = vrot.lane.b32.xlu0 %v316, 72
    %v3059 = vpop.permute.xlu0 %3058
    %v3061 = vsel %vm325, %v3057, 0
    %v3064 = vsel %vm325, %v3059, 0
    %3066 = vmatprep.subr.bf16.mxu0 0
    %3067 = vmatpush1.bf16.xpose.msra.mxu0 %v3064
    %3068 = vmatprep.subr.bf16.mxu0 0
    %3069 = vmatpush1.bf16.xpose.msra.mxu0 0
    %3070 = vmatprep.subr.bf16.mxu0 0
    %3071 = vmatpush1.bf16.xpose.msra.mxu0 0
    %3072 = vmatprep.subr.bf16.mxu0 0
    %3073 = vmatpush1.bf16.xpose.msra.mxu0 0
    %3074 = vmatprep.subr.bf16.mxu0 0
    %3075 = vmatpush1.bf16.xpose.msra.mxu0 0
    %3076 = vmatprep.subr.bf16.mxu0 0
    %3077 = vmatpush1.bf16.xpose.msra.mxu0 0
    %3078 = vmatprep.subr.bf16.mxu0 0
    %3079 = vmatpush1.bf16.xpose.msra.mxu0 0
    %3080 = vmatprep.subr.bf16.mxu0 0
    %3081 = vmatpush1.bf16.xpose.msra.mxu0 0
    %3082 = vmatprep.subr.bf16.mxu0 0
    %3083 = vmatpush1.bf16.xpose.msra.mxu0 0
    %3084 = vmatprep.subr.bf16.mxu0 0
    %3085 = vmatpush1.bf16.xpose.msra.mxu0 0
    %3086 = vmatprep.subr.bf16.mxu0 0
    %3087 = vmatpush1.bf16.xpose.msra.mxu0 0
    %3088 = vmatprep.subr.bf16.mxu0 0
    %3089 = vmatpush1.bf16.xpose.msra.mxu0 0
    %3090 = vmatprep.subr.bf16.mxu0 0
    %3091 = vmatpush1.bf16.xpose.msra.mxu0 0
    %3092 = vmatprep.subr.bf16.mxu0 0
    %3093 = vmatpush1.bf16.xpose.msra.mxu0 0
    %3094 = vmatprep.subr.bf16.mxu0 0
    %3095 = vmatpush1.bf16.xpose.msra.mxu0 0
    %3096 = vmatprep.subr.bf16.mxu0 0
    %3097 = vmatpush1.bf16.xpose.msra.mxu0 0
    %3098 = vmatprep.mubr.bf16.mxu0 0
    %3099 = vmatmul.mubr.bf16.gmra.mrb[0].mxu0 %v3061
    %v3100 = vpop.f32.mrb[0].mxu0
    %v3101 = vadd.f32 %v313, %v3100
    %v3102 = vpop.f32.mrb[0].mxu0
    %v3103 = vpop.f32.mrb[0].mxu0
    %v3104 = vpop.f32.mrb[0].mxu0
    %3105 = vdwg.mxu0
    %3106 = vrot.lane.b32.xlu0 %v317, 104
    %v3107 = vpop.permute.xlu0 %3106
    %3108 = vrot.lane.b32.xlu0 %v317, 72
    %v3109 = vpop.permute.xlu0 %3108
    %v3111 = vsel %vm325, %v3107, 0
    %v3114 = vsel %vm325, %v3109, 0
    %3116 = vmatprep.subr.bf16.mxu0 0
    %3117 = vmatpush1.bf16.xpose.msra.mxu0 %v3114
    %3118 = vmatprep.subr.bf16.mxu0 0
    %3119 = vmatpush1.bf16.xpose.msra.mxu0 0
    %3120 = vmatprep.subr.bf16.mxu0 0
    %3121 = vmatpush1.bf16.xpose.msra.mxu0 0
    %3122 = vmatprep.subr.bf16.mxu0 0
    %3123 = vmatpush1.bf16.xpose.msra.mxu0 0
    %3124 = vmatprep.subr.bf16.mxu0 0
    %3125 = vmatpush1.bf16.xpose.msra.mxu0 0
    %3126 = vmatprep.subr.bf16.mxu0 0
    %3127 = vmatpush1.bf16.xpose.msra.mxu0 0
    %3128 = vmatprep.subr.bf16.mxu0 0
    %3129 = vmatpush1.bf16.xpose.msra.mxu0 0
    %3130 = vmatprep.subr.bf16.mxu0 0
    %3131 = vmatpush1.bf16.xpose.msra.mxu0 0
    %3132 = vmatprep.subr.bf16.mxu0 0
    %3133 = vmatpush1.bf16.xpose.msra.mxu0 0
    %3134 = vmatprep.subr.bf16.mxu0 0
    %3135 = vmatpush1.bf16.xpose.msra.mxu0 0
    %3136 = vmatprep.subr.bf16.mxu0 0
    %3137 = vmatpush1.bf16.xpose.msra.mxu0 0
    %3138 = vmatprep.subr.bf16.mxu0 0
    %3139 = vmatpush1.bf16.xpose.msra.mxu0 0
    %3140 = vmatprep.subr.bf16.mxu0 0
    %3141 = vmatpush1.bf16.xpose.msra.mxu0 0
    %3142 = vmatprep.subr.bf16.mxu0 0
    %3143 = vmatpush1.bf16.xpose.msra.mxu0 0
    %3144 = vmatprep.subr.bf16.mxu0 0
    %3145 = vmatpush1.bf16.xpose.msra.mxu0 0
    %3146 = vmatprep.subr.bf16.mxu0 0
    %3147 = vmatpush1.bf16.xpose.msra.mxu0 0
    %3148 = vmatprep.mubr.bf16.mxu0 0
    %3149 = vmatmul.mubr.bf16.gmra.mrb[0].mxu0 %v3111
    %v3150 = vpop.f32.mrb[0].mxu0
    %v3151 = vadd.f32 %v313, %v3150
    %v3152 = vpop.f32.mrb[0].mxu0
    %v3153 = vpop.f32.mrb[0].mxu0
    %v3154 = vpop.f32.mrb[0].mxu0
    %3155 = vdwg.mxu0
    %3156 = vrot.lane.b32.xlu0 %v318, 104
    %v3157 = vpop.permute.xlu0 %3156
    %3158 = vrot.lane.b32.xlu0 %v318, 72
    %v3159 = vpop.permute.xlu0 %3158
    %v3161 = vsel %vm325, %v3157, 0
    %v3164 = vsel %vm325, %v3159, 0
    %3166 = vmatprep.subr.bf16.mxu0 0
    %3167 = vmatpush1.bf16.xpose.msra.mxu0 %v3164
    %3168 = vmatprep.subr.bf16.mxu0 0
    %3169 = vmatpush1.bf16.xpose.msra.mxu0 0
    %3170 = vmatprep.subr.bf16.mxu0 0
    %3171 = vmatpush1.bf16.xpose.msra.mxu0 0
    %3172 = vmatprep.subr.bf16.mxu0 0
    %3173 = vmatpush1.bf16.xpose.msra.mxu0 0
    %3174 = vmatprep.subr.bf16.mxu0 0
    %3175 = vmatpush1.bf16.xpose.msra.mxu0 0
    %3176 = vmatprep.subr.bf16.mxu0 0
    %3177 = vmatpush1.bf16.xpose.msra.mxu0 0
    %3178 = vmatprep.subr.bf16.mxu0 0
    %3179 = vmatpush1.bf16.xpose.msra.mxu0 0
    %3180 = vmatprep.subr.bf16.mxu0 0
    %3181 = vmatpush1.bf16.xpose.msra.mxu0 0
    %3182 = vmatprep.subr.bf16.mxu0 0
    %3183 = vmatpush1.bf16.xpose.msra.mxu0 0
    %3184 = vmatprep.subr.bf16.mxu0 0
    %3185 = vmatpush1.bf16.xpose.msra.mxu0 0
    %3186 = vmatprep.subr.bf16.mxu0 0
    %3187 = vmatpush1.bf16.xpose.msra.mxu0 0
    %3188 = vmatprep.subr.bf16.mxu0 0
    %3189 = vmatpush1.bf16.xpose.msra.mxu0 0
    %3190 = vmatprep.subr.bf16.mxu0 0
    %3191 = vmatpush1.bf16.xpose.msra.mxu0 0
    %3192 = vmatprep.subr.bf16.mxu0 0
    %3193 = vmatpush1.bf16.xpose.msra.mxu0 0
    %3194 = vmatprep.subr.bf16.mxu0 0
    %3195 = vmatpush1.bf16.xpose.msra.mxu0 0
    %3196 = vmatprep.subr.bf16.mxu0 0
    %3197 = vmatpush1.bf16.xpose.msra.mxu0 0
    %3198 = vmatprep.mubr.bf16.mxu0 0
    %3199 = vmatmul.mubr.bf16.gmra.mrb[0].mxu0 %v3161
    %v3200 = vpop.f32.mrb[0].mxu0
    %v3201 = vadd.f32 %v313, %v3200
    %v3202 = vpop.f32.mrb[0].mxu0
    %v3203 = vpop.f32.mrb[0].mxu0
    %v3204 = vpop.f32.mrb[0].mxu0
    %3205 = vdwg.mxu0
    %3206 = vrot.lane.b32.xlu0 %v319, 104
    %v3207 = vpop.permute.xlu0 %3206
    %3208 = vrot.lane.b32.xlu0 %v319, 72
    %v3209 = vpop.permute.xlu0 %3208
    %v3211 = vsel %vm325, %v3207, 0
    %v3214 = vsel %vm325, %v3209, 0
    %3216 = vmatprep.subr.bf16.mxu0 0
    %3217 = vmatpush1.bf16.xpose.msra.mxu0 %v3214
    %3218 = vmatprep.subr.bf16.mxu0 0
    %3219 = vmatpush1.bf16.xpose.msra.mxu0 0
    %3220 = vmatprep.subr.bf16.mxu0 0
    %3221 = vmatpush1.bf16.xpose.msra.mxu0 0
    %3222 = vmatprep.subr.bf16.mxu0 0
    %3223 = vmatpush1.bf16.xpose.msra.mxu0 0
    %3224 = vmatprep.subr.bf16.mxu0 0
    %3225 = vmatpush1.bf16.xpose.msra.mxu0 0
    %3226 = vmatprep.subr.bf16.mxu0 0
    %3227 = vmatpush1.bf16.xpose.msra.mxu0 0
    %3228 = vmatprep.subr.bf16.mxu0 0
    %3229 = vmatpush1.bf16.xpose.msra.mxu0 0
    %3230 = vmatprep.subr.bf16.mxu0 0
    %3231 = vmatpush1.bf16.xpose.msra.mxu0 0
    %3232 = vmatprep.subr.bf16.mxu0 0
    %3233 = vmatpush1.bf16.xpose.msra.mxu0 0
    %3234 = vmatprep.subr.bf16.mxu0 0
    %3235 = vmatpush1.bf16.xpose.msra.mxu0 0
    %3236 = vmatprep.subr.bf16.mxu0 0
    %3237 = vmatpush1.bf16.xpose.msra.mxu0 0
    %3238 = vmatprep.subr.bf16.mxu0 0
    %3239 = vmatpush1.bf16.xpose.msra.mxu0 0
    %3240 = vmatprep.subr.bf16.mxu0 0
    %3241 = vmatpush1.bf16.xpose.msra.mxu0 0
    %3242 = vmatprep.subr.bf16.mxu0 0
    %3243 = vmatpush1.bf16.xpose.msra.mxu0 0
    %3244 = vmatprep.subr.bf16.mxu0 0
    %3245 = vmatpush1.bf16.xpose.msra.mxu0 0
    %3246 = vmatprep.subr.bf16.mxu0 0
    %3247 = vmatpush1.bf16.xpose.msra.mxu0 0
    %3248 = vmatprep.mubr.bf16.mxu0 0
    %3249 = vmatmul.mubr.bf16.gmra.mrb[0].mxu0 %v3211
    %v3250 = vpop.f32.mrb[0].mxu0
    %v3251 = vadd.f32 %v313, %v3250
    %v3252 = vpop.f32.mrb[0].mxu0
    %v3253 = vpop.f32.mrb[0].mxu0
    %v3254 = vpop.f32.mrb[0].mxu0
    %3255 = vdwg.mxu0
    %3256 = vrot.lane.b32.xlu0 %v320, 104
    %v3257 = vpop.permute.xlu0 %3256
    %3258 = vrot.lane.b32.xlu0 %v320, 72
    %v3259 = vpop.permute.xlu0 %3258
    %v3261 = vsel %vm325, %v3257, 0
    %v3264 = vsel %vm325, %v3259, 0
    %3266 = vmatprep.subr.bf16.mxu0 0
    %3267 = vmatpush1.bf16.xpose.msra.mxu0 %v3264
    %3268 = vmatprep.subr.bf16.mxu0 0
    %3269 = vmatpush1.bf16.xpose.msra.mxu0 0
    %3270 = vmatprep.subr.bf16.mxu0 0
    %3271 = vmatpush1.bf16.xpose.msra.mxu0 0
    %3272 = vmatprep.subr.bf16.mxu0 0
    %3273 = vmatpush1.bf16.xpose.msra.mxu0 0
    %3274 = vmatprep.subr.bf16.mxu0 0
    %3275 = vmatpush1.bf16.xpose.msra.mxu0 0
    %3276 = vmatprep.subr.bf16.mxu0 0
    %3277 = vmatpush1.bf16.xpose.msra.mxu0 0
    %3278 = vmatprep.subr.bf16.mxu0 0
    %3279 = vmatpush1.bf16.xpose.msra.mxu0 0
    %3280 = vmatprep.subr.bf16.mxu0 0
    %3281 = vmatpush1.bf16.xpose.msra.mxu0 0
    %3282 = vmatprep.subr.bf16.mxu0 0
    %3283 = vmatpush1.bf16.xpose.msra.mxu0 0
    %3284 = vmatprep.subr.bf16.mxu0 0
    %3285 = vmatpush1.bf16.xpose.msra.mxu0 0
    %3286 = vmatprep.subr.bf16.mxu0 0
    %3287 = vmatpush1.bf16.xpose.msra.mxu0 0
    %3288 = vmatprep.subr.bf16.mxu0 0
    %3289 = vmatpush1.bf16.xpose.msra.mxu0 0
    %3290 = vmatprep.subr.bf16.mxu0 0
    %3291 = vmatpush1.bf16.xpose.msra.mxu0 0
    %3292 = vmatprep.subr.bf16.mxu0 0
    %3293 = vmatpush1.bf16.xpose.msra.mxu0 0
    %3294 = vmatprep.subr.bf16.mxu0 0
    %3295 = vmatpush1.bf16.xpose.msra.mxu0 0
    %3296 = vmatprep.subr.bf16.mxu0 0
    %3297 = vmatpush1.bf16.xpose.msra.mxu0 0
    %3298 = vmatprep.mubr.bf16.mxu0 0
    %3299 = vmatmul.mubr.bf16.gmra.mrb[0].mxu0 %v3261
    %v3300 = vpop.f32.mrb[0].mxu0
    %v3301 = vadd.f32 %v313, %v3300
    %v3302 = vpop.f32.mrb[0].mxu0
    %v3303 = vpop.f32.mrb[0].mxu0
    %v3304 = vpop.f32.mrb[0].mxu0
    %3305 = vdwg.mxu0
    %3306 = vrot.lane.b32.xlu0 %v321, 104
    %v3307 = vpop.permute.xlu0 %3306
    %3308 = vrot.lane.b32.xlu0 %v321, 72
    %v3309 = vpop.permute.xlu0 %3308
    %v3311 = vsel %vm325, %v3307, 0
    %v3314 = vsel %vm325, %v3309, 0
    %3316 = vmatprep.subr.bf16.mxu0 0
    %3317 = vmatpush1.bf16.xpose.msra.mxu0 %v3314
    %3318 = vmatprep.subr.bf16.mxu0 0
    %3319 = vmatpush1.bf16.xpose.msra.mxu0 0
    %3320 = vmatprep.subr.bf16.mxu0 0
    %3321 = vmatpush1.bf16.xpose.msra.mxu0 0
    %3322 = vmatprep.subr.bf16.mxu0 0
    %3323 = vmatpush1.bf16.xpose.msra.mxu0 0
    %3324 = vmatprep.subr.bf16.mxu0 0
    %3325 = vmatpush1.bf16.xpose.msra.mxu0 0
    %3326 = vmatprep.subr.bf16.mxu0 0
    %3327 = vmatpush1.bf16.xpose.msra.mxu0 0
    %3328 = vmatprep.subr.bf16.mxu0 0
    %3329 = vmatpush1.bf16.xpose.msra.mxu0 0
    %3330 = vmatprep.subr.bf16.mxu0 0
    %3331 = vmatpush1.bf16.xpose.msra.mxu0 0
    %3332 = vmatprep.subr.bf16.mxu0 0
    %3333 = vmatpush1.bf16.xpose.msra.mxu0 0
    %3334 = vmatprep.subr.bf16.mxu0 0
    %3335 = vmatpush1.bf16.xpose.msra.mxu0 0
    %3336 = vmatprep.subr.bf16.mxu0 0
    %3337 = vmatpush1.bf16.xpose.msra.mxu0 0
    %3338 = vmatprep.subr.bf16.mxu0 0
    %3339 = vmatpush1.bf16.xpose.msra.mxu0 0
    %3340 = vmatprep.subr.bf16.mxu0 0
    %3341 = vmatpush1.bf16.xpose.msra.mxu0 0
    %3342 = vmatprep.subr.bf16.mxu0 0
    %3343 = vmatpush1.bf16.xpose.msra.mxu0 0
    %3344 = vmatprep.subr.bf16.mxu0 0
    %3345 = vmatpush1.bf16.xpose.msra.mxu0 0
    %3346 = vmatprep.subr.bf16.mxu0 0
    %3347 = vmatpush1.bf16.xpose.msra.mxu0 0
    %3348 = vmatprep.mubr.bf16.mxu0 0
    %3349 = vmatmul.mubr.bf16.gmra.mrb[0].mxu0 %v3311
    %v3350 = vpop.f32.mrb[0].mxu0
    %v3351 = vadd.f32 %v313, %v3350
    %v3352 = vpop.f32.mrb[0].mxu0
    %v3353 = vpop.f32.mrb[0].mxu0
    %v3354 = vpop.f32.mrb[0].mxu0
    %3355 = vdwg.mxu0
    %v3356 = vsel %vm325, %v3001, -inf
    %3357 = vmax.xlane.f32.xlu0 %v3356
    %v3358 = vpop.xlane.xlu0 %3357
    %v3359 = vsel %vm325, %v3051, -inf
    %3360 = vmax.xlane.f32.xlu0 %v3359
    %v3361 = vpop.xlane.xlu0 %3360
    %v3362 = vsel %vm325, %v3101, -inf
    %3363 = vmax.xlane.f32.xlu0 %v3362
    %v3364 = vpop.xlane.xlu0 %3363
    %v3365 = vsel %vm325, %v3151, -inf
    %3366 = vmax.xlane.f32.xlu0 %v3365
    %v3367 = vpop.xlane.xlu0 %3366
    %v3368 = vsel %vm325, %v3201, -inf
    %3369 = vmax.xlane.f32.xlu0 %v3368
    %v3370 = vpop.xlane.xlu0 %3369
    %v3371 = vsel %vm325, %v3251, -inf
    %3372 = vmax.xlane.f32.xlu0 %v3371
    %v3373 = vpop.xlane.xlu0 %3372
    %v3374 = vsel %vm325, %v3301, -inf
    %3375 = vmax.xlane.f32.xlu0 %v3374
    %v3376 = vpop.xlane.xlu0 %3375
    %v3377 = vsel %vm325, %v3351, -inf
    %3378 = vmax.xlane.f32.xlu0 %v3377
    %v3379 = vpop.xlane.xlu0 %3378
    %v3380 = vsub.f32 %v3001, %v3358
    %v3381 = vsub.f32 %v3051, %v3361
    %v3382 = vsub.f32 %v3101, %v3364
    %v3383 = vsub.f32 %v3151, %v3367
    %v3384 = vsub.f32 %v3201, %v3370
    %v3385 = vsub.f32 %v3251, %v3373
    %v3386 = vsub.f32 %v3301, %v3376
    %v3387 = vsub.f32 %v3351, %v3379
    %v3388 = vmul.f32 %v3380, 1.442695
    %v3389 = vpow.pop %v3388
    %v3390 = vmul.f32 %v3381, 1.442695
    %v3391 = vpow.pop %v3390
    %v3392 = vmul.f32 %v3382, 1.442695
    %v3393 = vpow.pop %v3392
    %v3394 = vmul.f32 %v3383, 1.442695
    %v3395 = vpow.pop %v3394
    %v3396 = vmul.f32 %v3384, 1.442695
    %v3397 = vpow.pop %v3396
    %v3398 = vmul.f32 %v3385, 1.442695
    %v3399 = vpow.pop %v3398
    %v3400 = vmul.f32 %v3386, 1.442695
    %v3401 = vpow.pop %v3400
    %v3402 = vmul.f32 %v3387, 1.442695
    %v3403 = vpow.pop %v3402
    %v3404 = vsel %vm325, %v3389, 0.0
    %3405 = vadd.xlane.f32.xlu0 %v3404
    %v3406 = vpop.xlane.xlu0 %3405
    %v3407 = vsel %vm325, %v3391, 0.0
    %3408 = vadd.xlane.f32.xlu0 %v3407
    %v3409 = vpop.xlane.xlu0 %3408
    %v3410 = vsel %vm325, %v3393, 0.0
    %3411 = vadd.xlane.f32.xlu0 %v3410
    %v3412 = vpop.xlane.xlu0 %3411
    %v3413 = vsel %vm325, %v3395, 0.0
    %3414 = vadd.xlane.f32.xlu0 %v3413
    %v3415 = vpop.xlane.xlu0 %3414
    %v3416 = vsel %vm325, %v3397, 0.0
    %3417 = vadd.xlane.f32.xlu0 %v3416
    %v3418 = vpop.xlane.xlu0 %3417
    %v3419 = vsel %vm325, %v3399, 0.0
    %3420 = vadd.xlane.f32.xlu0 %v3419
    %v3421 = vpop.xlane.xlu0 %3420
    %v3422 = vsel %vm325, %v3401, 0.0
    %3423 = vadd.xlane.f32.xlu0 %v3422
    %v3424 = vpop.xlane.xlu0 %3423
    %v3425 = vsel %vm325, %v3403, 0.0
    %3426 = vadd.xlane.f32.xlu0 %v3425
    %v3427 = vpop.xlane.xlu0 %3426
    %v3428 = vrcp.pop %v3406
    %v3429 = vrcp.pop %v3409
    %v3430 = vrcp.pop %v3412
    %v3431 = vrcp.pop %v3415
    %v3432 = vrcp.pop %v3418
    %v3433 = vrcp.pop %v3421
    %v3434 = vrcp.pop %v3424
    %v3435 = vrcp.pop %v3427
    %v3436 = vmul.f32 %v3389, %v3428
    %v3437 = vmul.f32 %v3391, %v3429
    %v3438 = vmul.f32 %v3393, %v3430
    %v3439 = vmul.f32 %v3395, %v3431
    %v3440 = vmul.f32 %v3397, %v3432
    %v3441 = vmul.f32 %v3399, %v3433
    %v3442 = vmul.f32 %v3401, %v3434
    %v3443 = vmul.f32 %v3403, %v3435
    %v3444 = vpack.c.bf16 %v3436, %v3436
    %v3445 = vpack.c.bf16 %v3437, %v3437
    %v3446 = vpack.c.bf16 %v3438, %v3438
    %v3447 = vpack.c.bf16 %v3439, %v3439
    %v3448 = vpack.c.bf16 %v3440, %v3440
    %v3449 = vpack.c.bf16 %v3441, %v3441
    %v3450 = vpack.c.bf16 %v3442, %v3442
    %v3451 = vpack.c.bf16 %v3443, %v3443
    %3452 = vrot.lane.b32.xlu0 %v314, 40
    %v3453 = vpop.permute.xlu0 %3452
    %v3455 = vsel %vm325, %v3444, 0
    %v3458 = vsel %vm816, %v3453, 0
    %3460 = vmatprep.subr.bf16.mxu0 0
    %3461 = vmatpush1.bf16.msra.mxu0 %v3458
    %3462 = vmatprep.subr.bf16.mxu0 0
    %3463 = vmatpush1.bf16.msra.mxu0 0
    %3464 = vmatprep.subr.bf16.mxu0 0
    %3465 = vmatpush1.bf16.msra.mxu0 0
    %3466 = vmatprep.subr.bf16.mxu0 0
    %3467 = vmatpush1.bf16.msra.mxu0 0
    %3468 = vmatprep.subr.bf16.mxu0 0
    %3469 = vmatpush1.bf16.msra.mxu0 0
    %3470 = vmatprep.subr.bf16.mxu0 0
    %3471 = vmatpush1.bf16.msra.mxu0 0
    %3472 = vmatprep.subr.bf16.mxu0 0
    %3473 = vmatpush1.bf16.msra.mxu0 0
    %3474 = vmatprep.subr.bf16.mxu0 0
    %3475 = vmatpush1.bf16.msra.mxu0 0
    %3476 = vmatprep.subr.bf16.mxu0 0
    %3477 = vmatpush1.bf16.msra.mxu0 0
    %3478 = vmatprep.subr.bf16.mxu0 0
    %3479 = vmatpush1.bf16.msra.mxu0 0
    %3480 = vmatprep.subr.bf16.mxu0 0
    %3481 = vmatpush1.bf16.msra.mxu0 0
    %3482 = vmatprep.subr.bf16.mxu0 0
    %3483 = vmatpush1.bf16.msra.mxu0 0
    %3484 = vmatprep.subr.bf16.mxu0 0
    %3485 = vmatpush1.bf16.msra.mxu0 0
    %3486 = vmatprep.subr.bf16.mxu0 0
    %3487 = vmatpush1.bf16.msra.mxu0 0
    %3488 = vmatprep.subr.bf16.mxu0 0
    %3489 = vmatpush1.bf16.msra.mxu0 0
    %3490 = vmatprep.subr.bf16.mxu0 0
    %3491 = vmatpush1.bf16.msra.mxu0 0
    %3492 = vmatprep.mubr.bf16.mxu0 0
    %3493 = vmatmul.mubr.bf16.gmra.mrb[0].mxu0 %v3455
    %v3494 = vpop.f32.mrb[0].mxu0
    %v3495 = vadd.f32 0.0, %v3494
    %v3496 = vpop.f32.mrb[0].mxu0
    %v3497 = vpop.f32.mrb[0].mxu0
    %v3498 = vpop.f32.mrb[0].mxu0
    %3499 = vdwg.mxu0
    %3500 = vrot.lane.b32.xlu0 %v315, 40
    %v3501 = vpop.permute.xlu0 %3500
    %v3503 = vsel %vm325, %v3445, 0
    %v3506 = vsel %vm816, %v3501, 0
    %3508 = vmatprep.subr.bf16.mxu0 0
    %3509 = vmatpush1.bf16.msra.mxu0 %v3506
    %3510 = vmatprep.subr.bf16.mxu0 0
    %3511 = vmatpush1.bf16.msra.mxu0 0
    %3512 = vmatprep.subr.bf16.mxu0 0
    %3513 = vmatpush1.bf16.msra.mxu0 0
    %3514 = vmatprep.subr.bf16.mxu0 0
    %3515 = vmatpush1.bf16.msra.mxu0 0
    %3516 = vmatprep.subr.bf16.mxu0 0
    %3517 = vmatpush1.bf16.msra.mxu0 0
    %3518 = vmatprep.subr.bf16.mxu0 0
    %3519 = vmatpush1.bf16.msra.mxu0 0
    %3520 = vmatprep.subr.bf16.mxu0 0
    %3521 = vmatpush1.bf16.msra.mxu0 0
    %3522 = vmatprep.subr.bf16.mxu0 0
    %3523 = vmatpush1.bf16.msra.mxu0 0
    %3524 = vmatprep.subr.bf16.mxu0 0
    %3525 = vmatpush1.bf16.msra.mxu0 0
    %3526 = vmatprep.subr.bf16.mxu0 0
    %3527 = vmatpush1.bf16.msra.mxu0 0
    %3528 = vmatprep.subr.bf16.mxu0 0
    %3529 = vmatpush1.bf16.msra.mxu0 0
    %3530 = vmatprep.subr.bf16.mxu0 0
    %3531 = vmatpush1.bf16.msra.mxu0 0
    %3532 = vmatprep.subr.bf16.mxu0 0
    %3533 = vmatpush1.bf16.msra.mxu0 0
    %3534 = vmatprep.subr.bf16.mxu0 0
    %3535 = vmatpush1.bf16.msra.mxu0 0
    %3536 = vmatprep.subr.bf16.mxu0 0
    %3537 = vmatpush1.bf16.msra.mxu0 0
    %3538 = vmatprep.subr.bf16.mxu0 0
    %3539 = vmatpush1.bf16.msra.mxu0 0
    %3540 = vmatprep.mubr.bf16.mxu0 0
    %3541 = vmatmul.mubr.bf16.gmra.mrb[0].mxu0 %v3503
    %v3542 = vpop.f32.mrb[0].mxu0
    %v3543 = vadd.f32 0.0, %v3542
    %v3544 = vpop.f32.mrb[0].mxu0
    %v3545 = vpop.f32.mrb[0].mxu0
    %v3546 = vpop.f32.mrb[0].mxu0
    %3547 = vdwg.mxu0
    %3548 = vrot.lane.b32.xlu0 %v316, 40
    %v3549 = vpop.permute.xlu0 %3548
    %v3551 = vsel %vm325, %v3446, 0
    %v3554 = vsel %vm816, %v3549, 0
    %3556 = vmatprep.subr.bf16.mxu0 0
    %3557 = vmatpush1.bf16.msra.mxu0 %v3554
    %3558 = vmatprep.subr.bf16.mxu0 0
    %3559 = vmatpush1.bf16.msra.mxu0 0
    %3560 = vmatprep.subr.bf16.mxu0 0
    %3561 = vmatpush1.bf16.msra.mxu0 0
    %3562 = vmatprep.subr.bf16.mxu0 0
    %3563 = vmatpush1.bf16.msra.mxu0 0
    %3564 = vmatprep.subr.bf16.mxu0 0
    %3565 = vmatpush1.bf16.msra.mxu0 0
    %3566 = vmatprep.subr.bf16.mxu0 0
    %3567 = vmatpush1.bf16.msra.mxu0 0
    %3568 = vmatprep.subr.bf16.mxu0 0
    %3569 = vmatpush1.bf16.msra.mxu0 0
    %3570 = vmatprep.subr.bf16.mxu0 0
    %3571 = vmatpush1.bf16.msra.mxu0 0
    %3572 = vmatprep.subr.bf16.mxu0 0
    %3573 = vmatpush1.bf16.msra.mxu0 0
    %3574 = vmatprep.subr.bf16.mxu0 0
    %3575 = vmatpush1.bf16.msra.mxu0 0
    %3576 = vmatprep.subr.bf16.mxu0 0
    %3577 = vmatpush1.bf16.msra.mxu0 0
    %3578 = vmatprep.subr.bf16.mxu0 0
    %3579 = vmatpush1.bf16.msra.mxu0 0
    %3580 = vmatprep.subr.bf16.mxu0 0
    %3581 = vmatpush1.bf16.msra.mxu0 0
    %3582 = vmatprep.subr.bf16.mxu0 0
    %3583 = vmatpush1.bf16.msra.mxu0 0
    %3584 = vmatprep.subr.bf16.mxu0 0
    %3585 = vmatpush1.bf16.msra.mxu0 0
    %3586 = vmatprep.subr.bf16.mxu0 0
    %3587 = vmatpush1.bf16.msra.mxu0 0
    %3588 = vmatprep.mubr.bf16.mxu0 0
    %3589 = vmatmul.mubr.bf16.gmra.mrb[0].mxu0 %v3551
    %v3590 = vpop.f32.mrb[0].mxu0
    %v3591 = vadd.f32 0.0, %v3590
    %v3592 = vpop.f32.mrb[0].mxu0
    %v3593 = vpop.f32.mrb[0].mxu0
    %v3594 = vpop.f32.mrb[0].mxu0
    %3595 = vdwg.mxu0
    %3596 = vrot.lane.b32.xlu0 %v317, 40
    %v3597 = vpop.permute.xlu0 %3596
    %v3599 = vsel %vm325, %v3447, 0
    %v3602 = vsel %vm816, %v3597, 0
    %3604 = vmatprep.subr.bf16.mxu0 0
    %3605 = vmatpush1.bf16.msra.mxu0 %v3602
    %3606 = vmatprep.subr.bf16.mxu0 0
    %3607 = vmatpush1.bf16.msra.mxu0 0
    %3608 = vmatprep.subr.bf16.mxu0 0
    %3609 = vmatpush1.bf16.msra.mxu0 0
    %3610 = vmatprep.subr.bf16.mxu0 0
    %3611 = vmatpush1.bf16.msra.mxu0 0
    %3612 = vmatprep.subr.bf16.mxu0 0
    %3613 = vmatpush1.bf16.msra.mxu0 0
    %3614 = vmatprep.subr.bf16.mxu0 0
    %3615 = vmatpush1.bf16.msra.mxu0 0
    %3616 = vmatprep.subr.bf16.mxu0 0
    %3617 = vmatpush1.bf16.msra.mxu0 0
    %3618 = vmatprep.subr.bf16.mxu0 0
    %3619 = vmatpush1.bf16.msra.mxu0 0
    %3620 = vmatprep.subr.bf16.mxu0 0
    %3621 = vmatpush1.bf16.msra.mxu0 0
    %3622 = vmatprep.subr.bf16.mxu0 0
    %3623 = vmatpush1.bf16.msra.mxu0 0
    %3624 = vmatprep.subr.bf16.mxu0 0
    %3625 = vmatpush1.bf16.msra.mxu0 0
    %3626 = vmatprep.subr.bf16.mxu0 0
    %3627 = vmatpush1.bf16.msra.mxu0 0
    %3628 = vmatprep.subr.bf16.mxu0 0
    %3629 = vmatpush1.bf16.msra.mxu0 0
    %3630 = vmatprep.subr.bf16.mxu0 0
    %3631 = vmatpush1.bf16.msra.mxu0 0
    %3632 = vmatprep.subr.bf16.mxu0 0
    %3633 = vmatpush1.bf16.msra.mxu0 0
    %3634 = vmatprep.subr.bf16.mxu0 0
    %3635 = vmatpush1.bf16.msra.mxu0 0
    %3636 = vmatprep.mubr.bf16.mxu0 0
    %3637 = vmatmul.mubr.bf16.gmra.mrb[0].mxu0 %v3599
    %v3638 = vpop.f32.mrb[0].mxu0
    %v3639 = vadd.f32 0.0, %v3638
    %v3640 = vpop.f32.mrb[0].mxu0
    %v3641 = vpop.f32.mrb[0].mxu0
    %v3642 = vpop.f32.mrb[0].mxu0
    %3643 = vdwg.mxu0
    %3644 = vrot.lane.b32.xlu0 %v318, 40
    %v3645 = vpop.permute.xlu0 %3644
    %v3647 = vsel %vm325, %v3448, 0
    %v3650 = vsel %vm816, %v3645, 0
    %3652 = vmatprep.subr.bf16.mxu0 0
    %3653 = vmatpush1.bf16.msra.mxu0 %v3650
    %3654 = vmatprep.subr.bf16.mxu0 0
    %3655 = vmatpush1.bf16.msra.mxu0 0
    %3656 = vmatprep.subr.bf16.mxu0 0
    %3657 = vmatpush1.bf16.msra.mxu0 0
    %3658 = vmatprep.subr.bf16.mxu0 0
    %3659 = vmatpush1.bf16.msra.mxu0 0
    %3660 = vmatprep.subr.bf16.mxu0 0
    %3661 = vmatpush1.bf16.msra.mxu0 0
    %3662 = vmatprep.subr.bf16.mxu0 0
    %3663 = vmatpush1.bf16.msra.mxu0 0
    %3664 = vmatprep.subr.bf16.mxu0 0
    %3665 = vmatpush1.bf16.msra.mxu0 0
    %3666 = vmatprep.subr.bf16.mxu0 0
    %3667 = vmatpush1.bf16.msra.mxu0 0
    %3668 = vmatprep.subr.bf16.mxu0 0
    %3669 = vmatpush1.bf16.msra.mxu0 0
    %3670 = vmatprep.subr.bf16.mxu0 0
    %3671 = vmatpush1.bf16.msra.mxu0 0
    %3672 = vmatprep.subr.bf16.mxu0 0
    %3673 = vmatpush1.bf16.msra.mxu0 0
    %3674 = vmatprep.subr.bf16.mxu0 0
    %3675 = vmatpush1.bf16.msra.mxu0 0
    %3676 = vmatprep.subr.bf16.mxu0 0
    %3677 = vmatpush1.bf16.msra.mxu0 0
    %3678 = vmatprep.subr.bf16.mxu0 0
    %3679 = vmatpush1.bf16.msra.mxu0 0
    %3680 = vmatprep.subr.bf16.mxu0 0
    %3681 = vmatpush1.bf16.msra.mxu0 0
    %3682 = vmatprep.subr.bf16.mxu0 0
    %3683 = vmatpush1.bf16.msra.mxu0 0
    %3684 = vmatprep.mubr.bf16.mxu0 0
    %3685 = vmatmul.mubr.bf16.gmra.mrb[0].mxu0 %v3647
    %v3686 = vpop.f32.mrb[0].mxu0
    %v3687 = vadd.f32 0.0, %v3686
    %v3688 = vpop.f32.mrb[0].mxu0
    %v3689 = vpop.f32.mrb[0].mxu0
    %v3690 = vpop.f32.mrb[0].mxu0
    %3691 = vdwg.mxu0
    %3692 = vrot.lane.b32.xlu0 %v319, 40
    %v3693 = vpop.permute.xlu0 %3692
    %v3695 = vsel %vm325, %v3449, 0
    %v3698 = vsel %vm816, %v3693, 0
    %3700 = vmatprep.subr.bf16.mxu0 0
    %3701 = vmatpush1.bf16.msra.mxu0 %v3698
    %3702 = vmatprep.subr.bf16.mxu0 0
    %3703 = vmatpush1.bf16.msra.mxu0 0
    %3704 = vmatprep.subr.bf16.mxu0 0
    %3705 = vmatpush1.bf16.msra.mxu0 0
    %3706 = vmatprep.subr.bf16.mxu0 0
    %3707 = vmatpush1.bf16.msra.mxu0 0
    %3708 = vmatprep.subr.bf16.mxu0 0
    %3709 = vmatpush1.bf16.msra.mxu0 0
    %3710 = vmatprep.subr.bf16.mxu0 0
    %3711 = vmatpush1.bf16.msra.mxu0 0
    %3712 = vmatprep.subr.bf16.mxu0 0
    %3713 = vmatpush1.bf16.msra.mxu0 0
    %3714 = vmatprep.subr.bf16.mxu0 0
    %3715 = vmatpush1.bf16.msra.mxu0 0
    %3716 = vmatprep.subr.bf16.mxu0 0
    %3717 = vmatpush1.bf16.msra.mxu0 0
    %3718 = vmatprep.subr.bf16.mxu0 0
    %3719 = vmatpush1.bf16.msra.mxu0 0
    %3720 = vmatprep.subr.bf16.mxu0 0
    %3721 = vmatpush1.bf16.msra.mxu0 0
    %3722 = vmatprep.subr.bf16.mxu0 0
    %3723 = vmatpush1.bf16.msra.mxu0 0
    %3724 = vmatprep.subr.bf16.mxu0 0
    %3725 = vmatpush1.bf16.msra.mxu0 0
    %3726 = vmatprep.subr.bf16.mxu0 0
    %3727 = vmatpush1.bf16.msra.mxu0 0
    %3728 = vmatprep.subr.bf16.mxu0 0
    %3729 = vmatpush1.bf16.msra.mxu0 0
    %3730 = vmatprep.subr.bf16.mxu0 0
    %3731 = vmatpush1.bf16.msra.mxu0 0
    %3732 = vmatprep.mubr.bf16.mxu0 0
    %3733 = vmatmul.mubr.bf16.gmra.mrb[0].mxu0 %v3695
    %v3734 = vpop.f32.mrb[0].mxu0
    %v3735 = vadd.f32 0.0, %v3734
    %v3736 = vpop.f32.mrb[0].mxu0
    %v3737 = vpop.f32.mrb[0].mxu0
    %v3738 = vpop.f32.mrb[0].mxu0
    %3739 = vdwg.mxu0
    %3740 = vrot.lane.b32.xlu0 %v320, 40
    %v3741 = vpop.permute.xlu0 %3740
    %v3743 = vsel %vm325, %v3450, 0
    %v3746 = vsel %vm816, %v3741, 0
    %3748 = vmatprep.subr.bf16.mxu0 0
    %3749 = vmatpush1.bf16.msra.mxu0 %v3746
    %3750 = vmatprep.subr.bf16.mxu0 0
    %3751 = vmatpush1.bf16.msra.mxu0 0
    %3752 = vmatprep.subr.bf16.mxu0 0
    %3753 = vmatpush1.bf16.msra.mxu0 0
    %3754 = vmatprep.subr.bf16.mxu0 0
    %3755 = vmatpush1.bf16.msra.mxu0 0
    %3756 = vmatprep.subr.bf16.mxu0 0
    %3757 = vmatpush1.bf16.msra.mxu0 0
    %3758 = vmatprep.subr.bf16.mxu0 0
    %3759 = vmatpush1.bf16.msra.mxu0 0
    %3760 = vmatprep.subr.bf16.mxu0 0
    %3761 = vmatpush1.bf16.msra.mxu0 0
    %3762 = vmatprep.subr.bf16.mxu0 0
    %3763 = vmatpush1.bf16.msra.mxu0 0
    %3764 = vmatprep.subr.bf16.mxu0 0
    %3765 = vmatpush1.bf16.msra.mxu0 0
    %3766 = vmatprep.subr.bf16.mxu0 0
    %3767 = vmatpush1.bf16.msra.mxu0 0
    %3768 = vmatprep.subr.bf16.mxu0 0
    %3769 = vmatpush1.bf16.msra.mxu0 0
    %3770 = vmatprep.subr.bf16.mxu0 0
    %3771 = vmatpush1.bf16.msra.mxu0 0
    %3772 = vmatprep.subr.bf16.mxu0 0
    %3773 = vmatpush1.bf16.msra.mxu0 0
    %3774 = vmatprep.subr.bf16.mxu0 0
    %3775 = vmatpush1.bf16.msra.mxu0 0
    %3776 = vmatprep.subr.bf16.mxu0 0
    %3777 = vmatpush1.bf16.msra.mxu0 0
    %3778 = vmatprep.subr.bf16.mxu0 0
    %3779 = vmatpush1.bf16.msra.mxu0 0
    %3780 = vmatprep.mubr.bf16.mxu0 0
    %3781 = vmatmul.mubr.bf16.gmra.mrb[0].mxu0 %v3743
    %v3782 = vpop.f32.mrb[0].mxu0
    %v3783 = vadd.f32 0.0, %v3782
    %v3784 = vpop.f32.mrb[0].mxu0
    %v3785 = vpop.f32.mrb[0].mxu0
    %v3786 = vpop.f32.mrb[0].mxu0
    %3787 = vdwg.mxu0
    %3788 = vrot.lane.b32.xlu0 %v321, 40
    %v3789 = vpop.permute.xlu0 %3788
    %v3791 = vsel %vm325, %v3451, 0
    %v3794 = vsel %vm816, %v3789, 0
    %3796 = vmatprep.subr.bf16.mxu0 0
    %3797 = vmatpush1.bf16.msra.mxu0 %v3794
    %3798 = vmatprep.subr.bf16.mxu0 0
    %3799 = vmatpush1.bf16.msra.mxu0 0
    %3800 = vmatprep.subr.bf16.mxu0 0
    %3801 = vmatpush1.bf16.msra.mxu0 0
    %3802 = vmatprep.subr.bf16.mxu0 0
    %3803 = vmatpush1.bf16.msra.mxu0 0
    %3804 = vmatprep.subr.bf16.mxu0 0
    %3805 = vmatpush1.bf16.msra.mxu0 0
    %3806 = vmatprep.subr.bf16.mxu0 0
    %3807 = vmatpush1.bf16.msra.mxu0 0
    %3808 = vmatprep.subr.bf16.mxu0 0
    %3809 = vmatpush1.bf16.msra.mxu0 0
    %3810 = vmatprep.subr.bf16.mxu0 0
    %3811 = vmatpush1.bf16.msra.mxu0 0
    %3812 = vmatprep.subr.bf16.mxu0 0
    %3813 = vmatpush1.bf16.msra.mxu0 0
    %3814 = vmatprep.subr.bf16.mxu0 0
    %3815 = vmatpush1.bf16.msra.mxu0 0
    %3816 = vmatprep.subr.bf16.mxu0 0
    %3817 = vmatpush1.bf16.msra.mxu0 0
    %3818 = vmatprep.subr.bf16.mxu0 0
    %3819 = vmatpush1.bf16.msra.mxu0 0
    %3820 = vmatprep.subr.bf16.mxu0 0
    %3821 = vmatpush1.bf16.msra.mxu0 0
    %3822 = vmatprep.subr.bf16.mxu0 0
    %3823 = vmatpush1.bf16.msra.mxu0 0
    %3824 = vmatprep.subr.bf16.mxu0 0
    %3825 = vmatpush1.bf16.msra.mxu0 0
    %3826 = vmatprep.subr.bf16.mxu0 0
    %3827 = vmatpush1.bf16.msra.mxu0 0
    %3828 = vmatprep.mubr.bf16.mxu0 0
    %3829 = vmatmul.mubr.bf16.gmra.mrb[0].mxu0 %v3791
    %v3830 = vpop.f32.mrb[0].mxu0
    %v3831 = vadd.f32 0.0, %v3830
    %v3832 = vpop.f32.mrb[0].mxu0
    %v3833 = vpop.f32.mrb[0].mxu0
    %v3834 = vpop.f32.mrb[0].mxu0
    %3835 = vdwg.mxu0
    %3844 = vrot.lane.b32.xlu0 %v1735, 8
    %v3845 = vpop.permute.xlu0 %3844
    %3846 = vrot.lane.b32.xlu0 %v1783, 8
    %v3847 = vpop.permute.xlu0 %3846
    %3848 = vrot.lane.b32.xlu0 %v1831, 8
    %v3849 = vpop.permute.xlu0 %3848
    %3850 = vrot.lane.b32.xlu0 %v1879, 8
    %v3851 = vpop.permute.xlu0 %3850
    %3852 = vrot.lane.b32.xlu0 %v1927, 8
    %v3853 = vpop.permute.xlu0 %3852
    %3854 = vrot.lane.b32.xlu0 %v1975, 8
    %v3855 = vpop.permute.xlu0 %3854
    %3856 = vrot.lane.b32.xlu0 %v2023, 8
    %v3857 = vpop.permute.xlu0 %3856
    %3858 = vrot.lane.b32.xlu0 %v2071, 8
    %v3859 = vpop.permute.xlu0 %3858
    %3876 = vrot.lane.b32.xlu0 %v2615, 16
    %v3877 = vpop.permute.xlu0 %3876
    %3878 = vrot.lane.b32.xlu0 %v2663, 16
    %v3879 = vpop.permute.xlu0 %3878
    %3880 = vrot.lane.b32.xlu0 %v2711, 16
    %v3881 = vpop.permute.xlu0 %3880
    %3882 = vrot.lane.b32.xlu0 %v2759, 16
    %v3883 = vpop.permute.xlu0 %3882
    %3884 = vrot.lane.b32.xlu0 %v2807, 16
    %v3885 = vpop.permute.xlu0 %3884
    %3886 = vrot.lane.b32.xlu0 %v2855, 16
    %v3887 = vpop.permute.xlu0 %3886
    %3888 = vrot.lane.b32.xlu0 %v2903, 16
    %v3889 = vpop.permute.xlu0 %3888
    %3890 = vrot.lane.b32.xlu0 %v2951, 16
    %v3891 = vpop.permute.xlu0 %3890
    %3908 = vrot.lane.b32.xlu0 %v3495, 24
    %v3909 = vpop.permute.xlu0 %3908
    %3910 = vrot.lane.b32.xlu0 %v3543, 24
    %v3911 = vpop.permute.xlu0 %3910
    %3912 = vrot.lane.b32.xlu0 %v3591, 24
    %v3913 = vpop.permute.xlu0 %3912
    %3914 = vrot.lane.b32.xlu0 %v3639, 24
    %v3915 = vpop.permute.xlu0 %3914
    %3916 = vrot.lane.b32.xlu0 %v3687, 24
    %v3917 = vpop.permute.xlu0 %3916
    %3918 = vrot.lane.b32.xlu0 %v3735, 24
    %v3919 = vpop.permute.xlu0 %3918
    %3920 = vrot.lane.b32.xlu0 %v3783, 24
    %v3921 = vpop.permute.xlu0 %3920
    %3922 = vrot.lane.b32.xlu0 %v3831, 24
    %v3923 = vpop.permute.xlu0 %3922
    %v3932 = vsel %vm325, %v855, %v3845
    %v3933 = vsel %vm325, %v903, %v3847
    %v3934 = vsel %vm325, %v951, %v3849
    %v3935 = vsel %vm325, %v999, %v3851
    %v3936 = vsel %vm325, %v1047, %v3853
    %v3937 = vsel %vm325, %v1095, %v3855
    %v3938 = vsel %vm325, %v1143, %v3857
    %v3939 = vsel %vm325, %v1191, %v3859
    %vm3940 = vcmask 130048
    %v3941 = vsel %vm3940, %v3932, %v3877
    %v3942 = vsel %vm3940, %v3933, %v3879
    %v3943 = vsel %vm3940, %v3934, %v3881
    %v3944 = vsel %vm3940, %v3935, %v3883
    %v3945 = vsel %vm3940, %v3936, %v3885
    %v3946 = vsel %vm3940, %v3937, %v3887
    %v3947 = vsel %vm3940, %v3938, %v3889
    %v3948 = vsel %vm3940, %v3939, %v3891
    %vm3949 = vcmask 195584
    %v3950 = vsel %vm3949, %v3941, %v3909
    %v3951 = vsel %vm3949, %v3942, %v3911
    %v3952 = vsel %vm3949, %v3943, %v3913
    %v3953 = vsel %vm3949, %v3944, %v3915
    %v3954 = vsel %vm3949, %v3945, %v3917
    %v3955 = vsel %vm3949, %v3946, %v3919
    %v3956 = vsel %vm3949, %v3947, %v3921
    %v3957 = vsel %vm3949, %v3948, %v3923
    %v3958 = vpack.c.bf16 %v3951, %v3950
    %v3959 = vpack.c.bf16 %v3953, %v3952
    %v3960 = vpack.c.bf16 %v3955, %v3954
    %v3961 = vpack.c.bf16 %v3957, %v3956
    %v3962 = vlaneseq
    %v3963 = vshrl.u32 %v3962, 7
    %v3964 = vsub.s32 0, %v3963
    %v3965 = vrot.slane %v94, %v3964
    %3968 = vrot.lane.b32.xlu0 %v74, 32
    %v3969 = vpop.permute.xlu0 %3968
    %3970 = vrot.lane.b32.xlu0 %v75, 32
    %v3971 = vpop.permute.xlu0 %3970
    %v3975 = vsel %vm98, %v3958, 0
    %v3978 = vsel %vm98, %v3959, 0
    %v3981 = vsel %vm98, %v3960, 0
    %v3984 = vsel %vm98, %v3961, 0
    %3986 = vmatprep.subr.bf16.mxu0 0
    %3987 = vmatpush1.bf16.msra.mxu0 %v3969
    %3988 = vmatprep.subr.bf16.mxu0 0
    %3989 = vmatpush1.bf16.msra.mxu0 %v3971
    %3990 = vmatprep.subr.bf16.mxu0 0
    %3991 = vmatpush1.bf16.msra.mxu0 0
    %3992 = vmatprep.subr.bf16.mxu0 0
    %3993 = vmatpush1.bf16.msra.mxu0 0
    %3994 = vmatprep.subr.bf16.mxu0 0
    %3995 = vmatpush1.bf16.msra.mxu0 0
    %3996 = vmatprep.subr.bf16.mxu0 0
    %3997 = vmatpush1.bf16.msra.mxu0 0
    %3998 = vmatprep.subr.bf16.mxu0 0
    %3999 = vmatpush1.bf16.msra.mxu0 0
    %4000 = vmatprep.subr.bf16.mxu0 0
    %4001 = vmatpush1.bf16.msra.mxu0 0
    %4002 = vmatprep.subr.bf16.mxu0 0
    %4003 = vmatpush1.bf16.msra.mxu0 0
    %4004 = vmatprep.subr.bf16.mxu0 0
    %4005 = vmatpush1.bf16.msra.mxu0 0
    %4006 = vmatprep.subr.bf16.mxu0 0
    %4007 = vmatpush1.bf16.msra.mxu0 0
    %4008 = vmatprep.subr.bf16.mxu0 0
    %4009 = vmatpush1.bf16.msra.mxu0 0
    %4010 = vmatprep.subr.bf16.mxu0 0
    %4011 = vmatpush1.bf16.msra.mxu0 0
    %4012 = vmatprep.subr.bf16.mxu0 0
    %4013 = vmatpush1.bf16.msra.mxu0 0
    %4014 = vmatprep.subr.bf16.mxu0 0
    %4015 = vmatpush1.bf16.msra.mxu0 0
    %4016 = vmatprep.subr.bf16.mxu0 0
    %4017 = vmatpush1.bf16.msra.mxu0 0
    %4018 = vmatprep.mubr.bf16.mxu0 0
    %4019 = vmatmul.mubr.bf16.gmra.mrb[0].mxu0 %v3975
    %v4020 = vpop.f32.mrb[0].mxu0
    %v4021 = vadd.f32 %v3965, %v4020
    %v4022 = vpop.f32.mrb[0].mxu0
    %v4023 = vpop.f32.mrb[0].mxu0
    %v4024 = vadd.f32 %v3965, %v4023
    %v4025 = vpop.f32.mrb[0].mxu0
    %4026 = vmatprep.mubr.bf16.mxu0 0
    %4027 = vmatmul.mubr.bf16.gmra.mrb[0].mxu0 %v3978
    %v4028 = vpop.f32.mrb[0].mxu0
    %v4029 = vadd.f32 %v3965, %v4028
    %v4030 = vpop.f32.mrb[0].mxu0
    %v4031 = vpop.f32.mrb[0].mxu0
    %v4032 = vadd.f32 %v3965, %v4031
    %v4033 = vpop.f32.mrb[0].mxu0
    %4034 = vmatprep.mubr.bf16.mxu0 0
    %4035 = vmatmul.mubr.bf16.gmra.mrb[0].mxu0 %v3981
    %v4036 = vpop.f32.mrb[0].mxu0
    %v4037 = vadd.f32 %v3965, %v4036
    %v4038 = vpop.f32.mrb[0].mxu0
    %v4039 = vpop.f32.mrb[0].mxu0
    %v4040 = vadd.f32 %v3965, %v4039
    %v4041 = vpop.f32.mrb[0].mxu0
    %4042 = vmatprep.mubr.bf16.mxu0 0
    %4043 = vmatmul.mubr.bf16.gmra.mrb[0].mxu0 %v3984
    %v4044 = vpop.f32.mrb[0].mxu0
    %v4045 = vadd.f32 %v3965, %v4044
    %v4046 = vpop.f32.mrb[0].mxu0
    %v4047 = vpop.f32.mrb[0].mxu0
    %v4048 = vadd.f32 %v3965, %v4047
    %v4049 = vpop.f32.mrb[0].mxu0
    %4050 = vdwg.mxu0
    %v4051 = vadd.f32 %v30, %v4021
    %v4052 = vadd.f32 %v31, %v4024
    %v4053 = vadd.f32 %v32, %v4029
    %v4054 = vadd.f32 %v33, %v4032
    %v4055 = vadd.f32 %v34, %v4037
    %v4056 = vadd.f32 %v35, %v4040
    %v4057 = vadd.f32 %v36, %v4045
    %v4058 = vadd.f32 %v37, %v4048
    %v4059 = vsel %vm98, %v4051, 0.0
    %4060 = vadd.xlane.f32.xlu0 %v4059
    %v4061 = vpop.xlane.xlu0 %4060
    %v4062 = vsel %vm98, %v4052, 0.0
    %4063 = vadd.xlane.f32.xlu0 %v4062
    %v4064 = vpop.xlane.xlu0 %4063
    %v4065 = vsel %vm98, %v4053, 0.0
    %4066 = vadd.xlane.f32.xlu0 %v4065
    %v4067 = vpop.xlane.xlu0 %4066
    %v4068 = vsel %vm98, %v4054, 0.0
    %4069 = vadd.xlane.f32.xlu0 %v4068
    %v4070 = vpop.xlane.xlu0 %4069
    %v4071 = vsel %vm98, %v4055, 0.0
    %4072 = vadd.xlane.f32.xlu0 %v4071
    %v4073 = vpop.xlane.xlu0 %4072
    %v4074 = vsel %vm98, %v4056, 0.0
    %4075 = vadd.xlane.f32.xlu0 %v4074
    %v4076 = vpop.xlane.xlu0 %4075
    %v4077 = vsel %vm98, %v4057, 0.0
    %4078 = vadd.xlane.f32.xlu0 %v4077
    %v4079 = vpop.xlane.xlu0 %4078
    %v4080 = vsel %vm98, %v4058, 0.0
    %4081 = vadd.xlane.f32.xlu0 %v4080
    %v4082 = vpop.xlane.xlu0 %4081
    %v4083 = vmul.f32 %v4061, %v123
    %v4084 = vmul.f32 %v4064, %v123
    %v4085 = vmul.f32 %v4067, %v123
    %v4086 = vmul.f32 %v4070, %v123
    %v4087 = vmul.f32 %v4073, %v123
    %v4088 = vmul.f32 %v4076, %v123
    %v4089 = vmul.f32 %v4079, %v123
    %v4090 = vmul.f32 %v4082, %v123
    %v4091 = vsub.f32 %v4051, %v4083
    %v4092 = vsub.f32 %v4052, %v4084
    %v4093 = vsub.f32 %v4053, %v4085
    %v4094 = vsub.f32 %v4054, %v4086
    %v4095 = vsub.f32 %v4055, %v4087
    %v4096 = vsub.f32 %v4056, %v4088
    %v4097 = vsub.f32 %v4057, %v4089
    %v4098 = vsub.f32 %v4058, %v4090
    %v4099 = vmul.f32 %v4091, %v4091
    %v4100 = vmul.f32 %v4092, %v4092
    %v4101 = vmul.f32 %v4093, %v4093
    %v4102 = vmul.f32 %v4094, %v4094
    %v4103 = vmul.f32 %v4095, %v4095
    %v4104 = vmul.f32 %v4096, %v4096
    %v4105 = vmul.f32 %v4097, %v4097
    %v4106 = vmul.f32 %v4098, %v4098
    %v4107 = vsel %vm98, %v4099, 0.0
    %4108 = vadd.xlane.f32.xlu0 %v4107
    %v4109 = vpop.xlane.xlu0 %4108
    %v4110 = vsel %vm98, %v4100, 0.0
    %4111 = vadd.xlane.f32.xlu0 %v4110
    %v4112 = vpop.xlane.xlu0 %4111
    %v4113 = vsel %vm98, %v4101, 0.0
    %4114 = vadd.xlane.f32.xlu0 %v4113
    %v4115 = vpop.xlane.xlu0 %4114
    %v4116 = vsel %vm98, %v4102, 0.0
    %4117 = vadd.xlane.f32.xlu0 %v4116
    %v4118 = vpop.xlane.xlu0 %4117
    %v4119 = vsel %vm98, %v4103, 0.0
    %4120 = vadd.xlane.f32.xlu0 %v4119
    %v4121 = vpop.xlane.xlu0 %4120
    %v4122 = vsel %vm98, %v4104, 0.0
    %4123 = vadd.xlane.f32.xlu0 %v4122
    %v4124 = vpop.xlane.xlu0 %4123
    %v4125 = vsel %vm98, %v4105, 0.0
    %4126 = vadd.xlane.f32.xlu0 %v4125
    %v4127 = vpop.xlane.xlu0 %4126
    %v4128 = vsel %vm98, %v4106, 0.0
    %4129 = vadd.xlane.f32.xlu0 %v4128
    %v4130 = vpop.xlane.xlu0 %4129
    %v4131 = vmul.f32 %v4109, %v123
    %v4132 = vmul.f32 %v4112, %v123
    %v4133 = vmul.f32 %v4115, %v123
    %v4134 = vmul.f32 %v4118, %v123
    %v4135 = vmul.f32 %v4121, %v123
    %v4136 = vmul.f32 %v4124, %v123
    %v4137 = vmul.f32 %v4127, %v123
    %v4138 = vmul.f32 %v4130, %v123
    %v4139 = vadd.f32 %v4131, 1e-05
    %v4140 = vadd.f32 %v4132, 1e-05
    %v4141 = vadd.f32 %v4133, 1e-05
    %v4142 = vadd.f32 %v4134, 1e-05
    %v4143 = vadd.f32 %v4135, 1e-05
    %v4144 = vadd.f32 %v4136, 1e-05
    %v4145 = vadd.f32 %v4137, 1e-05
    %v4146 = vadd.f32 %v4138, 1e-05
    %v4147 = vrsqrt.pop %v4139
    %v4148 = vrsqrt.pop %v4140
    %v4149 = vrsqrt.pop %v4141
    %v4150 = vrsqrt.pop %v4142
    %v4151 = vrsqrt.pop %v4143
    %v4152 = vrsqrt.pop %v4144
    %v4153 = vrsqrt.pop %v4145
    %v4154 = vrsqrt.pop %v4146
    %v4155 = vmul.f32 %v4091, %v4147
    %v4156 = vmul.f32 %v4092, %v4148
    %v4157 = vmul.f32 %v4093, %v4149
    %v4158 = vmul.f32 %v4094, %v4150
    %v4159 = vmul.f32 %v4095, %v4151
    %v4160 = vmul.f32 %v4096, %v4152
    %v4161 = vmul.f32 %v4097, %v4153
    %v4162 = vmul.f32 %v4098, %v4154
    %4164 = vrot.lane.b32.xlu0 %v207, 96
    %v4165 = vpop.permute.xlu0 %4164
    %v4167 = vmul.f32 %v4155, %v4165
    %v4168 = vmul.f32 %v4156, %v4165
    %v4169 = vmul.f32 %v4157, %v4165
    %v4170 = vmul.f32 %v4158, %v4165
    %v4171 = vmul.f32 %v4159, %v4165
    %v4172 = vmul.f32 %v4160, %v4165
    %v4173 = vmul.f32 %v4161, %v4165
    %v4174 = vmul.f32 %v4162, %v4165
    %4176 = vrot.lane.b32.xlu0 %v219, 96
    %v4177 = vpop.permute.xlu0 %4176
    %v4179 = vadd.f32 %v4167, %v4177
    %v4180 = vadd.f32 %v4168, %v4177
    %v4181 = vadd.f32 %v4169, %v4177
    %v4182 = vadd.f32 %v4170, %v4177
    %v4183 = vadd.f32 %v4171, %v4177
    %v4184 = vadd.f32 %v4172, %v4177
    %v4185 = vadd.f32 %v4173, %v4177
    %v4186 = vadd.f32 %v4174, %v4177
    %v4187 = vpack.c.bf16 %v4180, %v4179
    %v4188 = vpack.c.bf16 %v4182, %v4181
    %v4189 = vpack.c.bf16 %v4184, %v4183
    %v4190 = vpack.c.bf16 %v4186, %v4185
    %v4191 = vlaneseq
    %v4192 = vshrl.u32 %v4191, 7
    %v4193 = vsub.s32 0, %v4192
    %v4194 = vrot.slane %v93, %v4193
    %v4196 = vsel %vm98, %v4187, 0
    %v4199 = vsel %vm98, %v4188, 0
    %v4202 = vsel %vm98, %v4189, 0
    %v4205 = vsel %vm98, %v4190, 0
    %4207 = vmatprep.subr.bf16.mxu0 0
    %4208 = vmatpush1.bf16.msra.mxu0 %v76
    %4209 = vmatprep.subr.bf16.mxu0 0
    %4210 = vmatpush1.bf16.msra.mxu0 %v77
    %4211 = vmatprep.subr.bf16.mxu0 0
    %4212 = vmatpush1.bf16.msra.mxu0 0
    %4213 = vmatprep.subr.bf16.mxu0 0
    %4214 = vmatpush1.bf16.msra.mxu0 0
    %4215 = vmatprep.subr.bf16.mxu0 0
    %4216 = vmatpush1.bf16.msra.mxu0 0
    %4217 = vmatprep.subr.bf16.mxu0 0
    %4218 = vmatpush1.bf16.msra.mxu0 0
    %4219 = vmatprep.subr.bf16.mxu0 0
    %4220 = vmatpush1.bf16.msra.mxu0 0
    %4221 = vmatprep.subr.bf16.mxu0 0
    %4222 = vmatpush1.bf16.msra.mxu0 0
    %4223 = vmatprep.subr.bf16.mxu0 0
    %4224 = vmatpush1.bf16.msra.mxu0 0
    %4225 = vmatprep.subr.bf16.mxu0 0
    %4226 = vmatpush1.bf16.msra.mxu0 0
    %4227 = vmatprep.subr.bf16.mxu0 0
    %4228 = vmatpush1.bf16.msra.mxu0 0
    %4229 = vmatprep.subr.bf16.mxu0 0
    %4230 = vmatpush1.bf16.msra.mxu0 0
    %4231 = vmatprep.subr.bf16.mxu0 0
    %4232 = vmatpush1.bf16.msra.mxu0 0
    %4233 = vmatprep.subr.bf16.mxu0 0
    %4234 = vmatpush1.bf16.msra.mxu0 0
    %4235 = vmatprep.subr.bf16.mxu0 0
    %4236 = vmatpush1.bf16.msra.mxu0 0
    %4237 = vmatprep.subr.bf16.mxu0 0
    %4238 = vmatpush1.bf16.msra.mxu0 0
    %4239 = vmatprep.mubr.bf16.mxu0 0
    %4240 = vmatmul.mubr.bf16.gmra.mrb[0].mxu0 %v4196
    %v4241 = vpop.f32.mrb[0].mxu0
    %v4242 = vadd.f32 %v4194, %v4241
    %v4243 = vpop.f32.mrb[0].mxu0
    %v4244 = vpop.f32.mrb[0].mxu0
    %v4245 = vadd.f32 %v4194, %v4244
    %v4246 = vpop.f32.mrb[0].mxu0
    %4247 = vmatprep.mubr.bf16.mxu0 0
    %4248 = vmatmul.mubr.bf16.gmra.mrb[0].mxu0 %v4199
    %v4249 = vpop.f32.mrb[0].mxu0
    %v4250 = vadd.f32 %v4194, %v4249
    %v4251 = vpop.f32.mrb[0].mxu0
    %v4252 = vpop.f32.mrb[0].mxu0
    %v4253 = vadd.f32 %v4194, %v4252
    %v4254 = vpop.f32.mrb[0].mxu0
    %4255 = vmatprep.mubr.bf16.mxu0 0
    %4256 = vmatmul.mubr.bf16.gmra.mrb[0].mxu0 %v4202
    %v4257 = vpop.f32.mrb[0].mxu0
    %v4258 = vadd.f32 %v4194, %v4257
    %v4259 = vpop.f32.mrb[0].mxu0
    %v4260 = vpop.f32.mrb[0].mxu0
    %v4261 = vadd.f32 %v4194, %v4260
    %v4262 = vpop.f32.mrb[0].mxu0
    %4263 = vmatprep.mubr.bf16.mxu0 0
    %4264 = vmatmul.mubr.bf16.gmra.mrb[0].mxu0 %v4205
    %v4265 = vpop.f32.mrb[0].mxu0
    %v4266 = vadd.f32 %v4194, %v4265
    %v4267 = vpop.f32.mrb[0].mxu0
    %v4268 = vpop.f32.mrb[0].mxu0
    %v4269 = vadd.f32 %v4194, %v4268
    %v4270 = vpop.f32.mrb[0].mxu0
    %4271 = vdwg.mxu0
    %4274 = vrot.lane.b32.xlu0 %v76, 96
    %v4275 = vpop.permute.xlu0 %4274
    %4276 = vrot.lane.b32.xlu0 %v77, 96
    %v4277 = vpop.permute.xlu0 %4276
    %4281 = vrot.lane.b32.xlu0 %v4194, 96
    %v4282 = vpop.permute.xlu0 %4281
    %v4285 = vsel %vm98, %v54, 0
    %v4288 = vsel %vm98, %v55, 0
    %v4291 = vsel %vm98, %v56, 0
    %v4294 = vsel %vm98, %v57, 0
    %v4297 = vsel %vm98, %v58, 0
    %v4300 = vsel %vm98, %v59, 0
    %v4303 = vsel %vm98, %v60, 0
    %v4306 = vsel %vm98, %v61, 0
    %4308 = vmatprep.subr.bf16.mxu0 0
    %4309 = vmatpush1.bf16.msra.mxu0 %v4275
    %4310 = vmatprep.subr.bf16.mxu0 0
    %4311 = vmatpush1.bf16.msra.mxu0 %v4277
    %4312 = vmatprep.subr.bf16.mxu0 0
    %4313 = vmatpush1.bf16.msra.mxu0 0
    %4314 = vmatprep.subr.bf16.mxu0 0
    %4315 = vmatpush1.bf16.msra.mxu0 0
    %4316 = vmatprep.subr.bf16.mxu0 0
    %4317 = vmatpush1.bf16.msra.mxu0 0
    %4318 = vmatprep.subr.bf16.mxu0 0
    %4319 = vmatpush1.bf16.msra.mxu0 0
    %4320 = vmatprep.subr.bf16.mxu0 0
    %4321 = vmatpush1.bf16.msra.mxu0 0
    %4322 = vmatprep.subr.bf16.mxu0 0
    %4323 = vmatpush1.bf16.msra.mxu0 0
    %4324 = vmatprep.subr.bf16.mxu0 0
    %4325 = vmatpush1.bf16.msra.mxu0 0
    %4326 = vmatprep.subr.bf16.mxu0 0
    %4327 = vmatpush1.bf16.msra.mxu0 0
    %4328 = vmatprep.subr.bf16.mxu0 0
    %4329 = vmatpush1.bf16.msra.mxu0 0
    %4330 = vmatprep.subr.bf16.mxu0 0
    %4331 = vmatpush1.bf16.msra.mxu0 0
    %4332 = vmatprep.subr.bf16.mxu0 0
    %4333 = vmatpush1.bf16.msra.mxu0 0
    %4334 = vmatprep.subr.bf16.mxu0 0
    %4335 = vmatpush1.bf16.msra.mxu0 0
    %4336 = vmatprep.subr.bf16.mxu0 0
    %4337 = vmatpush1.bf16.msra.mxu0 0
    %4338 = vmatprep.subr.bf16.mxu0 0
    %4339 = vmatpush1.bf16.msra.mxu0 0
    %4340 = vmatprep.mubr.bf16.mxu0 0
    %4341 = vmatmul.mubr.bf16.gmra.mrb[0].mxu0 %v4285
    %v4342 = vpop.f32.mrb[0].mxu0
    %v4343 = vadd.f32 %v4282, %v4342
    %v4344 = vpop.f32.mrb[0].mxu0
    %v4345 = vpop.f32.mrb[0].mxu0
    %v4346 = vadd.f32 %v4282, %v4345
    %v4347 = vpop.f32.mrb[0].mxu0
    %4348 = vmatprep.mubr.bf16.mxu0 0
    %4349 = vmatmul.mubr.bf16.gmra.mrb[0].mxu0 %v4288
    %v4350 = vpop.f32.mrb[0].mxu0
    %v4351 = vadd.f32 %v4282, %v4350
    %v4352 = vpop.f32.mrb[0].mxu0
    %v4353 = vpop.f32.mrb[0].mxu0
    %v4354 = vadd.f32 %v4282, %v4353
    %v4355 = vpop.f32.mrb[0].mxu0
    %4356 = vmatprep.mubr.bf16.mxu0 0
    %4357 = vmatmul.mubr.bf16.gmra.mrb[0].mxu0 %v4291
    %v4358 = vpop.f32.mrb[0].mxu0
    %v4359 = vadd.f32 %v4282, %v4358
    %v4360 = vpop.f32.mrb[0].mxu0
    %v4361 = vpop.f32.mrb[0].mxu0
    %v4362 = vadd.f32 %v4282, %v4361
    %v4363 = vpop.f32.mrb[0].mxu0
    %4364 = vmatprep.mubr.bf16.mxu0 0
    %4365 = vmatmul.mubr.bf16.gmra.mrb[0].mxu0 %v4294
    %v4366 = vpop.f32.mrb[0].mxu0
    %v4367 = vadd.f32 %v4282, %v4366
    %v4368 = vpop.f32.mrb[0].mxu0
    %v4369 = vpop.f32.mrb[0].mxu0
    %v4370 = vadd.f32 %v4282, %v4369
    %v4371 = vpop.f32.mrb[0].mxu0
    %4372 = vmatprep.mubr.bf16.mxu0 0
    %4373 = vmatmul.mubr.bf16.gmra.mrb[0].mxu0 %v4297
    %v4374 = vpop.f32.mrb[0].mxu0
    %v4375 = vadd.f32 %v4282, %v4374
    %v4376 = vpop.f32.mrb[0].mxu0
    %v4377 = vpop.f32.mrb[0].mxu0
    %v4378 = vadd.f32 %v4282, %v4377
    %v4379 = vpop.f32.mrb[0].mxu0
    %4380 = vmatprep.mubr.bf16.mxu0 0
    %4381 = vmatmul.mubr.bf16.gmra.mrb[0].mxu0 %v4300
    %v4382 = vpop.f32.mrb[0].mxu0
    %v4383 = vadd.f32 %v4282, %v4382
    %v4384 = vpop.f32.mrb[0].mxu0
    %v4385 = vpop.f32.mrb[0].mxu0
    %v4386 = vadd.f32 %v4282, %v4385
    %v4387 = vpop.f32.mrb[0].mxu0
    %4388 = vmatprep.mubr.bf16.mxu0 0
    %4389 = vmatmul.mubr.bf16.gmra.mrb[0].mxu0 %v4303
    %v4390 = vpop.f32.mrb[0].mxu0
    %v4391 = vadd.f32 %v4282, %v4390
    %v4392 = vpop.f32.mrb[0].mxu0
    %v4393 = vpop.f32.mrb[0].mxu0
    %v4394 = vadd.f32 %v4282, %v4393
    %v4395 = vpop.f32.mrb[0].mxu0
    %4396 = vmatprep.mubr.bf16.mxu0 0
    %4397 = vmatmul.mubr.bf16.gmra.mrb[0].mxu0 %v4306
    %v4398 = vpop.f32.mrb[0].mxu0
    %v4399 = vadd.f32 %v4282, %v4398
    %v4400 = vpop.f32.mrb[0].mxu0
    %v4401 = vpop.f32.mrb[0].mxu0
    %v4402 = vadd.f32 %v4282, %v4401
    %v4403 = vpop.f32.mrb[0].mxu0
    %4404 = vdwg.mxu0
    %v4405 = vld [vmem:[%s2] sm:$0xff]
    %v4406 = vld [vmem:[%s2 + $0x8] sm:$0xff]
    %v4407 = vld [vmem:[%s2 + $0x10] sm:$0xff]
    %v4408 = vld [vmem:[%s2 + $0x18] sm:$0xff]
    %v4409 = vld [vmem:[%s2 + $0x20] sm:$0xff]
    %v4410 = vld [vmem:[%s2 + $0x28] sm:$0xff]
    %v4411 = vld [vmem:[%s2 + $0x30] sm:$0xff]
    %v4412 = vld [vmem:[%s2 + $0x38] sm:$0xff]
    %v4413 = vpack.c.bf16 %v4242, %v4242
    %v4414 = vpack.c.bf16 %v4245, %v4245
    %v4415 = vpack.c.bf16 %v4250, %v4250
    %v4416 = vpack.c.bf16 %v4253, %v4253
    %v4417 = vpack.c.bf16 %v4258, %v4258
    %v4418 = vpack.c.bf16 %v4261, %v4261
    %v4419 = vpack.c.bf16 %v4266, %v4266
    %v4420 = vpack.c.bf16 %v4269, %v4269
    %v4421 = vpack.c.bf16 %v4346, %v4343
    %v4422 = vpack.c.bf16 %v4354, %v4351
    %v4423 = vpack.c.bf16 %v4362, %v4359
    %v4424 = vpack.c.bf16 %v4370, %v4367
    %v4425 = vpack.c.bf16 %v4378, %v4375
    %v4426 = vpack.c.bf16 %v4386, %v4383
    %v4427 = vpack.c.bf16 %v4394, %v4391
    %v4428 = vpack.c.bf16 %v4402, %v4399
    %v4430 = vsel %vm325, %v4413, 0
    %v4433 = vsel %vm325, %v4421, 0
    %4435 = vmatprep.subr.bf16.mxu0 0
    %4436 = vmatpush1.bf16.xpose.msra.mxu0 %v4433
    %4437 = vmatprep.subr.bf16.mxu0 0
    %4438 = vmatpush1.bf16.xpose.msra.mxu0 0
    %4439 = vmatprep.subr.bf16.mxu0 0
    %4440 = vmatpush1.bf16.xpose.msra.mxu0 0
    %4441 = vmatprep.subr.bf16.mxu0 0
    %4442 = vmatpush1.bf16.xpose.msra.mxu0 0
    %4443 = vmatprep.subr.bf16.mxu0 0
    %4444 = vmatpush1.bf16.xpose.msra.mxu0 0
    %4445 = vmatprep.subr.bf16.mxu0 0
    %4446 = vmatpush1.bf16.xpose.msra.mxu0 0
    %4447 = vmatprep.subr.bf16.mxu0 0
    %4448 = vmatpush1.bf16.xpose.msra.mxu0 0
    %4449 = vmatprep.subr.bf16.mxu0 0
    %4450 = vmatpush1.bf16.xpose.msra.mxu0 0
    %4451 = vmatprep.subr.bf16.mxu0 0
    %4452 = vmatpush1.bf16.xpose.msra.mxu0 0
    %4453 = vmatprep.subr.bf16.mxu0 0
    %4454 = vmatpush1.bf16.xpose.msra.mxu0 0
    %4455 = vmatprep.subr.bf16.mxu0 0
    %4456 = vmatpush1.bf16.xpose.msra.mxu0 0
    %4457 = vmatprep.subr.bf16.mxu0 0
    %4458 = vmatpush1.bf16.xpose.msra.mxu0 0
    %4459 = vmatprep.subr.bf16.mxu0 0
    %4460 = vmatpush1.bf16.xpose.msra.mxu0 0
    %4461 = vmatprep.subr.bf16.mxu0 0
    %4462 = vmatpush1.bf16.xpose.msra.mxu0 0
    %4463 = vmatprep.subr.bf16.mxu0 0
    %4464 = vmatpush1.bf16.xpose.msra.mxu0 0
    %4465 = vmatprep.subr.bf16.mxu0 0
    %4466 = vmatpush1.bf16.xpose.msra.mxu0 0
    %4467 = vmatprep.mubr.bf16.mxu0 0
    %4468 = vmatmul.mubr.bf16.gmra.mrb[0].mxu0 %v4430
    %v4469 = vpop.f32.mrb[0].mxu0
    %v4470 = vadd.f32 %v4405, %v4469
    %v4471 = vpop.f32.mrb[0].mxu0
    %v4472 = vpop.f32.mrb[0].mxu0
    %v4473 = vpop.f32.mrb[0].mxu0
    %4474 = vdwg.mxu0
    %v4476 = vsel %vm325, %v4414, 0
    %v4479 = vsel %vm325, %v4422, 0
    %4481 = vmatprep.subr.bf16.mxu0 0
    %4482 = vmatpush1.bf16.xpose.msra.mxu0 %v4479
    %4483 = vmatprep.subr.bf16.mxu0 0
    %4484 = vmatpush1.bf16.xpose.msra.mxu0 0
    %4485 = vmatprep.subr.bf16.mxu0 0
    %4486 = vmatpush1.bf16.xpose.msra.mxu0 0
    %4487 = vmatprep.subr.bf16.mxu0 0
    %4488 = vmatpush1.bf16.xpose.msra.mxu0 0
    %4489 = vmatprep.subr.bf16.mxu0 0
    %4490 = vmatpush1.bf16.xpose.msra.mxu0 0
    %4491 = vmatprep.subr.bf16.mxu0 0
    %4492 = vmatpush1.bf16.xpose.msra.mxu0 0
    %4493 = vmatprep.subr.bf16.mxu0 0
    %4494 = vmatpush1.bf16.xpose.msra.mxu0 0
    %4495 = vmatprep.subr.bf16.mxu0 0
    %4496 = vmatpush1.bf16.xpose.msra.mxu0 0
    %4497 = vmatprep.subr.bf16.mxu0 0
    %4498 = vmatpush1.bf16.xpose.msra.mxu0 0
    %4499 = vmatprep.subr.bf16.mxu0 0
    %4500 = vmatpush1.bf16.xpose.msra.mxu0 0
    %4501 = vmatprep.subr.bf16.mxu0 0
    %4502 = vmatpush1.bf16.xpose.msra.mxu0 0
    %4503 = vmatprep.subr.bf16.mxu0 0
    %4504 = vmatpush1.bf16.xpose.msra.mxu0 0
    %4505 = vmatprep.subr.bf16.mxu0 0
    %4506 = vmatpush1.bf16.xpose.msra.mxu0 0
    %4507 = vmatprep.subr.bf16.mxu0 0
    %4508 = vmatpush1.bf16.xpose.msra.mxu0 0
    %4509 = vmatprep.subr.bf16.mxu0 0
    %4510 = vmatpush1.bf16.xpose.msra.mxu0 0
    %4511 = vmatprep.subr.bf16.mxu0 0
    %4512 = vmatpush1.bf16.xpose.msra.mxu0 0
    %4513 = vmatprep.mubr.bf16.mxu0 0
    %4514 = vmatmul.mubr.bf16.gmra.mrb[0].mxu0 %v4476
    %v4515 = vpop.f32.mrb[0].mxu0
    %v4516 = vadd.f32 %v4406, %v4515
    %v4517 = vpop.f32.mrb[0].mxu0
    %v4518 = vpop.f32.mrb[0].mxu0
    %v4519 = vpop.f32.mrb[0].mxu0
    %4520 = vdwg.mxu0
    %v4522 = vsel %vm325, %v4415, 0
    %v4525 = vsel %vm325, %v4423, 0
    %4527 = vmatprep.subr.bf16.mxu0 0
    %4528 = vmatpush1.bf16.xpose.msra.mxu0 %v4525
    %4529 = vmatprep.subr.bf16.mxu0 0
    %4530 = vmatpush1.bf16.xpose.msra.mxu0 0
    %4531 = vmatprep.subr.bf16.mxu0 0
    %4532 = vmatpush1.bf16.xpose.msra.mxu0 0
    %4533 = vmatprep.subr.bf16.mxu0 0
    %4534 = vmatpush1.bf16.xpose.msra.mxu0 0
    %4535 = vmatprep.subr.bf16.mxu0 0
    %4536 = vmatpush1.bf16.xpose.msra.mxu0 0
    %4537 = vmatprep.subr.bf16.mxu0 0
    %4538 = vmatpush1.bf16.xpose.msra.mxu0 0
    %4539 = vmatprep.subr.bf16.mxu0 0
    %4540 = vmatpush1.bf16.xpose.msra.mxu0 0
    %4541 = vmatprep.subr.bf16.mxu0 0
    %4542 = vmatpush1.bf16.xpose.msra.mxu0 0
    %4543 = vmatprep.subr.bf16.mxu0 0
    %4544 = vmatpush1.bf16.xpose.msra.mxu0 0
    %4545 = vmatprep.subr.bf16.mxu0 0
    %4546 = vmatpush1.bf16.xpose.msra.mxu0 0
    %4547 = vmatprep.subr.bf16.mxu0 0
    %4548 = vmatpush1.bf16.xpose.msra.mxu0 0
    %4549 = vmatprep.subr.bf16.mxu0 0
    %4550 = vmatpush1.bf16.xpose.msra.mxu0 0
    %4551 = vmatprep.subr.bf16.mxu0 0
    %4552 = vmatpush1.bf16.xpose.msra.mxu0 0
    %4553 = vmatprep.subr.bf16.mxu0 0
    %4554 = vmatpush1.bf16.xpose.msra.mxu0 0
    %4555 = vmatprep.subr.bf16.mxu0 0
    %4556 = vmatpush1.bf16.xpose.msra.mxu0 0
    %4557 = vmatprep.subr.bf16.mxu0 0
    %4558 = vmatpush1.bf16.xpose.msra.mxu0 0
    %4559 = vmatprep.mubr.bf16.mxu0 0
    %4560 = vmatmul.mubr.bf16.gmra.mrb[0].mxu0 %v4522
    %v4561 = vpop.f32.mrb[0].mxu0
    %v4562 = vadd.f32 %v4407, %v4561
    %v4563 = vpop.f32.mrb[0].mxu0
    %v4564 = vpop.f32.mrb[0].mxu0
    %v4565 = vpop.f32.mrb[0].mxu0
    %4566 = vdwg.mxu0
    %v4568 = vsel %vm325, %v4416, 0
    %v4571 = vsel %vm325, %v4424, 0
    %4573 = vmatprep.subr.bf16.mxu0 0
    %4574 = vmatpush1.bf16.xpose.msra.mxu0 %v4571
    %4575 = vmatprep.subr.bf16.mxu0 0
    %4576 = vmatpush1.bf16.xpose.msra.mxu0 0
    %4577 = vmatprep.subr.bf16.mxu0 0
    %4578 = vmatpush1.bf16.xpose.msra.mxu0 0
    %4579 = vmatprep.subr.bf16.mxu0 0
    %4580 = vmatpush1.bf16.xpose.msra.mxu0 0
    %4581 = vmatprep.subr.bf16.mxu0 0
    %4582 = vmatpush1.bf16.xpose.msra.mxu0 0
    %4583 = vmatprep.subr.bf16.mxu0 0
    %4584 = vmatpush1.bf16.xpose.msra.mxu0 0
    %4585 = vmatprep.subr.bf16.mxu0 0
    %4586 = vmatpush1.bf16.xpose.msra.mxu0 0
    %4587 = vmatprep.subr.bf16.mxu0 0
    %4588 = vmatpush1.bf16.xpose.msra.mxu0 0
    %4589 = vmatprep.subr.bf16.mxu0 0
    %4590 = vmatpush1.bf16.xpose.msra.mxu0 0
    %4591 = vmatprep.subr.bf16.mxu0 0
    %4592 = vmatpush1.bf16.xpose.msra.mxu0 0
    %4593 = vmatprep.subr.bf16.mxu0 0
    %4594 = vmatpush1.bf16.xpose.msra.mxu0 0
    %4595 = vmatprep.subr.bf16.mxu0 0
    %4596 = vmatpush1.bf16.xpose.msra.mxu0 0
    %4597 = vmatprep.subr.bf16.mxu0 0
    %4598 = vmatpush1.bf16.xpose.msra.mxu0 0
    %4599 = vmatprep.subr.bf16.mxu0 0
    %4600 = vmatpush1.bf16.xpose.msra.mxu0 0
    %4601 = vmatprep.subr.bf16.mxu0 0
    %4602 = vmatpush1.bf16.xpose.msra.mxu0 0
    %4603 = vmatprep.subr.bf16.mxu0 0
    %4604 = vmatpush1.bf16.xpose.msra.mxu0 0
    %4605 = vmatprep.mubr.bf16.mxu0 0
    %4606 = vmatmul.mubr.bf16.gmra.mrb[0].mxu0 %v4568
    %v4607 = vpop.f32.mrb[0].mxu0
    %v4608 = vadd.f32 %v4408, %v4607
    %v4609 = vpop.f32.mrb[0].mxu0
    %v4610 = vpop.f32.mrb[0].mxu0
    %v4611 = vpop.f32.mrb[0].mxu0
    %4612 = vdwg.mxu0
    %v4614 = vsel %vm325, %v4417, 0
    %v4617 = vsel %vm325, %v4425, 0
    %4619 = vmatprep.subr.bf16.mxu0 0
    %4620 = vmatpush1.bf16.xpose.msra.mxu0 %v4617
    %4621 = vmatprep.subr.bf16.mxu0 0
    %4622 = vmatpush1.bf16.xpose.msra.mxu0 0
    %4623 = vmatprep.subr.bf16.mxu0 0
    %4624 = vmatpush1.bf16.xpose.msra.mxu0 0
    %4625 = vmatprep.subr.bf16.mxu0 0
    %4626 = vmatpush1.bf16.xpose.msra.mxu0 0
    %4627 = vmatprep.subr.bf16.mxu0 0
    %4628 = vmatpush1.bf16.xpose.msra.mxu0 0
    %4629 = vmatprep.subr.bf16.mxu0 0
    %4630 = vmatpush1.bf16.xpose.msra.mxu0 0
    %4631 = vmatprep.subr.bf16.mxu0 0
    %4632 = vmatpush1.bf16.xpose.msra.mxu0 0
    %4633 = vmatprep.subr.bf16.mxu0 0
    %4634 = vmatpush1.bf16.xpose.msra.mxu0 0
    %4635 = vmatprep.subr.bf16.mxu0 0
    %4636 = vmatpush1.bf16.xpose.msra.mxu0 0
    %4637 = vmatprep.subr.bf16.mxu0 0
    %4638 = vmatpush1.bf16.xpose.msra.mxu0 0
    %4639 = vmatprep.subr.bf16.mxu0 0
    %4640 = vmatpush1.bf16.xpose.msra.mxu0 0
    %4641 = vmatprep.subr.bf16.mxu0 0
    %4642 = vmatpush1.bf16.xpose.msra.mxu0 0
    %4643 = vmatprep.subr.bf16.mxu0 0
    %4644 = vmatpush1.bf16.xpose.msra.mxu0 0
    %4645 = vmatprep.subr.bf16.mxu0 0
    %4646 = vmatpush1.bf16.xpose.msra.mxu0 0
    %4647 = vmatprep.subr.bf16.mxu0 0
    %4648 = vmatpush1.bf16.xpose.msra.mxu0 0
    %4649 = vmatprep.subr.bf16.mxu0 0
    %4650 = vmatpush1.bf16.xpose.msra.mxu0 0
    %4651 = vmatprep.mubr.bf16.mxu0 0
    %4652 = vmatmul.mubr.bf16.gmra.mrb[0].mxu0 %v4614
    %v4653 = vpop.f32.mrb[0].mxu0
    %v4654 = vadd.f32 %v4409, %v4653
    %v4655 = vpop.f32.mrb[0].mxu0
    %v4656 = vpop.f32.mrb[0].mxu0
    %v4657 = vpop.f32.mrb[0].mxu0
    %4658 = vdwg.mxu0
    %v4660 = vsel %vm325, %v4418, 0
    %v4663 = vsel %vm325, %v4426, 0
    %4665 = vmatprep.subr.bf16.mxu0 0
    %4666 = vmatpush1.bf16.xpose.msra.mxu0 %v4663
    %4667 = vmatprep.subr.bf16.mxu0 0
    %4668 = vmatpush1.bf16.xpose.msra.mxu0 0
    %4669 = vmatprep.subr.bf16.mxu0 0
    %4670 = vmatpush1.bf16.xpose.msra.mxu0 0
    %4671 = vmatprep.subr.bf16.mxu0 0
    %4672 = vmatpush1.bf16.xpose.msra.mxu0 0
    %4673 = vmatprep.subr.bf16.mxu0 0
    %4674 = vmatpush1.bf16.xpose.msra.mxu0 0
    %4675 = vmatprep.subr.bf16.mxu0 0
    %4676 = vmatpush1.bf16.xpose.msra.mxu0 0
    %4677 = vmatprep.subr.bf16.mxu0 0
    %4678 = vmatpush1.bf16.xpose.msra.mxu0 0
    %4679 = vmatprep.subr.bf16.mxu0 0
    %4680 = vmatpush1.bf16.xpose.msra.mxu0 0
    %4681 = vmatprep.subr.bf16.mxu0 0
    %4682 = vmatpush1.bf16.xpose.msra.mxu0 0
    %4683 = vmatprep.subr.bf16.mxu0 0
    %4684 = vmatpush1.bf16.xpose.msra.mxu0 0
    %4685 = vmatprep.subr.bf16.mxu0 0
    %4686 = vmatpush1.bf16.xpose.msra.mxu0 0
    %4687 = vmatprep.subr.bf16.mxu0 0
    %4688 = vmatpush1.bf16.xpose.msra.mxu0 0
    %4689 = vmatprep.subr.bf16.mxu0 0
    %4690 = vmatpush1.bf16.xpose.msra.mxu0 0
    %4691 = vmatprep.subr.bf16.mxu0 0
    %4692 = vmatpush1.bf16.xpose.msra.mxu0 0
    %4693 = vmatprep.subr.bf16.mxu0 0
    %4694 = vmatpush1.bf16.xpose.msra.mxu0 0
    %4695 = vmatprep.subr.bf16.mxu0 0
    %4696 = vmatpush1.bf16.xpose.msra.mxu0 0
    %4697 = vmatprep.mubr.bf16.mxu0 0
    %4698 = vmatmul.mubr.bf16.gmra.mrb[0].mxu0 %v4660
    %v4699 = vpop.f32.mrb[0].mxu0
    %v4700 = vadd.f32 %v4410, %v4699
    %v4701 = vpop.f32.mrb[0].mxu0
    %v4702 = vpop.f32.mrb[0].mxu0
    %v4703 = vpop.f32.mrb[0].mxu0
    %4704 = vdwg.mxu0
    %v4706 = vsel %vm325, %v4419, 0
    %v4709 = vsel %vm325, %v4427, 0
    %4711 = vmatprep.subr.bf16.mxu0 0
    %4712 = vmatpush1.bf16.xpose.msra.mxu0 %v4709
    %4713 = vmatprep.subr.bf16.mxu0 0
    %4714 = vmatpush1.bf16.xpose.msra.mxu0 0
    %4715 = vmatprep.subr.bf16.mxu0 0
    %4716 = vmatpush1.bf16.xpose.msra.mxu0 0
    %4717 = vmatprep.subr.bf16.mxu0 0
    %4718 = vmatpush1.bf16.xpose.msra.mxu0 0
    %4719 = vmatprep.subr.bf16.mxu0 0
    %4720 = vmatpush1.bf16.xpose.msra.mxu0 0
    %4721 = vmatprep.subr.bf16.mxu0 0
    %4722 = vmatpush1.bf16.xpose.msra.mxu0 0
    %4723 = vmatprep.subr.bf16.mxu0 0
    %4724 = vmatpush1.bf16.xpose.msra.mxu0 0
    %4725 = vmatprep.subr.bf16.mxu0 0
    %4726 = vmatpush1.bf16.xpose.msra.mxu0 0
    %4727 = vmatprep.subr.bf16.mxu0 0
    %4728 = vmatpush1.bf16.xpose.msra.mxu0 0
    %4729 = vmatprep.subr.bf16.mxu0 0
    %4730 = vmatpush1.bf16.xpose.msra.mxu0 0
    %4731 = vmatprep.subr.bf16.mxu0 0
    %4732 = vmatpush1.bf16.xpose.msra.mxu0 0
    %4733 = vmatprep.subr.bf16.mxu0 0
    %4734 = vmatpush1.bf16.xpose.msra.mxu0 0
    %4735 = vmatprep.subr.bf16.mxu0 0
    %4736 = vmatpush1.bf16.xpose.msra.mxu0 0
    %4737 = vmatprep.subr.bf16.mxu0 0
    %4738 = vmatpush1.bf16.xpose.msra.mxu0 0
    %4739 = vmatprep.subr.bf16.mxu0 0
    %4740 = vmatpush1.bf16.xpose.msra.mxu0 0
    %4741 = vmatprep.subr.bf16.mxu0 0
    %4742 = vmatpush1.bf16.xpose.msra.mxu0 0
    %4743 = vmatprep.mubr.bf16.mxu0 0
    %4744 = vmatmul.mubr.bf16.gmra.mrb[0].mxu0 %v4706
    %v4745 = vpop.f32.mrb[0].mxu0
    %v4746 = vadd.f32 %v4411, %v4745
    %v4747 = vpop.f32.mrb[0].mxu0
    %v4748 = vpop.f32.mrb[0].mxu0
    %v4749 = vpop.f32.mrb[0].mxu0
    %4750 = vdwg.mxu0
    %v4752 = vsel %vm325, %v4420, 0
    %v4755 = vsel %vm325, %v4428, 0
    %4757 = vmatprep.subr.bf16.mxu0 0
    %4758 = vmatpush1.bf16.xpose.msra.mxu0 %v4755
    %4759 = vmatprep.subr.bf16.mxu0 0
    %4760 = vmatpush1.bf16.xpose.msra.mxu0 0
    %4761 = vmatprep.subr.bf16.mxu0 0
    %4762 = vmatpush1.bf16.xpose.msra.mxu0 0
    %4763 = vmatprep.subr.bf16.mxu0 0
    %4764 = vmatpush1.bf16.xpose.msra.mxu0 0
    %4765 = vmatprep.subr.bf16.mxu0 0
    %4766 = vmatpush1.bf16.xpose.msra.mxu0 0
    %4767 = vmatprep.subr.bf16.mxu0 0
    %4768 = vmatpush1.bf16.xpose.msra.mxu0 0
    %4769 = vmatprep.subr.bf16.mxu0 0
    %4770 = vmatpush1.bf16.xpose.msra.mxu0 0
    %4771 = vmatprep.subr.bf16.mxu0 0
    %4772 = vmatpush1.bf16.xpose.msra.mxu0 0
    %4773 = vmatprep.subr.bf16.mxu0 0
    %4774 = vmatpush1.bf16.xpose.msra.mxu0 0
    %4775 = vmatprep.subr.bf16.mxu0 0
    %4776 = vmatpush1.bf16.xpose.msra.mxu0 0
    %4777 = vmatprep.subr.bf16.mxu0 0
    %4778 = vmatpush1.bf16.xpose.msra.mxu0 0
    %4779 = vmatprep.subr.bf16.mxu0 0
    %4780 = vmatpush1.bf16.xpose.msra.mxu0 0
    %4781 = vmatprep.subr.bf16.mxu0 0
    %4782 = vmatpush1.bf16.xpose.msra.mxu0 0
    %4783 = vmatprep.subr.bf16.mxu0 0
    %4784 = vmatpush1.bf16.xpose.msra.mxu0 0
    %4785 = vmatprep.subr.bf16.mxu0 0
    %4786 = vmatpush1.bf16.xpose.msra.mxu0 0
    %4787 = vmatprep.subr.bf16.mxu0 0
    %4788 = vmatpush1.bf16.xpose.msra.mxu0 0
    %4789 = vmatprep.mubr.bf16.mxu0 0
    %4790 = vmatmul.mubr.bf16.gmra.mrb[0].mxu0 %v4752
    %v4791 = vpop.f32.mrb[0].mxu0
    %v4792 = vadd.f32 %v4412, %v4791
    %v4793 = vpop.f32.mrb[0].mxu0
    %v4794 = vpop.f32.mrb[0].mxu0
    %v4795 = vpop.f32.mrb[0].mxu0
    %4796 = vdwg.mxu0
    %v4797 = vsel %vm3940, %v4470, -inf
    %4798 = vmax.xlane.f32.xlu0 %v4797
    %v4799 = vpop.xlane.xlu0 %4798
    %v4800 = vsel %vm3940, %v4516, -inf
    %4801 = vmax.xlane.f32.xlu0 %v4800
    %v4802 = vpop.xlane.xlu0 %4801
    %v4803 = vsel %vm3940, %v4562, -inf
    %4804 = vmax.xlane.f32.xlu0 %v4803
    %v4805 = vpop.xlane.xlu0 %4804
    %v4806 = vsel %vm3940, %v4608, -inf
    %4807 = vmax.xlane.f32.xlu0 %v4806
    %v4808 = vpop.xlane.xlu0 %4807
    %v4809 = vsel %vm3940, %v4654, -inf
    %4810 = vmax.xlane.f32.xlu0 %v4809
    %v4811 = vpop.xlane.xlu0 %4810
    %v4812 = vsel %vm3940, %v4700, -inf
    %4813 = vmax.xlane.f32.xlu0 %v4812
    %v4814 = vpop.xlane.xlu0 %4813
    %v4815 = vsel %vm3940, %v4746, -inf
    %4816 = vmax.xlane.f32.xlu0 %v4815
    %v4817 = vpop.xlane.xlu0 %4816
    %v4818 = vsel %vm3940, %v4792, -inf
    %4819 = vmax.xlane.f32.xlu0 %v4818
    %v4820 = vpop.xlane.xlu0 %4819
    %v4821 = vsub.f32 %v4470, %v4799
    %v4822 = vsub.f32 %v4516, %v4802
    %v4823 = vsub.f32 %v4562, %v4805
    %v4824 = vsub.f32 %v4608, %v4808
    %v4825 = vsub.f32 %v4654, %v4811
    %v4826 = vsub.f32 %v4700, %v4814
    %v4827 = vsub.f32 %v4746, %v4817
    %v4828 = vsub.f32 %v4792, %v4820
    %v4829 = vmul.f32 %v4821, 1.442695
    %v4830 = vpow.pop %v4829
    %v4831 = vmul.f32 %v4822, 1.442695
    %v4832 = vpow.pop %v4831
    %v4833 = vmul.f32 %v4823, 1.442695
    %v4834 = vpow.pop %v4833
    %v4835 = vmul.f32 %v4824, 1.442695
    %v4836 = vpow.pop %v4835
    %v4837 = vmul.f32 %v4825, 1.442695
    %v4838 = vpow.pop %v4837
    %v4839 = vmul.f32 %v4826, 1.442695
    %v4840 = vpow.pop %v4839
    %v4841 = vmul.f32 %v4827, 1.442695
    %v4842 = vpow.pop %v4841
    %v4843 = vmul.f32 %v4828, 1.442695
    %v4844 = vpow.pop %v4843
    %v4845 = vsel %vm3940, %v4830, 0.0
    %4846 = vadd.xlane.f32.xlu0 %v4845
    %v4847 = vpop.xlane.xlu0 %4846
    %v4848 = vsel %vm3940, %v4832, 0.0
    %4849 = vadd.xlane.f32.xlu0 %v4848
    %v4850 = vpop.xlane.xlu0 %4849
    %v4851 = vsel %vm3940, %v4834, 0.0
    %4852 = vadd.xlane.f32.xlu0 %v4851
    %v4853 = vpop.xlane.xlu0 %4852
    %v4854 = vsel %vm3940, %v4836, 0.0
    %4855 = vadd.xlane.f32.xlu0 %v4854
    %v4856 = vpop.xlane.xlu0 %4855
    %v4857 = vsel %vm3940, %v4838, 0.0
    %4858 = vadd.xlane.f32.xlu0 %v4857
    %v4859 = vpop.xlane.xlu0 %4858
    %v4860 = vsel %vm3940, %v4840, 0.0
    %4861 = vadd.xlane.f32.xlu0 %v4860
    %v4862 = vpop.xlane.xlu0 %4861
    %v4863 = vsel %vm3940, %v4842, 0.0
    %4864 = vadd.xlane.f32.xlu0 %v4863
    %v4865 = vpop.xlane.xlu0 %4864
    %v4866 = vsel %vm3940, %v4844, 0.0
    %4867 = vadd.xlane.f32.xlu0 %v4866
    %v4868 = vpop.xlane.xlu0 %4867
    %v4869 = vrcp.pop %v4847
    %v4870 = vmul.f32 %v4830, %v4869
    %v4871 = vrcp.pop %v4850
    %v4872 = vmul.f32 %v4832, %v4871
    %v4873 = vrcp.pop %v4853
    %v4874 = vmul.f32 %v4834, %v4873
    %v4875 = vrcp.pop %v4856
    %v4876 = vmul.f32 %v4836, %v4875
    %v4877 = vrcp.pop %v4859
    %v4878 = vmul.f32 %v4838, %v4877
    %v4879 = vrcp.pop %v4862
    %v4880 = vmul.f32 %v4840, %v4879
    %v4881 = vrcp.pop %v4865
    %v4882 = vmul.f32 %v4842, %v4881
    %v4883 = vrcp.pop %v4868
    %v4884 = vmul.f32 %v4844, %v4883
    %v4885 = vpack.c.bf16 %v4870, %v4870
    %v4886 = vpack.c.bf16 %v4872, %v4872
    %v4887 = vpack.c.bf16 %v4874, %v4874
    %v4888 = vpack.c.bf16 %v4876, %v4876
    %v4889 = vpack.c.bf16 %v4878, %v4878
    %v4890 = vpack.c.bf16 %v4880, %v4880
    %v4891 = vpack.c.bf16 %v4882, %v4882
    %v4892 = vpack.c.bf16 %v4884, %v4884
    %4894 = vrot.lane.b32.xlu0 %v4421, 96
    %v4895 = vpop.permute.xlu0 %4894
    %v4898 = vsel %vm3940, %v4885, 0
    %4900 = vmatprep.subr.bf16.mxu0 0
    %4901 = vmatpush1.bf16.msra.mxu0 %v4895
    %4902 = vmatprep.subr.bf16.mxu0 0
    %4903 = vmatpush1.bf16.msra.mxu0 0
    %4904 = vmatprep.subr.bf16.mxu0 0
    %4905 = vmatpush1.bf16.msra.mxu0 0
    %4906 = vmatprep.subr.bf16.mxu0 0
    %4907 = vmatpush1.bf16.msra.mxu0 0
    %4908 = vmatprep.subr.bf16.mxu0 0
    %4909 = vmatpush1.bf16.msra.mxu0 0
    %4910 = vmatprep.subr.bf16.mxu0 0
    %4911 = vmatpush1.bf16.msra.mxu0 0
    %4912 = vmatprep.subr.bf16.mxu0 0
    %4913 = vmatpush1.bf16.msra.mxu0 0
    %4914 = vmatprep.subr.bf16.mxu0 0
    %4915 = vmatpush1.bf16.msra.mxu0 0
    %4916 = vmatprep.subr.bf16.mxu0 0
    %4917 = vmatpush1.bf16.msra.mxu0 0
    %4918 = vmatprep.subr.bf16.mxu0 0
    %4919 = vmatpush1.bf16.msra.mxu0 0
    %4920 = vmatprep.subr.bf16.mxu0 0
    %4921 = vmatpush1.bf16.msra.mxu0 0
    %4922 = vmatprep.subr.bf16.mxu0 0
    %4923 = vmatpush1.bf16.msra.mxu0 0
    %4924 = vmatprep.subr.bf16.mxu0 0
    %4925 = vmatpush1.bf16.msra.mxu0 0
    %4926 = vmatprep.subr.bf16.mxu0 0
    %4927 = vmatpush1.bf16.msra.mxu0 0
    %4928 = vmatprep.subr.bf16.mxu0 0
    %4929 = vmatpush1.bf16.msra.mxu0 0
    %4930 = vmatprep.subr.bf16.mxu0 0
    %4931 = vmatpush1.bf16.msra.mxu0 0
    %4932 = vmatprep.mubr.bf16.mxu0 0
    %4933 = vmatmul.mubr.bf16.gmra.mrb[0].mxu0 %v4898
    %v4934 = vpop.f32.mrb[0].mxu0
    %v4935 = vadd.f32 0.0, %v4934
    %v4936 = vpop.f32.mrb[0].mxu0
    %v4937 = vpop.f32.mrb[0].mxu0
    %v4938 = vpop.f32.mrb[0].mxu0
    %4939 = vdwg.mxu0
    %4941 = vrot.lane.b32.xlu0 %v4422, 96
    %v4942 = vpop.permute.xlu0 %4941
    %v4945 = vsel %vm3940, %v4886, 0
    %4947 = vmatprep.subr.bf16.mxu0 0
    %4948 = vmatpush1.bf16.msra.mxu0 %v4942
    %4949 = vmatprep.subr.bf16.mxu0 0
    %4950 = vmatpush1.bf16.msra.mxu0 0
    %4951 = vmatprep.subr.bf16.mxu0 0
    %4952 = vmatpush1.bf16.msra.mxu0 0
    %4953 = vmatprep.subr.bf16.mxu0 0
    %4954 = vmatpush1.bf16.msra.mxu0 0
    %4955 = vmatprep.subr.bf16.mxu0 0
    %4956 = vmatpush1.bf16.msra.mxu0 0
    %4957 = vmatprep.subr.bf16.mxu0 0
    %4958 = vmatpush1.bf16.msra.mxu0 0
    %4959 = vmatprep.subr.bf16.mxu0 0
    %4960 = vmatpush1.bf16.msra.mxu0 0
    %4961 = vmatprep.subr.bf16.mxu0 0
    %4962 = vmatpush1.bf16.msra.mxu0 0
    %4963 = vmatprep.subr.bf16.mxu0 0
    %4964 = vmatpush1.bf16.msra.mxu0 0
    %4965 = vmatprep.subr.bf16.mxu0 0
    %4966 = vmatpush1.bf16.msra.mxu0 0
    %4967 = vmatprep.subr.bf16.mxu0 0
    %4968 = vmatpush1.bf16.msra.mxu0 0
    %4969 = vmatprep.subr.bf16.mxu0 0
    %4970 = vmatpush1.bf16.msra.mxu0 0
    %4971 = vmatprep.subr.bf16.mxu0 0
    %4972 = vmatpush1.bf16.msra.mxu0 0
    %4973 = vmatprep.subr.bf16.mxu0 0
    %4974 = vmatpush1.bf16.msra.mxu0 0
    %4975 = vmatprep.subr.bf16.mxu0 0
    %4976 = vmatpush1.bf16.msra.mxu0 0
    %4977 = vmatprep.subr.bf16.mxu0 0
    %4978 = vmatpush1.bf16.msra.mxu0 0
    %4979 = vmatprep.mubr.bf16.mxu0 0
    %4980 = vmatmul.mubr.bf16.gmra.mrb[0].mxu0 %v4945
    %v4981 = vpop.f32.mrb[0].mxu0
    %v4982 = vadd.f32 0.0, %v4981
    %v4983 = vpop.f32.mrb[0].mxu0
    %v4984 = vpop.f32.mrb[0].mxu0
    %v4985 = vpop.f32.mrb[0].mxu0
    %4986 = vdwg.mxu0
    %4988 = vrot.lane.b32.xlu0 %v4423, 96
    %v4989 = vpop.permute.xlu0 %4988
    %v4992 = vsel %vm3940, %v4887, 0
    %4994 = vmatprep.subr.bf16.mxu0 0
    %4995 = vmatpush1.bf16.msra.mxu0 %v4989
    %4996 = vmatprep.subr.bf16.mxu0 0
    %4997 = vmatpush1.bf16.msra.mxu0 0
    %4998 = vmatprep.subr.bf16.mxu0 0
    %4999 = vmatpush1.bf16.msra.mxu0 0
    %5000 = vmatprep.subr.bf16.mxu0 0
    %5001 = vmatpush1.bf16.msra.mxu0 0
    %5002 = vmatprep.subr.bf16.mxu0 0
    %5003 = vmatpush1.bf16.msra.mxu0 0
    %5004 = vmatprep.subr.bf16.mxu0 0
    %5005 = vmatpush1.bf16.msra.mxu0 0
    %5006 = vmatprep.subr.bf16.mxu0 0
    %5007 = vmatpush1.bf16.msra.mxu0 0
    %5008 = vmatprep.subr.bf16.mxu0 0
    %5009 = vmatpush1.bf16.msra.mxu0 0
    %5010 = vmatprep.subr.bf16.mxu0 0
    %5011 = vmatpush1.bf16.msra.mxu0 0
    %5012 = vmatprep.subr.bf16.mxu0 0
    %5013 = vmatpush1.bf16.msra.mxu0 0
    %5014 = vmatprep.subr.bf16.mxu0 0
    %5015 = vmatpush1.bf16.msra.mxu0 0
    %5016 = vmatprep.subr.bf16.mxu0 0
    %5017 = vmatpush1.bf16.msra.mxu0 0
    %5018 = vmatprep.subr.bf16.mxu0 0
    %5019 = vmatpush1.bf16.msra.mxu0 0
    %5020 = vmatprep.subr.bf16.mxu0 0
    %5021 = vmatpush1.bf16.msra.mxu0 0
    %5022 = vmatprep.subr.bf16.mxu0 0
    %5023 = vmatpush1.bf16.msra.mxu0 0
    %5024 = vmatprep.subr.bf16.mxu0 0
    %5025 = vmatpush1.bf16.msra.mxu0 0
    %5026 = vmatprep.mubr.bf16.mxu0 0
    %5027 = vmatmul.mubr.bf16.gmra.mrb[0].mxu0 %v4992
    %v5028 = vpop.f32.mrb[0].mxu0
    %v5029 = vadd.f32 0.0, %v5028
    %v5030 = vpop.f32.mrb[0].mxu0
    %v5031 = vpop.f32.mrb[0].mxu0
    %v5032 = vpop.f32.mrb[0].mxu0
    %5033 = vdwg.mxu0
    %5035 = vrot.lane.b32.xlu0 %v4424, 96
    %v5036 = vpop.permute.xlu0 %5035
    %v5039 = vsel %vm3940, %v4888, 0
    %5041 = vmatprep.subr.bf16.mxu0 0
    %5042 = vmatpush1.bf16.msra.mxu0 %v5036
    %5043 = vmatprep.subr.bf16.mxu0 0
    %5044 = vmatpush1.bf16.msra.mxu0 0
    %5045 = vmatprep.subr.bf16.mxu0 0
    %5046 = vmatpush1.bf16.msra.mxu0 0
    %5047 = vmatprep.subr.bf16.mxu0 0
    %5048 = vmatpush1.bf16.msra.mxu0 0
    %5049 = vmatprep.subr.bf16.mxu0 0
    %5050 = vmatpush1.bf16.msra.mxu0 0
    %5051 = vmatprep.subr.bf16.mxu0 0
    %5052 = vmatpush1.bf16.msra.mxu0 0
    %5053 = vmatprep.subr.bf16.mxu0 0
    %5054 = vmatpush1.bf16.msra.mxu0 0
    %5055 = vmatprep.subr.bf16.mxu0 0
    %5056 = vmatpush1.bf16.msra.mxu0 0
    %5057 = vmatprep.subr.bf16.mxu0 0
    %5058 = vmatpush1.bf16.msra.mxu0 0
    %5059 = vmatprep.subr.bf16.mxu0 0
    %5060 = vmatpush1.bf16.msra.mxu0 0
    %5061 = vmatprep.subr.bf16.mxu0 0
    %5062 = vmatpush1.bf16.msra.mxu0 0
    %5063 = vmatprep.subr.bf16.mxu0 0
    %5064 = vmatpush1.bf16.msra.mxu0 0
    %5065 = vmatprep.subr.bf16.mxu0 0
    %5066 = vmatpush1.bf16.msra.mxu0 0
    %5067 = vmatprep.subr.bf16.mxu0 0
    %5068 = vmatpush1.bf16.msra.mxu0 0
    %5069 = vmatprep.subr.bf16.mxu0 0
    %5070 = vmatpush1.bf16.msra.mxu0 0
    %5071 = vmatprep.subr.bf16.mxu0 0
    %5072 = vmatpush1.bf16.msra.mxu0 0
    %5073 = vmatprep.mubr.bf16.mxu0 0
    %5074 = vmatmul.mubr.bf16.gmra.mrb[0].mxu0 %v5039
    %v5075 = vpop.f32.mrb[0].mxu0
    %v5076 = vadd.f32 0.0, %v5075
    %v5077 = vpop.f32.mrb[0].mxu0
    %v5078 = vpop.f32.mrb[0].mxu0
    %v5079 = vpop.f32.mrb[0].mxu0
    %5080 = vdwg.mxu0
    %5082 = vrot.lane.b32.xlu0 %v4425, 96
    %v5083 = vpop.permute.xlu0 %5082
    %v5086 = vsel %vm3940, %v4889, 0
    %5088 = vmatprep.subr.bf16.mxu0 0
    %5089 = vmatpush1.bf16.msra.mxu0 %v5083
    %5090 = vmatprep.subr.bf16.mxu0 0
    %5091 = vmatpush1.bf16.msra.mxu0 0
    %5092 = vmatprep.subr.bf16.mxu0 0
    %5093 = vmatpush1.bf16.msra.mxu0 0
    %5094 = vmatprep.subr.bf16.mxu0 0
    %5095 = vmatpush1.bf16.msra.mxu0 0
    %5096 = vmatprep.subr.bf16.mxu0 0
    %5097 = vmatpush1.bf16.msra.mxu0 0
    %5098 = vmatprep.subr.bf16.mxu0 0
    %5099 = vmatpush1.bf16.msra.mxu0 0
    %5100 = vmatprep.subr.bf16.mxu0 0
    %5101 = vmatpush1.bf16.msra.mxu0 0
    %5102 = vmatprep.subr.bf16.mxu0 0
    %5103 = vmatpush1.bf16.msra.mxu0 0
    %5104 = vmatprep.subr.bf16.mxu0 0
    %5105 = vmatpush1.bf16.msra.mxu0 0
    %5106 = vmatprep.subr.bf16.mxu0 0
    %5107 = vmatpush1.bf16.msra.mxu0 0
    %5108 = vmatprep.subr.bf16.mxu0 0
    %5109 = vmatpush1.bf16.msra.mxu0 0
    %5110 = vmatprep.subr.bf16.mxu0 0
    %5111 = vmatpush1.bf16.msra.mxu0 0
    %5112 = vmatprep.subr.bf16.mxu0 0
    %5113 = vmatpush1.bf16.msra.mxu0 0
    %5114 = vmatprep.subr.bf16.mxu0 0
    %5115 = vmatpush1.bf16.msra.mxu0 0
    %5116 = vmatprep.subr.bf16.mxu0 0
    %5117 = vmatpush1.bf16.msra.mxu0 0
    %5118 = vmatprep.subr.bf16.mxu0 0
    %5119 = vmatpush1.bf16.msra.mxu0 0
    %5120 = vmatprep.mubr.bf16.mxu0 0
    %5121 = vmatmul.mubr.bf16.gmra.mrb[0].mxu0 %v5086
    %v5122 = vpop.f32.mrb[0].mxu0
    %v5123 = vadd.f32 0.0, %v5122
    %v5124 = vpop.f32.mrb[0].mxu0
    %v5125 = vpop.f32.mrb[0].mxu0
    %v5126 = vpop.f32.mrb[0].mxu0
    %5127 = vdwg.mxu0
    %5129 = vrot.lane.b32.xlu0 %v4426, 96
    %v5130 = vpop.permute.xlu0 %5129
    %v5133 = vsel %vm3940, %v4890, 0
    %5135 = vmatprep.subr.bf16.mxu0 0
    %5136 = vmatpush1.bf16.msra.mxu0 %v5130
    %5137 = vmatprep.subr.bf16.mxu0 0
    %5138 = vmatpush1.bf16.msra.mxu0 0
    %5139 = vmatprep.subr.bf16.mxu0 0
    %5140 = vmatpush1.bf16.msra.mxu0 0
    %5141 = vmatprep.subr.bf16.mxu0 0
    %5142 = vmatpush1.bf16.msra.mxu0 0
    %5143 = vmatprep.subr.bf16.mxu0 0
    %5144 = vmatpush1.bf16.msra.mxu0 0
    %5145 = vmatprep.subr.bf16.mxu0 0
    %5146 = vmatpush1.bf16.msra.mxu0 0
    %5147 = vmatprep.subr.bf16.mxu0 0
    %5148 = vmatpush1.bf16.msra.mxu0 0
    %5149 = vmatprep.subr.bf16.mxu0 0
    %5150 = vmatpush1.bf16.msra.mxu0 0
    %5151 = vmatprep.subr.bf16.mxu0 0
    %5152 = vmatpush1.bf16.msra.mxu0 0
    %5153 = vmatprep.subr.bf16.mxu0 0
    %5154 = vmatpush1.bf16.msra.mxu0 0
    %5155 = vmatprep.subr.bf16.mxu0 0
    %5156 = vmatpush1.bf16.msra.mxu0 0
    %5157 = vmatprep.subr.bf16.mxu0 0
    %5158 = vmatpush1.bf16.msra.mxu0 0
    %5159 = vmatprep.subr.bf16.mxu0 0
    %5160 = vmatpush1.bf16.msra.mxu0 0
    %5161 = vmatprep.subr.bf16.mxu0 0
    %5162 = vmatpush1.bf16.msra.mxu0 0
    %5163 = vmatprep.subr.bf16.mxu0 0
    %5164 = vmatpush1.bf16.msra.mxu0 0
    %5165 = vmatprep.subr.bf16.mxu0 0
    %5166 = vmatpush1.bf16.msra.mxu0 0
    %5167 = vmatprep.mubr.bf16.mxu0 0
    %5168 = vmatmul.mubr.bf16.gmra.mrb[0].mxu0 %v5133
    %v5169 = vpop.f32.mrb[0].mxu0
    %v5170 = vadd.f32 0.0, %v5169
    %v5171 = vpop.f32.mrb[0].mxu0
    %v5172 = vpop.f32.mrb[0].mxu0
    %v5173 = vpop.f32.mrb[0].mxu0
    %5174 = vdwg.mxu0
    %5176 = vrot.lane.b32.xlu0 %v4427, 96
    %v5177 = vpop.permute.xlu0 %5176
    %v5180 = vsel %vm3940, %v4891, 0
    %5182 = vmatprep.subr.bf16.mxu0 0
    %5183 = vmatpush1.bf16.msra.mxu0 %v5177
    %5184 = vmatprep.subr.bf16.mxu0 0
    %5185 = vmatpush1.bf16.msra.mxu0 0
    %5186 = vmatprep.subr.bf16.mxu0 0
    %5187 = vmatpush1.bf16.msra.mxu0 0
    %5188 = vmatprep.subr.bf16.mxu0 0
    %5189 = vmatpush1.bf16.msra.mxu0 0
    %5190 = vmatprep.subr.bf16.mxu0 0
    %5191 = vmatpush1.bf16.msra.mxu0 0
    %5192 = vmatprep.subr.bf16.mxu0 0
    %5193 = vmatpush1.bf16.msra.mxu0 0
    %5194 = vmatprep.subr.bf16.mxu0 0
    %5195 = vmatpush1.bf16.msra.mxu0 0
    %5196 = vmatprep.subr.bf16.mxu0 0
    %5197 = vmatpush1.bf16.msra.mxu0 0
    %5198 = vmatprep.subr.bf16.mxu0 0
    %5199 = vmatpush1.bf16.msra.mxu0 0
    %5200 = vmatprep.subr.bf16.mxu0 0
    %5201 = vmatpush1.bf16.msra.mxu0 0
    %5202 = vmatprep.subr.bf16.mxu0 0
    %5203 = vmatpush1.bf16.msra.mxu0 0
    %5204 = vmatprep.subr.bf16.mxu0 0
    %5205 = vmatpush1.bf16.msra.mxu0 0
    %5206 = vmatprep.subr.bf16.mxu0 0
    %5207 = vmatpush1.bf16.msra.mxu0 0
    %5208 = vmatprep.subr.bf16.mxu0 0
    %5209 = vmatpush1.bf16.msra.mxu0 0
    %5210 = vmatprep.subr.bf16.mxu0 0
    %5211 = vmatpush1.bf16.msra.mxu0 0
    %5212 = vmatprep.subr.bf16.mxu0 0
    %5213 = vmatpush1.bf16.msra.mxu0 0
    %5214 = vmatprep.mubr.bf16.mxu0 0
    %5215 = vmatmul.mubr.bf16.gmra.mrb[0].mxu0 %v5180
    %v5216 = vpop.f32.mrb[0].mxu0
    %v5217 = vadd.f32 0.0, %v5216
    %v5218 = vpop.f32.mrb[0].mxu0
    %v5219 = vpop.f32.mrb[0].mxu0
    %v5220 = vpop.f32.mrb[0].mxu0
    %5221 = vdwg.mxu0
    %5223 = vrot.lane.b32.xlu0 %v4428, 96
    %v5224 = vpop.permute.xlu0 %5223
    %v5227 = vsel %vm3940, %v4892, 0
    %5229 = vmatprep.subr.bf16.mxu0 0
    %5230 = vmatpush1.bf16.msra.mxu0 %v5224
    %5231 = vmatprep.subr.bf16.mxu0 0
    %5232 = vmatpush1.bf16.msra.mxu0 0
    %5233 = vmatprep.subr.bf16.mxu0 0
    %5234 = vmatpush1.bf16.msra.mxu0 0
    %5235 = vmatprep.subr.bf16.mxu0 0
    %5236 = vmatpush1.bf16.msra.mxu0 0
    %5237 = vmatprep.subr.bf16.mxu0 0
    %5238 = vmatpush1.bf16.msra.mxu0 0
    %5239 = vmatprep.subr.bf16.mxu0 0
    %5240 = vmatpush1.bf16.msra.mxu0 0
    %5241 = vmatprep.subr.bf16.mxu0 0
    %5242 = vmatpush1.bf16.msra.mxu0 0
    %5243 = vmatprep.subr.bf16.mxu0 0
    %5244 = vmatpush1.bf16.msra.mxu0 0
    %5245 = vmatprep.subr.bf16.mxu0 0
    %5246 = vmatpush1.bf16.msra.mxu0 0
    %5247 = vmatprep.subr.bf16.mxu0 0
    %5248 = vmatpush1.bf16.msra.mxu0 0
    %5249 = vmatprep.subr.bf16.mxu0 0
    %5250 = vmatpush1.bf16.msra.mxu0 0
    %5251 = vmatprep.subr.bf16.mxu0 0
    %5252 = vmatpush1.bf16.msra.mxu0 0
    %5253 = vmatprep.subr.bf16.mxu0 0
    %5254 = vmatpush1.bf16.msra.mxu0 0
    %5255 = vmatprep.subr.bf16.mxu0 0
    %5256 = vmatpush1.bf16.msra.mxu0 0
    %5257 = vmatprep.subr.bf16.mxu0 0
    %5258 = vmatpush1.bf16.msra.mxu0 0
    %5259 = vmatprep.subr.bf16.mxu0 0
    %5260 = vmatpush1.bf16.msra.mxu0 0
    %5261 = vmatprep.mubr.bf16.mxu0 0
    %5262 = vmatmul.mubr.bf16.gmra.mrb[0].mxu0 %v5227
    %v5263 = vpop.f32.mrb[0].mxu0
    %v5264 = vadd.f32 0.0, %v5263
    %v5265 = vpop.f32.mrb[0].mxu0
    %v5266 = vpop.f32.mrb[0].mxu0
    %v5267 = vpop.f32.mrb[0].mxu0
    %5268 = vdwg.mxu0
    %5270 = vrot.lane.b32.xlu0 %v4413, 120
    %v5271 = vpop.permute.xlu0 %5270
    %5272 = vrot.lane.b32.xlu0 %v4421, 120
    %v5273 = vpop.permute.xlu0 %5272
    %v5275 = vsel %vm325, %v5271, 0
    %v5278 = vsel %vm325, %v5273, 0
    %5280 = vmatprep.subr.bf16.mxu0 0
    %5281 = vmatpush1.bf16.xpose.msra.mxu0 %v5278
    %5282 = vmatprep.subr.bf16.mxu0 0
    %5283 = vmatpush1.bf16.xpose.msra.mxu0 0
    %5284 = vmatprep.subr.bf16.mxu0 0
    %5285 = vmatpush1.bf16.xpose.msra.mxu0 0
    %5286 = vmatprep.subr.bf16.mxu0 0
    %5287 = vmatpush1.bf16.xpose.msra.mxu0 0
    %5288 = vmatprep.subr.bf16.mxu0 0
    %5289 = vmatpush1.bf16.xpose.msra.mxu0 0
    %5290 = vmatprep.subr.bf16.mxu0 0
    %5291 = vmatpush1.bf16.xpose.msra.mxu0 0
    %5292 = vmatprep.subr.bf16.mxu0 0
    %5293 = vmatpush1.bf16.xpose.msra.mxu0 0
    %5294 = vmatprep.subr.bf16.mxu0 0
    %5295 = vmatpush1.bf16.xpose.msra.mxu0 0
    %5296 = vmatprep.subr.bf16.mxu0 0
    %5297 = vmatpush1.bf16.xpose.msra.mxu0 0
    %5298 = vmatprep.subr.bf16.mxu0 0
    %5299 = vmatpush1.bf16.xpose.msra.mxu0 0
    %5300 = vmatprep.subr.bf16.mxu0 0
    %5301 = vmatpush1.bf16.xpose.msra.mxu0 0
    %5302 = vmatprep.subr.bf16.mxu0 0
    %5303 = vmatpush1.bf16.xpose.msra.mxu0 0
    %5304 = vmatprep.subr.bf16.mxu0 0
    %5305 = vmatpush1.bf16.xpose.msra.mxu0 0
    %5306 = vmatprep.subr.bf16.mxu0 0
    %5307 = vmatpush1.bf16.xpose.msra.mxu0 0
    %5308 = vmatprep.subr.bf16.mxu0 0
    %5309 = vmatpush1.bf16.xpose.msra.mxu0 0
    %5310 = vmatprep.subr.bf16.mxu0 0
    %5311 = vmatpush1.bf16.xpose.msra.mxu0 0
    %5312 = vmatprep.mubr.bf16.mxu0 0
    %5313 = vmatmul.mubr.bf16.gmra.mrb[0].mxu0 %v5275
    %v5314 = vpop.f32.mrb[0].mxu0
    %v5315 = vadd.f32 %v4405, %v5314
    %v5316 = vpop.f32.mrb[0].mxu0
    %v5317 = vpop.f32.mrb[0].mxu0
    %v5318 = vpop.f32.mrb[0].mxu0
    %5319 = vdwg.mxu0
    %5321 = vrot.lane.b32.xlu0 %v4414, 120
    %v5322 = vpop.permute.xlu0 %5321
    %5323 = vrot.lane.b32.xlu0 %v4422, 120
    %v5324 = vpop.permute.xlu0 %5323
    %v5326 = vsel %vm325, %v5322, 0
    %v5329 = vsel %vm325, %v5324, 0
    %5331 = vmatprep.subr.bf16.mxu0 0
    %5332 = vmatpush1.bf16.xpose.msra.mxu0 %v5329
    %5333 = vmatprep.subr.bf16.mxu0 0
    %5334 = vmatpush1.bf16.xpose.msra.mxu0 0
    %5335 = vmatprep.subr.bf16.mxu0 0
    %5336 = vmatpush1.bf16.xpose.msra.mxu0 0
    %5337 = vmatprep.subr.bf16.mxu0 0
    %5338 = vmatpush1.bf16.xpose.msra.mxu0 0
    %5339 = vmatprep.subr.bf16.mxu0 0
    %5340 = vmatpush1.bf16.xpose.msra.mxu0 0
    %5341 = vmatprep.subr.bf16.mxu0 0
    %5342 = vmatpush1.bf16.xpose.msra.mxu0 0
    %5343 = vmatprep.subr.bf16.mxu0 0
    %5344 = vmatpush1.bf16.xpose.msra.mxu0 0
    %5345 = vmatprep.subr.bf16.mxu0 0
    %5346 = vmatpush1.bf16.xpose.msra.mxu0 0
    %5347 = vmatprep.subr.bf16.mxu0 0
    %5348 = vmatpush1.bf16.xpose.msra.mxu0 0
    %5349 = vmatprep.subr.bf16.mxu0 0
    %5350 = vmatpush1.bf16.xpose.msra.mxu0 0
    %5351 = vmatprep.subr.bf16.mxu0 0
    %5352 = vmatpush1.bf16.xpose.msra.mxu0 0
    %5353 = vmatprep.subr.bf16.mxu0 0
    %5354 = vmatpush1.bf16.xpose.msra.mxu0 0
    %5355 = vmatprep.subr.bf16.mxu0 0
    %5356 = vmatpush1.bf16.xpose.msra.mxu0 0
    %5357 = vmatprep.subr.bf16.mxu0 0
    %5358 = vmatpush1.bf16.xpose.msra.mxu0 0
    %5359 = vmatprep.subr.bf16.mxu0 0
    %5360 = vmatpush1.bf16.xpose.msra.mxu0 0
    %5361 = vmatprep.subr.bf16.mxu0 0
    %5362 = vmatpush1.bf16.xpose.msra.mxu0 0
    %5363 = vmatprep.mubr.bf16.mxu0 0
    %5364 = vmatmul.mubr.bf16.gmra.mrb[0].mxu0 %v5326
    %v5365 = vpop.f32.mrb[0].mxu0
    %v5366 = vadd.f32 %v4406, %v5365
    %v5367 = vpop.f32.mrb[0].mxu0
    %v5368 = vpop.f32.mrb[0].mxu0
    %v5369 = vpop.f32.mrb[0].mxu0
    %5370 = vdwg.mxu0
    %5372 = vrot.lane.b32.xlu0 %v4415, 120
    %v5373 = vpop.permute.xlu0 %5372
    %5374 = vrot.lane.b32.xlu0 %v4423, 120
    %v5375 = vpop.permute.xlu0 %5374
    %v5377 = vsel %vm325, %v5373, 0
    %v5380 = vsel %vm325, %v5375, 0
    %5382 = vmatprep.subr.bf16.mxu0 0
    %5383 = vmatpush1.bf16.xpose.msra.mxu0 %v5380
    %5384 = vmatprep.subr.bf16.mxu0 0
    %5385 = vmatpush1.bf16.xpose.msra.mxu0 0
    %5386 = vmatprep.subr.bf16.mxu0 0
    %5387 = vmatpush1.bf16.xpose.msra.mxu0 0
    %5388 = vmatprep.subr.bf16.mxu0 0
    %5389 = vmatpush1.bf16.xpose.msra.mxu0 0
    %5390 = vmatprep.subr.bf16.mxu0 0
    %5391 = vmatpush1.bf16.xpose.msra.mxu0 0
    %5392 = vmatprep.subr.bf16.mxu0 0
    %5393 = vmatpush1.bf16.xpose.msra.mxu0 0
    %5394 = vmatprep.subr.bf16.mxu0 0
    %5395 = vmatpush1.bf16.xpose.msra.mxu0 0
    %5396 = vmatprep.subr.bf16.mxu0 0
    %5397 = vmatpush1.bf16.xpose.msra.mxu0 0
    %5398 = vmatprep.subr.bf16.mxu0 0
    %5399 = vmatpush1.bf16.xpose.msra.mxu0 0
    %5400 = vmatprep.subr.bf16.mxu0 0
    %5401 = vmatpush1.bf16.xpose.msra.mxu0 0
    %5402 = vmatprep.subr.bf16.mxu0 0
    %5403 = vmatpush1.bf16.xpose.msra.mxu0 0
    %5404 = vmatprep.subr.bf16.mxu0 0
    %5405 = vmatpush1.bf16.xpose.msra.mxu0 0
    %5406 = vmatprep.subr.bf16.mxu0 0
    %5407 = vmatpush1.bf16.xpose.msra.mxu0 0
    %5408 = vmatprep.subr.bf16.mxu0 0
    %5409 = vmatpush1.bf16.xpose.msra.mxu0 0
    %5410 = vmatprep.subr.bf16.mxu0 0
    %5411 = vmatpush1.bf16.xpose.msra.mxu0 0
    %5412 = vmatprep.subr.bf16.mxu0 0
    %5413 = vmatpush1.bf16.xpose.msra.mxu0 0
    %5414 = vmatprep.mubr.bf16.mxu0 0
    %5415 = vmatmul.mubr.bf16.gmra.mrb[0].mxu0 %v5377
    %v5416 = vpop.f32.mrb[0].mxu0
    %v5417 = vadd.f32 %v4407, %v5416
    %v5418 = vpop.f32.mrb[0].mxu0
    %v5419 = vpop.f32.mrb[0].mxu0
    %v5420 = vpop.f32.mrb[0].mxu0
    %5421 = vdwg.mxu0
    %5423 = vrot.lane.b32.xlu0 %v4416, 120
    %v5424 = vpop.permute.xlu0 %5423
    %5425 = vrot.lane.b32.xlu0 %v4424, 120
    %v5426 = vpop.permute.xlu0 %5425
    %v5428 = vsel %vm325, %v5424, 0
    %v5431 = vsel %vm325, %v5426, 0
    %5433 = vmatprep.subr.bf16.mxu0 0
    %5434 = vmatpush1.bf16.xpose.msra.mxu0 %v5431
    %5435 = vmatprep.subr.bf16.mxu0 0
    %5436 = vmatpush1.bf16.xpose.msra.mxu0 0
    %5437 = vmatprep.subr.bf16.mxu0 0
    %5438 = vmatpush1.bf16.xpose.msra.mxu0 0
    %5439 = vmatprep.subr.bf16.mxu0 0
    %5440 = vmatpush1.bf16.xpose.msra.mxu0 0
    %5441 = vmatprep.subr.bf16.mxu0 0
    %5442 = vmatpush1.bf16.xpose.msra.mxu0 0
    %5443 = vmatprep.subr.bf16.mxu0 0
    %5444 = vmatpush1.bf16.xpose.msra.mxu0 0
    %5445 = vmatprep.subr.bf16.mxu0 0
    %5446 = vmatpush1.bf16.xpose.msra.mxu0 0
    %5447 = vmatprep.subr.bf16.mxu0 0
    %5448 = vmatpush1.bf16.xpose.msra.mxu0 0
    %5449 = vmatprep.subr.bf16.mxu0 0
    %5450 = vmatpush1.bf16.xpose.msra.mxu0 0
    %5451 = vmatprep.subr.bf16.mxu0 0
    %5452 = vmatpush1.bf16.xpose.msra.mxu0 0
    %5453 = vmatprep.subr.bf16.mxu0 0
    %5454 = vmatpush1.bf16.xpose.msra.mxu0 0
    %5455 = vmatprep.subr.bf16.mxu0 0
    %5456 = vmatpush1.bf16.xpose.msra.mxu0 0
    %5457 = vmatprep.subr.bf16.mxu0 0
    %5458 = vmatpush1.bf16.xpose.msra.mxu0 0
    %5459 = vmatprep.subr.bf16.mxu0 0
    %5460 = vmatpush1.bf16.xpose.msra.mxu0 0
    %5461 = vmatprep.subr.bf16.mxu0 0
    %5462 = vmatpush1.bf16.xpose.msra.mxu0 0
    %5463 = vmatprep.subr.bf16.mxu0 0
    %5464 = vmatpush1.bf16.xpose.msra.mxu0 0
    %5465 = vmatprep.mubr.bf16.mxu0 0
    %5466 = vmatmul.mubr.bf16.gmra.mrb[0].mxu0 %v5428
    %v5467 = vpop.f32.mrb[0].mxu0
    %v5468 = vadd.f32 %v4408, %v5467
    %v5469 = vpop.f32.mrb[0].mxu0
    %v5470 = vpop.f32.mrb[0].mxu0
    %v5471 = vpop.f32.mrb[0].mxu0
    %5472 = vdwg.mxu0
    %5474 = vrot.lane.b32.xlu0 %v4417, 120
    %v5475 = vpop.permute.xlu0 %5474
    %5476 = vrot.lane.b32.xlu0 %v4425, 120
    %v5477 = vpop.permute.xlu0 %5476
    %v5479 = vsel %vm325, %v5475, 0
    %v5482 = vsel %vm325, %v5477, 0
    %5484 = vmatprep.subr.bf16.mxu0 0
    %5485 = vmatpush1.bf16.xpose.msra.mxu0 %v5482
    %5486 = vmatprep.subr.bf16.mxu0 0
    %5487 = vmatpush1.bf16.xpose.msra.mxu0 0
    %5488 = vmatprep.subr.bf16.mxu0 0
    %5489 = vmatpush1.bf16.xpose.msra.mxu0 0
    %5490 = vmatprep.subr.bf16.mxu0 0
    %5491 = vmatpush1.bf16.xpose.msra.mxu0 0
    %5492 = vmatprep.subr.bf16.mxu0 0
    %5493 = vmatpush1.bf16.xpose.msra.mxu0 0
    %5494 = vmatprep.subr.bf16.mxu0 0
    %5495 = vmatpush1.bf16.xpose.msra.mxu0 0
    %5496 = vmatprep.subr.bf16.mxu0 0
    %5497 = vmatpush1.bf16.xpose.msra.mxu0 0
    %5498 = vmatprep.subr.bf16.mxu0 0
    %5499 = vmatpush1.bf16.xpose.msra.mxu0 0
    %5500 = vmatprep.subr.bf16.mxu0 0
    %5501 = vmatpush1.bf16.xpose.msra.mxu0 0
    %5502 = vmatprep.subr.bf16.mxu0 0
    %5503 = vmatpush1.bf16.xpose.msra.mxu0 0
    %5504 = vmatprep.subr.bf16.mxu0 0
    %5505 = vmatpush1.bf16.xpose.msra.mxu0 0
    %5506 = vmatprep.subr.bf16.mxu0 0
    %5507 = vmatpush1.bf16.xpose.msra.mxu0 0
    %5508 = vmatprep.subr.bf16.mxu0 0
    %5509 = vmatpush1.bf16.xpose.msra.mxu0 0
    %5510 = vmatprep.subr.bf16.mxu0 0
    %5511 = vmatpush1.bf16.xpose.msra.mxu0 0
    %5512 = vmatprep.subr.bf16.mxu0 0
    %5513 = vmatpush1.bf16.xpose.msra.mxu0 0
    %5514 = vmatprep.subr.bf16.mxu0 0
    %5515 = vmatpush1.bf16.xpose.msra.mxu0 0
    %5516 = vmatprep.mubr.bf16.mxu0 0
    %5517 = vmatmul.mubr.bf16.gmra.mrb[0].mxu0 %v5479
    %v5518 = vpop.f32.mrb[0].mxu0
    %v5519 = vadd.f32 %v4409, %v5518
    %v5520 = vpop.f32.mrb[0].mxu0
    %v5521 = vpop.f32.mrb[0].mxu0
    %v5522 = vpop.f32.mrb[0].mxu0
    %5523 = vdwg.mxu0
    %5525 = vrot.lane.b32.xlu0 %v4418, 120
    %v5526 = vpop.permute.xlu0 %5525
    %5527 = vrot.lane.b32.xlu0 %v4426, 120
    %v5528 = vpop.permute.xlu0 %5527
    %v5530 = vsel %vm325, %v5526, 0
    %v5533 = vsel %vm325, %v5528, 0
    %5535 = vmatprep.subr.bf16.mxu0 0
    %5536 = vmatpush1.bf16.xpose.msra.mxu0 %v5533
    %5537 = vmatprep.subr.bf16.mxu0 0
    %5538 = vmatpush1.bf16.xpose.msra.mxu0 0
    %5539 = vmatprep.subr.bf16.mxu0 0
    %5540 = vmatpush1.bf16.xpose.msra.mxu0 0
    %5541 = vmatprep.subr.bf16.mxu0 0
    %5542 = vmatpush1.bf16.xpose.msra.mxu0 0
    %5543 = vmatprep.subr.bf16.mxu0 0
    %5544 = vmatpush1.bf16.xpose.msra.mxu0 0
    %5545 = vmatprep.subr.bf16.mxu0 0
    %5546 = vmatpush1.bf16.xpose.msra.mxu0 0
    %5547 = vmatprep.subr.bf16.mxu0 0
    %5548 = vmatpush1.bf16.xpose.msra.mxu0 0
    %5549 = vmatprep.subr.bf16.mxu0 0
    %5550 = vmatpush1.bf16.xpose.msra.mxu0 0
    %5551 = vmatprep.subr.bf16.mxu0 0
    %5552 = vmatpush1.bf16.xpose.msra.mxu0 0
    %5553 = vmatprep.subr.bf16.mxu0 0
    %5554 = vmatpush1.bf16.xpose.msra.mxu0 0
    %5555 = vmatprep.subr.bf16.mxu0 0
    %5556 = vmatpush1.bf16.xpose.msra.mxu0 0
    %5557 = vmatprep.subr.bf16.mxu0 0
    %5558 = vmatpush1.bf16.xpose.msra.mxu0 0
    %5559 = vmatprep.subr.bf16.mxu0 0
    %5560 = vmatpush1.bf16.xpose.msra.mxu0 0
    %5561 = vmatprep.subr.bf16.mxu0 0
    %5562 = vmatpush1.bf16.xpose.msra.mxu0 0
    %5563 = vmatprep.subr.bf16.mxu0 0
    %5564 = vmatpush1.bf16.xpose.msra.mxu0 0
    %5565 = vmatprep.subr.bf16.mxu0 0
    %5566 = vmatpush1.bf16.xpose.msra.mxu0 0
    %5567 = vmatprep.mubr.bf16.mxu0 0
    %5568 = vmatmul.mubr.bf16.gmra.mrb[0].mxu0 %v5530
    %v5569 = vpop.f32.mrb[0].mxu0
    %v5570 = vadd.f32 %v4410, %v5569
    %v5571 = vpop.f32.mrb[0].mxu0
    %v5572 = vpop.f32.mrb[0].mxu0
    %v5573 = vpop.f32.mrb[0].mxu0
    %5574 = vdwg.mxu0
    %5576 = vrot.lane.b32.xlu0 %v4419, 120
    %v5577 = vpop.permute.xlu0 %5576
    %5578 = vrot.lane.b32.xlu0 %v4427, 120
    %v5579 = vpop.permute.xlu0 %5578
    %v5581 = vsel %vm325, %v5577, 0
    %v5584 = vsel %vm325, %v5579, 0
    %5586 = vmatprep.subr.bf16.mxu0 0
    %5587 = vmatpush1.bf16.xpose.msra.mxu0 %v5584
    %5588 = vmatprep.subr.bf16.mxu0 0
    %5589 = vmatpush1.bf16.xpose.msra.mxu0 0
    %5590 = vmatprep.subr.bf16.mxu0 0
    %5591 = vmatpush1.bf16.xpose.msra.mxu0 0
    %5592 = vmatprep.subr.bf16.mxu0 0
    %5593 = vmatpush1.bf16.xpose.msra.mxu0 0
    %5594 = vmatprep.subr.bf16.mxu0 0
    %5595 = vmatpush1.bf16.xpose.msra.mxu0 0
    %5596 = vmatprep.subr.bf16.mxu0 0
    %5597 = vmatpush1.bf16.xpose.msra.mxu0 0
    %5598 = vmatprep.subr.bf16.mxu0 0
    %5599 = vmatpush1.bf16.xpose.msra.mxu0 0
    %5600 = vmatprep.subr.bf16.mxu0 0
    %5601 = vmatpush1.bf16.xpose.msra.mxu0 0
    %5602 = vmatprep.subr.bf16.mxu0 0
    %5603 = vmatpush1.bf16.xpose.msra.mxu0 0
    %5604 = vmatprep.subr.bf16.mxu0 0
    %5605 = vmatpush1.bf16.xpose.msra.mxu0 0
    %5606 = vmatprep.subr.bf16.mxu0 0
    %5607 = vmatpush1.bf16.xpose.msra.mxu0 0
    %5608 = vmatprep.subr.bf16.mxu0 0
    %5609 = vmatpush1.bf16.xpose.msra.mxu0 0
    %5610 = vmatprep.subr.bf16.mxu0 0
    %5611 = vmatpush1.bf16.xpose.msra.mxu0 0
    %5612 = vmatprep.subr.bf16.mxu0 0
    %5613 = vmatpush1.bf16.xpose.msra.mxu0 0
    %5614 = vmatprep.subr.bf16.mxu0 0
    %5615 = vmatpush1.bf16.xpose.msra.mxu0 0
    %5616 = vmatprep.subr.bf16.mxu0 0
    %5617 = vmatpush1.bf16.xpose.msra.mxu0 0
    %5618 = vmatprep.mubr.bf16.mxu0 0
    %5619 = vmatmul.mubr.bf16.gmra.mrb[0].mxu0 %v5581
    %v5620 = vpop.f32.mrb[0].mxu0
    %v5621 = vadd.f32 %v4411, %v5620
    %v5622 = vpop.f32.mrb[0].mxu0
    %v5623 = vpop.f32.mrb[0].mxu0
    %v5624 = vpop.f32.mrb[0].mxu0
    %5625 = vdwg.mxu0
    %5627 = vrot.lane.b32.xlu0 %v4420, 120
    %v5628 = vpop.permute.xlu0 %5627
    %5629 = vrot.lane.b32.xlu0 %v4428, 120
    %v5630 = vpop.permute.xlu0 %5629
    %v5632 = vsel %vm325, %v5628, 0
    %v5635 = vsel %vm325, %v5630, 0
    %5637 = vmatprep.subr.bf16.mxu0 0
    %5638 = vmatpush1.bf16.xpose.msra.mxu0 %v5635
    %5639 = vmatprep.subr.bf16.mxu0 0
    %5640 = vmatpush1.bf16.xpose.msra.mxu0 0
    %5641 = vmatprep.subr.bf16.mxu0 0
    %5642 = vmatpush1.bf16.xpose.msra.mxu0 0
    %5643 = vmatprep.subr.bf16.mxu0 0
    %5644 = vmatpush1.bf16.xpose.msra.mxu0 0
    %5645 = vmatprep.subr.bf16.mxu0 0
    %5646 = vmatpush1.bf16.xpose.msra.mxu0 0
    %5647 = vmatprep.subr.bf16.mxu0 0
    %5648 = vmatpush1.bf16.xpose.msra.mxu0 0
    %5649 = vmatprep.subr.bf16.mxu0 0
    %5650 = vmatpush1.bf16.xpose.msra.mxu0 0
    %5651 = vmatprep.subr.bf16.mxu0 0
    %5652 = vmatpush1.bf16.xpose.msra.mxu0 0
    %5653 = vmatprep.subr.bf16.mxu0 0
    %5654 = vmatpush1.bf16.xpose.msra.mxu0 0
    %5655 = vmatprep.subr.bf16.mxu0 0
    %5656 = vmatpush1.bf16.xpose.msra.mxu0 0
    %5657 = vmatprep.subr.bf16.mxu0 0
    %5658 = vmatpush1.bf16.xpose.msra.mxu0 0
    %5659 = vmatprep.subr.bf16.mxu0 0
    %5660 = vmatpush1.bf16.xpose.msra.mxu0 0
    %5661 = vmatprep.subr.bf16.mxu0 0
    %5662 = vmatpush1.bf16.xpose.msra.mxu0 0
    %5663 = vmatprep.subr.bf16.mxu0 0
    %5664 = vmatpush1.bf16.xpose.msra.mxu0 0
    %5665 = vmatprep.subr.bf16.mxu0 0
    %5666 = vmatpush1.bf16.xpose.msra.mxu0 0
    %5667 = vmatprep.subr.bf16.mxu0 0
    %5668 = vmatpush1.bf16.xpose.msra.mxu0 0
    %5669 = vmatprep.mubr.bf16.mxu0 0
    %5670 = vmatmul.mubr.bf16.gmra.mrb[0].mxu0 %v5632
    %v5671 = vpop.f32.mrb[0].mxu0
    %v5672 = vadd.f32 %v4412, %v5671
    %v5673 = vpop.f32.mrb[0].mxu0
    %v5674 = vpop.f32.mrb[0].mxu0
    %v5675 = vpop.f32.mrb[0].mxu0
    %5676 = vdwg.mxu0
    %v5677 = vsel %vm3940, %v5315, -inf
    %5678 = vmax.xlane.f32.xlu0 %v5677
    %v5679 = vpop.xlane.xlu0 %5678
    %v5680 = vsel %vm3940, %v5366, -inf
    %5681 = vmax.xlane.f32.xlu0 %v5680
    %v5682 = vpop.xlane.xlu0 %5681
    %v5683 = vsel %vm3940, %v5417, -inf
    %5684 = vmax.xlane.f32.xlu0 %v5683
    %v5685 = vpop.xlane.xlu0 %5684
    %v5686 = vsel %vm3940, %v5468, -inf
    %5687 = vmax.xlane.f32.xlu0 %v5686
    %v5688 = vpop.xlane.xlu0 %5687
    %v5689 = vsel %vm3940, %v5519, -inf
    %5690 = vmax.xlane.f32.xlu0 %v5689
    %v5691 = vpop.xlane.xlu0 %5690
    %v5692 = vsel %vm3940, %v5570, -inf
    %5693 = vmax.xlane.f32.xlu0 %v5692
    %v5694 = vpop.xlane.xlu0 %5693
    %v5695 = vsel %vm3940, %v5621, -inf
    %5696 = vmax.xlane.f32.xlu0 %v5695
    %v5697 = vpop.xlane.xlu0 %5696
    %v5698 = vsel %vm3940, %v5672, -inf
    %5699 = vmax.xlane.f32.xlu0 %v5698
    %v5700 = vpop.xlane.xlu0 %5699
    %v5701 = vsub.f32 %v5315, %v5679
    %v5702 = vsub.f32 %v5366, %v5682
    %v5703 = vsub.f32 %v5417, %v5685
    %v5704 = vsub.f32 %v5468, %v5688
    %v5705 = vsub.f32 %v5519, %v5691
    %v5706 = vsub.f32 %v5570, %v5694
    %v5707 = vsub.f32 %v5621, %v5697
    %v5708 = vsub.f32 %v5672, %v5700
    %v5709 = vmul.f32 %v5701, 1.442695
    %v5710 = vpow.pop %v5709
    %v5711 = vmul.f32 %v5702, 1.442695
    %v5712 = vpow.pop %v5711
    %v5713 = vmul.f32 %v5703, 1.442695
    %v5714 = vpow.pop %v5713
    %v5715 = vmul.f32 %v5704, 1.442695
    %v5716 = vpow.pop %v5715
    %v5717 = vmul.f32 %v5705, 1.442695
    %v5718 = vpow.pop %v5717
    %v5719 = vmul.f32 %v5706, 1.442695
    %v5720 = vpow.pop %v5719
    %v5721 = vmul.f32 %v5707, 1.442695
    %v5722 = vpow.pop %v5721
    %v5723 = vmul.f32 %v5708, 1.442695
    %v5724 = vpow.pop %v5723
    %v5725 = vsel %vm3940, %v5710, 0.0
    %5726 = vadd.xlane.f32.xlu0 %v5725
    %v5727 = vpop.xlane.xlu0 %5726
    %v5728 = vsel %vm3940, %v5712, 0.0
    %5729 = vadd.xlane.f32.xlu0 %v5728
    %v5730 = vpop.xlane.xlu0 %5729
    %v5731 = vsel %vm3940, %v5714, 0.0
    %5732 = vadd.xlane.f32.xlu0 %v5731
    %v5733 = vpop.xlane.xlu0 %5732
    %v5734 = vsel %vm3940, %v5716, 0.0
    %5735 = vadd.xlane.f32.xlu0 %v5734
    %v5736 = vpop.xlane.xlu0 %5735
    %v5737 = vsel %vm3940, %v5718, 0.0
    %5738 = vadd.xlane.f32.xlu0 %v5737
    %v5739 = vpop.xlane.xlu0 %5738
    %v5740 = vsel %vm3940, %v5720, 0.0
    %5741 = vadd.xlane.f32.xlu0 %v5740
    %v5742 = vpop.xlane.xlu0 %5741
    %v5743 = vsel %vm3940, %v5722, 0.0
    %5744 = vadd.xlane.f32.xlu0 %v5743
    %v5745 = vpop.xlane.xlu0 %5744
    %v5746 = vsel %vm3940, %v5724, 0.0
    %5747 = vadd.xlane.f32.xlu0 %v5746
    %v5748 = vpop.xlane.xlu0 %5747
    %v5749 = vrcp.pop %v5727
    %v5750 = vmul.f32 %v5710, %v5749
    %v5751 = vrcp.pop %v5730
    %v5752 = vmul.f32 %v5712, %v5751
    %v5753 = vrcp.pop %v5733
    %v5754 = vmul.f32 %v5714, %v5753
    %v5755 = vrcp.pop %v5736
    %v5756 = vmul.f32 %v5716, %v5755
    %v5757 = vrcp.pop %v5739
    %v5758 = vmul.f32 %v5718, %v5757
    %v5759 = vrcp.pop %v5742
    %v5760 = vmul.f32 %v5720, %v5759
    %v5761 = vrcp.pop %v5745
    %v5762 = vmul.f32 %v5722, %v5761
    %v5763 = vrcp.pop %v5748
    %v5764 = vmul.f32 %v5724, %v5763
    %v5765 = vpack.c.bf16 %v5750, %v5750
    %v5766 = vpack.c.bf16 %v5752, %v5752
    %v5767 = vpack.c.bf16 %v5754, %v5754
    %v5768 = vpack.c.bf16 %v5756, %v5756
    %v5769 = vpack.c.bf16 %v5758, %v5758
    %v5770 = vpack.c.bf16 %v5760, %v5760
    %v5771 = vpack.c.bf16 %v5762, %v5762
    %v5772 = vpack.c.bf16 %v5764, %v5764
    %5773 = vrot.lane.b32.xlu0 %v4421, 88
    %v5774 = vpop.permute.xlu0 %5773
    %v5777 = vsel %vm3940, %v5765, 0
    %5779 = vmatprep.subr.bf16.mxu0 0
    %5780 = vmatpush1.bf16.msra.mxu0 %v5774
    %5781 = vmatprep.subr.bf16.mxu0 0
    %5782 = vmatpush1.bf16.msra.mxu0 0
    %5783 = vmatprep.subr.bf16.mxu0 0
    %5784 = vmatpush1.bf16.msra.mxu0 0
    %5785 = vmatprep.subr.bf16.mxu0 0
    %5786 = vmatpush1.bf16.msra.mxu0 0
    %5787 = vmatprep.subr.bf16.mxu0 0
    %5788 = vmatpush1.bf16.msra.mxu0 0
    %5789 = vmatprep.subr.bf16.mxu0 0
    %5790 = vmatpush1.bf16.msra.mxu0 0
    %5791 = vmatprep.subr.bf16.mxu0 0
    %5792 = vmatpush1.bf16.msra.mxu0 0
    %5793 = vmatprep.subr.bf16.mxu0 0
    %5794 = vmatpush1.bf16.msra.mxu0 0
    %5795 = vmatprep.subr.bf16.mxu0 0
    %5796 = vmatpush1.bf16.msra.mxu0 0
    %5797 = vmatprep.subr.bf16.mxu0 0
    %5798 = vmatpush1.bf16.msra.mxu0 0
    %5799 = vmatprep.subr.bf16.mxu0 0
    %5800 = vmatpush1.bf16.msra.mxu0 0
    %5801 = vmatprep.subr.bf16.mxu0 0
    %5802 = vmatpush1.bf16.msra.mxu0 0
    %5803 = vmatprep.subr.bf16.mxu0 0
    %5804 = vmatpush1.bf16.msra.mxu0 0
    %5805 = vmatprep.subr.bf16.mxu0 0
    %5806 = vmatpush1.bf16.msra.mxu0 0
    %5807 = vmatprep.subr.bf16.mxu0 0
    %5808 = vmatpush1.bf16.msra.mxu0 0
    %5809 = vmatprep.subr.bf16.mxu0 0
    %5810 = vmatpush1.bf16.msra.mxu0 0
    %5811 = vmatprep.mubr.bf16.mxu0 0
    %5812 = vmatmul.mubr.bf16.gmra.mrb[0].mxu0 %v5777
    %v5813 = vpop.f32.mrb[0].mxu0
    %v5814 = vadd.f32 0.0, %v5813
    %v5815 = vpop.f32.mrb[0].mxu0
    %v5816 = vpop.f32.mrb[0].mxu0
    %v5817 = vpop.f32.mrb[0].mxu0
    %5818 = vdwg.mxu0
    %5819 = vrot.lane.b32.xlu0 %v4422, 88
    %v5820 = vpop.permute.xlu0 %5819
    %v5823 = vsel %vm3940, %v5766, 0
    %5825 = vmatprep.subr.bf16.mxu0 0
    %5826 = vmatpush1.bf16.msra.mxu0 %v5820
    %5827 = vmatprep.subr.bf16.mxu0 0
    %5828 = vmatpush1.bf16.msra.mxu0 0
    %5829 = vmatprep.subr.bf16.mxu0 0
    %5830 = vmatpush1.bf16.msra.mxu0 0
    %5831 = vmatprep.subr.bf16.mxu0 0
    %5832 = vmatpush1.bf16.msra.mxu0 0
    %5833 = vmatprep.subr.bf16.mxu0 0
    %5834 = vmatpush1.bf16.msra.mxu0 0
    %5835 = vmatprep.subr.bf16.mxu0 0
    %5836 = vmatpush1.bf16.msra.mxu0 0
    %5837 = vmatprep.subr.bf16.mxu0 0
    %5838 = vmatpush1.bf16.msra.mxu0 0
    %5839 = vmatprep.subr.bf16.mxu0 0
    %5840 = vmatpush1.bf16.msra.mxu0 0
    %5841 = vmatprep.subr.bf16.mxu0 0
    %5842 = vmatpush1.bf16.msra.mxu0 0
    %5843 = vmatprep.subr.bf16.mxu0 0
    %5844 = vmatpush1.bf16.msra.mxu0 0
    %5845 = vmatprep.subr.bf16.mxu0 0
    %5846 = vmatpush1.bf16.msra.mxu0 0
    %5847 = vmatprep.subr.bf16.mxu0 0
    %5848 = vmatpush1.bf16.msra.mxu0 0
    %5849 = vmatprep.subr.bf16.mxu0 0
    %5850 = vmatpush1.bf16.msra.mxu0 0
    %5851 = vmatprep.subr.bf16.mxu0 0
    %5852 = vmatpush1.bf16.msra.mxu0 0
    %5853 = vmatprep.subr.bf16.mxu0 0
    %5854 = vmatpush1.bf16.msra.mxu0 0
    %5855 = vmatprep.subr.bf16.mxu0 0
    %5856 = vmatpush1.bf16.msra.mxu0 0
    %5857 = vmatprep.mubr.bf16.mxu0 0
    %5858 = vmatmul.mubr.bf16.gmra.mrb[0].mxu0 %v5823
    %v5859 = vpop.f32.mrb[0].mxu0
    %v5860 = vadd.f32 0.0, %v5859
    %v5861 = vpop.f32.mrb[0].mxu0
    %v5862 = vpop.f32.mrb[0].mxu0
    %v5863 = vpop.f32.mrb[0].mxu0
    %5864 = vdwg.mxu0
    %5865 = vrot.lane.b32.xlu0 %v4423, 88
    %v5866 = vpop.permute.xlu0 %5865
    %v5869 = vsel %vm3940, %v5767, 0
    %5871 = vmatprep.subr.bf16.mxu0 0
    %5872 = vmatpush1.bf16.msra.mxu0 %v5866
    %5873 = vmatprep.subr.bf16.mxu0 0
    %5874 = vmatpush1.bf16.msra.mxu0 0
    %5875 = vmatprep.subr.bf16.mxu0 0
    %5876 = vmatpush1.bf16.msra.mxu0 0
    %5877 = vmatprep.subr.bf16.mxu0 0
    %5878 = vmatpush1.bf16.msra.mxu0 0
    %5879 = vmatprep.subr.bf16.mxu0 0
    %5880 = vmatpush1.bf16.msra.mxu0 0
    %5881 = vmatprep.subr.bf16.mxu0 0
    %5882 = vmatpush1.bf16.msra.mxu0 0
    %5883 = vmatprep.subr.bf16.mxu0 0
    %5884 = vmatpush1.bf16.msra.mxu0 0
    %5885 = vmatprep.subr.bf16.mxu0 0
    %5886 = vmatpush1.bf16.msra.mxu0 0
    %5887 = vmatprep.subr.bf16.mxu0 0
    %5888 = vmatpush1.bf16.msra.mxu0 0
    %5889 = vmatprep.subr.bf16.mxu0 0
    %5890 = vmatpush1.bf16.msra.mxu0 0
    %5891 = vmatprep.subr.bf16.mxu0 0
    %5892 = vmatpush1.bf16.msra.mxu0 0
    %5893 = vmatprep.subr.bf16.mxu0 0
    %5894 = vmatpush1.bf16.msra.mxu0 0
    %5895 = vmatprep.subr.bf16.mxu0 0
    %5896 = vmatpush1.bf16.msra.mxu0 0
    %5897 = vmatprep.subr.bf16.mxu0 0
    %5898 = vmatpush1.bf16.msra.mxu0 0
    %5899 = vmatprep.subr.bf16.mxu0 0
    %5900 = vmatpush1.bf16.msra.mxu0 0
    %5901 = vmatprep.subr.bf16.mxu0 0
    %5902 = vmatpush1.bf16.msra.mxu0 0
    %5903 = vmatprep.mubr.bf16.mxu0 0
    %5904 = vmatmul.mubr.bf16.gmra.mrb[0].mxu0 %v5869
    %v5905 = vpop.f32.mrb[0].mxu0
    %v5906 = vadd.f32 0.0, %v5905
    %v5907 = vpop.f32.mrb[0].mxu0
    %v5908 = vpop.f32.mrb[0].mxu0
    %v5909 = vpop.f32.mrb[0].mxu0
    %5910 = vdwg.mxu0
    %5911 = vrot.lane.b32.xlu0 %v4424, 88
    %v5912 = vpop.permute.xlu0 %5911
    %v5915 = vsel %vm3940, %v5768, 0
    %5917 = vmatprep.subr.bf16.mxu0 0
    %5918 = vmatpush1.bf16.msra.mxu0 %v5912
    %5919 = vmatprep.subr.bf16.mxu0 0
    %5920 = vmatpush1.bf16.msra.mxu0 0
    %5921 = vmatprep.subr.bf16.mxu0 0
    %5922 = vmatpush1.bf16.msra.mxu0 0
    %5923 = vmatprep.subr.bf16.mxu0 0
    %5924 = vmatpush1.bf16.msra.mxu0 0
    %5925 = vmatprep.subr.bf16.mxu0 0
    %5926 = vmatpush1.bf16.msra.mxu0 0
    %5927 = vmatprep.subr.bf16.mxu0 0
    %5928 = vmatpush1.bf16.msra.mxu0 0
    %5929 = vmatprep.subr.bf16.mxu0 0
    %5930 = vmatpush1.bf16.msra.mxu0 0
    %5931 = vmatprep.subr.bf16.mxu0 0
    %5932 = vmatpush1.bf16.msra.mxu0 0
    %5933 = vmatprep.subr.bf16.mxu0 0
    %5934 = vmatpush1.bf16.msra.mxu0 0
    %5935 = vmatprep.subr.bf16.mxu0 0
    %5936 = vmatpush1.bf16.msra.mxu0 0
    %5937 = vmatprep.subr.bf16.mxu0 0
    %5938 = vmatpush1.bf16.msra.mxu0 0
    %5939 = vmatprep.subr.bf16.mxu0 0
    %5940 = vmatpush1.bf16.msra.mxu0 0
    %5941 = vmatprep.subr.bf16.mxu0 0
    %5942 = vmatpush1.bf16.msra.mxu0 0
    %5943 = vmatprep.subr.bf16.mxu0 0
    %5944 = vmatpush1.bf16.msra.mxu0 0
    %5945 = vmatprep.subr.bf16.mxu0 0
    %5946 = vmatpush1.bf16.msra.mxu0 0
    %5947 = vmatprep.subr.bf16.mxu0 0
    %5948 = vmatpush1.bf16.msra.mxu0 0
    %5949 = vmatprep.mubr.bf16.mxu0 0
    %5950 = vmatmul.mubr.bf16.gmra.mrb[0].mxu0 %v5915
    %v5951 = vpop.f32.mrb[0].mxu0
    %v5952 = vadd.f32 0.0, %v5951
    %v5953 = vpop.f32.mrb[0].mxu0
    %v5954 = vpop.f32.mrb[0].mxu0
    %v5955 = vpop.f32.mrb[0].mxu0
    %5956 = vdwg.mxu0
    %5957 = vrot.lane.b32.xlu0 %v4425, 88
    %v5958 = vpop.permute.xlu0 %5957
    %v5961 = vsel %vm3940, %v5769, 0
    %5963 = vmatprep.subr.bf16.mxu0 0
    %5964 = vmatpush1.bf16.msra.mxu0 %v5958
    %5965 = vmatprep.subr.bf16.mxu0 0
    %5966 = vmatpush1.bf16.msra.mxu0 0
    %5967 = vmatprep.subr.bf16.mxu0 0
    %5968 = vmatpush1.bf16.msra.mxu0 0
    %5969 = vmatprep.subr.bf16.mxu0 0
    %5970 = vmatpush1.bf16.msra.mxu0 0
    %5971 = vmatprep.subr.bf16.mxu0 0
    %5972 = vmatpush1.bf16.msra.mxu0 0
    %5973 = vmatprep.subr.bf16.mxu0 0
    %5974 = vmatpush1.bf16.msra.mxu0 0
    %5975 = vmatprep.subr.bf16.mxu0 0
    %5976 = vmatpush1.bf16.msra.mxu0 0
    %5977 = vmatprep.subr.bf16.mxu0 0
    %5978 = vmatpush1.bf16.msra.mxu0 0
    %5979 = vmatprep.subr.bf16.mxu0 0
    %5980 = vmatpush1.bf16.msra.mxu0 0
    %5981 = vmatprep.subr.bf16.mxu0 0
    %5982 = vmatpush1.bf16.msra.mxu0 0
    %5983 = vmatprep.subr.bf16.mxu0 0
    %5984 = vmatpush1.bf16.msra.mxu0 0
    %5985 = vmatprep.subr.bf16.mxu0 0
    %5986 = vmatpush1.bf16.msra.mxu0 0
    %5987 = vmatprep.subr.bf16.mxu0 0
    %5988 = vmatpush1.bf16.msra.mxu0 0
    %5989 = vmatprep.subr.bf16.mxu0 0
    %5990 = vmatpush1.bf16.msra.mxu0 0
    %5991 = vmatprep.subr.bf16.mxu0 0
    %5992 = vmatpush1.bf16.msra.mxu0 0
    %5993 = vmatprep.subr.bf16.mxu0 0
    %5994 = vmatpush1.bf16.msra.mxu0 0
    %5995 = vmatprep.mubr.bf16.mxu0 0
    %5996 = vmatmul.mubr.bf16.gmra.mrb[0].mxu0 %v5961
    %v5997 = vpop.f32.mrb[0].mxu0
    %v5998 = vadd.f32 0.0, %v5997
    %v5999 = vpop.f32.mrb[0].mxu0
    %v6000 = vpop.f32.mrb[0].mxu0
    %v6001 = vpop.f32.mrb[0].mxu0
    %6002 = vdwg.mxu0
    %6003 = vrot.lane.b32.xlu0 %v4426, 88
    %v6004 = vpop.permute.xlu0 %6003
    %v6007 = vsel %vm3940, %v5770, 0
    %6009 = vmatprep.subr.bf16.mxu0 0
    %6010 = vmatpush1.bf16.msra.mxu0 %v6004
    %6011 = vmatprep.subr.bf16.mxu0 0
    %6012 = vmatpush1.bf16.msra.mxu0 0
    %6013 = vmatprep.subr.bf16.mxu0 0
    %6014 = vmatpush1.bf16.msra.mxu0 0
    %6015 = vmatprep.subr.bf16.mxu0 0
    %6016 = vmatpush1.bf16.msra.mxu0 0
    %6017 = vmatprep.subr.bf16.mxu0 0
    %6018 = vmatpush1.bf16.msra.mxu0 0
    %6019 = vmatprep.subr.bf16.mxu0 0
    %6020 = vmatpush1.bf16.msra.mxu0 0
    %6021 = vmatprep.subr.bf16.mxu0 0
    %6022 = vmatpush1.bf16.msra.mxu0 0
    %6023 = vmatprep.subr.bf16.mxu0 0
    %6024 = vmatpush1.bf16.msra.mxu0 0
    %6025 = vmatprep.subr.bf16.mxu0 0
    %6026 = vmatpush1.bf16.msra.mxu0 0
    %6027 = vmatprep.subr.bf16.mxu0 0
    %6028 = vmatpush1.bf16.msra.mxu0 0
    %6029 = vmatprep.subr.bf16.mxu0 0
    %6030 = vmatpush1.bf16.msra.mxu0 0
    %6031 = vmatprep.subr.bf16.mxu0 0
    %6032 = vmatpush1.bf16.msra.mxu0 0
    %6033 = vmatprep.subr.bf16.mxu0 0
    %6034 = vmatpush1.bf16.msra.mxu0 0
    %6035 = vmatprep.subr.bf16.mxu0 0
    %6036 = vmatpush1.bf16.msra.mxu0 0
    %6037 = vmatprep.subr.bf16.mxu0 0
    %6038 = vmatpush1.bf16.msra.mxu0 0
    %6039 = vmatprep.subr.bf16.mxu0 0
    %6040 = vmatpush1.bf16.msra.mxu0 0
    %6041 = vmatprep.mubr.bf16.mxu0 0
    %6042 = vmatmul.mubr.bf16.gmra.mrb[0].mxu0 %v6007
    %v6043 = vpop.f32.mrb[0].mxu0
    %v6044 = vadd.f32 0.0, %v6043
    %v6045 = vpop.f32.mrb[0].mxu0
    %v6046 = vpop.f32.mrb[0].mxu0
    %v6047 = vpop.f32.mrb[0].mxu0
    %6048 = vdwg.mxu0
    %6049 = vrot.lane.b32.xlu0 %v4427, 88
    %v6050 = vpop.permute.xlu0 %6049
    %v6053 = vsel %vm3940, %v5771, 0
    %6055 = vmatprep.subr.bf16.mxu0 0
    %6056 = vmatpush1.bf16.msra.mxu0 %v6050
    %6057 = vmatprep.subr.bf16.mxu0 0
    %6058 = vmatpush1.bf16.msra.mxu0 0
    %6059 = vmatprep.subr.bf16.mxu0 0
    %6060 = vmatpush1.bf16.msra.mxu0 0
    %6061 = vmatprep.subr.bf16.mxu0 0
    %6062 = vmatpush1.bf16.msra.mxu0 0
    %6063 = vmatprep.subr.bf16.mxu0 0
    %6064 = vmatpush1.bf16.msra.mxu0 0
    %6065 = vmatprep.subr.bf16.mxu0 0
    %6066 = vmatpush1.bf16.msra.mxu0 0
    %6067 = vmatprep.subr.bf16.mxu0 0
    %6068 = vmatpush1.bf16.msra.mxu0 0
    %6069 = vmatprep.subr.bf16.mxu0 0
    %6070 = vmatpush1.bf16.msra.mxu0 0
    %6071 = vmatprep.subr.bf16.mxu0 0
    %6072 = vmatpush1.bf16.msra.mxu0 0
    %6073 = vmatprep.subr.bf16.mxu0 0
    %6074 = vmatpush1.bf16.msra.mxu0 0
    %6075 = vmatprep.subr.bf16.mxu0 0
    %6076 = vmatpush1.bf16.msra.mxu0 0
    %6077 = vmatprep.subr.bf16.mxu0 0
    %6078 = vmatpush1.bf16.msra.mxu0 0
    %6079 = vmatprep.subr.bf16.mxu0 0
    %6080 = vmatpush1.bf16.msra.mxu0 0
    %6081 = vmatprep.subr.bf16.mxu0 0
    %6082 = vmatpush1.bf16.msra.mxu0 0
    %6083 = vmatprep.subr.bf16.mxu0 0
    %6084 = vmatpush1.bf16.msra.mxu0 0
    %6085 = vmatprep.subr.bf16.mxu0 0
    %6086 = vmatpush1.bf16.msra.mxu0 0
    %6087 = vmatprep.mubr.bf16.mxu0 0
    %6088 = vmatmul.mubr.bf16.gmra.mrb[0].mxu0 %v6053
    %v6089 = vpop.f32.mrb[0].mxu0
    %v6090 = vadd.f32 0.0, %v6089
    %v6091 = vpop.f32.mrb[0].mxu0
    %v6092 = vpop.f32.mrb[0].mxu0
    %v6093 = vpop.f32.mrb[0].mxu0
    %6094 = vdwg.mxu0
    %6095 = vrot.lane.b32.xlu0 %v4428, 88
    %v6096 = vpop.permute.xlu0 %6095
    %v6099 = vsel %vm3940, %v5772, 0
    %6101 = vmatprep.subr.bf16.mxu0 0
    %6102 = vmatpush1.bf16.msra.mxu0 %v6096
    %6103 = vmatprep.subr.bf16.mxu0 0
    %6104 = vmatpush1.bf16.msra.mxu0 0
    %6105 = vmatprep.subr.bf16.mxu0 0
    %6106 = vmatpush1.bf16.msra.mxu0 0
    %6107 = vmatprep.subr.bf16.mxu0 0
    %6108 = vmatpush1.bf16.msra.mxu0 0
    %6109 = vmatprep.subr.bf16.mxu0 0
    %6110 = vmatpush1.bf16.msra.mxu0 0
    %6111 = vmatprep.subr.bf16.mxu0 0
    %6112 = vmatpush1.bf16.msra.mxu0 0
    %6113 = vmatprep.subr.bf16.mxu0 0
    %6114 = vmatpush1.bf16.msra.mxu0 0
    %6115 = vmatprep.subr.bf16.mxu0 0
    %6116 = vmatpush1.bf16.msra.mxu0 0
    %6117 = vmatprep.subr.bf16.mxu0 0
    %6118 = vmatpush1.bf16.msra.mxu0 0
    %6119 = vmatprep.subr.bf16.mxu0 0
    %6120 = vmatpush1.bf16.msra.mxu0 0
    %6121 = vmatprep.subr.bf16.mxu0 0
    %6122 = vmatpush1.bf16.msra.mxu0 0
    %6123 = vmatprep.subr.bf16.mxu0 0
    %6124 = vmatpush1.bf16.msra.mxu0 0
    %6125 = vmatprep.subr.bf16.mxu0 0
    %6126 = vmatpush1.bf16.msra.mxu0 0
    %6127 = vmatprep.subr.bf16.mxu0 0
    %6128 = vmatpush1.bf16.msra.mxu0 0
    %6129 = vmatprep.subr.bf16.mxu0 0
    %6130 = vmatpush1.bf16.msra.mxu0 0
    %6131 = vmatprep.subr.bf16.mxu0 0
    %6132 = vmatpush1.bf16.msra.mxu0 0
    %6133 = vmatprep.mubr.bf16.mxu0 0
    %6134 = vmatmul.mubr.bf16.gmra.mrb[0].mxu0 %v6099
    %v6135 = vpop.f32.mrb[0].mxu0
    %v6136 = vadd.f32 0.0, %v6135
    %v6137 = vpop.f32.mrb[0].mxu0
    %v6138 = vpop.f32.mrb[0].mxu0
    %v6139 = vpop.f32.mrb[0].mxu0
    %6140 = vdwg.mxu0
    %6141 = vrot.lane.b32.xlu0 %v4413, 112
    %v6142 = vpop.permute.xlu0 %6141
    %6143 = vrot.lane.b32.xlu0 %v4421, 112
    %v6144 = vpop.permute.xlu0 %6143
    %v6146 = vsel %vm325, %v6142, 0
    %v6149 = vsel %vm325, %v6144, 0
    %6151 = vmatprep.subr.bf16.mxu0 0
    %6152 = vmatpush1.bf16.xpose.msra.mxu0 %v6149
    %6153 = vmatprep.subr.bf16.mxu0 0
    %6154 = vmatpush1.bf16.xpose.msra.mxu0 0
    %6155 = vmatprep.subr.bf16.mxu0 0
    %6156 = vmatpush1.bf16.xpose.msra.mxu0 0
    %6157 = vmatprep.subr.bf16.mxu0 0
    %6158 = vmatpush1.bf16.xpose.msra.mxu0 0
    %6159 = vmatprep.subr.bf16.mxu0 0
    %6160 = vmatpush1.bf16.xpose.msra.mxu0 0
    %6161 = vmatprep.subr.bf16.mxu0 0
    %6162 = vmatpush1.bf16.xpose.msra.mxu0 0
    %6163 = vmatprep.subr.bf16.mxu0 0
    %6164 = vmatpush1.bf16.xpose.msra.mxu0 0
    %6165 = vmatprep.subr.bf16.mxu0 0
    %6166 = vmatpush1.bf16.xpose.msra.mxu0 0
    %6167 = vmatprep.subr.bf16.mxu0 0
    %6168 = vmatpush1.bf16.xpose.msra.mxu0 0
    %6169 = vmatprep.subr.bf16.mxu0 0
    %6170 = vmatpush1.bf16.xpose.msra.mxu0 0
    %6171 = vmatprep.subr.bf16.mxu0 0
    %6172 = vmatpush1.bf16.xpose.msra.mxu0 0
    %6173 = vmatprep.subr.bf16.mxu0 0
    %6174 = vmatpush1.bf16.xpose.msra.mxu0 0
    %6175 = vmatprep.subr.bf16.mxu0 0
    %6176 = vmatpush1.bf16.xpose.msra.mxu0 0
    %6177 = vmatprep.subr.bf16.mxu0 0
    %6178 = vmatpush1.bf16.xpose.msra.mxu0 0
    %6179 = vmatprep.subr.bf16.mxu0 0
    %6180 = vmatpush1.bf16.xpose.msra.mxu0 0
    %6181 = vmatprep.subr.bf16.mxu0 0
    %6182 = vmatpush1.bf16.xpose.msra.mxu0 0
    %6183 = vmatprep.mubr.bf16.mxu0 0
    %6184 = vmatmul.mubr.bf16.gmra.mrb[0].mxu0 %v6146
    %v6185 = vpop.f32.mrb[0].mxu0
    %v6186 = vadd.f32 %v4405, %v6185
    %v6187 = vpop.f32.mrb[0].mxu0
    %v6188 = vpop.f32.mrb[0].mxu0
    %v6189 = vpop.f32.mrb[0].mxu0
    %6190 = vdwg.mxu0
    %6191 = vrot.lane.b32.xlu0 %v4414, 112
    %v6192 = vpop.permute.xlu0 %6191
    %6193 = vrot.lane.b32.xlu0 %v4422, 112
    %v6194 = vpop.permute.xlu0 %6193
    %v6196 = vsel %vm325, %v6192, 0
    %v6199 = vsel %vm325, %v6194, 0
    %6201 = vmatprep.subr.bf16.mxu0 0
    %6202 = vmatpush1.bf16.xpose.msra.mxu0 %v6199
    %6203 = vmatprep.subr.bf16.mxu0 0
    %6204 = vmatpush1.bf16.xpose.msra.mxu0 0
    %6205 = vmatprep.subr.bf16.mxu0 0
    %6206 = vmatpush1.bf16.xpose.msra.mxu0 0
    %6207 = vmatprep.subr.bf16.mxu0 0
    %6208 = vmatpush1.bf16.xpose.msra.mxu0 0
    %6209 = vmatprep.subr.bf16.mxu0 0
    %6210 = vmatpush1.bf16.xpose.msra.mxu0 0
    %6211 = vmatprep.subr.bf16.mxu0 0
    %6212 = vmatpush1.bf16.xpose.msra.mxu0 0
    %6213 = vmatprep.subr.bf16.mxu0 0
    %6214 = vmatpush1.bf16.xpose.msra.mxu0 0
    %6215 = vmatprep.subr.bf16.mxu0 0
    %6216 = vmatpush1.bf16.xpose.msra.mxu0 0
    %6217 = vmatprep.subr.bf16.mxu0 0
    %6218 = vmatpush1.bf16.xpose.msra.mxu0 0
    %6219 = vmatprep.subr.bf16.mxu0 0
    %6220 = vmatpush1.bf16.xpose.msra.mxu0 0
    %6221 = vmatprep.subr.bf16.mxu0 0
    %6222 = vmatpush1.bf16.xpose.msra.mxu0 0
    %6223 = vmatprep.subr.bf16.mxu0 0
    %6224 = vmatpush1.bf16.xpose.msra.mxu0 0
    %6225 = vmatprep.subr.bf16.mxu0 0
    %6226 = vmatpush1.bf16.xpose.msra.mxu0 0
    %6227 = vmatprep.subr.bf16.mxu0 0
    %6228 = vmatpush1.bf16.xpose.msra.mxu0 0
    %6229 = vmatprep.subr.bf16.mxu0 0
    %6230 = vmatpush1.bf16.xpose.msra.mxu0 0
    %6231 = vmatprep.subr.bf16.mxu0 0
    %6232 = vmatpush1.bf16.xpose.msra.mxu0 0
    %6233 = vmatprep.mubr.bf16.mxu0 0
    %6234 = vmatmul.mubr.bf16.gmra.mrb[0].mxu0 %v6196
    %v6235 = vpop.f32.mrb[0].mxu0
    %v6236 = vadd.f32 %v4406, %v6235
    %v6237 = vpop.f32.mrb[0].mxu0
    %v6238 = vpop.f32.mrb[0].mxu0
    %v6239 = vpop.f32.mrb[0].mxu0
    %6240 = vdwg.mxu0
    %6241 = vrot.lane.b32.xlu0 %v4415, 112
    %v6242 = vpop.permute.xlu0 %6241
    %6243 = vrot.lane.b32.xlu0 %v4423, 112
    %v6244 = vpop.permute.xlu0 %6243
    %v6246 = vsel %vm325, %v6242, 0
    %v6249 = vsel %vm325, %v6244, 0
    %6251 = vmatprep.subr.bf16.mxu0 0
    %6252 = vmatpush1.bf16.xpose.msra.mxu0 %v6249
    %6253 = vmatprep.subr.bf16.mxu0 0
    %6254 = vmatpush1.bf16.xpose.msra.mxu0 0
    %6255 = vmatprep.subr.bf16.mxu0 0
    %6256 = vmatpush1.bf16.xpose.msra.mxu0 0
    %6257 = vmatprep.subr.bf16.mxu0 0
    %6258 = vmatpush1.bf16.xpose.msra.mxu0 0
    %6259 = vmatprep.subr.bf16.mxu0 0
    %6260 = vmatpush1.bf16.xpose.msra.mxu0 0
    %6261 = vmatprep.subr.bf16.mxu0 0
    %6262 = vmatpush1.bf16.xpose.msra.mxu0 0
    %6263 = vmatprep.subr.bf16.mxu0 0
    %6264 = vmatpush1.bf16.xpose.msra.mxu0 0
    %6265 = vmatprep.subr.bf16.mxu0 0
    %6266 = vmatpush1.bf16.xpose.msra.mxu0 0
    %6267 = vmatprep.subr.bf16.mxu0 0
    %6268 = vmatpush1.bf16.xpose.msra.mxu0 0
    %6269 = vmatprep.subr.bf16.mxu0 0
    %6270 = vmatpush1.bf16.xpose.msra.mxu0 0
    %6271 = vmatprep.subr.bf16.mxu0 0
    %6272 = vmatpush1.bf16.xpose.msra.mxu0 0
    %6273 = vmatprep.subr.bf16.mxu0 0
    %6274 = vmatpush1.bf16.xpose.msra.mxu0 0
    %6275 = vmatprep.subr.bf16.mxu0 0
    %6276 = vmatpush1.bf16.xpose.msra.mxu0 0
    %6277 = vmatprep.subr.bf16.mxu0 0
    %6278 = vmatpush1.bf16.xpose.msra.mxu0 0
    %6279 = vmatprep.subr.bf16.mxu0 0
    %6280 = vmatpush1.bf16.xpose.msra.mxu0 0
    %6281 = vmatprep.subr.bf16.mxu0 0
    %6282 = vmatpush1.bf16.xpose.msra.mxu0 0
    %6283 = vmatprep.mubr.bf16.mxu0 0
    %6284 = vmatmul.mubr.bf16.gmra.mrb[0].mxu0 %v6246
    %v6285 = vpop.f32.mrb[0].mxu0
    %v6286 = vadd.f32 %v4407, %v6285
    %v6287 = vpop.f32.mrb[0].mxu0
    %v6288 = vpop.f32.mrb[0].mxu0
    %v6289 = vpop.f32.mrb[0].mxu0
    %6290 = vdwg.mxu0
    %6291 = vrot.lane.b32.xlu0 %v4416, 112
    %v6292 = vpop.permute.xlu0 %6291
    %6293 = vrot.lane.b32.xlu0 %v4424, 112
    %v6294 = vpop.permute.xlu0 %6293
    %v6296 = vsel %vm325, %v6292, 0
    %v6299 = vsel %vm325, %v6294, 0
    %6301 = vmatprep.subr.bf16.mxu0 0
    %6302 = vmatpush1.bf16.xpose.msra.mxu0 %v6299
    %6303 = vmatprep.subr.bf16.mxu0 0
    %6304 = vmatpush1.bf16.xpose.msra.mxu0 0
    %6305 = vmatprep.subr.bf16.mxu0 0
    %6306 = vmatpush1.bf16.xpose.msra.mxu0 0
    %6307 = vmatprep.subr.bf16.mxu0 0
    %6308 = vmatpush1.bf16.xpose.msra.mxu0 0
    %6309 = vmatprep.subr.bf16.mxu0 0
    %6310 = vmatpush1.bf16.xpose.msra.mxu0 0
    %6311 = vmatprep.subr.bf16.mxu0 0
    %6312 = vmatpush1.bf16.xpose.msra.mxu0 0
    %6313 = vmatprep.subr.bf16.mxu0 0
    %6314 = vmatpush1.bf16.xpose.msra.mxu0 0
    %6315 = vmatprep.subr.bf16.mxu0 0
    %6316 = vmatpush1.bf16.xpose.msra.mxu0 0
    %6317 = vmatprep.subr.bf16.mxu0 0
    %6318 = vmatpush1.bf16.xpose.msra.mxu0 0
    %6319 = vmatprep.subr.bf16.mxu0 0
    %6320 = vmatpush1.bf16.xpose.msra.mxu0 0
    %6321 = vmatprep.subr.bf16.mxu0 0
    %6322 = vmatpush1.bf16.xpose.msra.mxu0 0
    %6323 = vmatprep.subr.bf16.mxu0 0
    %6324 = vmatpush1.bf16.xpose.msra.mxu0 0
    %6325 = vmatprep.subr.bf16.mxu0 0
    %6326 = vmatpush1.bf16.xpose.msra.mxu0 0
    %6327 = vmatprep.subr.bf16.mxu0 0
    %6328 = vmatpush1.bf16.xpose.msra.mxu0 0
    %6329 = vmatprep.subr.bf16.mxu0 0
    %6330 = vmatpush1.bf16.xpose.msra.mxu0 0
    %6331 = vmatprep.subr.bf16.mxu0 0
    %6332 = vmatpush1.bf16.xpose.msra.mxu0 0
    %6333 = vmatprep.mubr.bf16.mxu0 0
    %6334 = vmatmul.mubr.bf16.gmra.mrb[0].mxu0 %v6296
    %v6335 = vpop.f32.mrb[0].mxu0
    %v6336 = vadd.f32 %v4408, %v6335
    %v6337 = vpop.f32.mrb[0].mxu0
    %v6338 = vpop.f32.mrb[0].mxu0
    %v6339 = vpop.f32.mrb[0].mxu0
    %6340 = vdwg.mxu0
    %6341 = vrot.lane.b32.xlu0 %v4417, 112
    %v6342 = vpop.permute.xlu0 %6341
    %6343 = vrot.lane.b32.xlu0 %v4425, 112
    %v6344 = vpop.permute.xlu0 %6343
    %v6346 = vsel %vm325, %v6342, 0
    %v6349 = vsel %vm325, %v6344, 0
    %6351 = vmatprep.subr.bf16.mxu0 0
    %6352 = vmatpush1.bf16.xpose.msra.mxu0 %v6349
    %6353 = vmatprep.subr.bf16.mxu0 0
    %6354 = vmatpush1.bf16.xpose.msra.mxu0 0
    %6355 = vmatprep.subr.bf16.mxu0 0
    %6356 = vmatpush1.bf16.xpose.msra.mxu0 0
    %6357 = vmatprep.subr.bf16.mxu0 0
    %6358 = vmatpush1.bf16.xpose.msra.mxu0 0
    %6359 = vmatprep.subr.bf16.mxu0 0
    %6360 = vmatpush1.bf16.xpose.msra.mxu0 0
    %6361 = vmatprep.subr.bf16.mxu0 0
    %6362 = vmatpush1.bf16.xpose.msra.mxu0 0
    %6363 = vmatprep.subr.bf16.mxu0 0
    %6364 = vmatpush1.bf16.xpose.msra.mxu0 0
    %6365 = vmatprep.subr.bf16.mxu0 0
    %6366 = vmatpush1.bf16.xpose.msra.mxu0 0
    %6367 = vmatprep.subr.bf16.mxu0 0
    %6368 = vmatpush1.bf16.xpose.msra.mxu0 0
    %6369 = vmatprep.subr.bf16.mxu0 0
    %6370 = vmatpush1.bf16.xpose.msra.mxu0 0
    %6371 = vmatprep.subr.bf16.mxu0 0
    %6372 = vmatpush1.bf16.xpose.msra.mxu0 0
    %6373 = vmatprep.subr.bf16.mxu0 0
    %6374 = vmatpush1.bf16.xpose.msra.mxu0 0
    %6375 = vmatprep.subr.bf16.mxu0 0
    %6376 = vmatpush1.bf16.xpose.msra.mxu0 0
    %6377 = vmatprep.subr.bf16.mxu0 0
    %6378 = vmatpush1.bf16.xpose.msra.mxu0 0
    %6379 = vmatprep.subr.bf16.mxu0 0
    %6380 = vmatpush1.bf16.xpose.msra.mxu0 0
    %6381 = vmatprep.subr.bf16.mxu0 0
    %6382 = vmatpush1.bf16.xpose.msra.mxu0 0
    %6383 = vmatprep.mubr.bf16.mxu0 0
    %6384 = vmatmul.mubr.bf16.gmra.mrb[0].mxu0 %v6346
    %v6385 = vpop.f32.mrb[0].mxu0
    %v6386 = vadd.f32 %v4409, %v6385
    %v6387 = vpop.f32.mrb[0].mxu0
    %v6388 = vpop.f32.mrb[0].mxu0
    %v6389 = vpop.f32.mrb[0].mxu0
    %6390 = vdwg.mxu0
    %6391 = vrot.lane.b32.xlu0 %v4418, 112
    %v6392 = vpop.permute.xlu0 %6391
    %6393 = vrot.lane.b32.xlu0 %v4426, 112
    %v6394 = vpop.permute.xlu0 %6393
    %v6396 = vsel %vm325, %v6392, 0
    %v6399 = vsel %vm325, %v6394, 0
    %6401 = vmatprep.subr.bf16.mxu0 0
    %6402 = vmatpush1.bf16.xpose.msra.mxu0 %v6399
    %6403 = vmatprep.subr.bf16.mxu0 0
    %6404 = vmatpush1.bf16.xpose.msra.mxu0 0
    %6405 = vmatprep.subr.bf16.mxu0 0
    %6406 = vmatpush1.bf16.xpose.msra.mxu0 0
    %6407 = vmatprep.subr.bf16.mxu0 0
    %6408 = vmatpush1.bf16.xpose.msra.mxu0 0
    %6409 = vmatprep.subr.bf16.mxu0 0
    %6410 = vmatpush1.bf16.xpose.msra.mxu0 0
    %6411 = vmatprep.subr.bf16.mxu0 0
    %6412 = vmatpush1.bf16.xpose.msra.mxu0 0
    %6413 = vmatprep.subr.bf16.mxu0 0
    %6414 = vmatpush1.bf16.xpose.msra.mxu0 0
    %6415 = vmatprep.subr.bf16.mxu0 0
    %6416 = vmatpush1.bf16.xpose.msra.mxu0 0
    %6417 = vmatprep.subr.bf16.mxu0 0
    %6418 = vmatpush1.bf16.xpose.msra.mxu0 0
    %6419 = vmatprep.subr.bf16.mxu0 0
    %6420 = vmatpush1.bf16.xpose.msra.mxu0 0
    %6421 = vmatprep.subr.bf16.mxu0 0
    %6422 = vmatpush1.bf16.xpose.msra.mxu0 0
    %6423 = vmatprep.subr.bf16.mxu0 0
    %6424 = vmatpush1.bf16.xpose.msra.mxu0 0
    %6425 = vmatprep.subr.bf16.mxu0 0
    %6426 = vmatpush1.bf16.xpose.msra.mxu0 0
    %6427 = vmatprep.subr.bf16.mxu0 0
    %6428 = vmatpush1.bf16.xpose.msra.mxu0 0
    %6429 = vmatprep.subr.bf16.mxu0 0
    %6430 = vmatpush1.bf16.xpose.msra.mxu0 0
    %6431 = vmatprep.subr.bf16.mxu0 0
    %6432 = vmatpush1.bf16.xpose.msra.mxu0 0
    %6433 = vmatprep.mubr.bf16.mxu0 0
    %6434 = vmatmul.mubr.bf16.gmra.mrb[0].mxu0 %v6396
    %v6435 = vpop.f32.mrb[0].mxu0
    %v6436 = vadd.f32 %v4410, %v6435
    %v6437 = vpop.f32.mrb[0].mxu0
    %v6438 = vpop.f32.mrb[0].mxu0
    %v6439 = vpop.f32.mrb[0].mxu0
    %6440 = vdwg.mxu0
    %6441 = vrot.lane.b32.xlu0 %v4419, 112
    %v6442 = vpop.permute.xlu0 %6441
    %6443 = vrot.lane.b32.xlu0 %v4427, 112
    %v6444 = vpop.permute.xlu0 %6443
    %v6446 = vsel %vm325, %v6442, 0
    %v6449 = vsel %vm325, %v6444, 0
    %6451 = vmatprep.subr.bf16.mxu0 0
    %6452 = vmatpush1.bf16.xpose.msra.mxu0 %v6449
    %6453 = vmatprep.subr.bf16.mxu0 0
    %6454 = vmatpush1.bf16.xpose.msra.mxu0 0
    %6455 = vmatprep.subr.bf16.mxu0 0
    %6456 = vmatpush1.bf16.xpose.msra.mxu0 0
    %6457 = vmatprep.subr.bf16.mxu0 0
    %6458 = vmatpush1.bf16.xpose.msra.mxu0 0
    %6459 = vmatprep.subr.bf16.mxu0 0
    %6460 = vmatpush1.bf16.xpose.msra.mxu0 0
    %6461 = vmatprep.subr.bf16.mxu0 0
    %6462 = vmatpush1.bf16.xpose.msra.mxu0 0
    %6463 = vmatprep.subr.bf16.mxu0 0
    %6464 = vmatpush1.bf16.xpose.msra.mxu0 0
    %6465 = vmatprep.subr.bf16.mxu0 0
    %6466 = vmatpush1.bf16.xpose.msra.mxu0 0
    %6467 = vmatprep.subr.bf16.mxu0 0
    %6468 = vmatpush1.bf16.xpose.msra.mxu0 0
    %6469 = vmatprep.subr.bf16.mxu0 0
    %6470 = vmatpush1.bf16.xpose.msra.mxu0 0
    %6471 = vmatprep.subr.bf16.mxu0 0
    %6472 = vmatpush1.bf16.xpose.msra.mxu0 0
    %6473 = vmatprep.subr.bf16.mxu0 0
    %6474 = vmatpush1.bf16.xpose.msra.mxu0 0
    %6475 = vmatprep.subr.bf16.mxu0 0
    %6476 = vmatpush1.bf16.xpose.msra.mxu0 0
    %6477 = vmatprep.subr.bf16.mxu0 0
    %6478 = vmatpush1.bf16.xpose.msra.mxu0 0
    %6479 = vmatprep.subr.bf16.mxu0 0
    %6480 = vmatpush1.bf16.xpose.msra.mxu0 0
    %6481 = vmatprep.subr.bf16.mxu0 0
    %6482 = vmatpush1.bf16.xpose.msra.mxu0 0
    %6483 = vmatprep.mubr.bf16.mxu0 0
    %6484 = vmatmul.mubr.bf16.gmra.mrb[0].mxu0 %v6446
    %v6485 = vpop.f32.mrb[0].mxu0
    %v6486 = vadd.f32 %v4411, %v6485
    %v6487 = vpop.f32.mrb[0].mxu0
    %v6488 = vpop.f32.mrb[0].mxu0
    %v6489 = vpop.f32.mrb[0].mxu0
    %6490 = vdwg.mxu0
    %6491 = vrot.lane.b32.xlu0 %v4420, 112
    %v6492 = vpop.permute.xlu0 %6491
    %6493 = vrot.lane.b32.xlu0 %v4428, 112
    %v6494 = vpop.permute.xlu0 %6493
    %v6496 = vsel %vm325, %v6492, 0
    %v6499 = vsel %vm325, %v6494, 0
    %6501 = vmatprep.subr.bf16.mxu0 0
    %6502 = vmatpush1.bf16.xpose.msra.mxu0 %v6499
    %6503 = vmatprep.subr.bf16.mxu0 0
    %6504 = vmatpush1.bf16.xpose.msra.mxu0 0
    %6505 = vmatprep.subr.bf16.mxu0 0
    %6506 = vmatpush1.bf16.xpose.msra.mxu0 0
    %6507 = vmatprep.subr.bf16.mxu0 0
    %6508 = vmatpush1.bf16.xpose.msra.mxu0 0
    %6509 = vmatprep.subr.bf16.mxu0 0
    %6510 = vmatpush1.bf16.xpose.msra.mxu0 0
    %6511 = vmatprep.subr.bf16.mxu0 0
    %6512 = vmatpush1.bf16.xpose.msra.mxu0 0
    %6513 = vmatprep.subr.bf16.mxu0 0
    %6514 = vmatpush1.bf16.xpose.msra.mxu0 0
    %6515 = vmatprep.subr.bf16.mxu0 0
    %6516 = vmatpush1.bf16.xpose.msra.mxu0 0
    %6517 = vmatprep.subr.bf16.mxu0 0
    %6518 = vmatpush1.bf16.xpose.msra.mxu0 0
    %6519 = vmatprep.subr.bf16.mxu0 0
    %6520 = vmatpush1.bf16.xpose.msra.mxu0 0
    %6521 = vmatprep.subr.bf16.mxu0 0
    %6522 = vmatpush1.bf16.xpose.msra.mxu0 0
    %6523 = vmatprep.subr.bf16.mxu0 0
    %6524 = vmatpush1.bf16.xpose.msra.mxu0 0
    %6525 = vmatprep.subr.bf16.mxu0 0
    %6526 = vmatpush1.bf16.xpose.msra.mxu0 0
    %6527 = vmatprep.subr.bf16.mxu0 0
    %6528 = vmatpush1.bf16.xpose.msra.mxu0 0
    %6529 = vmatprep.subr.bf16.mxu0 0
    %6530 = vmatpush1.bf16.xpose.msra.mxu0 0
    %6531 = vmatprep.subr.bf16.mxu0 0
    %6532 = vmatpush1.bf16.xpose.msra.mxu0 0
    %6533 = vmatprep.mubr.bf16.mxu0 0
    %6534 = vmatmul.mubr.bf16.gmra.mrb[0].mxu0 %v6496
    %v6535 = vpop.f32.mrb[0].mxu0
    %v6536 = vadd.f32 %v4412, %v6535
    %v6537 = vpop.f32.mrb[0].mxu0
    %v6538 = vpop.f32.mrb[0].mxu0
    %v6539 = vpop.f32.mrb[0].mxu0
    %6540 = vdwg.mxu0
    %v6541 = vsel %vm3940, %v6186, -inf
    %6542 = vmax.xlane.f32.xlu0 %v6541
    %v6543 = vpop.xlane.xlu0 %6542
    %v6544 = vsel %vm3940, %v6236, -inf
    %6545 = vmax.xlane.f32.xlu0 %v6544
    %v6546 = vpop.xlane.xlu0 %6545
    %v6547 = vsel %vm3940, %v6286, -inf
    %6548 = vmax.xlane.f32.xlu0 %v6547
    %v6549 = vpop.xlane.xlu0 %6548
    %v6550 = vsel %vm3940, %v6336, -inf
    %6551 = vmax.xlane.f32.xlu0 %v6550
    %v6552 = vpop.xlane.xlu0 %6551
    %v6553 = vsel %vm3940, %v6386, -inf
    %6554 = vmax.xlane.f32.xlu0 %v6553
    %v6555 = vpop.xlane.xlu0 %6554
    %v6556 = vsel %vm3940, %v6436, -inf
    %6557 = vmax.xlane.f32.xlu0 %v6556
    %v6558 = vpop.xlane.xlu0 %6557
    %v6559 = vsel %vm3940, %v6486, -inf
    %6560 = vmax.xlane.f32.xlu0 %v6559
    %v6561 = vpop.xlane.xlu0 %6560
    %v6562 = vsel %vm3940, %v6536, -inf
    %6563 = vmax.xlane.f32.xlu0 %v6562
    %v6564 = vpop.xlane.xlu0 %6563
    %v6565 = vsub.f32 %v6186, %v6543
    %v6566 = vsub.f32 %v6236, %v6546
    %v6567 = vsub.f32 %v6286, %v6549
    %v6568 = vsub.f32 %v6336, %v6552
    %v6569 = vsub.f32 %v6386, %v6555
    %v6570 = vsub.f32 %v6436, %v6558
    %v6571 = vsub.f32 %v6486, %v6561
    %v6572 = vsub.f32 %v6536, %v6564
    %v6573 = vmul.f32 %v6565, 1.442695
    %v6574 = vpow.pop %v6573
    %v6575 = vmul.f32 %v6566, 1.442695
    %v6576 = vpow.pop %v6575
    %v6577 = vmul.f32 %v6567, 1.442695
    %v6578 = vpow.pop %v6577
    %v6579 = vmul.f32 %v6568, 1.442695
    %v6580 = vpow.pop %v6579
    %v6581 = vmul.f32 %v6569, 1.442695
    %v6582 = vpow.pop %v6581
    %v6583 = vmul.f32 %v6570, 1.442695
    %v6584 = vpow.pop %v6583
    %v6585 = vmul.f32 %v6571, 1.442695
    %v6586 = vpow.pop %v6585
    %v6587 = vmul.f32 %v6572, 1.442695
    %v6588 = vpow.pop %v6587
    %v6589 = vsel %vm3940, %v6574, 0.0
    %6590 = vadd.xlane.f32.xlu0 %v6589
    %v6591 = vpop.xlane.xlu0 %6590
    %v6592 = vsel %vm3940, %v6576, 0.0
    %6593 = vadd.xlane.f32.xlu0 %v6592
    %v6594 = vpop.xlane.xlu0 %6593
    %v6595 = vsel %vm3940, %v6578, 0.0
    %6596 = vadd.xlane.f32.xlu0 %v6595
    %v6597 = vpop.xlane.xlu0 %6596
    %v6598 = vsel %vm3940, %v6580, 0.0
    %6599 = vadd.xlane.f32.xlu0 %v6598
    %v6600 = vpop.xlane.xlu0 %6599
    %v6601 = vsel %vm3940, %v6582, 0.0
    %6602 = vadd.xlane.f32.xlu0 %v6601
    %v6603 = vpop.xlane.xlu0 %6602
    %v6604 = vsel %vm3940, %v6584, 0.0
    %6605 = vadd.xlane.f32.xlu0 %v6604
    %v6606 = vpop.xlane.xlu0 %6605
    %v6607 = vsel %vm3940, %v6586, 0.0
    %6608 = vadd.xlane.f32.xlu0 %v6607
    %v6609 = vpop.xlane.xlu0 %6608
    %v6610 = vsel %vm3940, %v6588, 0.0
    %6611 = vadd.xlane.f32.xlu0 %v6610
    %v6612 = vpop.xlane.xlu0 %6611
    %v6613 = vrcp.pop %v6591
    %v6614 = vmul.f32 %v6574, %v6613
    %v6615 = vrcp.pop %v6594
    %v6616 = vmul.f32 %v6576, %v6615
    %v6617 = vrcp.pop %v6597
    %v6618 = vmul.f32 %v6578, %v6617
    %v6619 = vrcp.pop %v6600
    %v6620 = vmul.f32 %v6580, %v6619
    %v6621 = vrcp.pop %v6603
    %v6622 = vmul.f32 %v6582, %v6621
    %v6623 = vrcp.pop %v6606
    %v6624 = vmul.f32 %v6584, %v6623
    %v6625 = vrcp.pop %v6609
    %v6626 = vmul.f32 %v6586, %v6625
    %v6627 = vrcp.pop %v6612
    %v6628 = vmul.f32 %v6588, %v6627
    %v6629 = vpack.c.bf16 %v6614, %v6614
    %v6630 = vpack.c.bf16 %v6616, %v6616
    %v6631 = vpack.c.bf16 %v6618, %v6618
    %v6632 = vpack.c.bf16 %v6620, %v6620
    %v6633 = vpack.c.bf16 %v6622, %v6622
    %v6634 = vpack.c.bf16 %v6624, %v6624
    %v6635 = vpack.c.bf16 %v6626, %v6626
    %v6636 = vpack.c.bf16 %v6628, %v6628
    %6637 = vrot.lane.b32.xlu0 %v4421, 80
    %v6638 = vpop.permute.xlu0 %6637
    %v6641 = vsel %vm3940, %v6629, 0
    %6643 = vmatprep.subr.bf16.mxu0 0
    %6644 = vmatpush1.bf16.msra.mxu0 %v6638
    %6645 = vmatprep.subr.bf16.mxu0 0
    %6646 = vmatpush1.bf16.msra.mxu0 0
    %6647 = vmatprep.subr.bf16.mxu0 0
    %6648 = vmatpush1.bf16.msra.mxu0 0
    %6649 = vmatprep.subr.bf16.mxu0 0
    %6650 = vmatpush1.bf16.msra.mxu0 0
    %6651 = vmatprep.subr.bf16.mxu0 0
    %6652 = vmatpush1.bf16.msra.mxu0 0
    %6653 = vmatprep.subr.bf16.mxu0 0
    %6654 = vmatpush1.bf16.msra.mxu0 0
    %6655 = vmatprep.subr.bf16.mxu0 0
    %6656 = vmatpush1.bf16.msra.mxu0 0
    %6657 = vmatprep.subr.bf16.mxu0 0
    %6658 = vmatpush1.bf16.msra.mxu0 0
    %6659 = vmatprep.subr.bf16.mxu0 0
    %6660 = vmatpush1.bf16.msra.mxu0 0
    %6661 = vmatprep.subr.bf16.mxu0 0
    %6662 = vmatpush1.bf16.msra.mxu0 0
    %6663 = vmatprep.subr.bf16.mxu0 0
    %6664 = vmatpush1.bf16.msra.mxu0 0
    %6665 = vmatprep.subr.bf16.mxu0 0
    %6666 = vmatpush1.bf16.msra.mxu0 0
    %6667 = vmatprep.subr.bf16.mxu0 0
    %6668 = vmatpush1.bf16.msra.mxu0 0
    %6669 = vmatprep.subr.bf16.mxu0 0
    %6670 = vmatpush1.bf16.msra.mxu0 0
    %6671 = vmatprep.subr.bf16.mxu0 0
    %6672 = vmatpush1.bf16.msra.mxu0 0
    %6673 = vmatprep.subr.bf16.mxu0 0
    %6674 = vmatpush1.bf16.msra.mxu0 0
    %6675 = vmatprep.mubr.bf16.mxu0 0
    %6676 = vmatmul.mubr.bf16.gmra.mrb[0].mxu0 %v6641
    %v6677 = vpop.f32.mrb[0].mxu0
    %v6678 = vadd.f32 0.0, %v6677
    %v6679 = vpop.f32.mrb[0].mxu0
    %v6680 = vpop.f32.mrb[0].mxu0
    %v6681 = vpop.f32.mrb[0].mxu0
    %6682 = vdwg.mxu0
    %6683 = vrot.lane.b32.xlu0 %v4422, 80
    %v6684 = vpop.permute.xlu0 %6683
    %v6687 = vsel %vm3940, %v6630, 0
    %6689 = vmatprep.subr.bf16.mxu0 0
    %6690 = vmatpush1.bf16.msra.mxu0 %v6684
    %6691 = vmatprep.subr.bf16.mxu0 0
    %6692 = vmatpush1.bf16.msra.mxu0 0
    %6693 = vmatprep.subr.bf16.mxu0 0
    %6694 = vmatpush1.bf16.msra.mxu0 0
    %6695 = vmatprep.subr.bf16.mxu0 0
    %6696 = vmatpush1.bf16.msra.mxu0 0
    %6697 = vmatprep.subr.bf16.mxu0 0
    %6698 = vmatpush1.bf16.msra.mxu0 0
    %6699 = vmatprep.subr.bf16.mxu0 0
    %6700 = vmatpush1.bf16.msra.mxu0 0
    %6701 = vmatprep.subr.bf16.mxu0 0
    %6702 = vmatpush1.bf16.msra.mxu0 0
    %6703 = vmatprep.subr.bf16.mxu0 0
    %6704 = vmatpush1.bf16.msra.mxu0 0
    %6705 = vmatprep.subr.bf16.mxu0 0
    %6706 = vmatpush1.bf16.msra.mxu0 0
    %6707 = vmatprep.subr.bf16.mxu0 0
    %6708 = vmatpush1.bf16.msra.mxu0 0
    %6709 = vmatprep.subr.bf16.mxu0 0
    %6710 = vmatpush1.bf16.msra.mxu0 0
    %6711 = vmatprep.subr.bf16.mxu0 0
    %6712 = vmatpush1.bf16.msra.mxu0 0
    %6713 = vmatprep.subr.bf16.mxu0 0
    %6714 = vmatpush1.bf16.msra.mxu0 0
    %6715 = vmatprep.subr.bf16.mxu0 0
    %6716 = vmatpush1.bf16.msra.mxu0 0
    %6717 = vmatprep.subr.bf16.mxu0 0
    %6718 = vmatpush1.bf16.msra.mxu0 0
    %6719 = vmatprep.subr.bf16.mxu0 0
    %6720 = vmatpush1.bf16.msra.mxu0 0
    %6721 = vmatprep.mubr.bf16.mxu0 0
    %6722 = vmatmul.mubr.bf16.gmra.mrb[0].mxu0 %v6687
    %v6723 = vpop.f32.mrb[0].mxu0
    %v6724 = vadd.f32 0.0, %v6723
    %v6725 = vpop.f32.mrb[0].mxu0
    %v6726 = vpop.f32.mrb[0].mxu0
    %v6727 = vpop.f32.mrb[0].mxu0
    %6728 = vdwg.mxu0
    %6729 = vrot.lane.b32.xlu0 %v4423, 80
    %v6730 = vpop.permute.xlu0 %6729
    %v6733 = vsel %vm3940, %v6631, 0
    %6735 = vmatprep.subr.bf16.mxu0 0
    %6736 = vmatpush1.bf16.msra.mxu0 %v6730
    %6737 = vmatprep.subr.bf16.mxu0 0
    %6738 = vmatpush1.bf16.msra.mxu0 0
    %6739 = vmatprep.subr.bf16.mxu0 0
    %6740 = vmatpush1.bf16.msra.mxu0 0
    %6741 = vmatprep.subr.bf16.mxu0 0
    %6742 = vmatpush1.bf16.msra.mxu0 0
    %6743 = vmatprep.subr.bf16.mxu0 0
    %6744 = vmatpush1.bf16.msra.mxu0 0
    %6745 = vmatprep.subr.bf16.mxu0 0
    %6746 = vmatpush1.bf16.msra.mxu0 0
    %6747 = vmatprep.subr.bf16.mxu0 0
    %6748 = vmatpush1.bf16.msra.mxu0 0
    %6749 = vmatprep.subr.bf16.mxu0 0
    %6750 = vmatpush1.bf16.msra.mxu0 0
    %6751 = vmatprep.subr.bf16.mxu0 0
    %6752 = vmatpush1.bf16.msra.mxu0 0
    %6753 = vmatprep.subr.bf16.mxu0 0
    %6754 = vmatpush1.bf16.msra.mxu0 0
    %6755 = vmatprep.subr.bf16.mxu0 0
    %6756 = vmatpush1.bf16.msra.mxu0 0
    %6757 = vmatprep.subr.bf16.mxu0 0
    %6758 = vmatpush1.bf16.msra.mxu0 0
    %6759 = vmatprep.subr.bf16.mxu0 0
    %6760 = vmatpush1.bf16.msra.mxu0 0
    %6761 = vmatprep.subr.bf16.mxu0 0
    %6762 = vmatpush1.bf16.msra.mxu0 0
    %6763 = vmatprep.subr.bf16.mxu0 0
    %6764 = vmatpush1.bf16.msra.mxu0 0
    %6765 = vmatprep.subr.bf16.mxu0 0
    %6766 = vmatpush1.bf16.msra.mxu0 0
    %6767 = vmatprep.mubr.bf16.mxu0 0
    %6768 = vmatmul.mubr.bf16.gmra.mrb[0].mxu0 %v6733
    %v6769 = vpop.f32.mrb[0].mxu0
    %v6770 = vadd.f32 0.0, %v6769
    %v6771 = vpop.f32.mrb[0].mxu0
    %v6772 = vpop.f32.mrb[0].mxu0
    %v6773 = vpop.f32.mrb[0].mxu0
    %6774 = vdwg.mxu0
    %6775 = vrot.lane.b32.xlu0 %v4424, 80
    %v6776 = vpop.permute.xlu0 %6775
    %v6779 = vsel %vm3940, %v6632, 0
    %6781 = vmatprep.subr.bf16.mxu0 0
    %6782 = vmatpush1.bf16.msra.mxu0 %v6776
    %6783 = vmatprep.subr.bf16.mxu0 0
    %6784 = vmatpush1.bf16.msra.mxu0 0
    %6785 = vmatprep.subr.bf16.mxu0 0
    %6786 = vmatpush1.bf16.msra.mxu0 0
    %6787 = vmatprep.subr.bf16.mxu0 0
    %6788 = vmatpush1.bf16.msra.mxu0 0
    %6789 = vmatprep.subr.bf16.mxu0 0
    %6790 = vmatpush1.bf16.msra.mxu0 0
    %6791 = vmatprep.subr.bf16.mxu0 0
    %6792 = vmatpush1.bf16.msra.mxu0 0
    %6793 = vmatprep.subr.bf16.mxu0 0
    %6794 = vmatpush1.bf16.msra.mxu0 0
    %6795 = vmatprep.subr.bf16.mxu0 0
    %6796 = vmatpush1.bf16.msra.mxu0 0
    %6797 = vmatprep.subr.bf16.mxu0 0
    %6798 = vmatpush1.bf16.msra.mxu0 0
    %6799 = vmatprep.subr.bf16.mxu0 0
    %6800 = vmatpush1.bf16.msra.mxu0 0
    %6801 = vmatprep.subr.bf16.mxu0 0
    %6802 = vmatpush1.bf16.msra.mxu0 0
    %6803 = vmatprep.subr.bf16.mxu0 0
    %6804 = vmatpush1.bf16.msra.mxu0 0
    %6805 = vmatprep.subr.bf16.mxu0 0
    %6806 = vmatpush1.bf16.msra.mxu0 0
    %6807 = vmatprep.subr.bf16.mxu0 0
    %6808 = vmatpush1.bf16.msra.mxu0 0
    %6809 = vmatprep.subr.bf16.mxu0 0
    %6810 = vmatpush1.bf16.msra.mxu0 0
    %6811 = vmatprep.subr.bf16.mxu0 0
    %6812 = vmatpush1.bf16.msra.mxu0 0
    %6813 = vmatprep.mubr.bf16.mxu0 0
    %6814 = vmatmul.mubr.bf16.gmra.mrb[0].mxu0 %v6779
    %v6815 = vpop.f32.mrb[0].mxu0
    %v6816 = vadd.f32 0.0, %v6815
    %v6817 = vpop.f32.mrb[0].mxu0
    %v6818 = vpop.f32.mrb[0].mxu0
    %v6819 = vpop.f32.mrb[0].mxu0
    %6820 = vdwg.mxu0
    %6821 = vrot.lane.b32.xlu0 %v4425, 80
    %v6822 = vpop.permute.xlu0 %6821
    %v6825 = vsel %vm3940, %v6633, 0
    %6827 = vmatprep.subr.bf16.mxu0 0
    %6828 = vmatpush1.bf16.msra.mxu0 %v6822
    %6829 = vmatprep.subr.bf16.mxu0 0
    %6830 = vmatpush1.bf16.msra.mxu0 0
    %6831 = vmatprep.subr.bf16.mxu0 0
    %6832 = vmatpush1.bf16.msra.mxu0 0
    %6833 = vmatprep.subr.bf16.mxu0 0
    %6834 = vmatpush1.bf16.msra.mxu0 0
    %6835 = vmatprep.subr.bf16.mxu0 0
    %6836 = vmatpush1.bf16.msra.mxu0 0
    %6837 = vmatprep.subr.bf16.mxu0 0
    %6838 = vmatpush1.bf16.msra.mxu0 0
    %6839 = vmatprep.subr.bf16.mxu0 0
    %6840 = vmatpush1.bf16.msra.mxu0 0
    %6841 = vmatprep.subr.bf16.mxu0 0
    %6842 = vmatpush1.bf16.msra.mxu0 0
    %6843 = vmatprep.subr.bf16.mxu0 0
    %6844 = vmatpush1.bf16.msra.mxu0 0
    %6845 = vmatprep.subr.bf16.mxu0 0
    %6846 = vmatpush1.bf16.msra.mxu0 0
    %6847 = vmatprep.subr.bf16.mxu0 0
    %6848 = vmatpush1.bf16.msra.mxu0 0
    %6849 = vmatprep.subr.bf16.mxu0 0
    %6850 = vmatpush1.bf16.msra.mxu0 0
    %6851 = vmatprep.subr.bf16.mxu0 0
    %6852 = vmatpush1.bf16.msra.mxu0 0
    %6853 = vmatprep.subr.bf16.mxu0 0
    %6854 = vmatpush1.bf16.msra.mxu0 0
    %6855 = vmatprep.subr.bf16.mxu0 0
    %6856 = vmatpush1.bf16.msra.mxu0 0
    %6857 = vmatprep.subr.bf16.mxu0 0
    %6858 = vmatpush1.bf16.msra.mxu0 0
    %6859 = vmatprep.mubr.bf16.mxu0 0
    %6860 = vmatmul.mubr.bf16.gmra.mrb[0].mxu0 %v6825
    %v6861 = vpop.f32.mrb[0].mxu0
    %v6862 = vadd.f32 0.0, %v6861
    %v6863 = vpop.f32.mrb[0].mxu0
    %v6864 = vpop.f32.mrb[0].mxu0
    %v6865 = vpop.f32.mrb[0].mxu0
    %6866 = vdwg.mxu0
    %6867 = vrot.lane.b32.xlu0 %v4426, 80
    %v6868 = vpop.permute.xlu0 %6867
    %v6871 = vsel %vm3940, %v6634, 0
    %6873 = vmatprep.subr.bf16.mxu0 0
    %6874 = vmatpush1.bf16.msra.mxu0 %v6868
    %6875 = vmatprep.subr.bf16.mxu0 0
    %6876 = vmatpush1.bf16.msra.mxu0 0
    %6877 = vmatprep.subr.bf16.mxu0 0
    %6878 = vmatpush1.bf16.msra.mxu0 0
    %6879 = vmatprep.subr.bf16.mxu0 0
    %6880 = vmatpush1.bf16.msra.mxu0 0
    %6881 = vmatprep.subr.bf16.mxu0 0
    %6882 = vmatpush1.bf16.msra.mxu0 0
    %6883 = vmatprep.subr.bf16.mxu0 0
    %6884 = vmatpush1.bf16.msra.mxu0 0
    %6885 = vmatprep.subr.bf16.mxu0 0
    %6886 = vmatpush1.bf16.msra.mxu0 0
    %6887 = vmatprep.subr.bf16.mxu0 0
    %6888 = vmatpush1.bf16.msra.mxu0 0
    %6889 = vmatprep.subr.bf16.mxu0 0
    %6890 = vmatpush1.bf16.msra.mxu0 0
    %6891 = vmatprep.subr.bf16.mxu0 0
    %6892 = vmatpush1.bf16.msra.mxu0 0
    %6893 = vmatprep.subr.bf16.mxu0 0
    %6894 = vmatpush1.bf16.msra.mxu0 0
    %6895 = vmatprep.subr.bf16.mxu0 0
    %6896 = vmatpush1.bf16.msra.mxu0 0
    %6897 = vmatprep.subr.bf16.mxu0 0
    %6898 = vmatpush1.bf16.msra.mxu0 0
    %6899 = vmatprep.subr.bf16.mxu0 0
    %6900 = vmatpush1.bf16.msra.mxu0 0
    %6901 = vmatprep.subr.bf16.mxu0 0
    %6902 = vmatpush1.bf16.msra.mxu0 0
    %6903 = vmatprep.subr.bf16.mxu0 0
    %6904 = vmatpush1.bf16.msra.mxu0 0
    %6905 = vmatprep.mubr.bf16.mxu0 0
    %6906 = vmatmul.mubr.bf16.gmra.mrb[0].mxu0 %v6871
    %v6907 = vpop.f32.mrb[0].mxu0
    %v6908 = vadd.f32 0.0, %v6907
    %v6909 = vpop.f32.mrb[0].mxu0
    %v6910 = vpop.f32.mrb[0].mxu0
    %v6911 = vpop.f32.mrb[0].mxu0
    %6912 = vdwg.mxu0
    %6913 = vrot.lane.b32.xlu0 %v4427, 80
    %v6914 = vpop.permute.xlu0 %6913
    %v6917 = vsel %vm3940, %v6635, 0
    %6919 = vmatprep.subr.bf16.mxu0 0
    %6920 = vmatpush1.bf16.msra.mxu0 %v6914
    %6921 = vmatprep.subr.bf16.mxu0 0
    %6922 = vmatpush1.bf16.msra.mxu0 0
    %6923 = vmatprep.subr.bf16.mxu0 0
    %6924 = vmatpush1.bf16.msra.mxu0 0
    %6925 = vmatprep.subr.bf16.mxu0 0
    %6926 = vmatpush1.bf16.msra.mxu0 0
    %6927 = vmatprep.subr.bf16.mxu0 0
    %6928 = vmatpush1.bf16.msra.mxu0 0
    %6929 = vmatprep.subr.bf16.mxu0 0
    %6930 = vmatpush1.bf16.msra.mxu0 0
    %6931 = vmatprep.subr.bf16.mxu0 0
    %6932 = vmatpush1.bf16.msra.mxu0 0
    %6933 = vmatprep.subr.bf16.mxu0 0
    %6934 = vmatpush1.bf16.msra.mxu0 0
    %6935 = vmatprep.subr.bf16.mxu0 0
    %6936 = vmatpush1.bf16.msra.mxu0 0
    %6937 = vmatprep.subr.bf16.mxu0 0
    %6938 = vmatpush1.bf16.msra.mxu0 0
    %6939 = vmatprep.subr.bf16.mxu0 0
    %6940 = vmatpush1.bf16.msra.mxu0 0
    %6941 = vmatprep.subr.bf16.mxu0 0
    %6942 = vmatpush1.bf16.msra.mxu0 0
    %6943 = vmatprep.subr.bf16.mxu0 0
    %6944 = vmatpush1.bf16.msra.mxu0 0
    %6945 = vmatprep.subr.bf16.mxu0 0
    %6946 = vmatpush1.bf16.msra.mxu0 0
    %6947 = vmatprep.subr.bf16.mxu0 0
    %6948 = vmatpush1.bf16.msra.mxu0 0
    %6949 = vmatprep.subr.bf16.mxu0 0
    %6950 = vmatpush1.bf16.msra.mxu0 0
    %6951 = vmatprep.mubr.bf16.mxu0 0
    %6952 = vmatmul.mubr.bf16.gmra.mrb[0].mxu0 %v6917
    %v6953 = vpop.f32.mrb[0].mxu0
    %v6954 = vadd.f32 0.0, %v6953
    %v6955 = vpop.f32.mrb[0].mxu0
    %v6956 = vpop.f32.mrb[0].mxu0
    %v6957 = vpop.f32.mrb[0].mxu0
    %6958 = vdwg.mxu0
    %6959 = vrot.lane.b32.xlu0 %v4428, 80
    %v6960 = vpop.permute.xlu0 %6959
    %v6963 = vsel %vm3940, %v6636, 0
    %6965 = vmatprep.subr.bf16.mxu0 0
    %6966 = vmatpush1.bf16.msra.mxu0 %v6960
    %6967 = vmatprep.subr.bf16.mxu0 0
    %6968 = vmatpush1.bf16.msra.mxu0 0
    %6969 = vmatprep.subr.bf16.mxu0 0
    %6970 = vmatpush1.bf16.msra.mxu0 0
    %6971 = vmatprep.subr.bf16.mxu0 0
    %6972 = vmatpush1.bf16.msra.mxu0 0
    %6973 = vmatprep.subr.bf16.mxu0 0
    %6974 = vmatpush1.bf16.msra.mxu0 0
    %6975 = vmatprep.subr.bf16.mxu0 0
    %6976 = vmatpush1.bf16.msra.mxu0 0
    %6977 = vmatprep.subr.bf16.mxu0 0
    %6978 = vmatpush1.bf16.msra.mxu0 0
    %6979 = vmatprep.subr.bf16.mxu0 0
    %6980 = vmatpush1.bf16.msra.mxu0 0
    %6981 = vmatprep.subr.bf16.mxu0 0
    %6982 = vmatpush1.bf16.msra.mxu0 0
    %6983 = vmatprep.subr.bf16.mxu0 0
    %6984 = vmatpush1.bf16.msra.mxu0 0
    %6985 = vmatprep.subr.bf16.mxu0 0
    %6986 = vmatpush1.bf16.msra.mxu0 0
    %6987 = vmatprep.subr.bf16.mxu0 0
    %6988 = vmatpush1.bf16.msra.mxu0 0
    %6989 = vmatprep.subr.bf16.mxu0 0
    %6990 = vmatpush1.bf16.msra.mxu0 0
    %6991 = vmatprep.subr.bf16.mxu0 0
    %6992 = vmatpush1.bf16.msra.mxu0 0
    %6993 = vmatprep.subr.bf16.mxu0 0
    %6994 = vmatpush1.bf16.msra.mxu0 0
    %6995 = vmatprep.subr.bf16.mxu0 0
    %6996 = vmatpush1.bf16.msra.mxu0 0
    %6997 = vmatprep.mubr.bf16.mxu0 0
    %6998 = vmatmul.mubr.bf16.gmra.mrb[0].mxu0 %v6963
    %v6999 = vpop.f32.mrb[0].mxu0
    %v7000 = vadd.f32 0.0, %v6999
    %v7001 = vpop.f32.mrb[0].mxu0
    %v7002 = vpop.f32.mrb[0].mxu0
    %v7003 = vpop.f32.mrb[0].mxu0
    %7004 = vdwg.mxu0
    %7005 = vrot.lane.b32.xlu0 %v4413, 104
    %v7006 = vpop.permute.xlu0 %7005
    %7007 = vrot.lane.b32.xlu0 %v4421, 104
    %v7008 = vpop.permute.xlu0 %7007
    %v7010 = vsel %vm325, %v7006, 0
    %v7013 = vsel %vm325, %v7008, 0
    %7015 = vmatprep.subr.bf16.mxu0 0
    %7016 = vmatpush1.bf16.xpose.msra.mxu0 %v7013
    %7017 = vmatprep.subr.bf16.mxu0 0
    %7018 = vmatpush1.bf16.xpose.msra.mxu0 0
    %7019 = vmatprep.subr.bf16.mxu0 0
    %7020 = vmatpush1.bf16.xpose.msra.mxu0 0
    %7021 = vmatprep.subr.bf16.mxu0 0
    %7022 = vmatpush1.bf16.xpose.msra.mxu0 0
    %7023 = vmatprep.subr.bf16.mxu0 0
    %7024 = vmatpush1.bf16.xpose.msra.mxu0 0
    %7025 = vmatprep.subr.bf16.mxu0 0
    %7026 = vmatpush1.bf16.xpose.msra.mxu0 0
    %7027 = vmatprep.subr.bf16.mxu0 0
    %7028 = vmatpush1.bf16.xpose.msra.mxu0 0
    %7029 = vmatprep.subr.bf16.mxu0 0
    %7030 = vmatpush1.bf16.xpose.msra.mxu0 0
    %7031 = vmatprep.subr.bf16.mxu0 0
    %7032 = vmatpush1.bf16.xpose.msra.mxu0 0
    %7033 = vmatprep.subr.bf16.mxu0 0
    %7034 = vmatpush1.bf16.xpose.msra.mxu0 0
    %7035 = vmatprep.subr.bf16.mxu0 0
    %7036 = vmatpush1.bf16.xpose.msra.mxu0 0
    %7037 = vmatprep.subr.bf16.mxu0 0
    %7038 = vmatpush1.bf16.xpose.msra.mxu0 0
    %7039 = vmatprep.subr.bf16.mxu0 0
    %7040 = vmatpush1.bf16.xpose.msra.mxu0 0
    %7041 = vmatprep.subr.bf16.mxu0 0
    %7042 = vmatpush1.bf16.xpose.msra.mxu0 0
    %7043 = vmatprep.subr.bf16.mxu0 0
    %7044 = vmatpush1.bf16.xpose.msra.mxu0 0
    %7045 = vmatprep.subr.bf16.mxu0 0
    %7046 = vmatpush1.bf16.xpose.msra.mxu0 0
    %7047 = vmatprep.mubr.bf16.mxu0 0
    %7048 = vmatmul.mubr.bf16.gmra.mrb[0].mxu0 %v7010
    %v7049 = vpop.f32.mrb[0].mxu0
    %v7050 = vadd.f32 %v4405, %v7049
    %v7051 = vpop.f32.mrb[0].mxu0
    %v7052 = vpop.f32.mrb[0].mxu0
    %v7053 = vpop.f32.mrb[0].mxu0
    %7054 = vdwg.mxu0
    %7055 = vrot.lane.b32.xlu0 %v4414, 104
    %v7056 = vpop.permute.xlu0 %7055
    %7057 = vrot.lane.b32.xlu0 %v4422, 104
    %v7058 = vpop.permute.xlu0 %7057
    %v7060 = vsel %vm325, %v7056, 0
    %v7063 = vsel %vm325, %v7058, 0
    %7065 = vmatprep.subr.bf16.mxu0 0
    %7066 = vmatpush1.bf16.xpose.msra.mxu0 %v7063
    %7067 = vmatprep.subr.bf16.mxu0 0
    %7068 = vmatpush1.bf16.xpose.msra.mxu0 0
    %7069 = vmatprep.subr.bf16.mxu0 0
    %7070 = vmatpush1.bf16.xpose.msra.mxu0 0
    %7071 = vmatprep.subr.bf16.mxu0 0
    %7072 = vmatpush1.bf16.xpose.msra.mxu0 0
    %7073 = vmatprep.subr.bf16.mxu0 0
    %7074 = vmatpush1.bf16.xpose.msra.mxu0 0
    %7075 = vmatprep.subr.bf16.mxu0 0
    %7076 = vmatpush1.bf16.xpose.msra.mxu0 0
    %7077 = vmatprep.subr.bf16.mxu0 0
    %7078 = vmatpush1.bf16.xpose.msra.mxu0 0
    %7079 = vmatprep.subr.bf16.mxu0 0
    %7080 = vmatpush1.bf16.xpose.msra.mxu0 0
    %7081 = vmatprep.subr.bf16.mxu0 0
    %7082 = vmatpush1.bf16.xpose.msra.mxu0 0
    %7083 = vmatprep.subr.bf16.mxu0 0
    %7084 = vmatpush1.bf16.xpose.msra.mxu0 0
    %7085 = vmatprep.subr.bf16.mxu0 0
    %7086 = vmatpush1.bf16.xpose.msra.mxu0 0
    %7087 = vmatprep.subr.bf16.mxu0 0
    %7088 = vmatpush1.bf16.xpose.msra.mxu0 0
    %7089 = vmatprep.subr.bf16.mxu0 0
    %7090 = vmatpush1.bf16.xpose.msra.mxu0 0
    %7091 = vmatprep.subr.bf16.mxu0 0
    %7092 = vmatpush1.bf16.xpose.msra.mxu0 0
    %7093 = vmatprep.subr.bf16.mxu0 0
    %7094 = vmatpush1.bf16.xpose.msra.mxu0 0
    %7095 = vmatprep.subr.bf16.mxu0 0
    %7096 = vmatpush1.bf16.xpose.msra.mxu0 0
    %7097 = vmatprep.mubr.bf16.mxu0 0
    %7098 = vmatmul.mubr.bf16.gmra.mrb[0].mxu0 %v7060
    %v7099 = vpop.f32.mrb[0].mxu0
    %v7100 = vadd.f32 %v4406, %v7099
    %v7101 = vpop.f32.mrb[0].mxu0
    %v7102 = vpop.f32.mrb[0].mxu0
    %v7103 = vpop.f32.mrb[0].mxu0
    %7104 = vdwg.mxu0
    %7105 = vrot.lane.b32.xlu0 %v4415, 104
    %v7106 = vpop.permute.xlu0 %7105
    %7107 = vrot.lane.b32.xlu0 %v4423, 104
    %v7108 = vpop.permute.xlu0 %7107
    %v7110 = vsel %vm325, %v7106, 0
    %v7113 = vsel %vm325, %v7108, 0
    %7115 = vmatprep.subr.bf16.mxu0 0
    %7116 = vmatpush1.bf16.xpose.msra.mxu0 %v7113
    %7117 = vmatprep.subr.bf16.mxu0 0
    %7118 = vmatpush1.bf16.xpose.msra.mxu0 0
    %7119 = vmatprep.subr.bf16.mxu0 0
    %7120 = vmatpush1.bf16.xpose.msra.mxu0 0
    %7121 = vmatprep.subr.bf16.mxu0 0
    %7122 = vmatpush1.bf16.xpose.msra.mxu0 0
    %7123 = vmatprep.subr.bf16.mxu0 0
    %7124 = vmatpush1.bf16.xpose.msra.mxu0 0
    %7125 = vmatprep.subr.bf16.mxu0 0
    %7126 = vmatpush1.bf16.xpose.msra.mxu0 0
    %7127 = vmatprep.subr.bf16.mxu0 0
    %7128 = vmatpush1.bf16.xpose.msra.mxu0 0
    %7129 = vmatprep.subr.bf16.mxu0 0
    %7130 = vmatpush1.bf16.xpose.msra.mxu0 0
    %7131 = vmatprep.subr.bf16.mxu0 0
    %7132 = vmatpush1.bf16.xpose.msra.mxu0 0
    %7133 = vmatprep.subr.bf16.mxu0 0
    %7134 = vmatpush1.bf16.xpose.msra.mxu0 0
    %7135 = vmatprep.subr.bf16.mxu0 0
    %7136 = vmatpush1.bf16.xpose.msra.mxu0 0
    %7137 = vmatprep.subr.bf16.mxu0 0
    %7138 = vmatpush1.bf16.xpose.msra.mxu0 0
    %7139 = vmatprep.subr.bf16.mxu0 0
    %7140 = vmatpush1.bf16.xpose.msra.mxu0 0
    %7141 = vmatprep.subr.bf16.mxu0 0
    %7142 = vmatpush1.bf16.xpose.msra.mxu0 0
    %7143 = vmatprep.subr.bf16.mxu0 0
    %7144 = vmatpush1.bf16.xpose.msra.mxu0 0
    %7145 = vmatprep.subr.bf16.mxu0 0
    %7146 = vmatpush1.bf16.xpose.msra.mxu0 0
    %7147 = vmatprep.mubr.bf16.mxu0 0
    %7148 = vmatmul.mubr.bf16.gmra.mrb[0].mxu0 %v7110
    %v7149 = vpop.f32.mrb[0].mxu0
    %v7150 = vadd.f32 %v4407, %v7149
    %v7151 = vpop.f32.mrb[0].mxu0
    %v7152 = vpop.f32.mrb[0].mxu0
    %v7153 = vpop.f32.mrb[0].mxu0
    %7154 = vdwg.mxu0
    %7155 = vrot.lane.b32.xlu0 %v4416, 104
    %v7156 = vpop.permute.xlu0 %7155
    %7157 = vrot.lane.b32.xlu0 %v4424, 104
    %v7158 = vpop.permute.xlu0 %7157
    %v7160 = vsel %vm325, %v7156, 0
    %v7163 = vsel %vm325, %v7158, 0
    %7165 = vmatprep.subr.bf16.mxu0 0
    %7166 = vmatpush1.bf16.xpose.msra.mxu0 %v7163
    %7167 = vmatprep.subr.bf16.mxu0 0
    %7168 = vmatpush1.bf16.xpose.msra.mxu0 0
    %7169 = vmatprep.subr.bf16.mxu0 0
    %7170 = vmatpush1.bf16.xpose.msra.mxu0 0
    %7171 = vmatprep.subr.bf16.mxu0 0
    %7172 = vmatpush1.bf16.xpose.msra.mxu0 0
    %7173 = vmatprep.subr.bf16.mxu0 0
    %7174 = vmatpush1.bf16.xpose.msra.mxu0 0
    %7175 = vmatprep.subr.bf16.mxu0 0
    %7176 = vmatpush1.bf16.xpose.msra.mxu0 0
    %7177 = vmatprep.subr.bf16.mxu0 0
    %7178 = vmatpush1.bf16.xpose.msra.mxu0 0
    %7179 = vmatprep.subr.bf16.mxu0 0
    %7180 = vmatpush1.bf16.xpose.msra.mxu0 0
    %7181 = vmatprep.subr.bf16.mxu0 0
    %7182 = vmatpush1.bf16.xpose.msra.mxu0 0
    %7183 = vmatprep.subr.bf16.mxu0 0
    %7184 = vmatpush1.bf16.xpose.msra.mxu0 0
    %7185 = vmatprep.subr.bf16.mxu0 0
    %7186 = vmatpush1.bf16.xpose.msra.mxu0 0
    %7187 = vmatprep.subr.bf16.mxu0 0
    %7188 = vmatpush1.bf16.xpose.msra.mxu0 0
    %7189 = vmatprep.subr.bf16.mxu0 0
    %7190 = vmatpush1.bf16.xpose.msra.mxu0 0
    %7191 = vmatprep.subr.bf16.mxu0 0
    %7192 = vmatpush1.bf16.xpose.msra.mxu0 0
    %7193 = vmatprep.subr.bf16.mxu0 0
    %7194 = vmatpush1.bf16.xpose.msra.mxu0 0
    %7195 = vmatprep.subr.bf16.mxu0 0
    %7196 = vmatpush1.bf16.xpose.msra.mxu0 0
    %7197 = vmatprep.mubr.bf16.mxu0 0
    %7198 = vmatmul.mubr.bf16.gmra.mrb[0].mxu0 %v7160
    %v7199 = vpop.f32.mrb[0].mxu0
    %v7200 = vadd.f32 %v4408, %v7199
    %v7201 = vpop.f32.mrb[0].mxu0
    %v7202 = vpop.f32.mrb[0].mxu0
    %v7203 = vpop.f32.mrb[0].mxu0
    %7204 = vdwg.mxu0
    %7205 = vrot.lane.b32.xlu0 %v4417, 104
    %v7206 = vpop.permute.xlu0 %7205
    %7207 = vrot.lane.b32.xlu0 %v4425, 104
    %v7208 = vpop.permute.xlu0 %7207
    %v7210 = vsel %vm325, %v7206, 0
    %v7213 = vsel %vm325, %v7208, 0
    %7215 = vmatprep.subr.bf16.mxu0 0
    %7216 = vmatpush1.bf16.xpose.msra.mxu0 %v7213
    %7217 = vmatprep.subr.bf16.mxu0 0
    %7218 = vmatpush1.bf16.xpose.msra.mxu0 0
    %7219 = vmatprep.subr.bf16.mxu0 0
    %7220 = vmatpush1.bf16.xpose.msra.mxu0 0
    %7221 = vmatprep.subr.bf16.mxu0 0
    %7222 = vmatpush1.bf16.xpose.msra.mxu0 0
    %7223 = vmatprep.subr.bf16.mxu0 0
    %7224 = vmatpush1.bf16.xpose.msra.mxu0 0
    %7225 = vmatprep.subr.bf16.mxu0 0
    %7226 = vmatpush1.bf16.xpose.msra.mxu0 0
    %7227 = vmatprep.subr.bf16.mxu0 0
    %7228 = vmatpush1.bf16.xpose.msra.mxu0 0
    %7229 = vmatprep.subr.bf16.mxu0 0
    %7230 = vmatpush1.bf16.xpose.msra.mxu0 0
    %7231 = vmatprep.subr.bf16.mxu0 0
    %7232 = vmatpush1.bf16.xpose.msra.mxu0 0
    %7233 = vmatprep.subr.bf16.mxu0 0
    %7234 = vmatpush1.bf16.xpose.msra.mxu0 0
    %7235 = vmatprep.subr.bf16.mxu0 0
    %7236 = vmatpush1.bf16.xpose.msra.mxu0 0
    %7237 = vmatprep.subr.bf16.mxu0 0
    %7238 = vmatpush1.bf16.xpose.msra.mxu0 0
    %7239 = vmatprep.subr.bf16.mxu0 0
    %7240 = vmatpush1.bf16.xpose.msra.mxu0 0
    %7241 = vmatprep.subr.bf16.mxu0 0
    %7242 = vmatpush1.bf16.xpose.msra.mxu0 0
    %7243 = vmatprep.subr.bf16.mxu0 0
    %7244 = vmatpush1.bf16.xpose.msra.mxu0 0
    %7245 = vmatprep.subr.bf16.mxu0 0
    %7246 = vmatpush1.bf16.xpose.msra.mxu0 0
    %7247 = vmatprep.mubr.bf16.mxu0 0
    %7248 = vmatmul.mubr.bf16.gmra.mrb[0].mxu0 %v7210
    %v7249 = vpop.f32.mrb[0].mxu0
    %v7250 = vadd.f32 %v4409, %v7249
    %v7251 = vpop.f32.mrb[0].mxu0
    %v7252 = vpop.f32.mrb[0].mxu0
    %v7253 = vpop.f32.mrb[0].mxu0
    %7254 = vdwg.mxu0
    %7255 = vrot.lane.b32.xlu0 %v4418, 104
    %v7256 = vpop.permute.xlu0 %7255
    %7257 = vrot.lane.b32.xlu0 %v4426, 104
    %v7258 = vpop.permute.xlu0 %7257
    %v7260 = vsel %vm325, %v7256, 0
    %v7263 = vsel %vm325, %v7258, 0
    %7265 = vmatprep.subr.bf16.mxu0 0
    %7266 = vmatpush1.bf16.xpose.msra.mxu0 %v7263
    %7267 = vmatprep.subr.bf16.mxu0 0
    %7268 = vmatpush1.bf16.xpose.msra.mxu0 0
    %7269 = vmatprep.subr.bf16.mxu0 0
    %7270 = vmatpush1.bf16.xpose.msra.mxu0 0
    %7271 = vmatprep.subr.bf16.mxu0 0
    %7272 = vmatpush1.bf16.xpose.msra.mxu0 0
    %7273 = vmatprep.subr.bf16.mxu0 0
    %7274 = vmatpush1.bf16.xpose.msra.mxu0 0
    %7275 = vmatprep.subr.bf16.mxu0 0
    %7276 = vmatpush1.bf16.xpose.msra.mxu0 0
    %7277 = vmatprep.subr.bf16.mxu0 0
    %7278 = vmatpush1.bf16.xpose.msra.mxu0 0
    %7279 = vmatprep.subr.bf16.mxu0 0
    %7280 = vmatpush1.bf16.xpose.msra.mxu0 0
    %7281 = vmatprep.subr.bf16.mxu0 0
    %7282 = vmatpush1.bf16.xpose.msra.mxu0 0
    %7283 = vmatprep.subr.bf16.mxu0 0
    %7284 = vmatpush1.bf16.xpose.msra.mxu0 0
    %7285 = vmatprep.subr.bf16.mxu0 0
    %7286 = vmatpush1.bf16.xpose.msra.mxu0 0
    %7287 = vmatprep.subr.bf16.mxu0 0
    %7288 = vmatpush1.bf16.xpose.msra.mxu0 0
    %7289 = vmatprep.subr.bf16.mxu0 0
    %7290 = vmatpush1.bf16.xpose.msra.mxu0 0
    %7291 = vmatprep.subr.bf16.mxu0 0
    %7292 = vmatpush1.bf16.xpose.msra.mxu0 0
    %7293 = vmatprep.subr.bf16.mxu0 0
    %7294 = vmatpush1.bf16.xpose.msra.mxu0 0
    %7295 = vmatprep.subr.bf16.mxu0 0
    %7296 = vmatpush1.bf16.xpose.msra.mxu0 0
    %7297 = vmatprep.mubr.bf16.mxu0 0
    %7298 = vmatmul.mubr.bf16.gmra.mrb[0].mxu0 %v7260
    %v7299 = vpop.f32.mrb[0].mxu0
    %v7300 = vadd.f32 %v4410, %v7299
    %v7301 = vpop.f32.mrb[0].mxu0
    %v7302 = vpop.f32.mrb[0].mxu0
    %v7303 = vpop.f32.mrb[0].mxu0
    %7304 = vdwg.mxu0
    %7305 = vrot.lane.b32.xlu0 %v4419, 104
    %v7306 = vpop.permute.xlu0 %7305
    %7307 = vrot.lane.b32.xlu0 %v4427, 104
    %v7308 = vpop.permute.xlu0 %7307
    %v7310 = vsel %vm325, %v7306, 0
    %v7313 = vsel %vm325, %v7308, 0
    %7315 = vmatprep.subr.bf16.mxu0 0
    %7316 = vmatpush1.bf16.xpose.msra.mxu0 %v7313
    %7317 = vmatprep.subr.bf16.mxu0 0
    %7318 = vmatpush1.bf16.xpose.msra.mxu0 0
    %7319 = vmatprep.subr.bf16.mxu0 0
    %7320 = vmatpush1.bf16.xpose.msra.mxu0 0
    %7321 = vmatprep.subr.bf16.mxu0 0
    %7322 = vmatpush1.bf16.xpose.msra.mxu0 0
    %7323 = vmatprep.subr.bf16.mxu0 0
    %7324 = vmatpush1.bf16.xpose.msra.mxu0 0
    %7325 = vmatprep.subr.bf16.mxu0 0
    %7326 = vmatpush1.bf16.xpose.msra.mxu0 0
    %7327 = vmatprep.subr.bf16.mxu0 0
    %7328 = vmatpush1.bf16.xpose.msra.mxu0 0
    %7329 = vmatprep.subr.bf16.mxu0 0
    %7330 = vmatpush1.bf16.xpose.msra.mxu0 0
    %7331 = vmatprep.subr.bf16.mxu0 0
    %7332 = vmatpush1.bf16.xpose.msra.mxu0 0
    %7333 = vmatprep.subr.bf16.mxu0 0
    %7334 = vmatpush1.bf16.xpose.msra.mxu0 0
    %7335 = vmatprep.subr.bf16.mxu0 0
    %7336 = vmatpush1.bf16.xpose.msra.mxu0 0
    %7337 = vmatprep.subr.bf16.mxu0 0
    %7338 = vmatpush1.bf16.xpose.msra.mxu0 0
    %7339 = vmatprep.subr.bf16.mxu0 0
    %7340 = vmatpush1.bf16.xpose.msra.mxu0 0
    %7341 = vmatprep.subr.bf16.mxu0 0
    %7342 = vmatpush1.bf16.xpose.msra.mxu0 0
    %7343 = vmatprep.subr.bf16.mxu0 0
    %7344 = vmatpush1.bf16.xpose.msra.mxu0 0
    %7345 = vmatprep.subr.bf16.mxu0 0
    %7346 = vmatpush1.bf16.xpose.msra.mxu0 0
    %7347 = vmatprep.mubr.bf16.mxu0 0
    %7348 = vmatmul.mubr.bf16.gmra.mrb[0].mxu0 %v7310
    %v7349 = vpop.f32.mrb[0].mxu0
    %v7350 = vadd.f32 %v4411, %v7349
    %v7351 = vpop.f32.mrb[0].mxu0
    %v7352 = vpop.f32.mrb[0].mxu0
    %v7353 = vpop.f32.mrb[0].mxu0
    %7354 = vdwg.mxu0
    %7355 = vrot.lane.b32.xlu0 %v4420, 104
    %v7356 = vpop.permute.xlu0 %7355
    %7357 = vrot.lane.b32.xlu0 %v4428, 104
    %v7358 = vpop.permute.xlu0 %7357
    %v7360 = vsel %vm325, %v7356, 0
    %v7363 = vsel %vm325, %v7358, 0
    %7365 = vmatprep.subr.bf16.mxu0 0
    %7366 = vmatpush1.bf16.xpose.msra.mxu0 %v7363
    %7367 = vmatprep.subr.bf16.mxu0 0
    %7368 = vmatpush1.bf16.xpose.msra.mxu0 0
    %7369 = vmatprep.subr.bf16.mxu0 0
    %7370 = vmatpush1.bf16.xpose.msra.mxu0 0
    %7371 = vmatprep.subr.bf16.mxu0 0
    %7372 = vmatpush1.bf16.xpose.msra.mxu0 0
    %7373 = vmatprep.subr.bf16.mxu0 0
    %7374 = vmatpush1.bf16.xpose.msra.mxu0 0
    %7375 = vmatprep.subr.bf16.mxu0 0
    %7376 = vmatpush1.bf16.xpose.msra.mxu0 0
    %7377 = vmatprep.subr.bf16.mxu0 0
    %7378 = vmatpush1.bf16.xpose.msra.mxu0 0
    %7379 = vmatprep.subr.bf16.mxu0 0
    %7380 = vmatpush1.bf16.xpose.msra.mxu0 0
    %7381 = vmatprep.subr.bf16.mxu0 0
    %7382 = vmatpush1.bf16.xpose.msra.mxu0 0
    %7383 = vmatprep.subr.bf16.mxu0 0
    %7384 = vmatpush1.bf16.xpose.msra.mxu0 0
    %7385 = vmatprep.subr.bf16.mxu0 0
    %7386 = vmatpush1.bf16.xpose.msra.mxu0 0
    %7387 = vmatprep.subr.bf16.mxu0 0
    %7388 = vmatpush1.bf16.xpose.msra.mxu0 0
    %7389 = vmatprep.subr.bf16.mxu0 0
    %7390 = vmatpush1.bf16.xpose.msra.mxu0 0
    %7391 = vmatprep.subr.bf16.mxu0 0
    %7392 = vmatpush1.bf16.xpose.msra.mxu0 0
    %7393 = vmatprep.subr.bf16.mxu0 0
    %7394 = vmatpush1.bf16.xpose.msra.mxu0 0
    %7395 = vmatprep.subr.bf16.mxu0 0
    %7396 = vmatpush1.bf16.xpose.msra.mxu0 0
    %7397 = vmatprep.mubr.bf16.mxu0 0
    %7398 = vmatmul.mubr.bf16.gmra.mrb[0].mxu0 %v7360
    %v7399 = vpop.f32.mrb[0].mxu0
    %v7400 = vadd.f32 %v4412, %v7399
    %v7401 = vpop.f32.mrb[0].mxu0
    %v7402 = vpop.f32.mrb[0].mxu0
    %v7403 = vpop.f32.mrb[0].mxu0
    %7404 = vdwg.mxu0
    %v7405 = vsel %vm3940, %v7050, -inf
    %7406 = vmax.xlane.f32.xlu0 %v7405
    %v7407 = vpop.xlane.xlu0 %7406
    %v7408 = vsel %vm3940, %v7100, -inf
    %7409 = vmax.xlane.f32.xlu0 %v7408
    %v7410 = vpop.xlane.xlu0 %7409
    %v7411 = vsel %vm3940, %v7150, -inf
    %7412 = vmax.xlane.f32.xlu0 %v7411
    %v7413 = vpop.xlane.xlu0 %7412
    %v7414 = vsel %vm3940, %v7200, -inf
    %7415 = vmax.xlane.f32.xlu0 %v7414
    %v7416 = vpop.xlane.xlu0 %7415
    %v7417 = vsel %vm3940, %v7250, -inf
    %7418 = vmax.xlane.f32.xlu0 %v7417
    %v7419 = vpop.xlane.xlu0 %7418
    %v7420 = vsel %vm3940, %v7300, -inf
    %7421 = vmax.xlane.f32.xlu0 %v7420
    %v7422 = vpop.xlane.xlu0 %7421
    %v7423 = vsel %vm3940, %v7350, -inf
    %7424 = vmax.xlane.f32.xlu0 %v7423
    %v7425 = vpop.xlane.xlu0 %7424
    %v7426 = vsel %vm3940, %v7400, -inf
    %7427 = vmax.xlane.f32.xlu0 %v7426
    %v7428 = vpop.xlane.xlu0 %7427
    %v7429 = vsub.f32 %v7050, %v7407
    %v7430 = vsub.f32 %v7100, %v7410
    %v7431 = vsub.f32 %v7150, %v7413
    %v7432 = vsub.f32 %v7200, %v7416
    %v7433 = vsub.f32 %v7250, %v7419
    %v7434 = vsub.f32 %v7300, %v7422
    %v7435 = vsub.f32 %v7350, %v7425
    %v7436 = vsub.f32 %v7400, %v7428
    %v7437 = vmul.f32 %v7429, 1.442695
    %v7438 = vpow.pop %v7437
    %v7439 = vmul.f32 %v7430, 1.442695
    %v7440 = vpow.pop %v7439
    %v7441 = vmul.f32 %v7431, 1.442695
    %v7442 = vpow.pop %v7441
    %v7443 = vmul.f32 %v7432, 1.442695
    %v7444 = vpow.pop %v7443
    %v7445 = vmul.f32 %v7433, 1.442695
    %v7446 = vpow.pop %v7445
    %v7447 = vmul.f32 %v7434, 1.442695
    %v7448 = vpow.pop %v7447
    %v7449 = vmul.f32 %v7435, 1.442695
    %v7450 = vpow.pop %v7449
    %v7451 = vmul.f32 %v7436, 1.442695
    %v7452 = vpow.pop %v7451
    %v7453 = vsel %vm3940, %v7438, 0.0
    %7454 = vadd.xlane.f32.xlu0 %v7453
    %v7455 = vpop.xlane.xlu0 %7454
    %v7456 = vsel %vm3940, %v7440, 0.0
    %7457 = vadd.xlane.f32.xlu0 %v7456
    %v7458 = vpop.xlane.xlu0 %7457
    %v7459 = vsel %vm3940, %v7442, 0.0
    %7460 = vadd.xlane.f32.xlu0 %v7459
    %v7461 = vpop.xlane.xlu0 %7460
    %v7462 = vsel %vm3940, %v7444, 0.0
    %7463 = vadd.xlane.f32.xlu0 %v7462
    %v7464 = vpop.xlane.xlu0 %7463
    %v7465 = vsel %vm3940, %v7446, 0.0
    %7466 = vadd.xlane.f32.xlu0 %v7465
    %v7467 = vpop.xlane.xlu0 %7466
    %v7468 = vsel %vm3940, %v7448, 0.0
    %7469 = vadd.xlane.f32.xlu0 %v7468
    %v7470 = vpop.xlane.xlu0 %7469
    %v7471 = vsel %vm3940, %v7450, 0.0
    %7472 = vadd.xlane.f32.xlu0 %v7471
    %v7473 = vpop.xlane.xlu0 %7472
    %v7474 = vsel %vm3940, %v7452, 0.0
    %7475 = vadd.xlane.f32.xlu0 %v7474
    %v7476 = vpop.xlane.xlu0 %7475
    %v7477 = vrcp.pop %v7455
    %v7478 = vmul.f32 %v7438, %v7477
    %v7479 = vrcp.pop %v7458
    %v7480 = vmul.f32 %v7440, %v7479
    %v7481 = vrcp.pop %v7461
    %v7482 = vmul.f32 %v7442, %v7481
    %v7483 = vrcp.pop %v7464
    %v7484 = vmul.f32 %v7444, %v7483
    %v7485 = vrcp.pop %v7467
    %v7486 = vmul.f32 %v7446, %v7485
    %v7487 = vrcp.pop %v7470
    %v7488 = vmul.f32 %v7448, %v7487
    %v7489 = vrcp.pop %v7473
    %v7490 = vmul.f32 %v7450, %v7489
    %v7491 = vrcp.pop %v7476
    %v7492 = vmul.f32 %v7452, %v7491
    %v7493 = vpack.c.bf16 %v7478, %v7478
    %v7494 = vpack.c.bf16 %v7480, %v7480
    %v7495 = vpack.c.bf16 %v7482, %v7482
    %v7496 = vpack.c.bf16 %v7484, %v7484
    %v7497 = vpack.c.bf16 %v7486, %v7486
    %v7498 = vpack.c.bf16 %v7488, %v7488
    %v7499 = vpack.c.bf16 %v7490, %v7490
    %v7500 = vpack.c.bf16 %v7492, %v7492
    %7501 = vrot.lane.b32.xlu0 %v4421, 72
    %v7502 = vpop.permute.xlu0 %7501
    %v7505 = vsel %vm3940, %v7493, 0
    %7507 = vmatprep.subr.bf16.mxu0 0
    %7508 = vmatpush1.bf16.msra.mxu0 %v7502
    %7509 = vmatprep.subr.bf16.mxu0 0
    %7510 = vmatpush1.bf16.msra.mxu0 0
    %7511 = vmatprep.subr.bf16.mxu0 0
    %7512 = vmatpush1.bf16.msra.mxu0 0
    %7513 = vmatprep.subr.bf16.mxu0 0
    %7514 = vmatpush1.bf16.msra.mxu0 0
    %7515 = vmatprep.subr.bf16.mxu0 0
    %7516 = vmatpush1.bf16.msra.mxu0 0
    %7517 = vmatprep.subr.bf16.mxu0 0
    %7518 = vmatpush1.bf16.msra.mxu0 0
    %7519 = vmatprep.subr.bf16.mxu0 0
    %7520 = vmatpush1.bf16.msra.mxu0 0
    %7521 = vmatprep.subr.bf16.mxu0 0
    %7522 = vmatpush1.bf16.msra.mxu0 0
    %7523 = vmatprep.subr.bf16.mxu0 0
    %7524 = vmatpush1.bf16.msra.mxu0 0
    %7525 = vmatprep.subr.bf16.mxu0 0
    %7526 = vmatpush1.bf16.msra.mxu0 0
    %7527 = vmatprep.subr.bf16.mxu0 0
    %7528 = vmatpush1.bf16.msra.mxu0 0
    %7529 = vmatprep.subr.bf16.mxu0 0
    %7530 = vmatpush1.bf16.msra.mxu0 0
    %7531 = vmatprep.subr.bf16.mxu0 0
    %7532 = vmatpush1.bf16.msra.mxu0 0
    %7533 = vmatprep.subr.bf16.mxu0 0
    %7534 = vmatpush1.bf16.msra.mxu0 0
    %7535 = vmatprep.subr.bf16.mxu0 0
    %7536 = vmatpush1.bf16.msra.mxu0 0
    %7537 = vmatprep.subr.bf16.mxu0 0
    %7538 = vmatpush1.bf16.msra.mxu0 0
    %7539 = vmatprep.mubr.bf16.mxu0 0
    %7540 = vmatmul.mubr.bf16.gmra.mrb[0].mxu0 %v7505
    %v7541 = vpop.f32.mrb[0].mxu0
    %v7542 = vadd.f32 0.0, %v7541
    %v7543 = vpop.f32.mrb[0].mxu0
    %v7544 = vpop.f32.mrb[0].mxu0
    %v7545 = vpop.f32.mrb[0].mxu0
    %7546 = vdwg.mxu0
    %7547 = vrot.lane.b32.xlu0 %v4422, 72
    %v7548 = vpop.permute.xlu0 %7547
    %v7551 = vsel %vm3940, %v7494, 0
    %7553 = vmatprep.subr.bf16.mxu0 0
    %7554 = vmatpush1.bf16.msra.mxu0 %v7548
    %7555 = vmatprep.subr.bf16.mxu0 0
    %7556 = vmatpush1.bf16.msra.mxu0 0
    %7557 = vmatprep.subr.bf16.mxu0 0
    %7558 = vmatpush1.bf16.msra.mxu0 0
    %7559 = vmatprep.subr.bf16.mxu0 0
    %7560 = vmatpush1.bf16.msra.mxu0 0
    %7561 = vmatprep.subr.bf16.mxu0 0
    %7562 = vmatpush1.bf16.msra.mxu0 0
    %7563 = vmatprep.subr.bf16.mxu0 0
    %7564 = vmatpush1.bf16.msra.mxu0 0
    %7565 = vmatprep.subr.bf16.mxu0 0
    %7566 = vmatpush1.bf16.msra.mxu0 0
    %7567 = vmatprep.subr.bf16.mxu0 0
    %7568 = vmatpush1.bf16.msra.mxu0 0
    %7569 = vmatprep.subr.bf16.mxu0 0
    %7570 = vmatpush1.bf16.msra.mxu0 0
    %7571 = vmatprep.subr.bf16.mxu0 0
    %7572 = vmatpush1.bf16.msra.mxu0 0
    %7573 = vmatprep.subr.bf16.mxu0 0
    %7574 = vmatpush1.bf16.msra.mxu0 0
    %7575 = vmatprep.subr.bf16.mxu0 0
    %7576 = vmatpush1.bf16.msra.mxu0 0
    %7577 = vmatprep.subr.bf16.mxu0 0
    %7578 = vmatpush1.bf16.msra.mxu0 0
    %7579 = vmatprep.subr.bf16.mxu0 0
    %7580 = vmatpush1.bf16.msra.mxu0 0
    %7581 = vmatprep.subr.bf16.mxu0 0
    %7582 = vmatpush1.bf16.msra.mxu0 0
    %7583 = vmatprep.subr.bf16.mxu0 0
    %7584 = vmatpush1.bf16.msra.mxu0 0
    %7585 = vmatprep.mubr.bf16.mxu0 0
    %7586 = vmatmul.mubr.bf16.gmra.mrb[0].mxu0 %v7551
    %v7587 = vpop.f32.mrb[0].mxu0
    %v7588 = vadd.f32 0.0, %v7587
    %v7589 = vpop.f32.mrb[0].mxu0
    %v7590 = vpop.f32.mrb[0].mxu0
    %v7591 = vpop.f32.mrb[0].mxu0
    %7592 = vdwg.mxu0
    %7593 = vrot.lane.b32.xlu0 %v4423, 72
    %v7594 = vpop.permute.xlu0 %7593
    %v7597 = vsel %vm3940, %v7495, 0
    %7599 = vmatprep.subr.bf16.mxu0 0
    %7600 = vmatpush1.bf16.msra.mxu0 %v7594
    %7601 = vmatprep.subr.bf16.mxu0 0
    %7602 = vmatpush1.bf16.msra.mxu0 0
    %7603 = vmatprep.subr.bf16.mxu0 0
    %7604 = vmatpush1.bf16.msra.mxu0 0
    %7605 = vmatprep.subr.bf16.mxu0 0
    %7606 = vmatpush1.bf16.msra.mxu0 0
    %7607 = vmatprep.subr.bf16.mxu0 0
    %7608 = vmatpush1.bf16.msra.mxu0 0
    %7609 = vmatprep.subr.bf16.mxu0 0
    %7610 = vmatpush1.bf16.msra.mxu0 0
    %7611 = vmatprep.subr.bf16.mxu0 0
    %7612 = vmatpush1.bf16.msra.mxu0 0
    %7613 = vmatprep.subr.bf16.mxu0 0
    %7614 = vmatpush1.bf16.msra.mxu0 0
    %7615 = vmatprep.subr.bf16.mxu0 0
    %7616 = vmatpush1.bf16.msra.mxu0 0
    %7617 = vmatprep.subr.bf16.mxu0 0
    %7618 = vmatpush1.bf16.msra.mxu0 0
    %7619 = vmatprep.subr.bf16.mxu0 0
    %7620 = vmatpush1.bf16.msra.mxu0 0
    %7621 = vmatprep.subr.bf16.mxu0 0
    %7622 = vmatpush1.bf16.msra.mxu0 0
    %7623 = vmatprep.subr.bf16.mxu0 0
    %7624 = vmatpush1.bf16.msra.mxu0 0
    %7625 = vmatprep.subr.bf16.mxu0 0
    %7626 = vmatpush1.bf16.msra.mxu0 0
    %7627 = vmatprep.subr.bf16.mxu0 0
    %7628 = vmatpush1.bf16.msra.mxu0 0
    %7629 = vmatprep.subr.bf16.mxu0 0
    %7630 = vmatpush1.bf16.msra.mxu0 0
    %7631 = vmatprep.mubr.bf16.mxu0 0
    %7632 = vmatmul.mubr.bf16.gmra.mrb[0].mxu0 %v7597
    %v7633 = vpop.f32.mrb[0].mxu0
    %v7634 = vadd.f32 0.0, %v7633
    %v7635 = vpop.f32.mrb[0].mxu0
    %v7636 = vpop.f32.mrb[0].mxu0
    %v7637 = vpop.f32.mrb[0].mxu0
    %7638 = vdwg.mxu0
    %7639 = vrot.lane.b32.xlu0 %v4424, 72
    %v7640 = vpop.permute.xlu0 %7639
    %v7643 = vsel %vm3940, %v7496, 0
    %7645 = vmatprep.subr.bf16.mxu0 0
    %7646 = vmatpush1.bf16.msra.mxu0 %v7640
    %7647 = vmatprep.subr.bf16.mxu0 0
    %7648 = vmatpush1.bf16.msra.mxu0 0
    %7649 = vmatprep.subr.bf16.mxu0 0
    %7650 = vmatpush1.bf16.msra.mxu0 0
    %7651 = vmatprep.subr.bf16.mxu0 0
    %7652 = vmatpush1.bf16.msra.mxu0 0
    %7653 = vmatprep.subr.bf16.mxu0 0
    %7654 = vmatpush1.bf16.msra.mxu0 0
    %7655 = vmatprep.subr.bf16.mxu0 0
    %7656 = vmatpush1.bf16.msra.mxu0 0
    %7657 = vmatprep.subr.bf16.mxu0 0
    %7658 = vmatpush1.bf16.msra.mxu0 0
    %7659 = vmatprep.subr.bf16.mxu0 0
    %7660 = vmatpush1.bf16.msra.mxu0 0
    %7661 = vmatprep.subr.bf16.mxu0 0
    %7662 = vmatpush1.bf16.msra.mxu0 0
    %7663 = vmatprep.subr.bf16.mxu0 0
    %7664 = vmatpush1.bf16.msra.mxu0 0
    %7665 = vmatprep.subr.bf16.mxu0 0
    %7666 = vmatpush1.bf16.msra.mxu0 0
    %7667 = vmatprep.subr.bf16.mxu0 0
    %7668 = vmatpush1.bf16.msra.mxu0 0
    %7669 = vmatprep.subr.bf16.mxu0 0
    %7670 = vmatpush1.bf16.msra.mxu0 0
    %7671 = vmatprep.subr.bf16.mxu0 0
    %7672 = vmatpush1.bf16.msra.mxu0 0
    %7673 = vmatprep.subr.bf16.mxu0 0
    %7674 = vmatpush1.bf16.msra.mxu0 0
    %7675 = vmatprep.subr.bf16.mxu0 0
    %7676 = vmatpush1.bf16.msra.mxu0 0
    %7677 = vmatprep.mubr.bf16.mxu0 0
    %7678 = vmatmul.mubr.bf16.gmra.mrb[0].mxu0 %v7643
    %v7679 = vpop.f32.mrb[0].mxu0
    %v7680 = vadd.f32 0.0, %v7679
    %v7681 = vpop.f32.mrb[0].mxu0
    %v7682 = vpop.f32.mrb[0].mxu0
    %v7683 = vpop.f32.mrb[0].mxu0
    %7684 = vdwg.mxu0
    %7685 = vrot.lane.b32.xlu0 %v4425, 72
    %v7686 = vpop.permute.xlu0 %7685
    %v7689 = vsel %vm3940, %v7497, 0
    %7691 = vmatprep.subr.bf16.mxu0 0
    %7692 = vmatpush1.bf16.msra.mxu0 %v7686
    %7693 = vmatprep.subr.bf16.mxu0 0
    %7694 = vmatpush1.bf16.msra.mxu0 0
    %7695 = vmatprep.subr.bf16.mxu0 0
    %7696 = vmatpush1.bf16.msra.mxu0 0
    %7697 = vmatprep.subr.bf16.mxu0 0
    %7698 = vmatpush1.bf16.msra.mxu0 0
    %7699 = vmatprep.subr.bf16.mxu0 0
    %7700 = vmatpush1.bf16.msra.mxu0 0
    %7701 = vmatprep.subr.bf16.mxu0 0
    %7702 = vmatpush1.bf16.msra.mxu0 0
    %7703 = vmatprep.subr.bf16.mxu0 0
    %7704 = vmatpush1.bf16.msra.mxu0 0
    %7705 = vmatprep.subr.bf16.mxu0 0
    %7706 = vmatpush1.bf16.msra.mxu0 0
    %7707 = vmatprep.subr.bf16.mxu0 0
    %7708 = vmatpush1.bf16.msra.mxu0 0
    %7709 = vmatprep.subr.bf16.mxu0 0
    %7710 = vmatpush1.bf16.msra.mxu0 0
    %7711 = vmatprep.subr.bf16.mxu0 0
    %7712 = vmatpush1.bf16.msra.mxu0 0
    %7713 = vmatprep.subr.bf16.mxu0 0
    %7714 = vmatpush1.bf16.msra.mxu0 0
    %7715 = vmatprep.subr.bf16.mxu0 0
    %7716 = vmatpush1.bf16.msra.mxu0 0
    %7717 = vmatprep.subr.bf16.mxu0 0
    %7718 = vmatpush1.bf16.msra.mxu0 0
    %7719 = vmatprep.subr.bf16.mxu0 0
    %7720 = vmatpush1.bf16.msra.mxu0 0
    %7721 = vmatprep.subr.bf16.mxu0 0
    %7722 = vmatpush1.bf16.msra.mxu0 0
    %7723 = vmatprep.mubr.bf16.mxu0 0
    %7724 = vmatmul.mubr.bf16.gmra.mrb[0].mxu0 %v7689
    %v7725 = vpop.f32.mrb[0].mxu0
    %v7726 = vadd.f32 0.0, %v7725
    %v7727 = vpop.f32.mrb[0].mxu0
    %v7728 = vpop.f32.mrb[0].mxu0
    %v7729 = vpop.f32.mrb[0].mxu0
    %7730 = vdwg.mxu0
    %7731 = vrot.lane.b32.xlu0 %v4426, 72
    %v7732 = vpop.permute.xlu0 %7731
    %v7735 = vsel %vm3940, %v7498, 0
    %7737 = vmatprep.subr.bf16.mxu0 0
    %7738 = vmatpush1.bf16.msra.mxu0 %v7732
    %7739 = vmatprep.subr.bf16.mxu0 0
    %7740 = vmatpush1.bf16.msra.mxu0 0
    %7741 = vmatprep.subr.bf16.mxu0 0
    %7742 = vmatpush1.bf16.msra.mxu0 0
    %7743 = vmatprep.subr.bf16.mxu0 0
    %7744 = vmatpush1.bf16.msra.mxu0 0
    %7745 = vmatprep.subr.bf16.mxu0 0
    %7746 = vmatpush1.bf16.msra.mxu0 0
    %7747 = vmatprep.subr.bf16.mxu0 0
    %7748 = vmatpush1.bf16.msra.mxu0 0
    %7749 = vmatprep.subr.bf16.mxu0 0
    %7750 = vmatpush1.bf16.msra.mxu0 0
    %7751 = vmatprep.subr.bf16.mxu0 0
    %7752 = vmatpush1.bf16.msra.mxu0 0
    %7753 = vmatprep.subr.bf16.mxu0 0
    %7754 = vmatpush1.bf16.msra.mxu0 0
    %7755 = vmatprep.subr.bf16.mxu0 0
    %7756 = vmatpush1.bf16.msra.mxu0 0
    %7757 = vmatprep.subr.bf16.mxu0 0
    %7758 = vmatpush1.bf16.msra.mxu0 0
    %7759 = vmatprep.subr.bf16.mxu0 0
    %7760 = vmatpush1.bf16.msra.mxu0 0
    %7761 = vmatprep.subr.bf16.mxu0 0
    %7762 = vmatpush1.bf16.msra.mxu0 0
    %7763 = vmatprep.subr.bf16.mxu0 0
    %7764 = vmatpush1.bf16.msra.mxu0 0
    %7765 = vmatprep.subr.bf16.mxu0 0
    %7766 = vmatpush1.bf16.msra.mxu0 0
    %7767 = vmatprep.subr.bf16.mxu0 0
    %7768 = vmatpush1.bf16.msra.mxu0 0
    %7769 = vmatprep.mubr.bf16.mxu0 0
    %7770 = vmatmul.mubr.bf16.gmra.mrb[0].mxu0 %v7735
    %v7771 = vpop.f32.mrb[0].mxu0
    %v7772 = vadd.f32 0.0, %v7771
    %v7773 = vpop.f32.mrb[0].mxu0
    %v7774 = vpop.f32.mrb[0].mxu0
    %v7775 = vpop.f32.mrb[0].mxu0
    %7776 = vdwg.mxu0
    %7777 = vrot.lane.b32.xlu0 %v4427, 72
    %v7778 = vpop.permute.xlu0 %7777
    %v7781 = vsel %vm3940, %v7499, 0
    %7783 = vmatprep.subr.bf16.mxu0 0
    %7784 = vmatpush1.bf16.msra.mxu0 %v7778
    %7785 = vmatprep.subr.bf16.mxu0 0
    %7786 = vmatpush1.bf16.msra.mxu0 0
    %7787 = vmatprep.subr.bf16.mxu0 0
    %7788 = vmatpush1.bf16.msra.mxu0 0
    %7789 = vmatprep.subr.bf16.mxu0 0
    %7790 = vmatpush1.bf16.msra.mxu0 0
    %7791 = vmatprep.subr.bf16.mxu0 0
    %7792 = vmatpush1.bf16.msra.mxu0 0
    %7793 = vmatprep.subr.bf16.mxu0 0
    %7794 = vmatpush1.bf16.msra.mxu0 0
    %7795 = vmatprep.subr.bf16.mxu0 0
    %7796 = vmatpush1.bf16.msra.mxu0 0
    %7797 = vmatprep.subr.bf16.mxu0 0
    %7798 = vmatpush1.bf16.msra.mxu0 0
    %7799 = vmatprep.subr.bf16.mxu0 0
    %7800 = vmatpush1.bf16.msra.mxu0 0
    %7801 = vmatprep.subr.bf16.mxu0 0
    %7802 = vmatpush1.bf16.msra.mxu0 0
    %7803 = vmatprep.subr.bf16.mxu0 0
    %7804 = vmatpush1.bf16.msra.mxu0 0
    %7805 = vmatprep.subr.bf16.mxu0 0
    %7806 = vmatpush1.bf16.msra.mxu0 0
    %7807 = vmatprep.subr.bf16.mxu0 0
    %7808 = vmatpush1.bf16.msra.mxu0 0
    %7809 = vmatprep.subr.bf16.mxu0 0
    %7810 = vmatpush1.bf16.msra.mxu0 0
    %7811 = vmatprep.subr.bf16.mxu0 0
    %7812 = vmatpush1.bf16.msra.mxu0 0
    %7813 = vmatprep.subr.bf16.mxu0 0
    %7814 = vmatpush1.bf16.msra.mxu0 0
    %7815 = vmatprep.mubr.bf16.mxu0 0
    %7816 = vmatmul.mubr.bf16.gmra.mrb[0].mxu0 %v7781
    %v7817 = vpop.f32.mrb[0].mxu0
    %v7818 = vadd.f32 0.0, %v7817
    %v7819 = vpop.f32.mrb[0].mxu0
    %v7820 = vpop.f32.mrb[0].mxu0
    %v7821 = vpop.f32.mrb[0].mxu0
    %7822 = vdwg.mxu0
    %7823 = vrot.lane.b32.xlu0 %v4428, 72
    %v7824 = vpop.permute.xlu0 %7823
    %v7827 = vsel %vm3940, %v7500, 0
    %7829 = vmatprep.subr.bf16.mxu0 0
    %7830 = vmatpush1.bf16.msra.mxu0 %v7824
    %7831 = vmatprep.subr.bf16.mxu0 0
    %7832 = vmatpush1.bf16.msra.mxu0 0
    %7833 = vmatprep.subr.bf16.mxu0 0
    %7834 = vmatpush1.bf16.msra.mxu0 0
    %7835 = vmatprep.subr.bf16.mxu0 0
    %7836 = vmatpush1.bf16.msra.mxu0 0
    %7837 = vmatprep.subr.bf16.mxu0 0
    %7838 = vmatpush1.bf16.msra.mxu0 0
    %7839 = vmatprep.subr.bf16.mxu0 0
    %7840 = vmatpush1.bf16.msra.mxu0 0
    %7841 = vmatprep.subr.bf16.mxu0 0
    %7842 = vmatpush1.bf16.msra.mxu0 0
    %7843 = vmatprep.subr.bf16.mxu0 0
    %7844 = vmatpush1.bf16.msra.mxu0 0
    %7845 = vmatprep.subr.bf16.mxu0 0
    %7846 = vmatpush1.bf16.msra.mxu0 0
    %7847 = vmatprep.subr.bf16.mxu0 0
    %7848 = vmatpush1.bf16.msra.mxu0 0
    %7849 = vmatprep.subr.bf16.mxu0 0
    %7850 = vmatpush1.bf16.msra.mxu0 0
    %7851 = vmatprep.subr.bf16.mxu0 0
    %7852 = vmatpush1.bf16.msra.mxu0 0
    %7853 = vmatprep.subr.bf16.mxu0 0
    %7854 = vmatpush1.bf16.msra.mxu0 0
    %7855 = vmatprep.subr.bf16.mxu0 0
    %7856 = vmatpush1.bf16.msra.mxu0 0
    %7857 = vmatprep.subr.bf16.mxu0 0
    %7858 = vmatpush1.bf16.msra.mxu0 0
    %7859 = vmatprep.subr.bf16.mxu0 0
    %7860 = vmatpush1.bf16.msra.mxu0 0
    %7861 = vmatprep.mubr.bf16.mxu0 0
    %7862 = vmatmul.mubr.bf16.gmra.mrb[0].mxu0 %v7827
    %v7863 = vpop.f32.mrb[0].mxu0
    %v7864 = vadd.f32 0.0, %v7863
    %v7865 = vpop.f32.mrb[0].mxu0
    %v7866 = vpop.f32.mrb[0].mxu0
    %v7867 = vpop.f32.mrb[0].mxu0
    %7868 = vdwg.mxu0
    %7877 = vrot.lane.b32.xlu0 %v5814, 8
    %v7878 = vpop.permute.xlu0 %7877
    %7879 = vrot.lane.b32.xlu0 %v5860, 8
    %v7880 = vpop.permute.xlu0 %7879
    %7881 = vrot.lane.b32.xlu0 %v5906, 8
    %v7882 = vpop.permute.xlu0 %7881
    %7883 = vrot.lane.b32.xlu0 %v5952, 8
    %v7884 = vpop.permute.xlu0 %7883
    %7885 = vrot.lane.b32.xlu0 %v5998, 8
    %v7886 = vpop.permute.xlu0 %7885
    %7887 = vrot.lane.b32.xlu0 %v6044, 8
    %v7888 = vpop.permute.xlu0 %7887
    %7889 = vrot.lane.b32.xlu0 %v6090, 8
    %v7890 = vpop.permute.xlu0 %7889
    %7891 = vrot.lane.b32.xlu0 %v6136, 8
    %v7892 = vpop.permute.xlu0 %7891
    %7909 = vrot.lane.b32.xlu0 %v6678, 16
    %v7910 = vpop.permute.xlu0 %7909
    %7911 = vrot.lane.b32.xlu0 %v6724, 16
    %v7912 = vpop.permute.xlu0 %7911
    %7913 = vrot.lane.b32.xlu0 %v6770, 16
    %v7914 = vpop.permute.xlu0 %7913
    %7915 = vrot.lane.b32.xlu0 %v6816, 16
    %v7916 = vpop.permute.xlu0 %7915
    %7917 = vrot.lane.b32.xlu0 %v6862, 16
    %v7918 = vpop.permute.xlu0 %7917
    %7919 = vrot.lane.b32.xlu0 %v6908, 16
    %v7920 = vpop.permute.xlu0 %7919
    %7921 = vrot.lane.b32.xlu0 %v6954, 16
    %v7922 = vpop.permute.xlu0 %7921
    %7923 = vrot.lane.b32.xlu0 %v7000, 16
    %v7924 = vpop.permute.xlu0 %7923
    %7941 = vrot.lane.b32.xlu0 %v7542, 24
    %v7942 = vpop.permute.xlu0 %7941
    %7943 = vrot.lane.b32.xlu0 %v7588, 24
    %v7944 = vpop.permute.xlu0 %7943
    %7945 = vrot.lane.b32.xlu0 %v7634, 24
    %v7946 = vpop.permute.xlu0 %7945
    %7947 = vrot.lane.b32.xlu0 %v7680, 24
    %v7948 = vpop.permute.xlu0 %7947
    %7949 = vrot.lane.b32.xlu0 %v7726, 24
    %v7950 = vpop.permute.xlu0 %7949
    %7951 = vrot.lane.b32.xlu0 %v7772, 24
    %v7952 = vpop.permute.xlu0 %7951
    %7953 = vrot.lane.b32.xlu0 %v7818, 24
    %v7954 = vpop.permute.xlu0 %7953
    %7955 = vrot.lane.b32.xlu0 %v7864, 24
    %v7956 = vpop.permute.xlu0 %7955
    %v7965 = vsel %vm325, %v4935, %v7878
    %v7966 = vsel %vm325, %v4982, %v7880
    %v7967 = vsel %vm325, %v5029, %v7882
    %v7968 = vsel %vm325, %v5076, %v7884
    %v7969 = vsel %vm325, %v5123, %v7886
    %v7970 = vsel %vm325, %v5170, %v7888
    %v7971 = vsel %vm325, %v5217, %v7890
    %v7972 = vsel %vm325, %v5264, %v7892
    %v7973 = vsel %vm3940, %v7965, %v7910
    %v7974 = vsel %vm3940, %v7966, %v7912
    %v7975 = vsel %vm3940, %v7967, %v7914
    %v7976 = vsel %vm3940, %v7968, %v7916
    %v7977 = vsel %vm3940, %v7969, %v7918
    %v7978 = vsel %vm3940, %v7970, %v7920
    %v7979 = vsel %vm3940, %v7971, %v7922
    %v7980 = vsel %vm3940, %v7972, %v7924
    %v7981 = vsel %vm3949, %v7973, %v7942
    %v7982 = vsel %vm3949, %v7974, %v7944
    %v7983 = vsel %vm3949, %v7975, %v7946
    %v7984 = vsel %vm3949, %v7976, %v7948
    %v7985 = vsel %vm3949, %v7977, %v7950
    %v7986 = vsel %vm3949, %v7978, %v7952
    %v7987 = vsel %vm3949, %v7979, %v7954
    %v7988 = vsel %vm3949, %v7980, %v7956
    %v7989 = vpack.c.bf16 %v7982, %v7981
    %v7990 = vpack.c.bf16 %v7984, %v7983
    %v7991 = vpack.c.bf16 %v7986, %v7985
    %v7992 = vpack.c.bf16 %v7988, %v7987
    %7993 = vrot.lane.b32.xlu0 %v76, 32
    %v7994 = vpop.permute.xlu0 %7993
    %7995 = vrot.lane.b32.xlu0 %v77, 32
    %v7996 = vpop.permute.xlu0 %7995
    %8000 = vrot.lane.b32.xlu0 %v3965, 96
    %v8001 = vpop.permute.xlu0 %8000
    %v8004 = vsel %vm98, %v7989, 0
    %v8007 = vsel %vm98, %v7990, 0
    %v8010 = vsel %vm98, %v7991, 0
    %v8013 = vsel %vm98, %v7992, 0
    %8015 = vmatprep.subr.bf16.mxu0 0
    %8016 = vmatpush1.bf16.msra.mxu0 %v7994
    %8017 = vmatprep.subr.bf16.mxu0 0
    %8018 = vmatpush1.bf16.msra.mxu0 %v7996
    %8019 = vmatprep.subr.bf16.mxu0 0
    %8020 = vmatpush1.bf16.msra.mxu0 0
    %8021 = vmatprep.subr.bf16.mxu0 0
    %8022 = vmatpush1.bf16.msra.mxu0 0
    %8023 = vmatprep.subr.bf16.mxu0 0
    %8024 = vmatpush1.bf16.msra.mxu0 0
    %8025 = vmatprep.subr.bf16.mxu0 0
    %8026 = vmatpush1.bf16.msra.mxu0 0
    %8027 = vmatprep.subr.bf16.mxu0 0
    %8028 = vmatpush1.bf16.msra.mxu0 0
    %8029 = vmatprep.subr.bf16.mxu0 0
    %8030 = vmatpush1.bf16.msra.mxu0 0
    %8031 = vmatprep.subr.bf16.mxu0 0
    %8032 = vmatpush1.bf16.msra.mxu0 0
    %8033 = vmatprep.subr.bf16.mxu0 0
    %8034 = vmatpush1.bf16.msra.mxu0 0
    %8035 = vmatprep.subr.bf16.mxu0 0
    %8036 = vmatpush1.bf16.msra.mxu0 0
    %8037 = vmatprep.subr.bf16.mxu0 0
    %8038 = vmatpush1.bf16.msra.mxu0 0
    %8039 = vmatprep.subr.bf16.mxu0 0
    %8040 = vmatpush1.bf16.msra.mxu0 0
    %8041 = vmatprep.subr.bf16.mxu0 0
    %8042 = vmatpush1.bf16.msra.mxu0 0
    %8043 = vmatprep.subr.bf16.mxu0 0
    %8044 = vmatpush1.bf16.msra.mxu0 0
    %8045 = vmatprep.subr.bf16.mxu0 0
    %8046 = vmatpush1.bf16.msra.mxu0 0
    %8047 = vmatprep.mubr.bf16.mxu0 0
    %8048 = vmatmul.mubr.bf16.gmra.mrb[0].mxu0 %v8004
    %v8049 = vpop.f32.mrb[0].mxu0
    %v8050 = vadd.f32 %v8001, %v8049
    %v8051 = vpop.f32.mrb[0].mxu0
    %v8052 = vpop.f32.mrb[0].mxu0
    %v8053 = vadd.f32 %v8001, %v8052
    %v8054 = vpop.f32.mrb[0].mxu0
    %8055 = vmatprep.mubr.bf16.mxu0 0
    %8056 = vmatmul.mubr.bf16.gmra.mrb[0].mxu0 %v8007
    %v8057 = vpop.f32.mrb[0].mxu0
    %v8058 = vadd.f32 %v8001, %v8057
    %v8059 = vpop.f32.mrb[0].mxu0
    %v8060 = vpop.f32.mrb[0].mxu0
    %v8061 = vadd.f32 %v8001, %v8060
    %v8062 = vpop.f32.mrb[0].mxu0
    %8063 = vmatprep.mubr.bf16.mxu0 0
    %8064 = vmatmul.mubr.bf16.gmra.mrb[0].mxu0 %v8010
    %v8065 = vpop.f32.mrb[0].mxu0
    %v8066 = vadd.f32 %v8001, %v8065
    %v8067 = vpop.f32.mrb[0].mxu0
    %v8068 = vpop.f32.mrb[0].mxu0
    %v8069 = vadd.f32 %v8001, %v8068
    %v8070 = vpop.f32.mrb[0].mxu0
    %8071 = vmatprep.mubr.bf16.mxu0 0
    %8072 = vmatmul.mubr.bf16.gmra.mrb[0].mxu0 %v8013
    %v8073 = vpop.f32.mrb[0].mxu0
    %v8074 = vadd.f32 %v8001, %v8073
    %v8075 = vpop.f32.mrb[0].mxu0
    %v8076 = vpop.f32.mrb[0].mxu0
    %v8077 = vadd.f32 %v8001, %v8076
    %v8078 = vpop.f32.mrb[0].mxu0
    %8079 = vdwg.mxu0
    %v8080 = vadd.f32 %v4051, %v8050
    %v8081 = vadd.f32 %v4052, %v8053
    %v8082 = vadd.f32 %v4053, %v8058
    %v8083 = vadd.f32 %v4054, %v8061
    %v8084 = vadd.f32 %v4055, %v8066
    %v8085 = vadd.f32 %v4056, %v8069
    %v8086 = vadd.f32 %v4057, %v8074
    %v8087 = vadd.f32 %v4058, %v8077
    %8096 = vrot.lane.b32.xlu0 %v5750, 16
    %v8097 = vpop.permute.xlu0 %8096
    %8098 = vrot.lane.b32.xlu0 %v5752, 16
    %v8099 = vpop.permute.xlu0 %8098
    %8100 = vrot.lane.b32.xlu0 %v5754, 16
    %v8101 = vpop.permute.xlu0 %8100
    %8102 = vrot.lane.b32.xlu0 %v5756, 16
    %v8103 = vpop.permute.xlu0 %8102
    %8104 = vrot.lane.b32.xlu0 %v5758, 16
    %v8105 = vpop.permute.xlu0 %8104
    %8106 = vrot.lane.b32.xlu0 %v5760, 16
    %v8107 = vpop.permute.xlu0 %8106
    %8108 = vrot.lane.b32.xlu0 %v5762, 16
    %v8109 = vpop.permute.xlu0 %8108
    %8110 = vrot.lane.b32.xlu0 %v5764, 16
    %v8111 = vpop.permute.xlu0 %8110
    %8128 = vrot.lane.b32.xlu0 %v6614, 32
    %v8129 = vpop.permute.xlu0 %8128
    %8130 = vrot.lane.b32.xlu0 %v6616, 32
    %v8131 = vpop.permute.xlu0 %8130
    %8132 = vrot.lane.b32.xlu0 %v6618, 32
    %v8133 = vpop.permute.xlu0 %8132
    %8134 = vrot.lane.b32.xlu0 %v6620, 32
    %v8135 = vpop.permute.xlu0 %8134
    %8136 = vrot.lane.b32.xlu0 %v6622, 32
    %v8137 = vpop.permute.xlu0 %8136
    %8138 = vrot.lane.b32.xlu0 %v6624, 32
    %v8139 = vpop.permute.xlu0 %8138
    %8140 = vrot.lane.b32.xlu0 %v6626, 32
    %v8141 = vpop.permute.xlu0 %8140
    %8142 = vrot.lane.b32.xlu0 %v6628, 32
    %v8143 = vpop.permute.xlu0 %8142
    %8160 = vrot.lane.b32.xlu0 %v7478, 48
    %v8161 = vpop.permute.xlu0 %8160
    %8162 = vrot.lane.b32.xlu0 %v7480, 48
    %v8163 = vpop.permute.xlu0 %8162
    %8164 = vrot.lane.b32.xlu0 %v7482, 48
    %v8165 = vpop.permute.xlu0 %8164
    %8166 = vrot.lane.b32.xlu0 %v7484, 48
    %v8167 = vpop.permute.xlu0 %8166
    %8168 = vrot.lane.b32.xlu0 %v7486, 48
    %v8169 = vpop.permute.xlu0 %8168
    %8170 = vrot.lane.b32.xlu0 %v7488, 48
    %v8171 = vpop.permute.xlu0 %8170
    %8172 = vrot.lane.b32.xlu0 %v7490, 48
    %v8173 = vpop.permute.xlu0 %8172
    %8174 = vrot.lane.b32.xlu0 %v7492, 48
    %v8175 = vpop.permute.xlu0 %8174
    %v8184 = vsel %vm3940, %v4870, %v8097
    %v8185 = vsel %vm3940, %v4872, %v8099
    %v8186 = vsel %vm3940, %v4874, %v8101
    %v8187 = vsel %vm3940, %v4876, %v8103
    %v8188 = vsel %vm3940, %v4878, %v8105
    %v8189 = vsel %vm3940, %v4880, %v8107
    %v8190 = vsel %vm3940, %v4882, %v8109
    %v8191 = vsel %vm3940, %v4884, %v8111
    %v8192 = vsel %vm98, %v8184, %v8129
    %v8193 = vsel %vm98, %v8185, %v8131
    %v8194 = vsel %vm98, %v8186, %v8133
    %v8195 = vsel %vm98, %v8187, %v8135
    %v8196 = vsel %vm98, %v8188, %v8137
    %v8197 = vsel %vm98, %v8189, %v8139
    %v8198 = vsel %vm98, %v8190, %v8141
    %v8199 = vsel %vm98, %v8191, %v8143
    %vm8200 = vcmask 392192
    %v8201 = vsel %vm8200, %v8192, %v8161
    %v8202 = vsel %vm8200, %v8193, %v8163
    %v8203 = vsel %vm8200, %v8194, %v8165
    %v8204 = vsel %vm8200, %v8195, %v8167
    %v8205 = vsel %vm8200, %v8196, %v8169
    %v8206 = vsel %vm8200, %v8197, %v8171
    %v8207 = vsel %vm8200, %v8198, %v8173
    %v8208 = vsel %vm8200, %v8199, %v8175
    %vm8209 = vcmask 523264
    %8210 = vst.msk [vmem:[#allocation2] sm:$0xff] %vm8209, %v8201
    %8211 = vst.msk [vmem:[#allocation2 + $0x8] sm:$0xff] %vm8209, %v8202
    %8212 = vst.msk [vmem:[#allocation2 + $0x10] sm:$0xff] %vm8209, %v8203
    %8213 = vst.msk [vmem:[#allocation2 + $0x18] sm:$0xff] %vm8209, %v8204
    %8214 = vst.msk [vmem:[#allocation2 + $0x20] sm:$0xff] %vm8209, %v8205
    %8215 = vst.msk [vmem:[#allocation2 + $0x28] sm:$0xff] %vm8209, %v8206
    %8216 = vst.msk [vmem:[#allocation2 + $0x30] sm:$0xff] %vm8209, %v8207
    %8217 = vst.msk [vmem:[#allocation2 + $0x38] sm:$0xff] %vm8209, %v8208
    %v8218 = vsel %vm98, %v8080, 0.0
    %8219 = vadd.xlane.f32.xlu0 %v8218
    %v8220 = vpop.xlane.xlu0 %8219
    %v8221 = vsel %vm98, %v8081, 0.0
    %8222 = vadd.xlane.f32.xlu0 %v8221
    %v8223 = vpop.xlane.xlu0 %8222
    %v8224 = vsel %vm98, %v8082, 0.0
    %8225 = vadd.xlane.f32.xlu0 %v8224
    %v8226 = vpop.xlane.xlu0 %8225
    %v8227 = vsel %vm98, %v8083, 0.0
    %8228 = vadd.xlane.f32.xlu0 %v8227
    %v8229 = vpop.xlane.xlu0 %8228
    %v8230 = vsel %vm98, %v8084, 0.0
    %8231 = vadd.xlane.f32.xlu0 %v8230
    %v8232 = vpop.xlane.xlu0 %8231
    %v8233 = vsel %vm98, %v8085, 0.0
    %8234 = vadd.xlane.f32.xlu0 %v8233
    %v8235 = vpop.xlane.xlu0 %8234
    %v8236 = vsel %vm98, %v8086, 0.0
    %8237 = vadd.xlane.f32.xlu0 %v8236
    %v8238 = vpop.xlane.xlu0 %8237
    %v8239 = vsel %vm98, %v8087, 0.0
    %8240 = vadd.xlane.f32.xlu0 %v8239
    %v8241 = vpop.xlane.xlu0 %8240
    %v8242 = vmul.f32 %v8220, %v123
    %v8243 = vmul.f32 %v8223, %v123
    %v8244 = vmul.f32 %v8226, %v123
    %v8245 = vmul.f32 %v8229, %v123
    %v8246 = vmul.f32 %v8232, %v123
    %v8247 = vmul.f32 %v8235, %v123
    %v8248 = vmul.f32 %v8238, %v123
    %v8249 = vmul.f32 %v8241, %v123
    %v8250 = vsub.f32 %v8080, %v8242
    %v8251 = vsub.f32 %v8081, %v8243
    %v8252 = vsub.f32 %v8082, %v8244
    %v8253 = vsub.f32 %v8083, %v8245
    %v8254 = vsub.f32 %v8084, %v8246
    %v8255 = vsub.f32 %v8085, %v8247
    %v8256 = vsub.f32 %v8086, %v8248
    %v8257 = vsub.f32 %v8087, %v8249
    %v8258 = vmul.f32 %v8250, %v8250
    %v8259 = vmul.f32 %v8251, %v8251
    %v8260 = vmul.f32 %v8252, %v8252
    %v8261 = vmul.f32 %v8253, %v8253
    %v8262 = vmul.f32 %v8254, %v8254
    %v8263 = vmul.f32 %v8255, %v8255
    %v8264 = vmul.f32 %v8256, %v8256
    %v8265 = vmul.f32 %v8257, %v8257
    %v8266 = vsel %vm98, %v8258, 0.0
    %8267 = vadd.xlane.f32.xlu0 %v8266
    %v8268 = vpop.xlane.xlu0 %8267
    %v8269 = vsel %vm98, %v8259, 0.0
    %8270 = vadd.xlane.f32.xlu0 %v8269
    %v8271 = vpop.xlane.xlu0 %8270
    %v8272 = vsel %vm98, %v8260, 0.0
    %8273 = vadd.xlane.f32.xlu0 %v8272
    %v8274 = vpop.xlane.xlu0 %8273
    %v8275 = vsel %vm98, %v8261, 0.0
    %8276 = vadd.xlane.f32.xlu0 %v8275
    %v8277 = vpop.xlane.xlu0 %8276
    %v8278 = vsel %vm98, %v8262, 0.0
    %8279 = vadd.xlane.f32.xlu0 %v8278
    %v8280 = vpop.xlane.xlu0 %8279
    %v8281 = vsel %vm98, %v8263, 0.0
    %8282 = vadd.xlane.f32.xlu0 %v8281
    %v8283 = vpop.xlane.xlu0 %8282
    %v8284 = vsel %vm98, %v8264, 0.0
    %8285 = vadd.xlane.f32.xlu0 %v8284
    %v8286 = vpop.xlane.xlu0 %8285
    %v8287 = vsel %vm98, %v8265, 0.0
    %8288 = vadd.xlane.f32.xlu0 %v8287
    %v8289 = vpop.xlane.xlu0 %8288
    %v8290 = vmul.f32 %v8268, %v123
    %v8291 = vmul.f32 %v8271, %v123
    %v8292 = vmul.f32 %v8274, %v123
    %v8293 = vmul.f32 %v8277, %v123
    %v8294 = vmul.f32 %v8280, %v123
    %v8295 = vmul.f32 %v8283, %v123
    %v8296 = vmul.f32 %v8286, %v123
    %v8297 = vmul.f32 %v8289, %v123
    %v8298 = vadd.f32 %v8290, 1e-05
    %v8299 = vadd.f32 %v8291, 1e-05
    %v8300 = vadd.f32 %v8292, 1e-05
    %v8301 = vadd.f32 %v8293, 1e-05
    %v8302 = vadd.f32 %v8294, 1e-05
    %v8303 = vadd.f32 %v8295, 1e-05
    %v8304 = vadd.f32 %v8296, 1e-05
    %v8305 = vadd.f32 %v8297, 1e-05
    %v8306 = vrsqrt.pop %v8298
    %v8307 = vrsqrt.pop %v8299
    %v8308 = vrsqrt.pop %v8300
    %v8309 = vrsqrt.pop %v8301
    %v8310 = vrsqrt.pop %v8302
    %v8311 = vrsqrt.pop %v8303
    %v8312 = vrsqrt.pop %v8304
    %v8313 = vrsqrt.pop %v8305
    %v8314 = vmul.f32 %v8250, %v8306
    %v8315 = vmul.f32 %v8251, %v8307
    %v8316 = vmul.f32 %v8252, %v8308
    %v8317 = vmul.f32 %v8253, %v8309
    %v8318 = vmul.f32 %v8254, %v8310
    %v8319 = vmul.f32 %v8255, %v8311
    %v8320 = vmul.f32 %v8256, %v8312
    %v8321 = vmul.f32 %v8257, %v8313
    %8322 = vrot.lane.b32.xlu0 %v207, 64
    %v8323 = vpop.permute.xlu0 %8322
    %v8325 = vmul.f32 %v8314, %v8323
    %v8326 = vmul.f32 %v8315, %v8323
    %v8327 = vmul.f32 %v8316, %v8323
    %v8328 = vmul.f32 %v8317, %v8323
    %v8329 = vmul.f32 %v8318, %v8323
    %v8330 = vmul.f32 %v8319, %v8323
    %v8331 = vmul.f32 %v8320, %v8323
    %v8332 = vmul.f32 %v8321, %v8323
    %8333 = vrot.lane.b32.xlu0 %v219, 64
    %v8334 = vpop.permute.xlu0 %8333
    %v8336 = vadd.f32 %v8325, %v8334
    %v8337 = vadd.f32 %v8326, %v8334
    %v8338 = vadd.f32 %v8327, %v8334
    %v8339 = vadd.f32 %v8328, %v8334
    %v8340 = vadd.f32 %v8329, %v8334
    %v8341 = vadd.f32 %v8330, %v8334
    %v8342 = vadd.f32 %v8331, %v8334
    %v8343 = vadd.f32 %v8332, %v8334
    %v8344 = vpack.c.bf16 %v8337, %v8336
    %v8345 = vpack.c.bf16 %v8339, %v8338
    %v8346 = vpack.c.bf16 %v8341, %v8340
    %v8347 = vpack.c.bf16 %v8343, %v8342
    %v8348 = vlaneseq
    %v8349 = vshrl.u32 %v8348, 7
    %v8350 = vsub.s32 0, %v8349
    %v8351 = vrot.slane %v95, %v8350
    %v8353 = vsel %vm98, %v8344, 0
    %v8356 = vsel %vm98, %v8345, 0
    %v8359 = vsel %vm98, %v8346, 0
    %v8362 = vsel %vm98, %v8347, 0
    %8364 = vmatprep.subr.bf16.mxu0 0
    %8365 = vmatpush1.bf16.msra.mxu0 %v78
    %8366 = vmatprep.subr.bf16.mxu0 0
    %8367 = vmatpush1.bf16.msra.mxu0 %v79
    %8368 = vmatprep.subr.bf16.mxu0 0
    %8369 = vmatpush1.bf16.msra.mxu0 0
    %8370 = vmatprep.subr.bf16.mxu0 0
    %8371 = vmatpush1.bf16.msra.mxu0 0
    %8372 = vmatprep.subr.bf16.mxu0 0
    %8373 = vmatpush1.bf16.msra.mxu0 0
    %8374 = vmatprep.subr.bf16.mxu0 0
    %8375 = vmatpush1.bf16.msra.mxu0 0
    %8376 = vmatprep.subr.bf16.mxu0 0
    %8377 = vmatpush1.bf16.msra.mxu0 0
    %8378 = vmatprep.subr.bf16.mxu0 0
    %8379 = vmatpush1.bf16.msra.mxu0 0
    %8380 = vmatprep.subr.bf16.mxu0 0
    %8381 = vmatpush1.bf16.msra.mxu0 0
    %8382 = vmatprep.subr.bf16.mxu0 0
    %8383 = vmatpush1.bf16.msra.mxu0 0
    %8384 = vmatprep.subr.bf16.mxu0 0
    %8385 = vmatpush1.bf16.msra.mxu0 0
    %8386 = vmatprep.subr.bf16.mxu0 0
    %8387 = vmatpush1.bf16.msra.mxu0 0
    %8388 = vmatprep.subr.bf16.mxu0 0
    %8389 = vmatpush1.bf16.msra.mxu0 0
    %8390 = vmatprep.subr.bf16.mxu0 0
    %8391 = vmatpush1.bf16.msra.mxu0 0
    %8392 = vmatprep.subr.bf16.mxu0 0
    %8393 = vmatpush1.bf16.msra.mxu0 0
    %8394 = vmatprep.subr.bf16.mxu0 0
    %8395 = vmatpush1.bf16.msra.mxu0 0
    %8396 = vmatprep.mubr.bf16.mxu0 0
    %8397 = vmatmul.mubr.bf16.gmra.mrb[0].mxu0 %v8353
    %v8398 = vpop.f32.mrb[0].mxu0
    %v8399 = vadd.f32 %v8351, %v8398
    %v8400 = vpop.f32.mrb[0].mxu0
    %v8401 = vpop.f32.mrb[0].mxu0
    %v8402 = vadd.f32 %v8351, %v8401
    %v8403 = vpop.f32.mrb[0].mxu0
    %8404 = vmatprep.mubr.bf16.mxu0 0
    %8405 = vmatmul.mubr.bf16.gmra.mrb[0].mxu0 %v8356
    %v8406 = vpop.f32.mrb[0].mxu0
    %v8407 = vadd.f32 %v8351, %v8406
    %v8408 = vpop.f32.mrb[0].mxu0
    %v8409 = vpop.f32.mrb[0].mxu0
    %v8410 = vadd.f32 %v8351, %v8409
    %v8411 = vpop.f32.mrb[0].mxu0
    %8412 = vmatprep.mubr.bf16.mxu0 0
    %8413 = vmatmul.mubr.bf16.gmra.mrb[0].mxu0 %v8359
    %v8414 = vpop.f32.mrb[0].mxu0
    %v8415 = vadd.f32 %v8351, %v8414
    %v8416 = vpop.f32.mrb[0].mxu0
    %v8417 = vpop.f32.mrb[0].mxu0
    %v8418 = vadd.f32 %v8351, %v8417
    %v8419 = vpop.f32.mrb[0].mxu0
    %8420 = vmatprep.mubr.bf16.mxu0 0
    %8421 = vmatmul.mubr.bf16.gmra.mrb[0].mxu0 %v8362
    %v8422 = vpop.f32.mrb[0].mxu0
    %v8423 = vadd.f32 %v8351, %v8422
    %v8424 = vpop.f32.mrb[0].mxu0
    %v8425 = vpop.f32.mrb[0].mxu0
    %v8426 = vadd.f32 %v8351, %v8425
    %v8427 = vpop.f32.mrb[0].mxu0
    %8428 = vdwg.mxu0
    %v8429 = vmax.f32 %v8399, 0.0
    %v8430 = vmax.f32 %v8402, 0.0
    %v8431 = vmax.f32 %v8407, 0.0
    %v8432 = vmax.f32 %v8410, 0.0
    %v8433 = vmax.f32 %v8415, 0.0
    %v8434 = vmax.f32 %v8418, 0.0
    %v8435 = vmax.f32 %v8423, 0.0
    %v8436 = vmax.f32 %v8426, 0.0
    %v8437 = vpack.c.bf16 %v8430, %v8429
    %v8438 = vpack.c.bf16 %v8432, %v8431
    %v8439 = vpack.c.bf16 %v8434, %v8433
    %v8440 = vpack.c.bf16 %v8436, %v8435
    %8441 = vrot.lane.b32.xlu0 %v3965, 64
    %v8442 = vpop.permute.xlu0 %8441
    %v8445 = vsel %vm8209, %v8437, 0
    %v8448 = vsel %vm8209, %v8438, 0
    %v8451 = vsel %vm8209, %v8439, 0
    %v8454 = vsel %vm8209, %v8440, 0
    %8456 = vmatprep.subr.bf16.mxu0 0
    %8457 = vmatpush1.bf16.msra.mxu0 %v88
    %8458 = vmatprep.subr.bf16.mxu0 0
    %8459 = vmatpush1.bf16.msra.mxu0 %v89
    %8460 = vmatprep.subr.bf16.mxu0 0
    %8461 = vmatpush1.bf16.msra.mxu0 %v90
    %8462 = vmatprep.subr.bf16.mxu0 0
    %8463 = vmatpush1.bf16.msra.mxu0 %v91
    %8464 = vmatprep.subr.bf16.mxu0 0
    %8465 = vmatpush1.bf16.msra.mxu0 0
    %8466 = vmatprep.subr.bf16.mxu0 0
    %8467 = vmatpush1.bf16.msra.mxu0 0
    %8468 = vmatprep.subr.bf16.mxu0 0
    %8469 = vmatpush1.bf16.msra.mxu0 0
    %8470 = vmatprep.subr.bf16.mxu0 0
    %8471 = vmatpush1.bf16.msra.mxu0 0
    %8472 = vmatprep.subr.bf16.mxu0 0
    %8473 = vmatpush1.bf16.msra.mxu0 0
    %8474 = vmatprep.subr.bf16.mxu0 0
    %8475 = vmatpush1.bf16.msra.mxu0 0
    %8476 = vmatprep.subr.bf16.mxu0 0
    %8477 = vmatpush1.bf16.msra.mxu0 0
    %8478 = vmatprep.subr.bf16.mxu0 0
    %8479 = vmatpush1.bf16.msra.mxu0 0
    %8480 = vmatprep.subr.bf16.mxu0 0
    %8481 = vmatpush1.bf16.msra.mxu0 0
    %8482 = vmatprep.subr.bf16.mxu0 0
    %8483 = vmatpush1.bf16.msra.mxu0 0
    %8484 = vmatprep.subr.bf16.mxu0 0
    %8485 = vmatpush1.bf16.msra.mxu0 0
    %8486 = vmatprep.subr.bf16.mxu0 0
    %8487 = vmatpush1.bf16.msra.mxu0 0
    %8488 = vmatprep.mubr.bf16.mxu0 0
    %8489 = vmatmul.mubr.bf16.gmra.mrb[0].mxu0 %v8445
    %v8490 = vpop.f32.mrb[0].mxu0
    %v8491 = vadd.f32 %v8442, %v8490
    %v8492 = vpop.f32.mrb[0].mxu0
    %v8493 = vpop.f32.mrb[0].mxu0
    %v8494 = vadd.f32 %v8442, %v8493
    %v8495 = vpop.f32.mrb[0].mxu0
    %8496 = vmatprep.mubr.bf16.mxu0 0
    %8497 = vmatmul.mubr.bf16.gmra.mrb[0].mxu0 %v8448
    %v8498 = vpop.f32.mrb[0].mxu0
    %v8499 = vadd.f32 %v8442, %v8498
    %v8500 = vpop.f32.mrb[0].mxu0
    %v8501 = vpop.f32.mrb[0].mxu0
    %v8502 = vadd.f32 %v8442, %v8501
    %v8503 = vpop.f32.mrb[0].mxu0
    %8504 = vmatprep.mubr.bf16.mxu0 0
    %8505 = vmatmul.mubr.bf16.gmra.mrb[0].mxu0 %v8451
    %v8506 = vpop.f32.mrb[0].mxu0
    %v8507 = vadd.f32 %v8442, %v8506
    %v8508 = vpop.f32.mrb[0].mxu0
    %v8509 = vpop.f32.mrb[0].mxu0
    %v8510 = vadd.f32 %v8442, %v8509
    %v8511 = vpop.f32.mrb[0].mxu0
    %8512 = vmatprep.mubr.bf16.mxu0 0
    %8513 = vmatmul.mubr.bf16.gmra.mrb[0].mxu0 %v8454
    %v8514 = vpop.f32.mrb[0].mxu0
    %v8515 = vadd.f32 %v8442, %v8514
    %v8516 = vpop.f32.mrb[0].mxu0
    %v8517 = vpop.f32.mrb[0].mxu0
    %v8518 = vadd.f32 %v8442, %v8517
    %v8519 = vpop.f32.mrb[0].mxu0
    %8520 = vdwg.mxu0
    %v8521 = vadd.f32 %v8080, %v8491
    %v8522 = vadd.f32 %v8081, %v8494
    %v8523 = vadd.f32 %v8082, %v8499
    %v8524 = vadd.f32 %v8083, %v8502
    %v8525 = vadd.f32 %v8084, %v8507
    %v8526 = vadd.f32 %v8085, %v8510
    %v8527 = vadd.f32 %v8086, %v8515
    %v8528 = vadd.f32 %v8087, %v8518
    %8529 = vst.msk [vmem:[%s7] sm:$0xff] %vm98, %v8521
    %8530 = vst.msk [vmem:[%s7 + $0x8] sm:$0xff] %vm98, %v8522
    %8531 = vst.msk [vmem:[%s7 + $0x10] sm:$0xff] %vm98, %v8523
    %8532 = vst.msk [vmem:[%s7 + $0x18] sm:$0xff] %vm98, %v8524
    %8533 = vst.msk [vmem:[%s7 + $0x20] sm:$0xff] %vm98, %v8525
    %8534 = vst.msk [vmem:[%s7 + $0x28] sm:$0xff] %vm98, %v8526
    %8535 = vst.msk [vmem:[%s7 + $0x30] sm:$0xff] %vm98, %v8527
    %8536 = vst.msk [vmem:[%s7 + $0x38] sm:$0xff] %vm98, %v8528
    // Predicated region
    $region30: #{tpu_custom_call.1} parent=1 // pred_check
      _
    $region31: #{tpu_custom_call.1} parent=1 // pred_check_branch
      %8538 = sbr.rel (0) target = $region33
    $region32: #{tpu_custom_call.1} parent=1 // pred_region
      _
    $region33: #{tpu_custom_call.1} parent=1 // pred_fallthru
      _
    // Predicated region
    $region34: #{tpu_custom_call.1} parent=1 // pred_check
      _
    $region35: #{tpu_custom_call.1} parent=1 // pred_check_branch
      %8540 = sbr.rel (0) target = $region37
    $region36: #{tpu_custom_call.1} parent=1 // pred_region
      %s8542 = ssub.s32 1024, 1024
      %8543 = vsyncadd [#allocation3], %s8542
      %s8544 = sshll.u32 [#allocation2], 4
      %s8545 = int_to_ptr.vmem [resolvable:$true] %s8544
      %8550 = dma.vmem_to_hbm [thread:$0]  %s8545, 1024, %s8, [#allocation3], 128, 128, 8
    $region37: #{tpu_custom_call.1} parent=1 // pred_fallthru
      _
    // Predicated region
    $region38: #{tpu_custom_call.1} parent=1 // pred_check
      _
    $region39: #{tpu_custom_call.1} parent=1 // pred_check_branch
      %8552 = sbr.rel (0) target = $region41
    $region40: #{tpu_custom_call.1} parent=1 // pred_region
      _
    $region41: #{tpu_custom_call.1} parent=1 // pred_fallthru
      _
    // Predicated region
    $region42: #{tpu_custom_call.1} parent=1 // pred_check
      _
    $region43: #{tpu_custom_call.1} parent=1 // pred_check_branch
      %8554 = sbr.rel (0) target = $region45
    $region44: #{tpu_custom_call.1} parent=1 // pred_region
      %8555 = dma.done [#allocation3], 1024
    $region45: #{tpu_custom_call.1} parent=1 // pred_fallthru
      _
    %8556 = vsyncpa [#allocation3], 1

</llo_original>
